<compile_context>
chip_gen: v5e
topology: v5e:2x2
jax: 0.10.0
libtpu: 0.0.40
codegen_flags: <defaults>
</compile_context>

<pallas_src>
import functools

import numpy as np
import jax
import jax.numpy as jnp
from jax.experimental import pallas as pl
from jax.experimental.pallas import tpu as pltpu

HIDDEN = 50

# Static network geometry (MNIST: 28x28x1 input, 5x5 valid convs, 2x2 pools).
KH = 5
C1, C2 = 10, 20            # conv output channels
HP1, WP1 = 12, 12          # pooled conv1 spatial
HP2, WP2 = 4, 4            # pooled conv2 spatial
HALF1 = WP1 * C1           # 120
HALF2 = WP2 * C2           # 80
T1_COLS = 2 * HALF1        # 240 : [even output cols | odd output cols] x (j', c)
T2_COLS = 2 * HALF2        # 160


# ---------------------------------------------------------------------------
# Fused kernel: whole forward pass for one batch tile of `tb` images.
# ---------------------------------------------------------------------------
def fused_net_kernel(x_ref, t1_ref, b1_ref, t2_ref, b2_ref,
                     w1_ref, fb1_ref, w2_ref, fb2_ref,
                     o_ref, h_ref, *, tb, negate, one_minus):
    # x_ref : (tb, 4, 7, 28)  image rows grouped by (row % 4)
    # t1_ref: (5, 28, 240)    conv1 Toeplitz taps (pool-parity split columns)
    # b1_ref: (1, 120)        conv1 bias tiled over pooled width
    # t2_ref: (5, 120, 160)   conv2 Toeplitz taps (rows = j_in*10 + ci)
    # b2_ref: (1, 80)
    # w1_ref: (4, 80, 50)     fc1 weights, rows permuted to NHWC flatten order
    # fb1_ref: (1, 50)   w2_ref: (50, 10)   fb2_ref: (1, 10)
    # o_ref : (1, tb, 10)     log-softmax output tile
    # h_ref : (tb, 50)        VMEM scratch for fc1 activations
    f32 = jnp.float32

    for b in range(tb):
        # ---- conv1 (MXU Toeplitz matmuls) --------------------------------
        # acc1[s][u, :] holds conv1 output row 4u+s, columns laid out as
        # [even output col block (120) | odd output col block (120)].
        acc1 = [jnp.zeros((6, T1_COLS), f32) for _ in range(4)]
        for kh in range(KH):
            tap = t1_ref[kh]                                   # (28, 240)
            for s in range(4):
                r = kh + s
                rows = x_ref[b, r % 4, pl.ds(r // 4, 6), :]    # (6, 28) contiguous
                acc1[s] = acc1[s] + jnp.dot(rows, tap,
                                            preferred_element_type=f32)
        # 2x2 max pool + bias + relu, fully in registers.
        m_e = jnp.maximum(acc1[0], acc1[1])   # pooled rows 2u   (conv rows 4u, 4u+1)
        m_o = jnp.maximum(acc1[2], acc1[3])   # pooled rows 2u+1 (conv rows 4u+2, 4u+3)
        a1_e = jnp.maximum(jnp.maximum(m_e[:, :HALF1], m_e[:, HALF1:])
                           + b1_ref[...], 0.0)                 # (6, 120)
        a1_o = jnp.maximum(jnp.maximum(m_o[:, :HALF1], m_o[:, HALF1:])
                           + b1_ref[...], 0.0)                 # (6, 120)
        # a1_e[u, j*10+c] = relu(pool1)[2u, j, c] ; a1_o -> pooled row 2u+1.

        # ---- conv2 (same trick, Cin=10 folded into the Toeplitz rows) ----
        acc2_e = jnp.zeros((4, T2_COLS), f32)   # conv2 rows 2v
        acc2_o = jnp.zeros((4, T2_COLS), f32)   # conv2 rows 2v+1
        for kh in range(KH):
            tap = t2_ref[kh]                                   # (120, 160)
            r0 = kh                                            # needs a1 rows 2v+kh
            src0 = a1_e if r0 % 2 == 0 else a1_o
            acc2_e = acc2_e + jnp.dot(src0[r0 // 2:r0 // 2 + 4, :], tap,
                                      preferred_element_type=f32)
            r1 = kh + 1                                        # needs a1 rows 2v+kh+1
            src1 = a1_e if r1 % 2 == 0 else a1_o
            acc2_o = acc2_o + jnp.dot(src1[r1 // 2:r1 // 2 + 4, :], tap,
                                      preferred_element_type=f32)
        m2 = jnp.maximum(acc2_e, acc2_o)                       # (4, 160)
        a2 = jnp.maximum(jnp.maximum(m2[:, :HALF2], m2[:, HALF2:])
                         + b2_ref[...], 0.0)                   # (4, 80)
        # a2[i, j*20+c] = relu(pool2)[i, j, c]  -> NHWC flatten order (4x80=320).
        # TODO(synk): nn.Dropout2d / F.dropout are identity in eval mode;
        # training-mode stochastic dropout is not implemented.

        # net_type transforms act elementwise on the flattened activation.
        if negate:                      # net_type == 'negative'
            a2 = -a2
        if one_minus:                   # 'negative_relu' / '*hybrid*'
            a2 = 1.0 - a2

        # ---- fc1 + relu for this image (fc1_w rows pre-permuted) ---------
        h_b = jnp.zeros((1, HIDDEN), f32)
        for q in range(4):
            h_b = h_b + jnp.dot(a2[q:q + 1, :], w1_ref[q],
                                preferred_element_type=f32)
        h_ref[pl.ds(b, 1), :] = jnp.maximum(h_b + fb1_ref[...], 0.0)

    # ---- fc2 + log_softmax for the whole tile (lane-dense (tb,10) store) --
    h = h_ref[...]                                             # (tb, 50)
    logits = jnp.dot(h, w2_ref[...], preferred_element_type=f32) + fb2_ref[...]
    shifted = logits - jnp.max(logits, axis=1, keepdims=True)
    lse = jnp.log(jnp.sum(jnp.exp(shifted), axis=1, keepdims=True))
    o_ref[0] = shifted - lse


# ---------------------------------------------------------------------------
# Parameter preparation: torch layout -> fused kernel layout (one-time, host).
# ---------------------------------------------------------------------------
def prepare_params(params):
    w1 = np.asarray(params["conv1_w"], np.float32)      # (10, 1, 5, 5)
    b1 = np.asarray(params["conv1_b"], np.float32)      # (10,)
    w2 = np.asarray(params["conv2_w"], np.float32)      # (20, 10, 5, 5)
    b2 = np.asarray(params["conv2_b"], np.float32)      # (20,)
    fw1 = np.asarray(params["fc1_w"], np.float32)       # (50, 320)  torch (out, in)
    fb1 = np.asarray(params["fc1_b"], np.float32)       # (50,)
    fw2 = np.asarray(params["fc2_w"], np.float32)       # (10, 50)
    fb2 = np.asarray(params["fc2_b"], np.float32)       # (10,)

    # conv1 Toeplitz: T1[kh, j+kw, (j%2)*120 + (j//2)*10 + c] = w1[c, 0, kh, kw]
    t1 = np.zeros((KH, 28, T1_COLS), np.float32)
    for kh in range(KH):
        for kw in range(KH):
            for j in range(2 * WP1):
                base = (j % 2) * HALF1 + (j // 2) * C1
                t1[kh, j + kw, base:base + C1] = w1[:, 0, kh, kw]

    # conv2 Toeplitz: rows indexed by (input col j_in)*10 + ci.
    t2 = np.zeros((KH, WP1 * C1, T2_COLS), np.float32)
    for kh in range(KH):
        for kw in range(KH):
            for j in range(2 * WP2):
                base = (j % 2) * HALF2 + (j // 2) * C2
                for ci in range(C1):
                    t2[kh, (j + kw) * C1 + ci, base:base + C2] = w2[:, ci, kh, kw]

    # fc1: absorb torch's NCHW .view(-1, 320) by permuting weight rows into
    # the kernel's NHWC flatten order: (i, j, c) <- column c*16 + i*4 + j.
    w1k = np.zeros((HP2, WP2 * C2, HIDDEN), np.float32)
    for i in range(HP2):
        for j in range(WP2):
            for c in range(C2):
                w1k[i, j * C2 + c, :] = fw1[:, c * (HP2 * WP2) + i * WP2 + j]

    return {
        "t1": jnp.asarray(t1),
        "b1row": jnp.asarray(np.tile(b1, WP1)[None, :]),   # (1, 120)
        "t2": jnp.asarray(t2),
        "b2row": jnp.asarray(np.tile(b2, WP2)[None, :]),   # (1, 80)
        "w1k": jnp.asarray(w1k),                           # (4, 80, 50)
        "fb1": jnp.asarray(fb1[None, :]),                  # (1, 50)
        "w2k": jnp.asarray(fw2.T.copy()),                  # (50, 10)
        "fb2": jnp.asarray(fb2[None, :]),                  # (1, 10)
    }


# ---------------------------------------------------------------------------
# Forward wrapper: batch-tiled, single fused pallas_call.
# ---------------------------------------------------------------------------
def net_forward(x_nchw, kparams, net_type="plain", tile_b=4):
    B = x_nchw.shape[0]
    tb = min(tile_b, B)
    bp = ((B + tb - 1) // tb) * tb
    num_tiles = bp // tb

    x = x_nchw.astype(jnp.float32)[:, 0, :, :]                  # (B, 28, 28)
    if bp != B:
        x = jnp.pad(x, ((0, bp - B), (0, 0), (0, 0)))
    # Group rows by (row % 4) so all in-kernel conv row reads are contiguous.
    x4 = jnp.transpose(x.reshape(bp, 7, 4, 28), (0, 2, 1, 3))   # (bp, 4, 7, 28)

    negate = net_type == "negative"
    one_minus = (net_type == "negative_relu") or ("hybrid" in net_type)
    kernel = functools.partial(fused_net_kernel, tb=tb,
                               negate=negate, one_minus=one_minus)

    weights = [kparams[n] for n in
               ("t1", "b1row", "t2", "b2row", "w1k", "fb1", "w2k", "fb2")]

    def _const_spec(a):
        nd = a.ndim
        return pl.BlockSpec(a.shape, lambda i: (0,) * nd)

    flops_per_image = (2 * 4 * KH * 6 * 28 * T1_COLS          # conv1 matmuls
                       + 2 * 2 * KH * 4 * (WP1 * C1) * T2_COLS  # conv2 matmuls
                       + 2 * HP2 * HALF2 * HIDDEN               # fc1
                       + 2 * HIDDEN * 10)                       # fc2
    bytes_accessed = int(x4.size * 4 + sum(w.size * 4 for w in weights)
                         + bp * 10 * 4)
    cost = pl.CostEstimate(flops=int(bp * flops_per_image),
                           transcendentals=int(bp * 11),
                           bytes_accessed=bytes_accessed)

    out = pl.pallas_call(
        kernel,
        out_shape=jax.ShapeDtypeStruct((num_tiles, tb, 10), jnp.float32),
        grid_spec=pltpu.PrefetchScalarGridSpec(
            num_scalar_prefetch=0,
            grid=(num_tiles,),
            in_specs=[pl.BlockSpec((tb, 4, 7, 28), lambda i: (i, 0, 0, 0))]
                     + [_const_spec(w) for w in weights],
            out_specs=pl.BlockSpec((1, tb, 10), lambda i: (i, 0, 0)),
            scratch_shapes=[pltpu.VMEM((tb, HIDDEN), jnp.float32)]),
        compiler_params=pltpu.CompilerParams(
            dimension_semantics=("parallel",),
            vmem_limit_bytes=32 * 1024 * 1024),
        cost_estimate=cost,
    )(x4, *weights)
    return out.reshape(bp, 10)[:B]


# ---------------------------------------------------------------------------
# Deterministic synthetic parameters in PyTorch layout (no checkpoint loading)
# ---------------------------------------------------------------------------
def init_params(key):
    ks = jax.random.split(key, 8)

    def u(k, shape, fan_in):
        bound = 1.0 / (fan_in ** 0.5)
        return jax.random.uniform(k, shape, jnp.float32, -bound, bound)

    return {
        "conv1_w": u(ks[0], (10, 1, 5, 5), 25),
        "conv1_b": u(ks[1], (10,), 25),
        "conv2_w": u(ks[2], (20, 10, 5, 5), 250),
        "conv2_b": u(ks[3], (20,), 250),
        "fc1_w": u(ks[4], (HIDDEN, 320), 320),
        "fc1_b": u(ks[5], (HIDDEN,), 320),
        "fc2_w": u(ks[6], (10, HIDDEN), HIDDEN),
        "fc2_b": u(ks[7], (10,), HIDDEN),
    }


# ---------------------------------------------------------------------------
# Pure-JAX reference mirroring the PyTorch module (eval mode).
# ---------------------------------------------------------------------------
def reference_forward(x_nchw, params, net_type="plain"):
    hi = jax.lax.Precision.HIGHEST
    x = x_nchw.astype(jnp.float32)

    def conv_block(h, w, b):
        y = jax.lax.conv_general_dilated(
            h, w, window_strides=(1, 1), padding="VALID",
            dimension_numbers=("NCHW", "OIHW", "NCHW"), precision=hi)
        y = y + b.reshape(1, -1, 1, 1)
        y = jax.lax.reduce_window(y, -jnp.inf, jax.lax.max,
                                  (1, 1, 2, 2), (1, 1, 2, 2), "VALID")
        return jnp.maximum(y, 0.0)

    h = conv_block(x, params["conv1_w"], params["conv1_b"])
    h = conv_block(h, params["conv2_w"], params["conv2_b"])
    flat = h.reshape(h.shape[0], -1)            # torch .view(-1, 320), NCHW order
    if net_type == "negative":
        flat = -flat
    if net_type == "negative_relu" or "hybrid" in net_type:
        flat = 1.0 - flat
    h1 = jnp.maximum(jnp.dot(flat, params["fc1_w"].T, precision=hi)
                     + params["fc1_b"], 0.0)
    logits = jnp.dot(h1, params["fc2_w"].T, precision=hi) + params["fc2_b"]
    return jax.nn.log_softmax(logits, axis=1)


if __name__ == "__main__":
    key = jax.random.PRNGKey(0)
    k_params, k_x = jax.random.split(key)
    params = init_params(k_params)
    kparams = prepare_params(params)
    x = jax.random.normal(k_x, (8, 1, 28, 28), dtype=jnp.float32)

    forward = jax.jit(net_forward, static_argnames=("net_type",))
    for nt in ("plain", "negative"):
        out = forward(x, kparams, net_type=nt)
        jax.block_until_ready(out)
        ref = reference_forward(x, params, net_type=nt)
        assert out.shape == (8, 10), out.shape
        assert bool(jnp.all(jnp.isfinite(out)))
        assert bool(jnp.allclose(jnp.exp(out).sum(axis=1), 1.0, atol=1e-3))
        err = float(jnp.max(jnp.abs(out - ref)))
        assert err < 2e-2, err
    print("KERNEL_OK")
</pallas_src>

<mosaic_0001>
module attributes {stable_mosaic.version = 11 : i64} {
  func.func @fused_net_kernel(%arg0: i32, %arg1: memref<4x4x7x28xf32, #tpu.memory_space<vmem>>, %arg2: memref<5x28x240xf32, #tpu.memory_space<vmem>>, %arg3: memref<1x120xf32, #tpu.memory_space<vmem>>, %arg4: memref<5x120x160xf32, #tpu.memory_space<vmem>>, %arg5: memref<1x80xf32, #tpu.memory_space<vmem>>, %arg6: memref<4x80x50xf32, #tpu.memory_space<vmem>>, %arg7: memref<1x50xf32, #tpu.memory_space<vmem>>, %arg8: memref<50x10xf32, #tpu.memory_space<vmem>>, %arg9: memref<1x10xf32, #tpu.memory_space<vmem>>, %arg10: memref<1x4x10xf32, #tpu.memory_space<vmem>>, %arg11: memref<4x50xf32, #tpu.memory_space<vmem>>) attributes {dimension_semantics = [#tpu.dimension_semantics<parallel>], iteration_bounds = array<i64: 2>, scalar_prefetch = 0 : i64, scratch_operands = 1 : i64, tpu.core_type = #tpu.core_type<tc>, window_params = [{transform_indices = @transform_0, window_bounds = array<i64: 4, 4, 7, 28>}, {pipeline_mode = #tpu.pipeline_mode<synchronous>, transform_indices = @transform_1, window_bounds = array<i64: 5, 28, 240>}, {pipeline_mode = #tpu.pipeline_mode<synchronous>, transform_indices = @transform_2, window_bounds = array<i64: 1, 120>}, {pipeline_mode = #tpu.pipeline_mode<synchronous>, transform_indices = @transform_3, window_bounds = array<i64: 5, 120, 160>}, {pipeline_mode = #tpu.pipeline_mode<synchronous>, transform_indices = @transform_4, window_bounds = array<i64: 1, 80>}, {pipeline_mode = #tpu.pipeline_mode<synchronous>, transform_indices = @transform_5, window_bounds = array<i64: 4, 80, 50>}, {pipeline_mode = #tpu.pipeline_mode<synchronous>, transform_indices = @transform_6, window_bounds = array<i64: 1, 50>}, {pipeline_mode = #tpu.pipeline_mode<synchronous>, transform_indices = @transform_7, window_bounds = array<i64: 50, 10>}, {pipeline_mode = #tpu.pipeline_mode<synchronous>, transform_indices = @transform_8, window_bounds = array<i64: 1, 10>}, {transform_indices = @transform_9, window_bounds = array<i64: 1, 4, 10>}]} {
    %cst = arith.constant 0.000000e+00 : f32
    %0 = vector.broadcast %cst : f32 to vector<6x240xf32>
    %cst_0 = arith.constant 0.000000e+00 : f32
    %1 = vector.broadcast %cst_0 : f32 to vector<6x240xf32>
    %cst_1 = arith.constant 0.000000e+00 : f32
    %2 = vector.broadcast %cst_1 : f32 to vector<6x240xf32>
    %cst_2 = arith.constant 0.000000e+00 : f32
    %3 = vector.broadcast %cst_2 : f32 to vector<6x240xf32>
    %c0 = arith.constant 0 : index
    %c0_3 = arith.constant 0 : index
    %c0_4 = arith.constant 0 : index
    %4 = vector.load %arg2[%c0, %c0_3, %c0_4] : memref<5x28x240xf32, #tpu.memory_space<vmem>>, vector<1x28x240xf32>
    %5 = vector.shape_cast %4 : vector<1x28x240xf32> to vector<28x240xf32>
    %c0_5 = arith.constant 0 : index
    %c0_6 = arith.constant 0 : index
    %c0_7 = arith.constant 0 : index
    %c0_8 = arith.constant 0 : index
    %6 = vector.load %arg1[%c0_5, %c0_6, %c0_7, %c0_8] : memref<4x4x7x28xf32, #tpu.memory_space<vmem>>, vector<1x1x6x28xf32>
    %7 = vector.shape_cast %6 : vector<1x1x6x28xf32> to vector<6x28xf32>
    %cst_9 = arith.constant dense<0.000000e+00> : vector<6x240xf32>
    %8 = tpu.matmul %7, %5, %cst_9 {dimension_numbers = #tpu.dot_dimension_numbers<[1], [0], [0], [1], [0, 0, 1, 1], [], []>} : vector<6x28xf32>, vector<28x240xf32>, vector<6x240xf32> -> vector<6x240xf32>
    %9 = arith.addf %0, %8 : vector<6x240xf32>
    %c0_10 = arith.constant 0 : index
    %c1 = arith.constant 1 : index
    %c0_11 = arith.constant 0 : index
    %c0_12 = arith.constant 0 : index
    %10 = vector.load %arg1[%c0_10, %c1, %c0_11, %c0_12] : memref<4x4x7x28xf32, #tpu.memory_space<vmem>>, vector<1x1x6x28xf32>
    %11 = vector.shape_cast %10 : vector<1x1x6x28xf32> to vector<6x28xf32>
    %cst_13 = arith.constant dense<0.000000e+00> : vector<6x240xf32>
    %12 = tpu.matmul %11, %5, %cst_13 {dimension_numbers = #tpu.dot_dimension_numbers<[1], [0], [0], [1], [0, 0, 1, 1], [], []>} : vector<6x28xf32>, vector<28x240xf32>, vector<6x240xf32> -> vector<6x240xf32>
    %13 = arith.addf %1, %12 : vector<6x240xf32>
    %c0_14 = arith.constant 0 : index
    %c2 = arith.constant 2 : index
    %c0_15 = arith.constant 0 : index
    %c0_16 = arith.constant 0 : index
    %14 = vector.load %arg1[%c0_14, %c2, %c0_15, %c0_16] : memref<4x4x7x28xf32, #tpu.memory_space<vmem>>, vector<1x1x6x28xf32>
    %15 = vector.shape_cast %14 : vector<1x1x6x28xf32> to vector<6x28xf32>
    %cst_17 = arith.constant dense<0.000000e+00> : vector<6x240xf32>
    %16 = tpu.matmul %15, %5, %cst_17 {dimension_numbers = #tpu.dot_dimension_numbers<[1], [0], [0], [1], [0, 0, 1, 1], [], []>} : vector<6x28xf32>, vector<28x240xf32>, vector<6x240xf32> -> vector<6x240xf32>
    %17 = arith.addf %2, %16 : vector<6x240xf32>
    %c0_18 = arith.constant 0 : index
    %c3 = arith.constant 3 : index
    %c0_19 = arith.constant 0 : index
    %c0_20 = arith.constant 0 : index
    %18 = vector.load %arg1[%c0_18, %c3, %c0_19, %c0_20] : memref<4x4x7x28xf32, #tpu.memory_space<vmem>>, vector<1x1x6x28xf32>
    %19 = vector.shape_cast %18 : vector<1x1x6x28xf32> to vector<6x28xf32>
    %cst_21 = arith.constant dense<0.000000e+00> : vector<6x240xf32>
    %20 = tpu.matmul %19, %5, %cst_21 {dimension_numbers = #tpu.dot_dimension_numbers<[1], [0], [0], [1], [0, 0, 1, 1], [], []>} : vector<6x28xf32>, vector<28x240xf32>, vector<6x240xf32> -> vector<6x240xf32>
    %21 = arith.addf %3, %20 : vector<6x240xf32>
    %c1_22 = arith.constant 1 : index
    %c0_23 = arith.constant 0 : index
    %c0_24 = arith.constant 0 : index
    %22 = vector.load %arg2[%c1_22, %c0_23, %c0_24] : memref<5x28x240xf32, #tpu.memory_space<vmem>>, vector<1x28x240xf32>
    %23 = vector.shape_cast %22 : vector<1x28x240xf32> to vector<28x240xf32>
    %c0_25 = arith.constant 0 : index
    %c1_26 = arith.constant 1 : index
    %c0_27 = arith.constant 0 : index
    %c0_28 = arith.constant 0 : index
    %24 = vector.load %arg1[%c0_25, %c1_26, %c0_27, %c0_28] : memref<4x4x7x28xf32, #tpu.memory_space<vmem>>, vector<1x1x6x28xf32>
    %25 = vector.shape_cast %24 : vector<1x1x6x28xf32> to vector<6x28xf32>
    %cst_29 = arith.constant dense<0.000000e+00> : vector<6x240xf32>
    %26 = tpu.matmul %25, %23, %cst_29 {dimension_numbers = #tpu.dot_dimension_numbers<[1], [0], [0], [1], [0, 0, 1, 1], [], []>} : vector<6x28xf32>, vector<28x240xf32>, vector<6x240xf32> -> vector<6x240xf32>
    %27 = arith.addf %9, %26 : vector<6x240xf32>
    %c0_30 = arith.constant 0 : index
    %c2_31 = arith.constant 2 : index
    %c0_32 = arith.constant 0 : index
    %c0_33 = arith.constant 0 : index
    %28 = vector.load %arg1[%c0_30, %c2_31, %c0_32, %c0_33] : memref<4x4x7x28xf32, #tpu.memory_space<vmem>>, vector<1x1x6x28xf32>
    %29 = vector.shape_cast %28 : vector<1x1x6x28xf32> to vector<6x28xf32>
    %cst_34 = arith.constant dense<0.000000e+00> : vector<6x240xf32>
    %30 = tpu.matmul %29, %23, %cst_34 {dimension_numbers = #tpu.dot_dimension_numbers<[1], [0], [0], [1], [0, 0, 1, 1], [], []>} : vector<6x28xf32>, vector<28x240xf32>, vector<6x240xf32> -> vector<6x240xf32>
    %31 = arith.addf %13, %30 : vector<6x240xf32>
    %c0_35 = arith.constant 0 : index
    %c3_36 = arith.constant 3 : index
    %c0_37 = arith.constant 0 : index
    %c0_38 = arith.constant 0 : index
    %32 = vector.load %arg1[%c0_35, %c3_36, %c0_37, %c0_38] : memref<4x4x7x28xf32, #tpu.memory_space<vmem>>, vector<1x1x6x28xf32>
    %33 = vector.shape_cast %32 : vector<1x1x6x28xf32> to vector<6x28xf32>
    %cst_39 = arith.constant dense<0.000000e+00> : vector<6x240xf32>
    %34 = tpu.matmul %33, %23, %cst_39 {dimension_numbers = #tpu.dot_dimension_numbers<[1], [0], [0], [1], [0, 0, 1, 1], [], []>} : vector<6x28xf32>, vector<28x240xf32>, vector<6x240xf32> -> vector<6x240xf32>
    %35 = arith.addf %17, %34 : vector<6x240xf32>
    %c0_40 = arith.constant 0 : index
    %c0_41 = arith.constant 0 : index
    %c1_42 = arith.constant 1 : index
    %c0_43 = arith.constant 0 : index
    %36 = vector.load %arg1[%c0_40, %c0_41, %c1_42, %c0_43] : memref<4x4x7x28xf32, #tpu.memory_space<vmem>>, vector<1x1x6x28xf32>
    %37 = vector.shape_cast %36 : vector<1x1x6x28xf32> to vector<6x28xf32>
    %cst_44 = arith.constant dense<0.000000e+00> : vector<6x240xf32>
    %38 = tpu.matmul %37, %23, %cst_44 {dimension_numbers = #tpu.dot_dimension_numbers<[1], [0], [0], [1], [0, 0, 1, 1], [], []>} : vector<6x28xf32>, vector<28x240xf32>, vector<6x240xf32> -> vector<6x240xf32>
    %39 = arith.addf %21, %38 : vector<6x240xf32>
    %c2_45 = arith.constant 2 : index
    %c0_46 = arith.constant 0 : index
    %c0_47 = arith.constant 0 : index
    %40 = vector.load %arg2[%c2_45, %c0_46, %c0_47] : memref<5x28x240xf32, #tpu.memory_space<vmem>>, vector<1x28x240xf32>
    %41 = vector.shape_cast %40 : vector<1x28x240xf32> to vector<28x240xf32>
    %c0_48 = arith.constant 0 : index
    %c2_49 = arith.constant 2 : index
    %c0_50 = arith.constant 0 : index
    %c0_51 = arith.constant 0 : index
    %42 = vector.load %arg1[%c0_48, %c2_49, %c0_50, %c0_51] : memref<4x4x7x28xf32, #tpu.memory_space<vmem>>, vector<1x1x6x28xf32>
    %43 = vector.shape_cast %42 : vector<1x1x6x28xf32> to vector<6x28xf32>
    %cst_52 = arith.constant dense<0.000000e+00> : vector<6x240xf32>
    %44 = tpu.matmul %43, %41, %cst_52 {dimension_numbers = #tpu.dot_dimension_numbers<[1], [0], [0], [1], [0, 0, 1, 1], [], []>} : vector<6x28xf32>, vector<28x240xf32>, vector<6x240xf32> -> vector<6x240xf32>
    %45 = arith.addf %27, %44 : vector<6x240xf32>
    %c0_53 = arith.constant 0 : index
    %c3_54 = arith.constant 3 : index
    %c0_55 = arith.constant 0 : index
    %c0_56 = arith.constant 0 : index
    %46 = vector.load %arg1[%c0_53, %c3_54, %c0_55, %c0_56] : memref<4x4x7x28xf32, #tpu.memory_space<vmem>>, vector<1x1x6x28xf32>
    %47 = vector.shape_cast %46 : vector<1x1x6x28xf32> to vector<6x28xf32>
    %cst_57 = arith.constant dense<0.000000e+00> : vector<6x240xf32>
    %48 = tpu.matmul %47, %41, %cst_57 {dimension_numbers = #tpu.dot_dimension_numbers<[1], [0], [0], [1], [0, 0, 1, 1], [], []>} : vector<6x28xf32>, vector<28x240xf32>, vector<6x240xf32> -> vector<6x240xf32>
    %49 = arith.addf %31, %48 : vector<6x240xf32>
    %c0_58 = arith.constant 0 : index
    %c0_59 = arith.constant 0 : index
    %c1_60 = arith.constant 1 : index
    %c0_61 = arith.constant 0 : index
    %50 = vector.load %arg1[%c0_58, %c0_59, %c1_60, %c0_61] : memref<4x4x7x28xf32, #tpu.memory_space<vmem>>, vector<1x1x6x28xf32>
    %51 = vector.shape_cast %50 : vector<1x1x6x28xf32> to vector<6x28xf32>
    %cst_62 = arith.constant dense<0.000000e+00> : vector<6x240xf32>
    %52 = tpu.matmul %51, %41, %cst_62 {dimension_numbers = #tpu.dot_dimension_numbers<[1], [0], [0], [1], [0, 0, 1, 1], [], []>} : vector<6x28xf32>, vector<28x240xf32>, vector<6x240xf32> -> vector<6x240xf32>
    %53 = arith.addf %35, %52 : vector<6x240xf32>
    %c0_63 = arith.constant 0 : index
    %c1_64 = arith.constant 1 : index
    %c1_65 = arith.constant 1 : index
    %c0_66 = arith.constant 0 : index
    %54 = vector.load %arg1[%c0_63, %c1_64, %c1_65, %c0_66] : memref<4x4x7x28xf32, #tpu.memory_space<vmem>>, vector<1x1x6x28xf32>
    %55 = vector.shape_cast %54 : vector<1x1x6x28xf32> to vector<6x28xf32>
    %cst_67 = arith.constant dense<0.000000e+00> : vector<6x240xf32>
    %56 = tpu.matmul %55, %41, %cst_67 {dimension_numbers = #tpu.dot_dimension_numbers<[1], [0], [0], [1], [0, 0, 1, 1], [], []>} : vector<6x28xf32>, vector<28x240xf32>, vector<6x240xf32> -> vector<6x240xf32>
    %57 = arith.addf %39, %56 : vector<6x240xf32>
    %c3_68 = arith.constant 3 : index
    %c0_69 = arith.constant 0 : index
    %c0_70 = arith.constant 0 : index
    %58 = vector.load %arg2[%c3_68, %c0_69, %c0_70] : memref<5x28x240xf32, #tpu.memory_space<vmem>>, vector<1x28x240xf32>
    %59 = vector.shape_cast %58 : vector<1x28x240xf32> to vector<28x240xf32>
    %c0_71 = arith.constant 0 : index
    %c3_72 = arith.constant 3 : index
    %c0_73 = arith.constant 0 : index
    %c0_74 = arith.constant 0 : index
    %60 = vector.load %arg1[%c0_71, %c3_72, %c0_73, %c0_74] : memref<4x4x7x28xf32, #tpu.memory_space<vmem>>, vector<1x1x6x28xf32>
    %61 = vector.shape_cast %60 : vector<1x1x6x28xf32> to vector<6x28xf32>
    %cst_75 = arith.constant dense<0.000000e+00> : vector<6x240xf32>
    %62 = tpu.matmul %61, %59, %cst_75 {dimension_numbers = #tpu.dot_dimension_numbers<[1], [0], [0], [1], [0, 0, 1, 1], [], []>} : vector<6x28xf32>, vector<28x240xf32>, vector<6x240xf32> -> vector<6x240xf32>
    %63 = arith.addf %45, %62 : vector<6x240xf32>
    %c0_76 = arith.constant 0 : index
    %c0_77 = arith.constant 0 : index
    %c1_78 = arith.constant 1 : index
    %c0_79 = arith.constant 0 : index
    %64 = vector.load %arg1[%c0_76, %c0_77, %c1_78, %c0_79] : memref<4x4x7x28xf32, #tpu.memory_space<vmem>>, vector<1x1x6x28xf32>
    %65 = vector.shape_cast %64 : vector<1x1x6x28xf32> to vector<6x28xf32>
    %cst_80 = arith.constant dense<0.000000e+00> : vector<6x240xf32>
    %66 = tpu.matmul %65, %59, %cst_80 {dimension_numbers = #tpu.dot_dimension_numbers<[1], [0], [0], [1], [0, 0, 1, 1], [], []>} : vector<6x28xf32>, vector<28x240xf32>, vector<6x240xf32> -> vector<6x240xf32>
    %67 = arith.addf %49, %66 : vector<6x240xf32>
    %c0_81 = arith.constant 0 : index
    %c1_82 = arith.constant 1 : index
    %c1_83 = arith.constant 1 : index
    %c0_84 = arith.constant 0 : index
    %68 = vector.load %arg1[%c0_81, %c1_82, %c1_83, %c0_84] : memref<4x4x7x28xf32, #tpu.memory_space<vmem>>, vector<1x1x6x28xf32>
    %69 = vector.shape_cast %68 : vector<1x1x6x28xf32> to vector<6x28xf32>
    %cst_85 = arith.constant dense<0.000000e+00> : vector<6x240xf32>
    %70 = tpu.matmul %69, %59, %cst_85 {dimension_numbers = #tpu.dot_dimension_numbers<[1], [0], [0], [1], [0, 0, 1, 1], [], []>} : vector<6x28xf32>, vector<28x240xf32>, vector<6x240xf32> -> vector<6x240xf32>
    %71 = arith.addf %53, %70 : vector<6x240xf32>
    %c0_86 = arith.constant 0 : index
    %c2_87 = arith.constant 2 : index
    %c1_88 = arith.constant 1 : index
    %c0_89 = arith.constant 0 : index
    %72 = vector.load %arg1[%c0_86, %c2_87, %c1_88, %c0_89] : memref<4x4x7x28xf32, #tpu.memory_space<vmem>>, vector<1x1x6x28xf32>
    %73 = vector.shape_cast %72 : vector<1x1x6x28xf32> to vector<6x28xf32>
    %cst_90 = arith.constant dense<0.000000e+00> : vector<6x240xf32>
    %74 = tpu.matmul %73, %59, %cst_90 {dimension_numbers = #tpu.dot_dimension_numbers<[1], [0], [0], [1], [0, 0, 1, 1], [], []>} : vector<6x28xf32>, vector<28x240xf32>, vector<6x240xf32> -> vector<6x240xf32>
    %75 = arith.addf %57, %74 : vector<6x240xf32>
    %c4 = arith.constant 4 : index
    %c0_91 = arith.constant 0 : index
    %c0_92 = arith.constant 0 : index
    %76 = vector.load %arg2[%c4, %c0_91, %c0_92] : memref<5x28x240xf32, #tpu.memory_space<vmem>>, vector<1x28x240xf32>
    %77 = vector.shape_cast %76 : vector<1x28x240xf32> to vector<28x240xf32>
    %c0_93 = arith.constant 0 : index
    %c0_94 = arith.constant 0 : index
    %c1_95 = arith.constant 1 : index
    %c0_96 = arith.constant 0 : index
    %78 = vector.load %arg1[%c0_93, %c0_94, %c1_95, %c0_96] : memref<4x4x7x28xf32, #tpu.memory_space<vmem>>, vector<1x1x6x28xf32>
    %79 = vector.shape_cast %78 : vector<1x1x6x28xf32> to vector<6x28xf32>
    %cst_97 = arith.constant dense<0.000000e+00> : vector<6x240xf32>
    %80 = tpu.matmul %79, %77, %cst_97 {dimension_numbers = #tpu.dot_dimension_numbers<[1], [0], [0], [1], [0, 0, 1, 1], [], []>} : vector<6x28xf32>, vector<28x240xf32>, vector<6x240xf32> -> vector<6x240xf32>
    %81 = arith.addf %63, %80 : vector<6x240xf32>
    %c0_98 = arith.constant 0 : index
    %c1_99 = arith.constant 1 : index
    %c1_100 = arith.constant 1 : index
    %c0_101 = arith.constant 0 : index
    %82 = vector.load %arg1[%c0_98, %c1_99, %c1_100, %c0_101] : memref<4x4x7x28xf32, #tpu.memory_space<vmem>>, vector<1x1x6x28xf32>
    %83 = vector.shape_cast %82 : vector<1x1x6x28xf32> to vector<6x28xf32>
    %cst_102 = arith.constant dense<0.000000e+00> : vector<6x240xf32>
    %84 = tpu.matmul %83, %77, %cst_102 {dimension_numbers = #tpu.dot_dimension_numbers<[1], [0], [0], [1], [0, 0, 1, 1], [], []>} : vector<6x28xf32>, vector<28x240xf32>, vector<6x240xf32> -> vector<6x240xf32>
    %85 = arith.addf %67, %84 : vector<6x240xf32>
    %c0_103 = arith.constant 0 : index
    %c2_104 = arith.constant 2 : index
    %c1_105 = arith.constant 1 : index
    %c0_106 = arith.constant 0 : index
    %86 = vector.load %arg1[%c0_103, %c2_104, %c1_105, %c0_106] : memref<4x4x7x28xf32, #tpu.memory_space<vmem>>, vector<1x1x6x28xf32>
    %87 = vector.shape_cast %86 : vector<1x1x6x28xf32> to vector<6x28xf32>
    %cst_107 = arith.constant dense<0.000000e+00> : vector<6x240xf32>
    %88 = tpu.matmul %87, %77, %cst_107 {dimension_numbers = #tpu.dot_dimension_numbers<[1], [0], [0], [1], [0, 0, 1, 1], [], []>} : vector<6x28xf32>, vector<28x240xf32>, vector<6x240xf32> -> vector<6x240xf32>
    %89 = arith.addf %71, %88 : vector<6x240xf32>
    %c0_108 = arith.constant 0 : index
    %c3_109 = arith.constant 3 : index
    %c1_110 = arith.constant 1 : index
    %c0_111 = arith.constant 0 : index
    %90 = vector.load %arg1[%c0_108, %c3_109, %c1_110, %c0_111] : memref<4x4x7x28xf32, #tpu.memory_space<vmem>>, vector<1x1x6x28xf32>
    %91 = vector.shape_cast %90 : vector<1x1x6x28xf32> to vector<6x28xf32>
    %cst_112 = arith.constant dense<0.000000e+00> : vector<6x240xf32>
    %92 = tpu.matmul %91, %77, %cst_112 {dimension_numbers = #tpu.dot_dimension_numbers<[1], [0], [0], [1], [0, 0, 1, 1], [], []>} : vector<6x28xf32>, vector<28x240xf32>, vector<6x240xf32> -> vector<6x240xf32>
    %93 = arith.addf %75, %92 : vector<6x240xf32>
    %94 = arith.maximumf %81, %85 : vector<6x240xf32>
    %95 = arith.maximumf %89, %93 : vector<6x240xf32>
    %96 = vector.extract_strided_slice %94 {offsets = [0, 0], sizes = [6, 120], strides = [1, 1]} : vector<6x240xf32> to vector<6x120xf32>
    %97 = vector.extract_strided_slice %94 {offsets = [0, 120], sizes = [6, 120], strides = [1, 1]} : vector<6x240xf32> to vector<6x120xf32>
    %98 = arith.maximumf %96, %97 : vector<6x120xf32>
    %c0_113 = arith.constant 0 : index
    %c0_114 = arith.constant 0 : index
    %99 = vector.load %arg3[%c0_113, %c0_114] : memref<1x120xf32, #tpu.memory_space<vmem>>, vector<1x120xf32>
    %100 = vector.broadcast %99 : vector<1x120xf32> to vector<6x120xf32>
    %101 = arith.addf %98, %100 : vector<6x120xf32>
    %cst_115 = arith.constant 0.000000e+00 : f32
    %102 = vector.broadcast %cst_115 : f32 to vector<6x120xf32>
    %103 = arith.maximumf %101, %102 : vector<6x120xf32>
    %104 = vector.extract_strided_slice %95 {offsets = [0, 0], sizes = [6, 120], strides = [1, 1]} : vector<6x240xf32> to vector<6x120xf32>
    %105 = vector.extract_strided_slice %95 {offsets = [0, 120], sizes = [6, 120], strides = [1, 1]} : vector<6x240xf32> to vector<6x120xf32>
    %106 = arith.maximumf %104, %105 : vector<6x120xf32>
    %c0_116 = arith.constant 0 : index
    %c0_117 = arith.constant 0 : index
    %107 = vector.load %arg3[%c0_116, %c0_117] : memref<1x120xf32, #tpu.memory_space<vmem>>, vector<1x120xf32>
    %108 = vector.broadcast %107 : vector<1x120xf32> to vector<6x120xf32>
    %109 = arith.addf %106, %108 : vector<6x120xf32>
    %cst_118 = arith.constant 0.000000e+00 : f32
    %110 = vector.broadcast %cst_118 : f32 to vector<6x120xf32>
    %111 = arith.maximumf %109, %110 : vector<6x120xf32>
    %cst_119 = arith.constant 0.000000e+00 : f32
    %112 = vector.broadcast %cst_119 : f32 to vector<4x160xf32>
    %cst_120 = arith.constant 0.000000e+00 : f32
    %113 = vector.broadcast %cst_120 : f32 to vector<4x160xf32>
    %c0_121 = arith.constant 0 : index
    %c0_122 = arith.constant 0 : index
    %c0_123 = arith.constant 0 : index
    %114 = vector.load %arg4[%c0_121, %c0_122, %c0_123] : memref<5x120x160xf32, #tpu.memory_space<vmem>>, vector<1x120x160xf32>
    %115 = vector.shape_cast %114 : vector<1x120x160xf32> to vector<120x160xf32>
    %116 = vector.extract_strided_slice %103 {offsets = [0, 0], sizes = [4, 120], strides = [1, 1]} : vector<6x120xf32> to vector<4x120xf32>
    %cst_124 = arith.constant dense<0.000000e+00> : vector<4x160xf32>
    %117 = tpu.matmul %116, %115, %cst_124 {dimension_numbers = #tpu.dot_dimension_numbers<[1], [0], [0], [1], [0, 0, 1, 1], [], []>} : vector<4x120xf32>, vector<120x160xf32>, vector<4x160xf32> -> vector<4x160xf32>
    %118 = arith.addf %112, %117 : vector<4x160xf32>
    %119 = vector.extract_strided_slice %111 {offsets = [0, 0], sizes = [4, 120], strides = [1, 1]} : vector<6x120xf32> to vector<4x120xf32>
    %cst_125 = arith.constant dense<0.000000e+00> : vector<4x160xf32>
    %120 = tpu.matmul %119, %115, %cst_125 {dimension_numbers = #tpu.dot_dimension_numbers<[1], [0], [0], [1], [0, 0, 1, 1], [], []>} : vector<4x120xf32>, vector<120x160xf32>, vector<4x160xf32> -> vector<4x160xf32>
    %121 = arith.addf %113, %120 : vector<4x160xf32>
    %c1_126 = arith.constant 1 : index
    %c0_127 = arith.constant 0 : index
    %c0_128 = arith.constant 0 : index
    %122 = vector.load %arg4[%c1_126, %c0_127, %c0_128] : memref<5x120x160xf32, #tpu.memory_space<vmem>>, vector<1x120x160xf32>
    %123 = vector.shape_cast %122 : vector<1x120x160xf32> to vector<120x160xf32>
    %124 = vector.extract_strided_slice %111 {offsets = [0, 0], sizes = [4, 120], strides = [1, 1]} : vector<6x120xf32> to vector<4x120xf32>
    %cst_129 = arith.constant dense<0.000000e+00> : vector<4x160xf32>
    %125 = tpu.matmul %124, %123, %cst_129 {dimension_numbers = #tpu.dot_dimension_numbers<[1], [0], [0], [1], [0, 0, 1, 1], [], []>} : vector<4x120xf32>, vector<120x160xf32>, vector<4x160xf32> -> vector<4x160xf32>
    %126 = arith.addf %118, %125 : vector<4x160xf32>
    %127 = vector.extract_strided_slice %103 {offsets = [1, 0], sizes = [4, 120], strides = [1, 1]} : vector<6x120xf32> to vector<4x120xf32>
    %cst_130 = arith.constant dense<0.000000e+00> : vector<4x160xf32>
    %128 = tpu.matmul %127, %123, %cst_130 {dimension_numbers = #tpu.dot_dimension_numbers<[1], [0], [0], [1], [0, 0, 1, 1], [], []>} : vector<4x120xf32>, vector<120x160xf32>, vector<4x160xf32> -> vector<4x160xf32>
    %129 = arith.addf %121, %128 : vector<4x160xf32>
    %c2_131 = arith.constant 2 : index
    %c0_132 = arith.constant 0 : index
    %c0_133 = arith.constant 0 : index
    %130 = vector.load %arg4[%c2_131, %c0_132, %c0_133] : memref<5x120x160xf32, #tpu.memory_space<vmem>>, vector<1x120x160xf32>
    %131 = vector.shape_cast %130 : vector<1x120x160xf32> to vector<120x160xf32>
    %132 = vector.extract_strided_slice %103 {offsets = [1, 0], sizes = [4, 120], strides = [1, 1]} : vector<6x120xf32> to vector<4x120xf32>
    %cst_134 = arith.constant dense<0.000000e+00> : vector<4x160xf32>
    %133 = tpu.matmul %132, %131, %cst_134 {dimension_numbers = #tpu.dot_dimension_numbers<[1], [0], [0], [1], [0, 0, 1, 1], [], []>} : vector<4x120xf32>, vector<120x160xf32>, vector<4x160xf32> -> vector<4x160xf32>
    %134 = arith.addf %126, %133 : vector<4x160xf32>
    %135 = vector.extract_strided_slice %111 {offsets = [1, 0], sizes = [4, 120], strides = [1, 1]} : vector<6x120xf32> to vector<4x120xf32>
    %cst_135 = arith.constant dense<0.000000e+00> : vector<4x160xf32>
    %136 = tpu.matmul %135, %131, %cst_135 {dimension_numbers = #tpu.dot_dimension_numbers<[1], [0], [0], [1], [0, 0, 1, 1], [], []>} : vector<4x120xf32>, vector<120x160xf32>, vector<4x160xf32> -> vector<4x160xf32>
    %137 = arith.addf %129, %136 : vector<4x160xf32>
    %c3_136 = arith.constant 3 : index
    %c0_137 = arith.constant 0 : index
    %c0_138 = arith.constant 0 : index
    %138 = vector.load %arg4[%c3_136, %c0_137, %c0_138] : memref<5x120x160xf32, #tpu.memory_space<vmem>>, vector<1x120x160xf32>
    %139 = vector.shape_cast %138 : vector<1x120x160xf32> to vector<120x160xf32>
    %140 = vector.extract_strided_slice %111 {offsets = [1, 0], sizes = [4, 120], strides = [1, 1]} : vector<6x120xf32> to vector<4x120xf32>
    %cst_139 = arith.constant dense<0.000000e+00> : vector<4x160xf32>
    %141 = tpu.matmul %140, %139, %cst_139 {dimension_numbers = #tpu.dot_dimension_numbers<[1], [0], [0], [1], [0, 0, 1, 1], [], []>} : vector<4x120xf32>, vector<120x160xf32>, vector<4x160xf32> -> vector<4x160xf32>
    %142 = arith.addf %134, %141 : vector<4x160xf32>
    %143 = vector.extract_strided_slice %103 {offsets = [2, 0], sizes = [4, 120], strides = [1, 1]} : vector<6x120xf32> to vector<4x120xf32>
    %cst_140 = arith.constant dense<0.000000e+00> : vector<4x160xf32>
    %144 = tpu.matmul %143, %139, %cst_140 {dimension_numbers = #tpu.dot_dimension_numbers<[1], [0], [0], [1], [0, 0, 1, 1], [], []>} : vector<4x120xf32>, vector<120x160xf32>, vector<4x160xf32> -> vector<4x160xf32>
    %145 = arith.addf %137, %144 : vector<4x160xf32>
    %c4_141 = arith.constant 4 : index
    %c0_142 = arith.constant 0 : index
    %c0_143 = arith.constant 0 : index
    %146 = vector.load %arg4[%c4_141, %c0_142, %c0_143] : memref<5x120x160xf32, #tpu.memory_space<vmem>>, vector<1x120x160xf32>
    %147 = vector.shape_cast %146 : vector<1x120x160xf32> to vector<120x160xf32>
    %148 = vector.extract_strided_slice %103 {offsets = [2, 0], sizes = [4, 120], strides = [1, 1]} : vector<6x120xf32> to vector<4x120xf32>
    %cst_144 = arith.constant dense<0.000000e+00> : vector<4x160xf32>
    %149 = tpu.matmul %148, %147, %cst_144 {dimension_numbers = #tpu.dot_dimension_numbers<[1], [0], [0], [1], [0, 0, 1, 1], [], []>} : vector<4x120xf32>, vector<120x160xf32>, vector<4x160xf32> -> vector<4x160xf32>
    %150 = arith.addf %142, %149 : vector<4x160xf32>
    %151 = vector.extract_strided_slice %111 {offsets = [2, 0], sizes = [4, 120], strides = [1, 1]} : vector<6x120xf32> to vector<4x120xf32>
    %cst_145 = arith.constant dense<0.000000e+00> : vector<4x160xf32>
    %152 = tpu.matmul %151, %147, %cst_145 {dimension_numbers = #tpu.dot_dimension_numbers<[1], [0], [0], [1], [0, 0, 1, 1], [], []>} : vector<4x120xf32>, vector<120x160xf32>, vector<4x160xf32> -> vector<4x160xf32>
    %153 = arith.addf %145, %152 : vector<4x160xf32>
    %154 = arith.maximumf %150, %153 : vector<4x160xf32>
    %155 = vector.extract_strided_slice %154 {offsets = [0, 0], sizes = [4, 80], strides = [1, 1]} : vector<4x160xf32> to vector<4x80xf32>
    %156 = vector.extract_strided_slice %154 {offsets = [0, 80], sizes = [4, 80], strides = [1, 1]} : vector<4x160xf32> to vector<4x80xf32>
    %157 = arith.maximumf %155, %156 : vector<4x80xf32>
    %c0_146 = arith.constant 0 : index
    %c0_147 = arith.constant 0 : index
    %158 = vector.load %arg5[%c0_146, %c0_147] : memref<1x80xf32, #tpu.memory_space<vmem>>, vector<1x80xf32>
    %159 = vector.broadcast %158 : vector<1x80xf32> to vector<4x80xf32>
    %160 = arith.addf %157, %159 : vector<4x80xf32>
    %cst_148 = arith.constant 0.000000e+00 : f32
    %161 = vector.broadcast %cst_148 : f32 to vector<4x80xf32>
    %162 = arith.maximumf %160, %161 : vector<4x80xf32>
    %cst_149 = arith.constant 0.000000e+00 : f32
    %163 = vector.broadcast %cst_149 : f32 to vector<1x50xf32>
    %164 = vector.extract_strided_slice %162 {offsets = [0, 0], sizes = [1, 80], strides = [1, 1]} : vector<4x80xf32> to vector<1x80xf32>
    %c0_150 = arith.constant 0 : index
    %c0_151 = arith.constant 0 : index
    %c0_152 = arith.constant 0 : index
    %165 = vector.load %arg6[%c0_150, %c0_151, %c0_152] : memref<4x80x50xf32, #tpu.memory_space<vmem>>, vector<1x80x50xf32>
    %166 = vector.shape_cast %165 : vector<1x80x50xf32> to vector<80x50xf32>
    %cst_153 = arith.constant dense<0.000000e+00> : vector<1x50xf32>
    %167 = tpu.matmul %164, %166, %cst_153 {dimension_numbers = #tpu.dot_dimension_numbers<[1], [0], [0], [1], [0, 0, 1, 1], [], []>} : vector<1x80xf32>, vector<80x50xf32>, vector<1x50xf32> -> vector<1x50xf32>
    %168 = arith.addf %163, %167 : vector<1x50xf32>
    %169 = vector.extract_strided_slice %162 {offsets = [1, 0], sizes = [1, 80], strides = [1, 1]} : vector<4x80xf32> to vector<1x80xf32>
    %c1_154 = arith.constant 1 : index
    %c0_155 = arith.constant 0 : index
    %c0_156 = arith.constant 0 : index
    %170 = vector.load %arg6[%c1_154, %c0_155, %c0_156] : memref<4x80x50xf32, #tpu.memory_space<vmem>>, vector<1x80x50xf32>
    %171 = vector.shape_cast %170 : vector<1x80x50xf32> to vector<80x50xf32>
    %cst_157 = arith.constant dense<0.000000e+00> : vector<1x50xf32>
    %172 = tpu.matmul %169, %171, %cst_157 {dimension_numbers = #tpu.dot_dimension_numbers<[1], [0], [0], [1], [0, 0, 1, 1], [], []>} : vector<1x80xf32>, vector<80x50xf32>, vector<1x50xf32> -> vector<1x50xf32>
    %173 = arith.addf %168, %172 : vector<1x50xf32>
    %174 = vector.extract_strided_slice %162 {offsets = [2, 0], sizes = [1, 80], strides = [1, 1]} : vector<4x80xf32> to vector<1x80xf32>
    %c2_158 = arith.constant 2 : index
    %c0_159 = arith.constant 0 : index
    %c0_160 = arith.constant 0 : index
    %175 = vector.load %arg6[%c2_158, %c0_159, %c0_160] : memref<4x80x50xf32, #tpu.memory_space<vmem>>, vector<1x80x50xf32>
    %176 = vector.shape_cast %175 : vector<1x80x50xf32> to vector<80x50xf32>
    %cst_161 = arith.constant dense<0.000000e+00> : vector<1x50xf32>
    %177 = tpu.matmul %174, %176, %cst_161 {dimension_numbers = #tpu.dot_dimension_numbers<[1], [0], [0], [1], [0, 0, 1, 1], [], []>} : vector<1x80xf32>, vector<80x50xf32>, vector<1x50xf32> -> vector<1x50xf32>
    %178 = arith.addf %173, %177 : vector<1x50xf32>
    %179 = vector.extract_strided_slice %162 {offsets = [3, 0], sizes = [1, 80], strides = [1, 1]} : vector<4x80xf32> to vector<1x80xf32>
    %c3_162 = arith.constant 3 : index
    %c0_163 = arith.constant 0 : index
    %c0_164 = arith.constant 0 : index
    %180 = vector.load %arg6[%c3_162, %c0_163, %c0_164] : memref<4x80x50xf32, #tpu.memory_space<vmem>>, vector<1x80x50xf32>
    %181 = vector.shape_cast %180 : vector<1x80x50xf32> to vector<80x50xf32>
    %cst_165 = arith.constant dense<0.000000e+00> : vector<1x50xf32>
    %182 = tpu.matmul %179, %181, %cst_165 {dimension_numbers = #tpu.dot_dimension_numbers<[1], [0], [0], [1], [0, 0, 1, 1], [], []>} : vector<1x80xf32>, vector<80x50xf32>, vector<1x50xf32> -> vector<1x50xf32>
    %183 = arith.addf %178, %182 : vector<1x50xf32>
    %c0_166 = arith.constant 0 : index
    %c0_167 = arith.constant 0 : index
    %184 = vector.load %arg7[%c0_166, %c0_167] : memref<1x50xf32, #tpu.memory_space<vmem>>, vector<1x50xf32>
    %185 = arith.addf %183, %184 : vector<1x50xf32>
    %cst_168 = arith.constant 0.000000e+00 : f32
    %186 = vector.broadcast %cst_168 : f32 to vector<1x50xf32>
    %187 = arith.maximumf %185, %186 : vector<1x50xf32>
    %c0_169 = arith.constant 0 : index
    %c0_170 = arith.constant 0 : index
    %188 = vector.load %arg11[%c0_169, %c0_170] : memref<4x50xf32, #tpu.memory_space<vmem>>, vector<1x50xf32>
    tpu.vector_store %arg11[%c0_169, %c0_170], %187 {strides = array<i32>} : memref<4x50xf32, #tpu.memory_space<vmem>>, vector<1x50xf32>,
    %cst_171 = arith.constant 0.000000e+00 : f32
    %189 = vector.broadcast %cst_171 : f32 to vector<6x240xf32>
    %cst_172 = arith.constant 0.000000e+00 : f32
    %190 = vector.broadcast %cst_172 : f32 to vector<6x240xf32>
    %cst_173 = arith.constant 0.000000e+00 : f32
    %191 = vector.broadcast %cst_173 : f32 to vector<6x240xf32>
    %cst_174 = arith.constant 0.000000e+00 : f32
    %192 = vector.broadcast %cst_174 : f32 to vector<6x240xf32>
    %c0_175 = arith.constant 0 : index
    %c0_176 = arith.constant 0 : index
    %c0_177 = arith.constant 0 : index
    %193 = vector.load %arg2[%c0_175, %c0_176, %c0_177] : memref<5x28x240xf32, #tpu.memory_space<vmem>>, vector<1x28x240xf32>
    %194 = vector.shape_cast %193 : vector<1x28x240xf32> to vector<28x240xf32>
    %c1_178 = arith.constant 1 : index
    %c0_179 = arith.constant 0 : index
    %c0_180 = arith.constant 0 : index
    %c0_181 = arith.constant 0 : index
    %195 = vector.load %arg1[%c1_178, %c0_179, %c0_180, %c0_181] : memref<4x4x7x28xf32, #tpu.memory_space<vmem>>, vector<1x1x6x28xf32>
    %196 = vector.shape_cast %195 : vector<1x1x6x28xf32> to vector<6x28xf32>
    %cst_182 = arith.constant dense<0.000000e+00> : vector<6x240xf32>
    %197 = tpu.matmul %196, %194, %cst_182 {dimension_numbers = #tpu.dot_dimension_numbers<[1], [0], [0], [1], [0, 0, 1, 1], [], []>} : vector<6x28xf32>, vector<28x240xf32>, vector<6x240xf32> -> vector<6x240xf32>
    %198 = arith.addf %189, %197 : vector<6x240xf32>
    %c1_183 = arith.constant 1 : index
    %c1_184 = arith.constant 1 : index
    %c0_185 = arith.constant 0 : index
    %c0_186 = arith.constant 0 : index
    %199 = vector.load %arg1[%c1_183, %c1_184, %c0_185, %c0_186] : memref<4x4x7x28xf32, #tpu.memory_space<vmem>>, vector<1x1x6x28xf32>
    %200 = vector.shape_cast %199 : vector<1x1x6x28xf32> to vector<6x28xf32>
    %cst_187 = arith.constant dense<0.000000e+00> : vector<6x240xf32>
    %201 = tpu.matmul %200, %194, %cst_187 {dimension_numbers = #tpu.dot_dimension_numbers<[1], [0], [0], [1], [0, 0, 1, 1], [], []>} : vector<6x28xf32>, vector<28x240xf32>, vector<6x240xf32> -> vector<6x240xf32>
    %202 = arith.addf %190, %201 : vector<6x240xf32>
    %c1_188 = arith.constant 1 : index
    %c2_189 = arith.constant 2 : index
    %c0_190 = arith.constant 0 : index
    %c0_191 = arith.constant 0 : index
    %203 = vector.load %arg1[%c1_188, %c2_189, %c0_190, %c0_191] : memref<4x4x7x28xf32, #tpu.memory_space<vmem>>, vector<1x1x6x28xf32>
    %204 = vector.shape_cast %203 : vector<1x1x6x28xf32> to vector<6x28xf32>
    %cst_192 = arith.constant dense<0.000000e+00> : vector<6x240xf32>
    %205 = tpu.matmul %204, %194, %cst_192 {dimension_numbers = #tpu.dot_dimension_numbers<[1], [0], [0], [1], [0, 0, 1, 1], [], []>} : vector<6x28xf32>, vector<28x240xf32>, vector<6x240xf32> -> vector<6x240xf32>
    %206 = arith.addf %191, %205 : vector<6x240xf32>
    %c1_193 = arith.constant 1 : index
    %c3_194 = arith.constant 3 : index
    %c0_195 = arith.constant 0 : index
    %c0_196 = arith.constant 0 : index
    %207 = vector.load %arg1[%c1_193, %c3_194, %c0_195, %c0_196] : memref<4x4x7x28xf32, #tpu.memory_space<vmem>>, vector<1x1x6x28xf32>
    %208 = vector.shape_cast %207 : vector<1x1x6x28xf32> to vector<6x28xf32>
    %cst_197 = arith.constant dense<0.000000e+00> : vector<6x240xf32>
    %209 = tpu.matmul %208, %194, %cst_197 {dimension_numbers = #tpu.dot_dimension_numbers<[1], [0], [0], [1], [0, 0, 1, 1], [], []>} : vector<6x28xf32>, vector<28x240xf32>, vector<6x240xf32> -> vector<6x240xf32>
    %210 = arith.addf %192, %209 : vector<6x240xf32>
    %c1_198 = arith.constant 1 : index
    %c0_199 = arith.constant 0 : index
    %c0_200 = arith.constant 0 : index
    %211 = vector.load %arg2[%c1_198, %c0_199, %c0_200] : memref<5x28x240xf32, #tpu.memory_space<vmem>>, vector<1x28x240xf32>
    %212 = vector.shape_cast %211 : vector<1x28x240xf32> to vector<28x240xf32>
    %c1_201 = arith.constant 1 : index
    %c1_202 = arith.constant 1 : index
    %c0_203 = arith.constant 0 : index
    %c0_204 = arith.constant 0 : index
    %213 = vector.load %arg1[%c1_201, %c1_202, %c0_203, %c0_204] : memref<4x4x7x28xf32, #tpu.memory_space<vmem>>, vector<1x1x6x28xf32>
    %214 = vector.shape_cast %213 : vector<1x1x6x28xf32> to vector<6x28xf32>
    %cst_205 = arith.constant dense<0.000000e+00> : vector<6x240xf32>
    %215 = tpu.matmul %214, %212, %cst_205 {dimension_numbers = #tpu.dot_dimension_numbers<[1], [0], [0], [1], [0, 0, 1, 1], [], []>} : vector<6x28xf32>, vector<28x240xf32>, vector<6x240xf32> -> vector<6x240xf32>
    %216 = arith.addf %198, %215 : vector<6x240xf32>
    %c1_206 = arith.constant 1 : index
    %c2_207 = arith.constant 2 : index
    %c0_208 = arith.constant 0 : index
    %c0_209 = arith.constant 0 : index
    %217 = vector.load %arg1[%c1_206, %c2_207, %c0_208, %c0_209] : memref<4x4x7x28xf32, #tpu.memory_space<vmem>>, vector<1x1x6x28xf32>
    %218 = vector.shape_cast %217 : vector<1x1x6x28xf32> to vector<6x28xf32>
    %cst_210 = arith.constant dense<0.000000e+00> : vector<6x240xf32>
    %219 = tpu.matmul %218, %212, %cst_210 {dimension_numbers = #tpu.dot_dimension_numbers<[1], [0], [0], [1], [0, 0, 1, 1], [], []>} : vector<6x28xf32>, vector<28x240xf32>, vector<6x240xf32> -> vector<6x240xf32>
    %220 = arith.addf %202, %219 : vector<6x240xf32>
    %c1_211 = arith.constant 1 : index
    %c3_212 = arith.constant 3 : index
    %c0_213 = arith.constant 0 : index
    %c0_214 = arith.constant 0 : index
    %221 = vector.load %arg1[%c1_211, %c3_212, %c0_213, %c0_214] : memref<4x4x7x28xf32, #tpu.memory_space<vmem>>, vector<1x1x6x28xf32>
    %222 = vector.shape_cast %221 : vector<1x1x6x28xf32> to vector<6x28xf32>
    %cst_215 = arith.constant dense<0.000000e+00> : vector<6x240xf32>
    %223 = tpu.matmul %222, %212, %cst_215 {dimension_numbers = #tpu.dot_dimension_numbers<[1], [0], [0], [1], [0, 0, 1, 1], [], []>} : vector<6x28xf32>, vector<28x240xf32>, vector<6x240xf32> -> vector<6x240xf32>
    %224 = arith.addf %206, %223 : vector<6x240xf32>
    %c1_216 = arith.constant 1 : index
    %c0_217 = arith.constant 0 : index
    %c1_218 = arith.constant 1 : index
    %c0_219 = arith.constant 0 : index
    %225 = vector.load %arg1[%c1_216, %c0_217, %c1_218, %c0_219] : memref<4x4x7x28xf32, #tpu.memory_space<vmem>>, vector<1x1x6x28xf32>
    %226 = vector.shape_cast %225 : vector<1x1x6x28xf32> to vector<6x28xf32>
    %cst_220 = arith.constant dense<0.000000e+00> : vector<6x240xf32>
    %227 = tpu.matmul %226, %212, %cst_220 {dimension_numbers = #tpu.dot_dimension_numbers<[1], [0], [0], [1], [0, 0, 1, 1], [], []>} : vector<6x28xf32>, vector<28x240xf32>, vector<6x240xf32> -> vector<6x240xf32>
    %228 = arith.addf %210, %227 : vector<6x240xf32>
    %c2_221 = arith.constant 2 : index
    %c0_222 = arith.constant 0 : index
    %c0_223 = arith.constant 0 : index
    %229 = vector.load %arg2[%c2_221, %c0_222, %c0_223] : memref<5x28x240xf32, #tpu.memory_space<vmem>>, vector<1x28x240xf32>
    %230 = vector.shape_cast %229 : vector<1x28x240xf32> to vector<28x240xf32>
    %c1_224 = arith.constant 1 : index
    %c2_225 = arith.constant 2 : index
    %c0_226 = arith.constant 0 : index
    %c0_227 = arith.constant 0 : index
    %231 = vector.load %arg1[%c1_224, %c2_225, %c0_226, %c0_227] : memref<4x4x7x28xf32, #tpu.memory_space<vmem>>, vector<1x1x6x28xf32>
    %232 = vector.shape_cast %231 : vector<1x1x6x28xf32> to vector<6x28xf32>
    %cst_228 = arith.constant dense<0.000000e+00> : vector<6x240xf32>
    %233 = tpu.matmul %232, %230, %cst_228 {dimension_numbers = #tpu.dot_dimension_numbers<[1], [0], [0], [1], [0, 0, 1, 1], [], []>} : vector<6x28xf32>, vector<28x240xf32>, vector<6x240xf32> -> vector<6x240xf32>
    %234 = arith.addf %216, %233 : vector<6x240xf32>
    %c1_229 = arith.constant 1 : index
    %c3_230 = arith.constant 3 : index
    %c0_231 = arith.constant 0 : index
    %c0_232 = arith.constant 0 : index
    %235 = vector.load %arg1[%c1_229, %c3_230, %c0_231, %c0_232] : memref<4x4x7x28xf32, #tpu.memory_space<vmem>>, vector<1x1x6x28xf32>
    %236 = vector.shape_cast %235 : vector<1x1x6x28xf32> to vector<6x28xf32>
    %cst_233 = arith.constant dense<0.000000e+00> : vector<6x240xf32>
    %237 = tpu.matmul %236, %230, %cst_233 {dimension_numbers = #tpu.dot_dimension_numbers<[1], [0], [0], [1], [0, 0, 1, 1], [], []>} : vector<6x28xf32>, vector<28x240xf32>, vector<6x240xf32> -> vector<6x240xf32>
    %238 = arith.addf %220, %237 : vector<6x240xf32>
    %c1_234 = arith.constant 1 : index
    %c0_235 = arith.constant 0 : index
    %c1_236 = arith.constant 1 : index
    %c0_237 = arith.constant 0 : index
    %239 = vector.load %arg1[%c1_234, %c0_235, %c1_236, %c0_237] : memref<4x4x7x28xf32, #tpu.memory_space<vmem>>, vector<1x1x6x28xf32>
    %240 = vector.shape_cast %239 : vector<1x1x6x28xf32> to vector<6x28xf32>
    %cst_238 = arith.constant dense<0.000000e+00> : vector<6x240xf32>
    %241 = tpu.matmul %240, %230, %cst_238 {dimension_numbers = #tpu.dot_dimension_numbers<[1], [0], [0], [1], [0, 0, 1, 1], [], []>} : vector<6x28xf32>, vector<28x240xf32>, vector<6x240xf32> -> vector<6x240xf32>
    %242 = arith.addf %224, %241 : vector<6x240xf32>
    %c1_239 = arith.constant 1 : index
    %c1_240 = arith.constant 1 : index
    %c1_241 = arith.constant 1 : index
    %c0_242 = arith.constant 0 : index
    %243 = vector.load %arg1[%c1_239, %c1_240, %c1_241, %c0_242] : memref<4x4x7x28xf32, #tpu.memory_space<vmem>>, vector<1x1x6x28xf32>
    %244 = vector.shape_cast %243 : vector<1x1x6x28xf32> to vector<6x28xf32>
    %cst_243 = arith.constant dense<0.000000e+00> : vector<6x240xf32>
    %245 = tpu.matmul %244, %230, %cst_243 {dimension_numbers = #tpu.dot_dimension_numbers<[1], [0], [0], [1], [0, 0, 1, 1], [], []>} : vector<6x28xf32>, vector<28x240xf32>, vector<6x240xf32> -> vector<6x240xf32>
    %246 = arith.addf %228, %245 : vector<6x240xf32>
    %c3_244 = arith.constant 3 : index
    %c0_245 = arith.constant 0 : index
    %c0_246 = arith.constant 0 : index
    %247 = vector.load %arg2[%c3_244, %c0_245, %c0_246] : memref<5x28x240xf32, #tpu.memory_space<vmem>>, vector<1x28x240xf32>
    %248 = vector.shape_cast %247 : vector<1x28x240xf32> to vector<28x240xf32>
    %c1_247 = arith.constant 1 : index
    %c3_248 = arith.constant 3 : index
    %c0_249 = arith.constant 0 : index
    %c0_250 = arith.constant 0 : index
    %249 = vector.load %arg1[%c1_247, %c3_248, %c0_249, %c0_250] : memref<4x4x7x28xf32, #tpu.memory_space<vmem>>, vector<1x1x6x28xf32>
    %250 = vector.shape_cast %249 : vector<1x1x6x28xf32> to vector<6x28xf32>
    %cst_251 = arith.constant dense<0.000000e+00> : vector<6x240xf32>
    %251 = tpu.matmul %250, %248, %cst_251 {dimension_numbers = #tpu.dot_dimension_numbers<[1], [0], [0], [1], [0, 0, 1, 1], [], []>} : vector<6x28xf32>, vector<28x240xf32>, vector<6x240xf32> -> vector<6x240xf32>
    %252 = arith.addf %234, %251 : vector<6x240xf32>
    %c1_252 = arith.constant 1 : index
    %c0_253 = arith.constant 0 : index
    %c1_254 = arith.constant 1 : index
    %c0_255 = arith.constant 0 : index
    %253 = vector.load %arg1[%c1_252, %c0_253, %c1_254, %c0_255] : memref<4x4x7x28xf32, #tpu.memory_space<vmem>>, vector<1x1x6x28xf32>
    %254 = vector.shape_cast %253 : vector<1x1x6x28xf32> to vector<6x28xf32>
    %cst_256 = arith.constant dense<0.000000e+00> : vector<6x240xf32>
    %255 = tpu.matmul %254, %248, %cst_256 {dimension_numbers = #tpu.dot_dimension_numbers<[1], [0], [0], [1], [0, 0, 1, 1], [], []>} : vector<6x28xf32>, vector<28x240xf32>, vector<6x240xf32> -> vector<6x240xf32>
    %256 = arith.addf %238, %255 : vector<6x240xf32>
    %c1_257 = arith.constant 1 : index
    %c1_258 = arith.constant 1 : index
    %c1_259 = arith.constant 1 : index
    %c0_260 = arith.constant 0 : index
    %257 = vector.load %arg1[%c1_257, %c1_258, %c1_259, %c0_260] : memref<4x4x7x28xf32, #tpu.memory_space<vmem>>, vector<1x1x6x28xf32>
    %258 = vector.shape_cast %257 : vector<1x1x6x28xf32> to vector<6x28xf32>
    %cst_261 = arith.constant dense<0.000000e+00> : vector<6x240xf32>
    %259 = tpu.matmul %258, %248, %cst_261 {dimension_numbers = #tpu.dot_dimension_numbers<[1], [0], [0], [1], [0, 0, 1, 1], [], []>} : vector<6x28xf32>, vector<28x240xf32>, vector<6x240xf32> -> vector<6x240xf32>
    %260 = arith.addf %242, %259 : vector<6x240xf32>
    %c1_262 = arith.constant 1 : index
    %c2_263 = arith.constant 2 : index
    %c1_264 = arith.constant 1 : index
    %c0_265 = arith.constant 0 : index
    %261 = vector.load %arg1[%c1_262, %c2_263, %c1_264, %c0_265] : memref<4x4x7x28xf32, #tpu.memory_space<vmem>>, vector<1x1x6x28xf32>
    %262 = vector.shape_cast %261 : vector<1x1x6x28xf32> to vector<6x28xf32>
    %cst_266 = arith.constant dense<0.000000e+00> : vector<6x240xf32>
    %263 = tpu.matmul %262, %248, %cst_266 {dimension_numbers = #tpu.dot_dimension_numbers<[1], [0], [0], [1], [0, 0, 1, 1], [], []>} : vector<6x28xf32>, vector<28x240xf32>, vector<6x240xf32> -> vector<6x240xf32>
    %264 = arith.addf %246, %263 : vector<6x240xf32>
    %c4_267 = arith.constant 4 : index
    %c0_268 = arith.constant 0 : index
    %c0_269 = arith.constant 0 : index
    %265 = vector.load %arg2[%c4_267, %c0_268, %c0_269] : memref<5x28x240xf32, #tpu.memory_space<vmem>>, vector<1x28x240xf32>
    %266 = vector.shape_cast %265 : vector<1x28x240xf32> to vector<28x240xf32>
    %c1_270 = arith.constant 1 : index
    %c0_271 = arith.constant 0 : index
    %c1_272 = arith.constant 1 : index
    %c0_273 = arith.constant 0 : index
    %267 = vector.load %arg1[%c1_270, %c0_271, %c1_272, %c0_273] : memref<4x4x7x28xf32, #tpu.memory_space<vmem>>, vector<1x1x6x28xf32>
    %268 = vector.shape_cast %267 : vector<1x1x6x28xf32> to vector<6x28xf32>
    %cst_274 = arith.constant dense<0.000000e+00> : vector<6x240xf32>
    %269 = tpu.matmul %268, %266, %cst_274 {dimension_numbers = #tpu.dot_dimension_numbers<[1], [0], [0], [1], [0, 0, 1, 1], [], []>} : vector<6x28xf32>, vector<28x240xf32>, vector<6x240xf32> -> vector<6x240xf32>
    %270 = arith.addf %252, %269 : vector<6x240xf32>
    %c1_275 = arith.constant 1 : index
    %c1_276 = arith.constant 1 : index
    %c1_277 = arith.constant 1 : index
    %c0_278 = arith.constant 0 : index
    %271 = vector.load %arg1[%c1_275, %c1_276, %c1_277, %c0_278] : memref<4x4x7x28xf32, #tpu.memory_space<vmem>>, vector<1x1x6x28xf32>
    %272 = vector.shape_cast %271 : vector<1x1x6x28xf32> to vector<6x28xf32>
    %cst_279 = arith.constant dense<0.000000e+00> : vector<6x240xf32>
    %273 = tpu.matmul %272, %266, %cst_279 {dimension_numbers = #tpu.dot_dimension_numbers<[1], [0], [0], [1], [0, 0, 1, 1], [], []>} : vector<6x28xf32>, vector<28x240xf32>, vector<6x240xf32> -> vector<6x240xf32>
    %274 = arith.addf %256, %273 : vector<6x240xf32>
    %c1_280 = arith.constant 1 : index
    %c2_281 = arith.constant 2 : index
    %c1_282 = arith.constant 1 : index
    %c0_283 = arith.constant 0 : index
    %275 = vector.load %arg1[%c1_280, %c2_281, %c1_282, %c0_283] : memref<4x4x7x28xf32, #tpu.memory_space<vmem>>, vector<1x1x6x28xf32>
    %276 = vector.shape_cast %275 : vector<1x1x6x28xf32> to vector<6x28xf32>
    %cst_284 = arith.constant dense<0.000000e+00> : vector<6x240xf32>
    %277 = tpu.matmul %276, %266, %cst_284 {dimension_numbers = #tpu.dot_dimension_numbers<[1], [0], [0], [1], [0, 0, 1, 1], [], []>} : vector<6x28xf32>, vector<28x240xf32>, vector<6x240xf32> -> vector<6x240xf32>
    %278 = arith.addf %260, %277 : vector<6x240xf32>
    %c1_285 = arith.constant 1 : index
    %c3_286 = arith.constant 3 : index
    %c1_287 = arith.constant 1 : index
    %c0_288 = arith.constant 0 : index
    %279 = vector.load %arg1[%c1_285, %c3_286, %c1_287, %c0_288] : memref<4x4x7x28xf32, #tpu.memory_space<vmem>>, vector<1x1x6x28xf32>
    %280 = vector.shape_cast %279 : vector<1x1x6x28xf32> to vector<6x28xf32>
    %cst_289 = arith.constant dense<0.000000e+00> : vector<6x240xf32>
    %281 = tpu.matmul %280, %266, %cst_289 {dimension_numbers = #tpu.dot_dimension_numbers<[1], [0], [0], [1], [0, 0, 1, 1], [], []>} : vector<6x28xf32>, vector<28x240xf32>, vector<6x240xf32> -> vector<6x240xf32>
    %282 = arith.addf %264, %281 : vector<6x240xf32>
    %283 = arith.maximumf %270, %274 : vector<6x240xf32>
    %284 = arith.maximumf %278, %282 : vector<6x240xf32>
    %285 = vector.extract_strided_slice %283 {offsets = [0, 0], sizes = [6, 120], strides = [1, 1]} : vector<6x240xf32> to vector<6x120xf32>
    %286 = vector.extract_strided_slice %283 {offsets = [0, 120], sizes = [6, 120], strides = [1, 1]} : vector<6x240xf32> to vector<6x120xf32>
    %287 = arith.maximumf %285, %286 : vector<6x120xf32>
    %c0_290 = arith.constant 0 : index
    %c0_291 = arith.constant 0 : index
    %288 = vector.load %arg3[%c0_290, %c0_291] : memref<1x120xf32, #tpu.memory_space<vmem>>, vector<1x120xf32>
    %289 = vector.broadcast %288 : vector<1x120xf32> to vector<6x120xf32>
    %290 = arith.addf %287, %289 : vector<6x120xf32>
    %cst_292 = arith.constant 0.000000e+00 : f32
    %291 = vector.broadcast %cst_292 : f32 to vector<6x120xf32>
    %292 = arith.maximumf %290, %291 : vector<6x120xf32>
    %293 = vector.extract_strided_slice %284 {offsets = [0, 0], sizes = [6, 120], strides = [1, 1]} : vector<6x240xf32> to vector<6x120xf32>
    %294 = vector.extract_strided_slice %284 {offsets = [0, 120], sizes = [6, 120], strides = [1, 1]} : vector<6x240xf32> to vector<6x120xf32>
    %295 = arith.maximumf %293, %294 : vector<6x120xf32>
    %c0_293 = arith.constant 0 : index
    %c0_294 = arith.constant 0 : index
    %296 = vector.load %arg3[%c0_293, %c0_294] : memref<1x120xf32, #tpu.memory_space<vmem>>, vector<1x120xf32>
    %297 = vector.broadcast %296 : vector<1x120xf32> to vector<6x120xf32>
    %298 = arith.addf %295, %297 : vector<6x120xf32>
    %cst_295 = arith.constant 0.000000e+00 : f32
    %299 = vector.broadcast %cst_295 : f32 to vector<6x120xf32>
    %300 = arith.maximumf %298, %299 : vector<6x120xf32>
    %cst_296 = arith.constant 0.000000e+00 : f32
    %301 = vector.broadcast %cst_296 : f32 to vector<4x160xf32>
    %cst_297 = arith.constant 0.000000e+00 : f32
    %302 = vector.broadcast %cst_297 : f32 to vector<4x160xf32>
    %c0_298 = arith.constant 0 : index
    %c0_299 = arith.constant 0 : index
    %c0_300 = arith.constant 0 : index
    %303 = vector.load %arg4[%c0_298, %c0_299, %c0_300] : memref<5x120x160xf32, #tpu.memory_space<vmem>>, vector<1x120x160xf32>
    %304 = vector.shape_cast %303 : vector<1x120x160xf32> to vector<120x160xf32>
    %305 = vector.extract_strided_slice %292 {offsets = [0, 0], sizes = [4, 120], strides = [1, 1]} : vector<6x120xf32> to vector<4x120xf32>
    %cst_301 = arith.constant dense<0.000000e+00> : vector<4x160xf32>
    %306 = tpu.matmul %305, %304, %cst_301 {dimension_numbers = #tpu.dot_dimension_numbers<[1], [0], [0], [1], [0, 0, 1, 1], [], []>} : vector<4x120xf32>, vector<120x160xf32>, vector<4x160xf32> -> vector<4x160xf32>
    %307 = arith.addf %301, %306 : vector<4x160xf32>
    %308 = vector.extract_strided_slice %300 {offsets = [0, 0], sizes = [4, 120], strides = [1, 1]} : vector<6x120xf32> to vector<4x120xf32>
    %cst_302 = arith.constant dense<0.000000e+00> : vector<4x160xf32>
    %309 = tpu.matmul %308, %304, %cst_302 {dimension_numbers = #tpu.dot_dimension_numbers<[1], [0], [0], [1], [0, 0, 1, 1], [], []>} : vector<4x120xf32>, vector<120x160xf32>, vector<4x160xf32> -> vector<4x160xf32>
    %310 = arith.addf %302, %309 : vector<4x160xf32>
    %c1_303 = arith.constant 1 : index
    %c0_304 = arith.constant 0 : index
    %c0_305 = arith.constant 0 : index
    %311 = vector.load %arg4[%c1_303, %c0_304, %c0_305] : memref<5x120x160xf32, #tpu.memory_space<vmem>>, vector<1x120x160xf32>
    %312 = vector.shape_cast %311 : vector<1x120x160xf32> to vector<120x160xf32>
    %313 = vector.extract_strided_slice %300 {offsets = [0, 0], sizes = [4, 120], strides = [1, 1]} : vector<6x120xf32> to vector<4x120xf32>
    %cst_306 = arith.constant dense<0.000000e+00> : vector<4x160xf32>
    %314 = tpu.matmul %313, %312, %cst_306 {dimension_numbers = #tpu.dot_dimension_numbers<[1], [0], [0], [1], [0, 0, 1, 1], [], []>} : vector<4x120xf32>, vector<120x160xf32>, vector<4x160xf32> -> vector<4x160xf32>
    %315 = arith.addf %307, %314 : vector<4x160xf32>
    %316 = vector.extract_strided_slice %292 {offsets = [1, 0], sizes = [4, 120], strides = [1, 1]} : vector<6x120xf32> to vector<4x120xf32>
    %cst_307 = arith.constant dense<0.000000e+00> : vector<4x160xf32>
    %317 = tpu.matmul %316, %312, %cst_307 {dimension_numbers = #tpu.dot_dimension_numbers<[1], [0], [0], [1], [0, 0, 1, 1], [], []>} : vector<4x120xf32>, vector<120x160xf32>, vector<4x160xf32> -> vector<4x160xf32>
    %318 = arith.addf %310, %317 : vector<4x160xf32>
    %c2_308 = arith.constant 2 : index
    %c0_309 = arith.constant 0 : index
    %c0_310 = arith.constant 0 : index
    %319 = vector.load %arg4[%c2_308, %c0_309, %c0_310] : memref<5x120x160xf32, #tpu.memory_space<vmem>>, vector<1x120x160xf32>
    %320 = vector.shape_cast %319 : vector<1x120x160xf32> to vector<120x160xf32>
    %321 = vector.extract_strided_slice %292 {offsets = [1, 0], sizes = [4, 120], strides = [1, 1]} : vector<6x120xf32> to vector<4x120xf32>
    %cst_311 = arith.constant dense<0.000000e+00> : vector<4x160xf32>
    %322 = tpu.matmul %321, %320, %cst_311 {dimension_numbers = #tpu.dot_dimension_numbers<[1], [0], [0], [1], [0, 0, 1, 1], [], []>} : vector<4x120xf32>, vector<120x160xf32>, vector<4x160xf32> -> vector<4x160xf32>
    %323 = arith.addf %315, %322 : vector<4x160xf32>
    %324 = vector.extract_strided_slice %300 {offsets = [1, 0], sizes = [4, 120], strides = [1, 1]} : vector<6x120xf32> to vector<4x120xf32>
    %cst_312 = arith.constant dense<0.000000e+00> : vector<4x160xf32>
    %325 = tpu.matmul %324, %320, %cst_312 {dimension_numbers = #tpu.dot_dimension_numbers<[1], [0], [0], [1], [0, 0, 1, 1], [], []>} : vector<4x120xf32>, vector<120x160xf32>, vector<4x160xf32> -> vector<4x160xf32>
    %326 = arith.addf %318, %325 : vector<4x160xf32>
    %c3_313 = arith.constant 3 : index
    %c0_314 = arith.constant 0 : index
    %c0_315 = arith.constant 0 : index
    %327 = vector.load %arg4[%c3_313, %c0_314, %c0_315] : memref<5x120x160xf32, #tpu.memory_space<vmem>>, vector<1x120x160xf32>
    %328 = vector.shape_cast %327 : vector<1x120x160xf32> to vector<120x160xf32>
    %329 = vector.extract_strided_slice %300 {offsets = [1, 0], sizes = [4, 120], strides = [1, 1]} : vector<6x120xf32> to vector<4x120xf32>
    %cst_316 = arith.constant dense<0.000000e+00> : vector<4x160xf32>
    %330 = tpu.matmul %329, %328, %cst_316 {dimension_numbers = #tpu.dot_dimension_numbers<[1], [0], [0], [1], [0, 0, 1, 1], [], []>} : vector<4x120xf32>, vector<120x160xf32>, vector<4x160xf32> -> vector<4x160xf32>
    %331 = arith.addf %323, %330 : vector<4x160xf32>
    %332 = vector.extract_strided_slice %292 {offsets = [2, 0], sizes = [4, 120], strides = [1, 1]} : vector<6x120xf32> to vector<4x120xf32>
    %cst_317 = arith.constant dense<0.000000e+00> : vector<4x160xf32>
    %333 = tpu.matmul %332, %328, %cst_317 {dimension_numbers = #tpu.dot_dimension_numbers<[1], [0], [0], [1], [0, 0, 1, 1], [], []>} : vector<4x120xf32>, vector<120x160xf32>, vector<4x160xf32> -> vector<4x160xf32>
    %334 = arith.addf %326, %333 : vector<4x160xf32>
    %c4_318 = arith.constant 4 : index
    %c0_319 = arith.constant 0 : index
    %c0_320 = arith.constant 0 : index
    %335 = vector.load %arg4[%c4_318, %c0_319, %c0_320] : memref<5x120x160xf32, #tpu.memory_space<vmem>>, vector<1x120x160xf32>
    %336 = vector.shape_cast %335 : vector<1x120x160xf32> to vector<120x160xf32>
    %337 = vector.extract_strided_slice %292 {offsets = [2, 0], sizes = [4, 120], strides = [1, 1]} : vector<6x120xf32> to vector<4x120xf32>
    %cst_321 = arith.constant dense<0.000000e+00> : vector<4x160xf32>
    %338 = tpu.matmul %337, %336, %cst_321 {dimension_numbers = #tpu.dot_dimension_numbers<[1], [0], [0], [1], [0, 0, 1, 1], [], []>} : vector<4x120xf32>, vector<120x160xf32>, vector<4x160xf32> -> vector<4x160xf32>
    %339 = arith.addf %331, %338 : vector<4x160xf32>
    %340 = vector.extract_strided_slice %300 {offsets = [2, 0], sizes = [4, 120], strides = [1, 1]} : vector<6x120xf32> to vector<4x120xf32>
    %cst_322 = arith.constant dense<0.000000e+00> : vector<4x160xf32>
    %341 = tpu.matmul %340, %336, %cst_322 {dimension_numbers = #tpu.dot_dimension_numbers<[1], [0], [0], [1], [0, 0, 1, 1], [], []>} : vector<4x120xf32>, vector<120x160xf32>, vector<4x160xf32> -> vector<4x160xf32>
    %342 = arith.addf %334, %341 : vector<4x160xf32>
    %343 = arith.maximumf %339, %342 : vector<4x160xf32>
    %344 = vector.extract_strided_slice %343 {offsets = [0, 0], sizes = [4, 80], strides = [1, 1]} : vector<4x160xf32> to vector<4x80xf32>
    %345 = vector.extract_strided_slice %343 {offsets = [0, 80], sizes = [4, 80], strides = [1, 1]} : vector<4x160xf32> to vector<4x80xf32>
    %346 = arith.maximumf %344, %345 : vector<4x80xf32>
    %c0_323 = arith.constant 0 : index
    %c0_324 = arith.constant 0 : index
    %347 = vector.load %arg5[%c0_323, %c0_324] : memref<1x80xf32, #tpu.memory_space<vmem>>, vector<1x80xf32>
    %348 = vector.broadcast %347 : vector<1x80xf32> to vector<4x80xf32>
    %349 = arith.addf %346, %348 : vector<4x80xf32>
    %cst_325 = arith.constant 0.000000e+00 : f32
    %350 = vector.broadcast %cst_325 : f32 to vector<4x80xf32>
    %351 = arith.maximumf %349, %350 : vector<4x80xf32>
    %cst_326 = arith.constant 0.000000e+00 : f32
    %352 = vector.broadcast %cst_326 : f32 to vector<1x50xf32>
    %353 = vector.extract_strided_slice %351 {offsets = [0, 0], sizes = [1, 80], strides = [1, 1]} : vector<4x80xf32> to vector<1x80xf32>
    %c0_327 = arith.constant 0 : index
    %c0_328 = arith.constant 0 : index
    %c0_329 = arith.constant 0 : index
    %354 = vector.load %arg6[%c0_327, %c0_328, %c0_329] : memref<4x80x50xf32, #tpu.memory_space<vmem>>, vector<1x80x50xf32>
    %355 = vector.shape_cast %354 : vector<1x80x50xf32> to vector<80x50xf32>
    %cst_330 = arith.constant dense<0.000000e+00> : vector<1x50xf32>
    %356 = tpu.matmul %353, %355, %cst_330 {dimension_numbers = #tpu.dot_dimension_numbers<[1], [0], [0], [1], [0, 0, 1, 1], [], []>} : vector<1x80xf32>, vector<80x50xf32>, vector<1x50xf32> -> vector<1x50xf32>
    %357 = arith.addf %352, %356 : vector<1x50xf32>
    %358 = vector.extract_strided_slice %351 {offsets = [1, 0], sizes = [1, 80], strides = [1, 1]} : vector<4x80xf32> to vector<1x80xf32>
    %c1_331 = arith.constant 1 : index
    %c0_332 = arith.constant 0 : index
    %c0_333 = arith.constant 0 : index
    %359 = vector.load %arg6[%c1_331, %c0_332, %c0_333] : memref<4x80x50xf32, #tpu.memory_space<vmem>>, vector<1x80x50xf32>
    %360 = vector.shape_cast %359 : vector<1x80x50xf32> to vector<80x50xf32>
    %cst_334 = arith.constant dense<0.000000e+00> : vector<1x50xf32>
    %361 = tpu.matmul %358, %360, %cst_334 {dimension_numbers = #tpu.dot_dimension_numbers<[1], [0], [0], [1], [0, 0, 1, 1], [], []>} : vector<1x80xf32>, vector<80x50xf32>, vector<1x50xf32> -> vector<1x50xf32>
    %362 = arith.addf %357, %361 : vector<1x50xf32>
    %363 = vector.extract_strided_slice %351 {offsets = [2, 0], sizes = [1, 80], strides = [1, 1]} : vector<4x80xf32> to vector<1x80xf32>
    %c2_335 = arith.constant 2 : index
    %c0_336 = arith.constant 0 : index
    %c0_337 = arith.constant 0 : index
    %364 = vector.load %arg6[%c2_335, %c0_336, %c0_337] : memref<4x80x50xf32, #tpu.memory_space<vmem>>, vector<1x80x50xf32>
    %365 = vector.shape_cast %364 : vector<1x80x50xf32> to vector<80x50xf32>
    %cst_338 = arith.constant dense<0.000000e+00> : vector<1x50xf32>
    %366 = tpu.matmul %363, %365, %cst_338 {dimension_numbers = #tpu.dot_dimension_numbers<[1], [0], [0], [1], [0, 0, 1, 1], [], []>} : vector<1x80xf32>, vector<80x50xf32>, vector<1x50xf32> -> vector<1x50xf32>
    %367 = arith.addf %362, %366 : vector<1x50xf32>
    %368 = vector.extract_strided_slice %351 {offsets = [3, 0], sizes = [1, 80], strides = [1, 1]} : vector<4x80xf32> to vector<1x80xf32>
    %c3_339 = arith.constant 3 : index
    %c0_340 = arith.constant 0 : index
    %c0_341 = arith.constant 0 : index
    %369 = vector.load %arg6[%c3_339, %c0_340, %c0_341] : memref<4x80x50xf32, #tpu.memory_space<vmem>>, vector<1x80x50xf32>
    %370 = vector.shape_cast %369 : vector<1x80x50xf32> to vector<80x50xf32>
    %cst_342 = arith.constant dense<0.000000e+00> : vector<1x50xf32>
    %371 = tpu.matmul %368, %370, %cst_342 {dimension_numbers = #tpu.dot_dimension_numbers<[1], [0], [0], [1], [0, 0, 1, 1], [], []>} : vector<1x80xf32>, vector<80x50xf32>, vector<1x50xf32> -> vector<1x50xf32>
    %372 = arith.addf %367, %371 : vector<1x50xf32>
    %c0_343 = arith.constant 0 : index
    %c0_344 = arith.constant 0 : index
    %373 = vector.load %arg7[%c0_343, %c0_344] : memref<1x50xf32, #tpu.memory_space<vmem>>, vector<1x50xf32>
    %374 = arith.addf %372, %373 : vector<1x50xf32>
    %cst_345 = arith.constant 0.000000e+00 : f32
    %375 = vector.broadcast %cst_345 : f32 to vector<1x50xf32>
    %376 = arith.maximumf %374, %375 : vector<1x50xf32>
    %c1_346 = arith.constant 1 : index
    %c0_347 = arith.constant 0 : index
    %377 = vector.load %arg11[%c1_346, %c0_347] : memref<4x50xf32, #tpu.memory_space<vmem>>, vector<1x50xf32>
    tpu.vector_store %arg11[%c1_346, %c0_347], %376 {strides = array<i32>} : memref<4x50xf32, #tpu.memory_space<vmem>>, vector<1x50xf32>,
    %cst_348 = arith.constant 0.000000e+00 : f32
    %378 = vector.broadcast %cst_348 : f32 to vector<6x240xf32>
    %cst_349 = arith.constant 0.000000e+00 : f32
    %379 = vector.broadcast %cst_349 : f32 to vector<6x240xf32>
    %cst_350 = arith.constant 0.000000e+00 : f32
    %380 = vector.broadcast %cst_350 : f32 to vector<6x240xf32>
    %cst_351 = arith.constant 0.000000e+00 : f32
    %381 = vector.broadcast %cst_351 : f32 to vector<6x240xf32>
    %c0_352 = arith.constant 0 : index
    %c0_353 = arith.constant 0 : index
    %c0_354 = arith.constant 0 : index
    %382 = vector.load %arg2[%c0_352, %c0_353, %c0_354] : memref<5x28x240xf32, #tpu.memory_space<vmem>>, vector<1x28x240xf32>
    %383 = vector.shape_cast %382 : vector<1x28x240xf32> to vector<28x240xf32>
    %c2_355 = arith.constant 2 : index
    %c0_356 = arith.constant 0 : index
    %c0_357 = arith.constant 0 : index
    %c0_358 = arith.constant 0 : index
    %384 = vector.load %arg1[%c2_355, %c0_356, %c0_357, %c0_358] : memref<4x4x7x28xf32, #tpu.memory_space<vmem>>, vector<1x1x6x28xf32>
    %385 = vector.shape_cast %384 : vector<1x1x6x28xf32> to vector<6x28xf32>
    %cst_359 = arith.constant dense<0.000000e+00> : vector<6x240xf32>
    %386 = tpu.matmul %385, %383, %cst_359 {dimension_numbers = #tpu.dot_dimension_numbers<[1], [0], [0], [1], [0, 0, 1, 1], [], []>} : vector<6x28xf32>, vector<28x240xf32>, vector<6x240xf32> -> vector<6x240xf32>
    %387 = arith.addf %378, %386 : vector<6x240xf32>
    %c2_360 = arith.constant 2 : index
    %c1_361 = arith.constant 1 : index
    %c0_362 = arith.constant 0 : index
    %c0_363 = arith.constant 0 : index
    %388 = vector.load %arg1[%c2_360, %c1_361, %c0_362, %c0_363] : memref<4x4x7x28xf32, #tpu.memory_space<vmem>>, vector<1x1x6x28xf32>
    %389 = vector.shape_cast %388 : vector<1x1x6x28xf32> to vector<6x28xf32>
    %cst_364 = arith.constant dense<0.000000e+00> : vector<6x240xf32>
    %390 = tpu.matmul %389, %383, %cst_364 {dimension_numbers = #tpu.dot_dimension_numbers<[1], [0], [0], [1], [0, 0, 1, 1], [], []>} : vector<6x28xf32>, vector<28x240xf32>, vector<6x240xf32> -> vector<6x240xf32>
    %391 = arith.addf %379, %390 : vector<6x240xf32>
    %c2_365 = arith.constant 2 : index
    %c2_366 = arith.constant 2 : index
    %c0_367 = arith.constant 0 : index
    %c0_368 = arith.constant 0 : index
    %392 = vector.load %arg1[%c2_365, %c2_366, %c0_367, %c0_368] : memref<4x4x7x28xf32, #tpu.memory_space<vmem>>, vector<1x1x6x28xf32>
    %393 = vector.shape_cast %392 : vector<1x1x6x28xf32> to vector<6x28xf32>
    %cst_369 = arith.constant dense<0.000000e+00> : vector<6x240xf32>
    %394 = tpu.matmul %393, %383, %cst_369 {dimension_numbers = #tpu.dot_dimension_numbers<[1], [0], [0], [1], [0, 0, 1, 1], [], []>} : vector<6x28xf32>, vector<28x240xf32>, vector<6x240xf32> -> vector<6x240xf32>
    %395 = arith.addf %380, %394 : vector<6x240xf32>
    %c2_370 = arith.constant 2 : index
    %c3_371 = arith.constant 3 : index
    %c0_372 = arith.constant 0 : index
    %c0_373 = arith.constant 0 : index
    %396 = vector.load %arg1[%c2_370, %c3_371, %c0_372, %c0_373] : memref<4x4x7x28xf32, #tpu.memory_space<vmem>>, vector<1x1x6x28xf32>
    %397 = vector.shape_cast %396 : vector<1x1x6x28xf32> to vector<6x28xf32>
    %cst_374 = arith.constant dense<0.000000e+00> : vector<6x240xf32>
    %398 = tpu.matmul %397, %383, %cst_374 {dimension_numbers = #tpu.dot_dimension_numbers<[1], [0], [0], [1], [0, 0, 1, 1], [], []>} : vector<6x28xf32>, vector<28x240xf32>, vector<6x240xf32> -> vector<6x240xf32>
    %399 = arith.addf %381, %398 : vector<6x240xf32>
    %c1_375 = arith.constant 1 : index
    %c0_376 = arith.constant 0 : index
    %c0_377 = arith.constant 0 : index
    %400 = vector.load %arg2[%c1_375, %c0_376, %c0_377] : memref<5x28x240xf32, #tpu.memory_space<vmem>>, vector<1x28x240xf32>
    %401 = vector.shape_cast %400 : vector<1x28x240xf32> to vector<28x240xf32>
    %c2_378 = arith.constant 2 : index
    %c1_379 = arith.constant 1 : index
    %c0_380 = arith.constant 0 : index
    %c0_381 = arith.constant 0 : index
    %402 = vector.load %arg1[%c2_378, %c1_379, %c0_380, %c0_381] : memref<4x4x7x28xf32, #tpu.memory_space<vmem>>, vector<1x1x6x28xf32>
    %403 = vector.shape_cast %402 : vector<1x1x6x28xf32> to vector<6x28xf32>
    %cst_382 = arith.constant dense<0.000000e+00> : vector<6x240xf32>
    %404 = tpu.matmul %403, %401, %cst_382 {dimension_numbers = #tpu.dot_dimension_numbers<[1], [0], [0], [1], [0, 0, 1, 1], [], []>} : vector<6x28xf32>, vector<28x240xf32>, vector<6x240xf32> -> vector<6x240xf32>
    %405 = arith.addf %387, %404 : vector<6x240xf32>
    %c2_383 = arith.constant 2 : index
    %c2_384 = arith.constant 2 : index
    %c0_385 = arith.constant 0 : index
    %c0_386 = arith.constant 0 : index
    %406 = vector.load %arg1[%c2_383, %c2_384, %c0_385, %c0_386] : memref<4x4x7x28xf32, #tpu.memory_space<vmem>>, vector<1x1x6x28xf32>
    %407 = vector.shape_cast %406 : vector<1x1x6x28xf32> to vector<6x28xf32>
    %cst_387 = arith.constant dense<0.000000e+00> : vector<6x240xf32>
    %408 = tpu.matmul %407, %401, %cst_387 {dimension_numbers = #tpu.dot_dimension_numbers<[1], [0], [0], [1], [0, 0, 1, 1], [], []>} : vector<6x28xf32>, vector<28x240xf32>, vector<6x240xf32> -> vector<6x240xf32>
    %409 = arith.addf %391, %408 : vector<6x240xf32>
    %c2_388 = arith.constant 2 : index
    %c3_389 = arith.constant 3 : index
    %c0_390 = arith.constant 0 : index
    %c0_391 = arith.constant 0 : index
    %410 = vector.load %arg1[%c2_388, %c3_389, %c0_390, %c0_391] : memref<4x4x7x28xf32, #tpu.memory_space<vmem>>, vector<1x1x6x28xf32>
    %411 = vector.shape_cast %410 : vector<1x1x6x28xf32> to vector<6x28xf32>
    %cst_392 = arith.constant dense<0.000000e+00> : vector<6x240xf32>
    %412 = tpu.matmul %411, %401, %cst_392 {dimension_numbers = #tpu.dot_dimension_numbers<[1], [0], [0], [1], [0, 0, 1, 1], [], []>} : vector<6x28xf32>, vector<28x240xf32>, vector<6x240xf32> -> vector<6x240xf32>
    %413 = arith.addf %395, %412 : vector<6x240xf32>
    %c2_393 = arith.constant 2 : index
    %c0_394 = arith.constant 0 : index
    %c1_395 = arith.constant 1 : index
    %c0_396 = arith.constant 0 : index
    %414 = vector.load %arg1[%c2_393, %c0_394, %c1_395, %c0_396] : memref<4x4x7x28xf32, #tpu.memory_space<vmem>>, vector<1x1x6x28xf32>
    %415 = vector.shape_cast %414 : vector<1x1x6x28xf32> to vector<6x28xf32>
    %cst_397 = arith.constant dense<0.000000e+00> : vector<6x240xf32>
    %416 = tpu.matmul %415, %401, %cst_397 {dimension_numbers = #tpu.dot_dimension_numbers<[1], [0], [0], [1], [0, 0, 1, 1], [], []>} : vector<6x28xf32>, vector<28x240xf32>, vector<6x240xf32> -> vector<6x240xf32>
    %417 = arith.addf %399, %416 : vector<6x240xf32>
    %c2_398 = arith.constant 2 : index
    %c0_399 = arith.constant 0 : index
    %c0_400 = arith.constant 0 : index
    %418 = vector.load %arg2[%c2_398, %c0_399, %c0_400] : memref<5x28x240xf32, #tpu.memory_space<vmem>>, vector<1x28x240xf32>
    %419 = vector.shape_cast %418 : vector<1x28x240xf32> to vector<28x240xf32>
    %c2_401 = arith.constant 2 : index
    %c2_402 = arith.constant 2 : index
    %c0_403 = arith.constant 0 : index
    %c0_404 = arith.constant 0 : index
    %420 = vector.load %arg1[%c2_401, %c2_402, %c0_403, %c0_404] : memref<4x4x7x28xf32, #tpu.memory_space<vmem>>, vector<1x1x6x28xf32>
    %421 = vector.shape_cast %420 : vector<1x1x6x28xf32> to vector<6x28xf32>
    %cst_405 = arith.constant dense<0.000000e+00> : vector<6x240xf32>
    %422 = tpu.matmul %421, %419, %cst_405 {dimension_numbers = #tpu.dot_dimension_numbers<[1], [0], [0], [1], [0, 0, 1, 1], [], []>} : vector<6x28xf32>, vector<28x240xf32>, vector<6x240xf32> -> vector<6x240xf32>
    %423 = arith.addf %405, %422 : vector<6x240xf32>
    %c2_406 = arith.constant 2 : index
    %c3_407 = arith.constant 3 : index
    %c0_408 = arith.constant 0 : index
    %c0_409 = arith.constant 0 : index
    %424 = vector.load %arg1[%c2_406, %c3_407, %c0_408, %c0_409] : memref<4x4x7x28xf32, #tpu.memory_space<vmem>>, vector<1x1x6x28xf32>
    %425 = vector.shape_cast %424 : vector<1x1x6x28xf32> to vector<6x28xf32>
    %cst_410 = arith.constant dense<0.000000e+00> : vector<6x240xf32>
    %426 = tpu.matmul %425, %419, %cst_410 {dimension_numbers = #tpu.dot_dimension_numbers<[1], [0], [0], [1], [0, 0, 1, 1], [], []>} : vector<6x28xf32>, vector<28x240xf32>, vector<6x240xf32> -> vector<6x240xf32>
    %427 = arith.addf %409, %426 : vector<6x240xf32>
    %c2_411 = arith.constant 2 : index
    %c0_412 = arith.constant 0 : index
    %c1_413 = arith.constant 1 : index
    %c0_414 = arith.constant 0 : index
    %428 = vector.load %arg1[%c2_411, %c0_412, %c1_413, %c0_414] : memref<4x4x7x28xf32, #tpu.memory_space<vmem>>, vector<1x1x6x28xf32>
    %429 = vector.shape_cast %428 : vector<1x1x6x28xf32> to vector<6x28xf32>
    %cst_415 = arith.constant dense<0.000000e+00> : vector<6x240xf32>
    %430 = tpu.matmul %429, %419, %cst_415 {dimension_numbers = #tpu.dot_dimension_numbers<[1], [0], [0], [1], [0, 0, 1, 1], [], []>} : vector<6x28xf32>, vector<28x240xf32>, vector<6x240xf32> -> vector<6x240xf32>
    %431 = arith.addf %413, %430 : vector<6x240xf32>
    %c2_416 = arith.constant 2 : index
    %c1_417 = arith.constant 1 : index
    %c1_418 = arith.constant 1 : index
    %c0_419 = arith.constant 0 : index
    %432 = vector.load %arg1[%c2_416, %c1_417, %c1_418, %c0_419] : memref<4x4x7x28xf32, #tpu.memory_space<vmem>>, vector<1x1x6x28xf32>
    %433 = vector.shape_cast %432 : vector<1x1x6x28xf32> to vector<6x28xf32>
    %cst_420 = arith.constant dense<0.000000e+00> : vector<6x240xf32>
    %434 = tpu.matmul %433, %419, %cst_420 {dimension_numbers = #tpu.dot_dimension_numbers<[1], [0], [0], [1], [0, 0, 1, 1], [], []>} : vector<6x28xf32>, vector<28x240xf32>, vector<6x240xf32> -> vector<6x240xf32>
    %435 = arith.addf %417, %434 : vector<6x240xf32>
    %c3_421 = arith.constant 3 : index
    %c0_422 = arith.constant 0 : index
    %c0_423 = arith.constant 0 : index
    %436 = vector.load %arg2[%c3_421, %c0_422, %c0_423] : memref<5x28x240xf32, #tpu.memory_space<vmem>>, vector<1x28x240xf32>
    %437 = vector.shape_cast %436 : vector<1x28x240xf32> to vector<28x240xf32>
    %c2_424 = arith.constant 2 : index
    %c3_425 = arith.constant 3 : index
    %c0_426 = arith.constant 0 : index
    %c0_427 = arith.constant 0 : index
    %438 = vector.load %arg1[%c2_424, %c3_425, %c0_426, %c0_427] : memref<4x4x7x28xf32, #tpu.memory_space<vmem>>, vector<1x1x6x28xf32>
    %439 = vector.shape_cast %438 : vector<1x1x6x28xf32> to vector<6x28xf32>
    %cst_428 = arith.constant dense<0.000000e+00> : vector<6x240xf32>
    %440 = tpu.matmul %439, %437, %cst_428 {dimension_numbers = #tpu.dot_dimension_numbers<[1], [0], [0], [1], [0, 0, 1, 1], [], []>} : vector<6x28xf32>, vector<28x240xf32>, vector<6x240xf32> -> vector<6x240xf32>
    %441 = arith.addf %423, %440 : vector<6x240xf32>
    %c2_429 = arith.constant 2 : index
    %c0_430 = arith.constant 0 : index
    %c1_431 = arith.constant 1 : index
    %c0_432 = arith.constant 0 : index
    %442 = vector.load %arg1[%c2_429, %c0_430, %c1_431, %c0_432] : memref<4x4x7x28xf32, #tpu.memory_space<vmem>>, vector<1x1x6x28xf32>
    %443 = vector.shape_cast %442 : vector<1x1x6x28xf32> to vector<6x28xf32>
    %cst_433 = arith.constant dense<0.000000e+00> : vector<6x240xf32>
    %444 = tpu.matmul %443, %437, %cst_433 {dimension_numbers = #tpu.dot_dimension_numbers<[1], [0], [0], [1], [0, 0, 1, 1], [], []>} : vector<6x28xf32>, vector<28x240xf32>, vector<6x240xf32> -> vector<6x240xf32>
    %445 = arith.addf %427, %444 : vector<6x240xf32>
    %c2_434 = arith.constant 2 : index
    %c1_435 = arith.constant 1 : index
    %c1_436 = arith.constant 1 : index
    %c0_437 = arith.constant 0 : index
    %446 = vector.load %arg1[%c2_434, %c1_435, %c1_436, %c0_437] : memref<4x4x7x28xf32, #tpu.memory_space<vmem>>, vector<1x1x6x28xf32>
    %447 = vector.shape_cast %446 : vector<1x1x6x28xf32> to vector<6x28xf32>
    %cst_438 = arith.constant dense<0.000000e+00> : vector<6x240xf32>
    %448 = tpu.matmul %447, %437, %cst_438 {dimension_numbers = #tpu.dot_dimension_numbers<[1], [0], [0], [1], [0, 0, 1, 1], [], []>} : vector<6x28xf32>, vector<28x240xf32>, vector<6x240xf32> -> vector<6x240xf32>
    %449 = arith.addf %431, %448 : vector<6x240xf32>
    %c2_439 = arith.constant 2 : index
    %c2_440 = arith.constant 2 : index
    %c1_441 = arith.constant 1 : index
    %c0_442 = arith.constant 0 : index
    %450 = vector.load %arg1[%c2_439, %c2_440, %c1_441, %c0_442] : memref<4x4x7x28xf32, #tpu.memory_space<vmem>>, vector<1x1x6x28xf32>
    %451 = vector.shape_cast %450 : vector<1x1x6x28xf32> to vector<6x28xf32>
    %cst_443 = arith.constant dense<0.000000e+00> : vector<6x240xf32>
    %452 = tpu.matmul %451, %437, %cst_443 {dimension_numbers = #tpu.dot_dimension_numbers<[1], [0], [0], [1], [0, 0, 1, 1], [], []>} : vector<6x28xf32>, vector<28x240xf32>, vector<6x240xf32> -> vector<6x240xf32>
    %453 = arith.addf %435, %452 : vector<6x240xf32>
    %c4_444 = arith.constant 4 : index
    %c0_445 = arith.constant 0 : index
    %c0_446 = arith.constant 0 : index
    %454 = vector.load %arg2[%c4_444, %c0_445, %c0_446] : memref<5x28x240xf32, #tpu.memory_space<vmem>>, vector<1x28x240xf32>
    %455 = vector.shape_cast %454 : vector<1x28x240xf32> to vector<28x240xf32>
    %c2_447 = arith.constant 2 : index
    %c0_448 = arith.constant 0 : index
    %c1_449 = arith.constant 1 : index
    %c0_450 = arith.constant 0 : index
    %456 = vector.load %arg1[%c2_447, %c0_448, %c1_449, %c0_450] : memref<4x4x7x28xf32, #tpu.memory_space<vmem>>, vector<1x1x6x28xf32>
    %457 = vector.shape_cast %456 : vector<1x1x6x28xf32> to vector<6x28xf32>
    %cst_451 = arith.constant dense<0.000000e+00> : vector<6x240xf32>
    %458 = tpu.matmul %457, %455, %cst_451 {dimension_numbers = #tpu.dot_dimension_numbers<[1], [0], [0], [1], [0, 0, 1, 1], [], []>} : vector<6x28xf32>, vector<28x240xf32>, vector<6x240xf32> -> vector<6x240xf32>
    %459 = arith.addf %441, %458 : vector<6x240xf32>
    %c2_452 = arith.constant 2 : index
    %c1_453 = arith.constant 1 : index
    %c1_454 = arith.constant 1 : index
    %c0_455 = arith.constant 0 : index
    %460 = vector.load %arg1[%c2_452, %c1_453, %c1_454, %c0_455] : memref<4x4x7x28xf32, #tpu.memory_space<vmem>>, vector<1x1x6x28xf32>
    %461 = vector.shape_cast %460 : vector<1x1x6x28xf32> to vector<6x28xf32>
    %cst_456 = arith.constant dense<0.000000e+00> : vector<6x240xf32>
    %462 = tpu.matmul %461, %455, %cst_456 {dimension_numbers = #tpu.dot_dimension_numbers<[1], [0], [0], [1], [0, 0, 1, 1], [], []>} : vector<6x28xf32>, vector<28x240xf32>, vector<6x240xf32> -> vector<6x240xf32>
    %463 = arith.addf %445, %462 : vector<6x240xf32>
    %c2_457 = arith.constant 2 : index
    %c2_458 = arith.constant 2 : index
    %c1_459 = arith.constant 1 : index
    %c0_460 = arith.constant 0 : index
    %464 = vector.load %arg1[%c2_457, %c2_458, %c1_459, %c0_460] : memref<4x4x7x28xf32, #tpu.memory_space<vmem>>, vector<1x1x6x28xf32>
    %465 = vector.shape_cast %464 : vector<1x1x6x28xf32> to vector<6x28xf32>
    %cst_461 = arith.constant dense<0.000000e+00> : vector<6x240xf32>
    %466 = tpu.matmul %465, %455, %cst_461 {dimension_numbers = #tpu.dot_dimension_numbers<[1], [0], [0], [1], [0, 0, 1, 1], [], []>} : vector<6x28xf32>, vector<28x240xf32>, vector<6x240xf32> -> vector<6x240xf32>
    %467 = arith.addf %449, %466 : vector<6x240xf32>
    %c2_462 = arith.constant 2 : index
    %c3_463 = arith.constant 3 : index
    %c1_464 = arith.constant 1 : index
    %c0_465 = arith.constant 0 : index
    %468 = vector.load %arg1[%c2_462, %c3_463, %c1_464, %c0_465] : memref<4x4x7x28xf32, #tpu.memory_space<vmem>>, vector<1x1x6x28xf32>
    %469 = vector.shape_cast %468 : vector<1x1x6x28xf32> to vector<6x28xf32>
    %cst_466 = arith.constant dense<0.000000e+00> : vector<6x240xf32>
    %470 = tpu.matmul %469, %455, %cst_466 {dimension_numbers = #tpu.dot_dimension_numbers<[1], [0], [0], [1], [0, 0, 1, 1], [], []>} : vector<6x28xf32>, vector<28x240xf32>, vector<6x240xf32> -> vector<6x240xf32>
    %471 = arith.addf %453, %470 : vector<6x240xf32>
    %472 = arith.maximumf %459, %463 : vector<6x240xf32>
    %473 = arith.maximumf %467, %471 : vector<6x240xf32>
    %474 = vector.extract_strided_slice %472 {offsets = [0, 0], sizes = [6, 120], strides = [1, 1]} : vector<6x240xf32> to vector<6x120xf32>
    %475 = vector.extract_strided_slice %472 {offsets = [0, 120], sizes = [6, 120], strides = [1, 1]} : vector<6x240xf32> to vector<6x120xf32>
    %476 = arith.maximumf %474, %475 : vector<6x120xf32>
    %c0_467 = arith.constant 0 : index
    %c0_468 = arith.constant 0 : index
    %477 = vector.load %arg3[%c0_467, %c0_468] : memref<1x120xf32, #tpu.memory_space<vmem>>, vector<1x120xf32>
    %478 = vector.broadcast %477 : vector<1x120xf32> to vector<6x120xf32>
    %479 = arith.addf %476, %478 : vector<6x120xf32>
    %cst_469 = arith.constant 0.000000e+00 : f32
    %480 = vector.broadcast %cst_469 : f32 to vector<6x120xf32>
    %481 = arith.maximumf %479, %480 : vector<6x120xf32>
    %482 = vector.extract_strided_slice %473 {offsets = [0, 0], sizes = [6, 120], strides = [1, 1]} : vector<6x240xf32> to vector<6x120xf32>
    %483 = vector.extract_strided_slice %473 {offsets = [0, 120], sizes = [6, 120], strides = [1, 1]} : vector<6x240xf32> to vector<6x120xf32>
    %484 = arith.maximumf %482, %483 : vector<6x120xf32>
    %c0_470 = arith.constant 0 : index
    %c0_471 = arith.constant 0 : index
    %485 = vector.load %arg3[%c0_470, %c0_471] : memref<1x120xf32, #tpu.memory_space<vmem>>, vector<1x120xf32>
    %486 = vector.broadcast %485 : vector<1x120xf32> to vector<6x120xf32>
    %487 = arith.addf %484, %486 : vector<6x120xf32>
    %cst_472 = arith.constant 0.000000e+00 : f32
    %488 = vector.broadcast %cst_472 : f32 to vector<6x120xf32>
    %489 = arith.maximumf %487, %488 : vector<6x120xf32>
    %cst_473 = arith.constant 0.000000e+00 : f32
    %490 = vector.broadcast %cst_473 : f32 to vector<4x160xf32>
    %cst_474 = arith.constant 0.000000e+00 : f32
    %491 = vector.broadcast %cst_474 : f32 to vector<4x160xf32>
    %c0_475 = arith.constant 0 : index
    %c0_476 = arith.constant 0 : index
    %c0_477 = arith.constant 0 : index
    %492 = vector.load %arg4[%c0_475, %c0_476, %c0_477] : memref<5x120x160xf32, #tpu.memory_space<vmem>>, vector<1x120x160xf32>
    %493 = vector.shape_cast %492 : vector<1x120x160xf32> to vector<120x160xf32>
    %494 = vector.extract_strided_slice %481 {offsets = [0, 0], sizes = [4, 120], strides = [1, 1]} : vector<6x120xf32> to vector<4x120xf32>
    %cst_478 = arith.constant dense<0.000000e+00> : vector<4x160xf32>
    %495 = tpu.matmul %494, %493, %cst_478 {dimension_numbers = #tpu.dot_dimension_numbers<[1], [0], [0], [1], [0, 0, 1, 1], [], []>} : vector<4x120xf32>, vector<120x160xf32>, vector<4x160xf32> -> vector<4x160xf32>
    %496 = arith.addf %490, %495 : vector<4x160xf32>
    %497 = vector.extract_strided_slice %489 {offsets = [0, 0], sizes = [4, 120], strides = [1, 1]} : vector<6x120xf32> to vector<4x120xf32>
    %cst_479 = arith.constant dense<0.000000e+00> : vector<4x160xf32>
    %498 = tpu.matmul %497, %493, %cst_479 {dimension_numbers = #tpu.dot_dimension_numbers<[1], [0], [0], [1], [0, 0, 1, 1], [], []>} : vector<4x120xf32>, vector<120x160xf32>, vector<4x160xf32> -> vector<4x160xf32>
    %499 = arith.addf %491, %498 : vector<4x160xf32>
    %c1_480 = arith.constant 1 : index
    %c0_481 = arith.constant 0 : index
    %c0_482 = arith.constant 0 : index
    %500 = vector.load %arg4[%c1_480, %c0_481, %c0_482] : memref<5x120x160xf32, #tpu.memory_space<vmem>>, vector<1x120x160xf32>
    %501 = vector.shape_cast %500 : vector<1x120x160xf32> to vector<120x160xf32>
    %502 = vector.extract_strided_slice %489 {offsets = [0, 0], sizes = [4, 120], strides = [1, 1]} : vector<6x120xf32> to vector<4x120xf32>
    %cst_483 = arith.constant dense<0.000000e+00> : vector<4x160xf32>
    %503 = tpu.matmul %502, %501, %cst_483 {dimension_numbers = #tpu.dot_dimension_numbers<[1], [0], [0], [1], [0, 0, 1, 1], [], []>} : vector<4x120xf32>, vector<120x160xf32>, vector<4x160xf32> -> vector<4x160xf32>
    %504 = arith.addf %496, %503 : vector<4x160xf32>
    %505 = vector.extract_strided_slice %481 {offsets = [1, 0], sizes = [4, 120], strides = [1, 1]} : vector<6x120xf32> to vector<4x120xf32>
    %cst_484 = arith.constant dense<0.000000e+00> : vector<4x160xf32>
    %506 = tpu.matmul %505, %501, %cst_484 {dimension_numbers = #tpu.dot_dimension_numbers<[1], [0], [0], [1], [0, 0, 1, 1], [], []>} : vector<4x120xf32>, vector<120x160xf32>, vector<4x160xf32> -> vector<4x160xf32>
    %507 = arith.addf %499, %506 : vector<4x160xf32>
    %c2_485 = arith.constant 2 : index
    %c0_486 = arith.constant 0 : index
    %c0_487 = arith.constant 0 : index
    %508 = vector.load %arg4[%c2_485, %c0_486, %c0_487] : memref<5x120x160xf32, #tpu.memory_space<vmem>>, vector<1x120x160xf32>
    %509 = vector.shape_cast %508 : vector<1x120x160xf32> to vector<120x160xf32>
    %510 = vector.extract_strided_slice %481 {offsets = [1, 0], sizes = [4, 120], strides = [1, 1]} : vector<6x120xf32> to vector<4x120xf32>
    %cst_488 = arith.constant dense<0.000000e+00> : vector<4x160xf32>
    %511 = tpu.matmul %510, %509, %cst_488 {dimension_numbers = #tpu.dot_dimension_numbers<[1], [0], [0], [1], [0, 0, 1, 1], [], []>} : vector<4x120xf32>, vector<120x160xf32>, vector<4x160xf32> -> vector<4x160xf32>
    %512 = arith.addf %504, %511 : vector<4x160xf32>
    %513 = vector.extract_strided_slice %489 {offsets = [1, 0], sizes = [4, 120], strides = [1, 1]} : vector<6x120xf32> to vector<4x120xf32>
    %cst_489 = arith.constant dense<0.000000e+00> : vector<4x160xf32>
    %514 = tpu.matmul %513, %509, %cst_489 {dimension_numbers = #tpu.dot_dimension_numbers<[1], [0], [0], [1], [0, 0, 1, 1], [], []>} : vector<4x120xf32>, vector<120x160xf32>, vector<4x160xf32> -> vector<4x160xf32>
    %515 = arith.addf %507, %514 : vector<4x160xf32>
    %c3_490 = arith.constant 3 : index
    %c0_491 = arith.constant 0 : index
    %c0_492 = arith.constant 0 : index
    %516 = vector.load %arg4[%c3_490, %c0_491, %c0_492] : memref<5x120x160xf32, #tpu.memory_space<vmem>>, vector<1x120x160xf32>
    %517 = vector.shape_cast %516 : vector<1x120x160xf32> to vector<120x160xf32>
    %518 = vector.extract_strided_slice %489 {offsets = [1, 0], sizes = [4, 120], strides = [1, 1]} : vector<6x120xf32> to vector<4x120xf32>
    %cst_493 = arith.constant dense<0.000000e+00> : vector<4x160xf32>
    %519 = tpu.matmul %518, %517, %cst_493 {dimension_numbers = #tpu.dot_dimension_numbers<[1], [0], [0], [1], [0, 0, 1, 1], [], []>} : vector<4x120xf32>, vector<120x160xf32>, vector<4x160xf32> -> vector<4x160xf32>
    %520 = arith.addf %512, %519 : vector<4x160xf32>
    %521 = vector.extract_strided_slice %481 {offsets = [2, 0], sizes = [4, 120], strides = [1, 1]} : vector<6x120xf32> to vector<4x120xf32>
    %cst_494 = arith.constant dense<0.000000e+00> : vector<4x160xf32>
    %522 = tpu.matmul %521, %517, %cst_494 {dimension_numbers = #tpu.dot_dimension_numbers<[1], [0], [0], [1], [0, 0, 1, 1], [], []>} : vector<4x120xf32>, vector<120x160xf32>, vector<4x160xf32> -> vector<4x160xf32>
    %523 = arith.addf %515, %522 : vector<4x160xf32>
    %c4_495 = arith.constant 4 : index
    %c0_496 = arith.constant 0 : index
    %c0_497 = arith.constant 0 : index
    %524 = vector.load %arg4[%c4_495, %c0_496, %c0_497] : memref<5x120x160xf32, #tpu.memory_space<vmem>>, vector<1x120x160xf32>
    %525 = vector.shape_cast %524 : vector<1x120x160xf32> to vector<120x160xf32>
    %526 = vector.extract_strided_slice %481 {offsets = [2, 0], sizes = [4, 120], strides = [1, 1]} : vector<6x120xf32> to vector<4x120xf32>
    %cst_498 = arith.constant dense<0.000000e+00> : vector<4x160xf32>
    %527 = tpu.matmul %526, %525, %cst_498 {dimension_numbers = #tpu.dot_dimension_numbers<[1], [0], [0], [1], [0, 0, 1, 1], [], []>} : vector<4x120xf32>, vector<120x160xf32>, vector<4x160xf32> -> vector<4x160xf32>
    %528 = arith.addf %520, %527 : vector<4x160xf32>
    %529 = vector.extract_strided_slice %489 {offsets = [2, 0], sizes = [4, 120], strides = [1, 1]} : vector<6x120xf32> to vector<4x120xf32>
    %cst_499 = arith.constant dense<0.000000e+00> : vector<4x160xf32>
    %530 = tpu.matmul %529, %525, %cst_499 {dimension_numbers = #tpu.dot_dimension_numbers<[1], [0], [0], [1], [0, 0, 1, 1], [], []>} : vector<4x120xf32>, vector<120x160xf32>, vector<4x160xf32> -> vector<4x160xf32>
    %531 = arith.addf %523, %530 : vector<4x160xf32>
    %532 = arith.maximumf %528, %531 : vector<4x160xf32>
    %533 = vector.extract_strided_slice %532 {offsets = [0, 0], sizes = [4, 80], strides = [1, 1]} : vector<4x160xf32> to vector<4x80xf32>
    %534 = vector.extract_strided_slice %532 {offsets = [0, 80], sizes = [4, 80], strides = [1, 1]} : vector<4x160xf32> to vector<4x80xf32>
    %535 = arith.maximumf %533, %534 : vector<4x80xf32>
    %c0_500 = arith.constant 0 : index
    %c0_501 = arith.constant 0 : index
    %536 = vector.load %arg5[%c0_500, %c0_501] : memref<1x80xf32, #tpu.memory_space<vmem>>, vector<1x80xf32>
    %537 = vector.broadcast %536 : vector<1x80xf32> to vector<4x80xf32>
    %538 = arith.addf %535, %537 : vector<4x80xf32>
    %cst_502 = arith.constant 0.000000e+00 : f32
    %539 = vector.broadcast %cst_502 : f32 to vector<4x80xf32>
    %540 = arith.maximumf %538, %539 : vector<4x80xf32>
    %cst_503 = arith.constant 0.000000e+00 : f32
    %541 = vector.broadcast %cst_503 : f32 to vector<1x50xf32>
    %542 = vector.extract_strided_slice %540 {offsets = [0, 0], sizes = [1, 80], strides = [1, 1]} : vector<4x80xf32> to vector<1x80xf32>
    %c0_504 = arith.constant 0 : index
    %c0_505 = arith.constant 0 : index
    %c0_506 = arith.constant 0 : index
    %543 = vector.load %arg6[%c0_504, %c0_505, %c0_506] : memref<4x80x50xf32, #tpu.memory_space<vmem>>, vector<1x80x50xf32>
    %544 = vector.shape_cast %543 : vector<1x80x50xf32> to vector<80x50xf32>
    %cst_507 = arith.constant dense<0.000000e+00> : vector<1x50xf32>
    %545 = tpu.matmul %542, %544, %cst_507 {dimension_numbers = #tpu.dot_dimension_numbers<[1], [0], [0], [1], [0, 0, 1, 1], [], []>} : vector<1x80xf32>, vector<80x50xf32>, vector<1x50xf32> -> vector<1x50xf32>
    %546 = arith.addf %541, %545 : vector<1x50xf32>
    %547 = vector.extract_strided_slice %540 {offsets = [1, 0], sizes = [1, 80], strides = [1, 1]} : vector<4x80xf32> to vector<1x80xf32>
    %c1_508 = arith.constant 1 : index
    %c0_509 = arith.constant 0 : index
    %c0_510 = arith.constant 0 : index
    %548 = vector.load %arg6[%c1_508, %c0_509, %c0_510] : memref<4x80x50xf32, #tpu.memory_space<vmem>>, vector<1x80x50xf32>
    %549 = vector.shape_cast %548 : vector<1x80x50xf32> to vector<80x50xf32>
    %cst_511 = arith.constant dense<0.000000e+00> : vector<1x50xf32>
    %550 = tpu.matmul %547, %549, %cst_511 {dimension_numbers = #tpu.dot_dimension_numbers<[1], [0], [0], [1], [0, 0, 1, 1], [], []>} : vector<1x80xf32>, vector<80x50xf32>, vector<1x50xf32> -> vector<1x50xf32>
    %551 = arith.addf %546, %550 : vector<1x50xf32>
    %552 = vector.extract_strided_slice %540 {offsets = [2, 0], sizes = [1, 80], strides = [1, 1]} : vector<4x80xf32> to vector<1x80xf32>
    %c2_512 = arith.constant 2 : index
    %c0_513 = arith.constant 0 : index
    %c0_514 = arith.constant 0 : index
    %553 = vector.load %arg6[%c2_512, %c0_513, %c0_514] : memref<4x80x50xf32, #tpu.memory_space<vmem>>, vector<1x80x50xf32>
    %554 = vector.shape_cast %553 : vector<1x80x50xf32> to vector<80x50xf32>
    %cst_515 = arith.constant dense<0.000000e+00> : vector<1x50xf32>
    %555 = tpu.matmul %552, %554, %cst_515 {dimension_numbers = #tpu.dot_dimension_numbers<[1], [0], [0], [1], [0, 0, 1, 1], [], []>} : vector<1x80xf32>, vector<80x50xf32>, vector<1x50xf32> -> vector<1x50xf32>
    %556 = arith.addf %551, %555 : vector<1x50xf32>
    %557 = vector.extract_strided_slice %540 {offsets = [3, 0], sizes = [1, 80], strides = [1, 1]} : vector<4x80xf32> to vector<1x80xf32>
    %c3_516 = arith.constant 3 : index
    %c0_517 = arith.constant 0 : index
    %c0_518 = arith.constant 0 : index
    %558 = vector.load %arg6[%c3_516, %c0_517, %c0_518] : memref<4x80x50xf32, #tpu.memory_space<vmem>>, vector<1x80x50xf32>
    %559 = vector.shape_cast %558 : vector<1x80x50xf32> to vector<80x50xf32>
    %cst_519 = arith.constant dense<0.000000e+00> : vector<1x50xf32>
    %560 = tpu.matmul %557, %559, %cst_519 {dimension_numbers = #tpu.dot_dimension_numbers<[1], [0], [0], [1], [0, 0, 1, 1], [], []>} : vector<1x80xf32>, vector<80x50xf32>, vector<1x50xf32> -> vector<1x50xf32>
    %561 = arith.addf %556, %560 : vector<1x50xf32>
    %c0_520 = arith.constant 0 : index
    %c0_521 = arith.constant 0 : index
    %562 = vector.load %arg7[%c0_520, %c0_521] : memref<1x50xf32, #tpu.memory_space<vmem>>, vector<1x50xf32>
    %563 = arith.addf %561, %562 : vector<1x50xf32>
    %cst_522 = arith.constant 0.000000e+00 : f32
    %564 = vector.broadcast %cst_522 : f32 to vector<1x50xf32>
    %565 = arith.maximumf %563, %564 : vector<1x50xf32>
    %c2_523 = arith.constant 2 : index
    %c0_524 = arith.constant 0 : index
    %566 = vector.load %arg11[%c2_523, %c0_524] : memref<4x50xf32, #tpu.memory_space<vmem>>, vector<1x50xf32>
    tpu.vector_store %arg11[%c2_523, %c0_524], %565 {strides = array<i32>} : memref<4x50xf32, #tpu.memory_space<vmem>>, vector<1x50xf32>,
    %cst_525 = arith.constant 0.000000e+00 : f32
    %567 = vector.broadcast %cst_525 : f32 to vector<6x240xf32>
    %cst_526 = arith.constant 0.000000e+00 : f32
    %568 = vector.broadcast %cst_526 : f32 to vector<6x240xf32>
    %cst_527 = arith.constant 0.000000e+00 : f32
    %569 = vector.broadcast %cst_527 : f32 to vector<6x240xf32>
    %cst_528 = arith.constant 0.000000e+00 : f32
    %570 = vector.broadcast %cst_528 : f32 to vector<6x240xf32>
    %c0_529 = arith.constant 0 : index
    %c0_530 = arith.constant 0 : index
    %c0_531 = arith.constant 0 : index
    %571 = vector.load %arg2[%c0_529, %c0_530, %c0_531] : memref<5x28x240xf32, #tpu.memory_space<vmem>>, vector<1x28x240xf32>
    %572 = vector.shape_cast %571 : vector<1x28x240xf32> to vector<28x240xf32>
    %c3_532 = arith.constant 3 : index
    %c0_533 = arith.constant 0 : index
    %c0_534 = arith.constant 0 : index
    %c0_535 = arith.constant 0 : index
    %573 = vector.load %arg1[%c3_532, %c0_533, %c0_534, %c0_535] : memref<4x4x7x28xf32, #tpu.memory_space<vmem>>, vector<1x1x6x28xf32>
    %574 = vector.shape_cast %573 : vector<1x1x6x28xf32> to vector<6x28xf32>
    %cst_536 = arith.constant dense<0.000000e+00> : vector<6x240xf32>
    %575 = tpu.matmul %574, %572, %cst_536 {dimension_numbers = #tpu.dot_dimension_numbers<[1], [0], [0], [1], [0, 0, 1, 1], [], []>} : vector<6x28xf32>, vector<28x240xf32>, vector<6x240xf32> -> vector<6x240xf32>
    %576 = arith.addf %567, %575 : vector<6x240xf32>
    %c3_537 = arith.constant 3 : index
    %c1_538 = arith.constant 1 : index
    %c0_539 = arith.constant 0 : index
    %c0_540 = arith.constant 0 : index
    %577 = vector.load %arg1[%c3_537, %c1_538, %c0_539, %c0_540] : memref<4x4x7x28xf32, #tpu.memory_space<vmem>>, vector<1x1x6x28xf32>
    %578 = vector.shape_cast %577 : vector<1x1x6x28xf32> to vector<6x28xf32>
    %cst_541 = arith.constant dense<0.000000e+00> : vector<6x240xf32>
    %579 = tpu.matmul %578, %572, %cst_541 {dimension_numbers = #tpu.dot_dimension_numbers<[1], [0], [0], [1], [0, 0, 1, 1], [], []>} : vector<6x28xf32>, vector<28x240xf32>, vector<6x240xf32> -> vector<6x240xf32>
    %580 = arith.addf %568, %579 : vector<6x240xf32>
    %c3_542 = arith.constant 3 : index
    %c2_543 = arith.constant 2 : index
    %c0_544 = arith.constant 0 : index
    %c0_545 = arith.constant 0 : index
    %581 = vector.load %arg1[%c3_542, %c2_543, %c0_544, %c0_545] : memref<4x4x7x28xf32, #tpu.memory_space<vmem>>, vector<1x1x6x28xf32>
    %582 = vector.shape_cast %581 : vector<1x1x6x28xf32> to vector<6x28xf32>
    %cst_546 = arith.constant dense<0.000000e+00> : vector<6x240xf32>
    %583 = tpu.matmul %582, %572, %cst_546 {dimension_numbers = #tpu.dot_dimension_numbers<[1], [0], [0], [1], [0, 0, 1, 1], [], []>} : vector<6x28xf32>, vector<28x240xf32>, vector<6x240xf32> -> vector<6x240xf32>
    %584 = arith.addf %569, %583 : vector<6x240xf32>
    %c3_547 = arith.constant 3 : index
    %c3_548 = arith.constant 3 : index
    %c0_549 = arith.constant 0 : index
    %c0_550 = arith.constant 0 : index
    %585 = vector.load %arg1[%c3_547, %c3_548, %c0_549, %c0_550] : memref<4x4x7x28xf32, #tpu.memory_space<vmem>>, vector<1x1x6x28xf32>
    %586 = vector.shape_cast %585 : vector<1x1x6x28xf32> to vector<6x28xf32>
    %cst_551 = arith.constant dense<0.000000e+00> : vector<6x240xf32>
    %587 = tpu.matmul %586, %572, %cst_551 {dimension_numbers = #tpu.dot_dimension_numbers<[1], [0], [0], [1], [0, 0, 1, 1], [], []>} : vector<6x28xf32>, vector<28x240xf32>, vector<6x240xf32> -> vector<6x240xf32>
    %588 = arith.addf %570, %587 : vector<6x240xf32>
    %c1_552 = arith.constant 1 : index
    %c0_553 = arith.constant 0 : index
    %c0_554 = arith.constant 0 : index
    %589 = vector.load %arg2[%c1_552, %c0_553, %c0_554] : memref<5x28x240xf32, #tpu.memory_space<vmem>>, vector<1x28x240xf32>
    %590 = vector.shape_cast %589 : vector<1x28x240xf32> to vector<28x240xf32>
    %c3_555 = arith.constant 3 : index
    %c1_556 = arith.constant 1 : index
    %c0_557 = arith.constant 0 : index
    %c0_558 = arith.constant 0 : index
    %591 = vector.load %arg1[%c3_555, %c1_556, %c0_557, %c0_558] : memref<4x4x7x28xf32, #tpu.memory_space<vmem>>, vector<1x1x6x28xf32>
    %592 = vector.shape_cast %591 : vector<1x1x6x28xf32> to vector<6x28xf32>
    %cst_559 = arith.constant dense<0.000000e+00> : vector<6x240xf32>
    %593 = tpu.matmul %592, %590, %cst_559 {dimension_numbers = #tpu.dot_dimension_numbers<[1], [0], [0], [1], [0, 0, 1, 1], [], []>} : vector<6x28xf32>, vector<28x240xf32>, vector<6x240xf32> -> vector<6x240xf32>
    %594 = arith.addf %576, %593 : vector<6x240xf32>
    %c3_560 = arith.constant 3 : index
    %c2_561 = arith.constant 2 : index
    %c0_562 = arith.constant 0 : index
    %c0_563 = arith.constant 0 : index
    %595 = vector.load %arg1[%c3_560, %c2_561, %c0_562, %c0_563] : memref<4x4x7x28xf32, #tpu.memory_space<vmem>>, vector<1x1x6x28xf32>
    %596 = vector.shape_cast %595 : vector<1x1x6x28xf32> to vector<6x28xf32>
    %cst_564 = arith.constant dense<0.000000e+00> : vector<6x240xf32>
    %597 = tpu.matmul %596, %590, %cst_564 {dimension_numbers = #tpu.dot_dimension_numbers<[1], [0], [0], [1], [0, 0, 1, 1], [], []>} : vector<6x28xf32>, vector<28x240xf32>, vector<6x240xf32> -> vector<6x240xf32>
    %598 = arith.addf %580, %597 : vector<6x240xf32>
    %c3_565 = arith.constant 3 : index
    %c3_566 = arith.constant 3 : index
    %c0_567 = arith.constant 0 : index
    %c0_568 = arith.constant 0 : index
    %599 = vector.load %arg1[%c3_565, %c3_566, %c0_567, %c0_568] : memref<4x4x7x28xf32, #tpu.memory_space<vmem>>, vector<1x1x6x28xf32>
    %600 = vector.shape_cast %599 : vector<1x1x6x28xf32> to vector<6x28xf32>
    %cst_569 = arith.constant dense<0.000000e+00> : vector<6x240xf32>
    %601 = tpu.matmul %600, %590, %cst_569 {dimension_numbers = #tpu.dot_dimension_numbers<[1], [0], [0], [1], [0, 0, 1, 1], [], []>} : vector<6x28xf32>, vector<28x240xf32>, vector<6x240xf32> -> vector<6x240xf32>
    %602 = arith.addf %584, %601 : vector<6x240xf32>
    %c3_570 = arith.constant 3 : index
    %c0_571 = arith.constant 0 : index
    %c1_572 = arith.constant 1 : index
    %c0_573 = arith.constant 0 : index
    %603 = vector.load %arg1[%c3_570, %c0_571, %c1_572, %c0_573] : memref<4x4x7x28xf32, #tpu.memory_space<vmem>>, vector<1x1x6x28xf32>
    %604 = vector.shape_cast %603 : vector<1x1x6x28xf32> to vector<6x28xf32>
    %cst_574 = arith.constant dense<0.000000e+00> : vector<6x240xf32>
    %605 = tpu.matmul %604, %590, %cst_574 {dimension_numbers = #tpu.dot_dimension_numbers<[1], [0], [0], [1], [0, 0, 1, 1], [], []>} : vector<6x28xf32>, vector<28x240xf32>, vector<6x240xf32> -> vector<6x240xf32>
    %606 = arith.addf %588, %605 : vector<6x240xf32>
    %c2_575 = arith.constant 2 : index
    %c0_576 = arith.constant 0 : index
    %c0_577 = arith.constant 0 : index
    %607 = vector.load %arg2[%c2_575, %c0_576, %c0_577] : memref<5x28x240xf32, #tpu.memory_space<vmem>>, vector<1x28x240xf32>
    %608 = vector.shape_cast %607 : vector<1x28x240xf32> to vector<28x240xf32>
    %c3_578 = arith.constant 3 : index
    %c2_579 = arith.constant 2 : index
    %c0_580 = arith.constant 0 : index
    %c0_581 = arith.constant 0 : index
    %609 = vector.load %arg1[%c3_578, %c2_579, %c0_580, %c0_581] : memref<4x4x7x28xf32, #tpu.memory_space<vmem>>, vector<1x1x6x28xf32>
    %610 = vector.shape_cast %609 : vector<1x1x6x28xf32> to vector<6x28xf32>
    %cst_582 = arith.constant dense<0.000000e+00> : vector<6x240xf32>
    %611 = tpu.matmul %610, %608, %cst_582 {dimension_numbers = #tpu.dot_dimension_numbers<[1], [0], [0], [1], [0, 0, 1, 1], [], []>} : vector<6x28xf32>, vector<28x240xf32>, vector<6x240xf32> -> vector<6x240xf32>
    %612 = arith.addf %594, %611 : vector<6x240xf32>
    %c3_583 = arith.constant 3 : index
    %c3_584 = arith.constant 3 : index
    %c0_585 = arith.constant 0 : index
    %c0_586 = arith.constant 0 : index
    %613 = vector.load %arg1[%c3_583, %c3_584, %c0_585, %c0_586] : memref<4x4x7x28xf32, #tpu.memory_space<vmem>>, vector<1x1x6x28xf32>
    %614 = vector.shape_cast %613 : vector<1x1x6x28xf32> to vector<6x28xf32>
    %cst_587 = arith.constant dense<0.000000e+00> : vector<6x240xf32>
    %615 = tpu.matmul %614, %608, %cst_587 {dimension_numbers = #tpu.dot_dimension_numbers<[1], [0], [0], [1], [0, 0, 1, 1], [], []>} : vector<6x28xf32>, vector<28x240xf32>, vector<6x240xf32> -> vector<6x240xf32>
    %616 = arith.addf %598, %615 : vector<6x240xf32>
    %c3_588 = arith.constant 3 : index
    %c0_589 = arith.constant 0 : index
    %c1_590 = arith.constant 1 : index
    %c0_591 = arith.constant 0 : index
    %617 = vector.load %arg1[%c3_588, %c0_589, %c1_590, %c0_591] : memref<4x4x7x28xf32, #tpu.memory_space<vmem>>, vector<1x1x6x28xf32>
    %618 = vector.shape_cast %617 : vector<1x1x6x28xf32> to vector<6x28xf32>
    %cst_592 = arith.constant dense<0.000000e+00> : vector<6x240xf32>
    %619 = tpu.matmul %618, %608, %cst_592 {dimension_numbers = #tpu.dot_dimension_numbers<[1], [0], [0], [1], [0, 0, 1, 1], [], []>} : vector<6x28xf32>, vector<28x240xf32>, vector<6x240xf32> -> vector<6x240xf32>
    %620 = arith.addf %602, %619 : vector<6x240xf32>
    %c3_593 = arith.constant 3 : index
    %c1_594 = arith.constant 1 : index
    %c1_595 = arith.constant 1 : index
    %c0_596 = arith.constant 0 : index
    %621 = vector.load %arg1[%c3_593, %c1_594, %c1_595, %c0_596] : memref<4x4x7x28xf32, #tpu.memory_space<vmem>>, vector<1x1x6x28xf32>
    %622 = vector.shape_cast %621 : vector<1x1x6x28xf32> to vector<6x28xf32>
    %cst_597 = arith.constant dense<0.000000e+00> : vector<6x240xf32>
    %623 = tpu.matmul %622, %608, %cst_597 {dimension_numbers = #tpu.dot_dimension_numbers<[1], [0], [0], [1], [0, 0, 1, 1], [], []>} : vector<6x28xf32>, vector<28x240xf32>, vector<6x240xf32> -> vector<6x240xf32>
    %624 = arith.addf %606, %623 : vector<6x240xf32>
    %c3_598 = arith.constant 3 : index
    %c0_599 = arith.constant 0 : index
    %c0_600 = arith.constant 0 : index
    %625 = vector.load %arg2[%c3_598, %c0_599, %c0_600] : memref<5x28x240xf32, #tpu.memory_space<vmem>>, vector<1x28x240xf32>
    %626 = vector.shape_cast %625 : vector<1x28x240xf32> to vector<28x240xf32>
    %c3_601 = arith.constant 3 : index
    %c3_602 = arith.constant 3 : index
    %c0_603 = arith.constant 0 : index
    %c0_604 = arith.constant 0 : index
    %627 = vector.load %arg1[%c3_601, %c3_602, %c0_603, %c0_604] : memref<4x4x7x28xf32, #tpu.memory_space<vmem>>, vector<1x1x6x28xf32>
    %628 = vector.shape_cast %627 : vector<1x1x6x28xf32> to vector<6x28xf32>
    %cst_605 = arith.constant dense<0.000000e+00> : vector<6x240xf32>
    %629 = tpu.matmul %628, %626, %cst_605 {dimension_numbers = #tpu.dot_dimension_numbers<[1], [0], [0], [1], [0, 0, 1, 1], [], []>} : vector<6x28xf32>, vector<28x240xf32>, vector<6x240xf32> -> vector<6x240xf32>
    %630 = arith.addf %612, %629 : vector<6x240xf32>
    %c3_606 = arith.constant 3 : index
    %c0_607 = arith.constant 0 : index
    %c1_608 = arith.constant 1 : index
    %c0_609 = arith.constant 0 : index
    %631 = vector.load %arg1[%c3_606, %c0_607, %c1_608, %c0_609] : memref<4x4x7x28xf32, #tpu.memory_space<vmem>>, vector<1x1x6x28xf32>
    %632 = vector.shape_cast %631 : vector<1x1x6x28xf32> to vector<6x28xf32>
    %cst_610 = arith.constant dense<0.000000e+00> : vector<6x240xf32>
    %633 = tpu.matmul %632, %626, %cst_610 {dimension_numbers = #tpu.dot_dimension_numbers<[1], [0], [0], [1], [0, 0, 1, 1], [], []>} : vector<6x28xf32>, vector<28x240xf32>, vector<6x240xf32> -> vector<6x240xf32>
    %634 = arith.addf %616, %633 : vector<6x240xf32>
    %c3_611 = arith.constant 3 : index
    %c1_612 = arith.constant 1 : index
    %c1_613 = arith.constant 1 : index
    %c0_614 = arith.constant 0 : index
    %635 = vector.load %arg1[%c3_611, %c1_612, %c1_613, %c0_614] : memref<4x4x7x28xf32, #tpu.memory_space<vmem>>, vector<1x1x6x28xf32>
    %636 = vector.shape_cast %635 : vector<1x1x6x28xf32> to vector<6x28xf32>
    %cst_615 = arith.constant dense<0.000000e+00> : vector<6x240xf32>
    %637 = tpu.matmul %636, %626, %cst_615 {dimension_numbers = #tpu.dot_dimension_numbers<[1], [0], [0], [1], [0, 0, 1, 1], [], []>} : vector<6x28xf32>, vector<28x240xf32>, vector<6x240xf32> -> vector<6x240xf32>
    %638 = arith.addf %620, %637 : vector<6x240xf32>
    %c3_616 = arith.constant 3 : index
    %c2_617 = arith.constant 2 : index
    %c1_618 = arith.constant 1 : index
    %c0_619 = arith.constant 0 : index
    %639 = vector.load %arg1[%c3_616, %c2_617, %c1_618, %c0_619] : memref<4x4x7x28xf32, #tpu.memory_space<vmem>>, vector<1x1x6x28xf32>
    %640 = vector.shape_cast %639 : vector<1x1x6x28xf32> to vector<6x28xf32>
    %cst_620 = arith.constant dense<0.000000e+00> : vector<6x240xf32>
    %641 = tpu.matmul %640, %626, %cst_620 {dimension_numbers = #tpu.dot_dimension_numbers<[1], [0], [0], [1], [0, 0, 1, 1], [], []>} : vector<6x28xf32>, vector<28x240xf32>, vector<6x240xf32> -> vector<6x240xf32>
    %642 = arith.addf %624, %641 : vector<6x240xf32>
    %c4_621 = arith.constant 4 : index
    %c0_622 = arith.constant 0 : index
    %c0_623 = arith.constant 0 : index
    %643 = vector.load %arg2[%c4_621, %c0_622, %c0_623] : memref<5x28x240xf32, #tpu.memory_space<vmem>>, vector<1x28x240xf32>
    %644 = vector.shape_cast %643 : vector<1x28x240xf32> to vector<28x240xf32>
    %c3_624 = arith.constant 3 : index
    %c0_625 = arith.constant 0 : index
    %c1_626 = arith.constant 1 : index
    %c0_627 = arith.constant 0 : index
    %645 = vector.load %arg1[%c3_624, %c0_625, %c1_626, %c0_627] : memref<4x4x7x28xf32, #tpu.memory_space<vmem>>, vector<1x1x6x28xf32>
    %646 = vector.shape_cast %645 : vector<1x1x6x28xf32> to vector<6x28xf32>
    %cst_628 = arith.constant dense<0.000000e+00> : vector<6x240xf32>
    %647 = tpu.matmul %646, %644, %cst_628 {dimension_numbers = #tpu.dot_dimension_numbers<[1], [0], [0], [1], [0, 0, 1, 1], [], []>} : vector<6x28xf32>, vector<28x240xf32>, vector<6x240xf32> -> vector<6x240xf32>
    %648 = arith.addf %630, %647 : vector<6x240xf32>
    %c3_629 = arith.constant 3 : index
    %c1_630 = arith.constant 1 : index
    %c1_631 = arith.constant 1 : index
    %c0_632 = arith.constant 0 : index
    %649 = vector.load %arg1[%c3_629, %c1_630, %c1_631, %c0_632] : memref<4x4x7x28xf32, #tpu.memory_space<vmem>>, vector<1x1x6x28xf32>
    %650 = vector.shape_cast %649 : vector<1x1x6x28xf32> to vector<6x28xf32>
    %cst_633 = arith.constant dense<0.000000e+00> : vector<6x240xf32>
    %651 = tpu.matmul %650, %644, %cst_633 {dimension_numbers = #tpu.dot_dimension_numbers<[1], [0], [0], [1], [0, 0, 1, 1], [], []>} : vector<6x28xf32>, vector<28x240xf32>, vector<6x240xf32> -> vector<6x240xf32>
    %652 = arith.addf %634, %651 : vector<6x240xf32>
    %c3_634 = arith.constant 3 : index
    %c2_635 = arith.constant 2 : index
    %c1_636 = arith.constant 1 : index
    %c0_637 = arith.constant 0 : index
    %653 = vector.load %arg1[%c3_634, %c2_635, %c1_636, %c0_637] : memref<4x4x7x28xf32, #tpu.memory_space<vmem>>, vector<1x1x6x28xf32>
    %654 = vector.shape_cast %653 : vector<1x1x6x28xf32> to vector<6x28xf32>
    %cst_638 = arith.constant dense<0.000000e+00> : vector<6x240xf32>
    %655 = tpu.matmul %654, %644, %cst_638 {dimension_numbers = #tpu.dot_dimension_numbers<[1], [0], [0], [1], [0, 0, 1, 1], [], []>} : vector<6x28xf32>, vector<28x240xf32>, vector<6x240xf32> -> vector<6x240xf32>
    %656 = arith.addf %638, %655 : vector<6x240xf32>
    %c3_639 = arith.constant 3 : index
    %c3_640 = arith.constant 3 : index
    %c1_641 = arith.constant 1 : index
    %c0_642 = arith.constant 0 : index
    %657 = vector.load %arg1[%c3_639, %c3_640, %c1_641, %c0_642] : memref<4x4x7x28xf32, #tpu.memory_space<vmem>>, vector<1x1x6x28xf32>
    %658 = vector.shape_cast %657 : vector<1x1x6x28xf32> to vector<6x28xf32>
    %cst_643 = arith.constant dense<0.000000e+00> : vector<6x240xf32>
    %659 = tpu.matmul %658, %644, %cst_643 {dimension_numbers = #tpu.dot_dimension_numbers<[1], [0], [0], [1], [0, 0, 1, 1], [], []>} : vector<6x28xf32>, vector<28x240xf32>, vector<6x240xf32> -> vector<6x240xf32>
    %660 = arith.addf %642, %659 : vector<6x240xf32>
    %661 = arith.maximumf %648, %652 : vector<6x240xf32>
    %662 = arith.maximumf %656, %660 : vector<6x240xf32>
    %663 = vector.extract_strided_slice %661 {offsets = [0, 0], sizes = [6, 120], strides = [1, 1]} : vector<6x240xf32> to vector<6x120xf32>
    %664 = vector.extract_strided_slice %661 {offsets = [0, 120], sizes = [6, 120], strides = [1, 1]} : vector<6x240xf32> to vector<6x120xf32>
    %665 = arith.maximumf %663, %664 : vector<6x120xf32>
    %c0_644 = arith.constant 0 : index
    %c0_645 = arith.constant 0 : index
    %666 = vector.load %arg3[%c0_644, %c0_645] : memref<1x120xf32, #tpu.memory_space<vmem>>, vector<1x120xf32>
    %667 = vector.broadcast %666 : vector<1x120xf32> to vector<6x120xf32>
    %668 = arith.addf %665, %667 : vector<6x120xf32>
    %cst_646 = arith.constant 0.000000e+00 : f32
    %669 = vector.broadcast %cst_646 : f32 to vector<6x120xf32>
    %670 = arith.maximumf %668, %669 : vector<6x120xf32>
    %671 = vector.extract_strided_slice %662 {offsets = [0, 0], sizes = [6, 120], strides = [1, 1]} : vector<6x240xf32> to vector<6x120xf32>
    %672 = vector.extract_strided_slice %662 {offsets = [0, 120], sizes = [6, 120], strides = [1, 1]} : vector<6x240xf32> to vector<6x120xf32>
    %673 = arith.maximumf %671, %672 : vector<6x120xf32>
    %c0_647 = arith.constant 0 : index
    %c0_648 = arith.constant 0 : index
    %674 = vector.load %arg3[%c0_647, %c0_648] : memref<1x120xf32, #tpu.memory_space<vmem>>, vector<1x120xf32>
    %675 = vector.broadcast %674 : vector<1x120xf32> to vector<6x120xf32>
    %676 = arith.addf %673, %675 : vector<6x120xf32>
    %cst_649 = arith.constant 0.000000e+00 : f32
    %677 = vector.broadcast %cst_649 : f32 to vector<6x120xf32>
    %678 = arith.maximumf %676, %677 : vector<6x120xf32>
    %cst_650 = arith.constant 0.000000e+00 : f32
    %679 = vector.broadcast %cst_650 : f32 to vector<4x160xf32>
    %cst_651 = arith.constant 0.000000e+00 : f32
    %680 = vector.broadcast %cst_651 : f32 to vector<4x160xf32>
    %c0_652 = arith.constant 0 : index
    %c0_653 = arith.constant 0 : index
    %c0_654 = arith.constant 0 : index
    %681 = vector.load %arg4[%c0_652, %c0_653, %c0_654] : memref<5x120x160xf32, #tpu.memory_space<vmem>>, vector<1x120x160xf32>
    %682 = vector.shape_cast %681 : vector<1x120x160xf32> to vector<120x160xf32>
    %683 = vector.extract_strided_slice %670 {offsets = [0, 0], sizes = [4, 120], strides = [1, 1]} : vector<6x120xf32> to vector<4x120xf32>
    %cst_655 = arith.constant dense<0.000000e+00> : vector<4x160xf32>
    %684 = tpu.matmul %683, %682, %cst_655 {dimension_numbers = #tpu.dot_dimension_numbers<[1], [0], [0], [1], [0, 0, 1, 1], [], []>} : vector<4x120xf32>, vector<120x160xf32>, vector<4x160xf32> -> vector<4x160xf32>
    %685 = arith.addf %679, %684 : vector<4x160xf32>
    %686 = vector.extract_strided_slice %678 {offsets = [0, 0], sizes = [4, 120], strides = [1, 1]} : vector<6x120xf32> to vector<4x120xf32>
    %cst_656 = arith.constant dense<0.000000e+00> : vector<4x160xf32>
    %687 = tpu.matmul %686, %682, %cst_656 {dimension_numbers = #tpu.dot_dimension_numbers<[1], [0], [0], [1], [0, 0, 1, 1], [], []>} : vector<4x120xf32>, vector<120x160xf32>, vector<4x160xf32> -> vector<4x160xf32>
    %688 = arith.addf %680, %687 : vector<4x160xf32>
    %c1_657 = arith.constant 1 : index
    %c0_658 = arith.constant 0 : index
    %c0_659 = arith.constant 0 : index
    %689 = vector.load %arg4[%c1_657, %c0_658, %c0_659] : memref<5x120x160xf32, #tpu.memory_space<vmem>>, vector<1x120x160xf32>
    %690 = vector.shape_cast %689 : vector<1x120x160xf32> to vector<120x160xf32>
    %691 = vector.extract_strided_slice %678 {offsets = [0, 0], sizes = [4, 120], strides = [1, 1]} : vector<6x120xf32> to vector<4x120xf32>
    %cst_660 = arith.constant dense<0.000000e+00> : vector<4x160xf32>
    %692 = tpu.matmul %691, %690, %cst_660 {dimension_numbers = #tpu.dot_dimension_numbers<[1], [0], [0], [1], [0, 0, 1, 1], [], []>} : vector<4x120xf32>, vector<120x160xf32>, vector<4x160xf32> -> vector<4x160xf32>
    %693 = arith.addf %685, %692 : vector<4x160xf32>
    %694 = vector.extract_strided_slice %670 {offsets = [1, 0], sizes = [4, 120], strides = [1, 1]} : vector<6x120xf32> to vector<4x120xf32>
    %cst_661 = arith.constant dense<0.000000e+00> : vector<4x160xf32>
    %695 = tpu.matmul %694, %690, %cst_661 {dimension_numbers = #tpu.dot_dimension_numbers<[1], [0], [0], [1], [0, 0, 1, 1], [], []>} : vector<4x120xf32>, vector<120x160xf32>, vector<4x160xf32> -> vector<4x160xf32>
    %696 = arith.addf %688, %695 : vector<4x160xf32>
    %c2_662 = arith.constant 2 : index
    %c0_663 = arith.constant 0 : index
    %c0_664 = arith.constant 0 : index
    %697 = vector.load %arg4[%c2_662, %c0_663, %c0_664] : memref<5x120x160xf32, #tpu.memory_space<vmem>>, vector<1x120x160xf32>
    %698 = vector.shape_cast %697 : vector<1x120x160xf32> to vector<120x160xf32>
    %699 = vector.extract_strided_slice %670 {offsets = [1, 0], sizes = [4, 120], strides = [1, 1]} : vector<6x120xf32> to vector<4x120xf32>
    %cst_665 = arith.constant dense<0.000000e+00> : vector<4x160xf32>
    %700 = tpu.matmul %699, %698, %cst_665 {dimension_numbers = #tpu.dot_dimension_numbers<[1], [0], [0], [1], [0, 0, 1, 1], [], []>} : vector<4x120xf32>, vector<120x160xf32>, vector<4x160xf32> -> vector<4x160xf32>
    %701 = arith.addf %693, %700 : vector<4x160xf32>
    %702 = vector.extract_strided_slice %678 {offsets = [1, 0], sizes = [4, 120], strides = [1, 1]} : vector<6x120xf32> to vector<4x120xf32>
    %cst_666 = arith.constant dense<0.000000e+00> : vector<4x160xf32>
    %703 = tpu.matmul %702, %698, %cst_666 {dimension_numbers = #tpu.dot_dimension_numbers<[1], [0], [0], [1], [0, 0, 1, 1], [], []>} : vector<4x120xf32>, vector<120x160xf32>, vector<4x160xf32> -> vector<4x160xf32>
    %704 = arith.addf %696, %703 : vector<4x160xf32>
    %c3_667 = arith.constant 3 : index
    %c0_668 = arith.constant 0 : index
    %c0_669 = arith.constant 0 : index
    %705 = vector.load %arg4[%c3_667, %c0_668, %c0_669] : memref<5x120x160xf32, #tpu.memory_space<vmem>>, vector<1x120x160xf32>
    %706 = vector.shape_cast %705 : vector<1x120x160xf32> to vector<120x160xf32>
    %707 = vector.extract_strided_slice %678 {offsets = [1, 0], sizes = [4, 120], strides = [1, 1]} : vector<6x120xf32> to vector<4x120xf32>
    %cst_670 = arith.constant dense<0.000000e+00> : vector<4x160xf32>
    %708 = tpu.matmul %707, %706, %cst_670 {dimension_numbers = #tpu.dot_dimension_numbers<[1], [0], [0], [1], [0, 0, 1, 1], [], []>} : vector<4x120xf32>, vector<120x160xf32>, vector<4x160xf32> -> vector<4x160xf32>
    %709 = arith.addf %701, %708 : vector<4x160xf32>
    %710 = vector.extract_strided_slice %670 {offsets = [2, 0], sizes = [4, 120], strides = [1, 1]} : vector<6x120xf32> to vector<4x120xf32>
    %cst_671 = arith.constant dense<0.000000e+00> : vector<4x160xf32>
    %711 = tpu.matmul %710, %706, %cst_671 {dimension_numbers = #tpu.dot_dimension_numbers<[1], [0], [0], [1], [0, 0, 1, 1], [], []>} : vector<4x120xf32>, vector<120x160xf32>, vector<4x160xf32> -> vector<4x160xf32>
    %712 = arith.addf %704, %711 : vector<4x160xf32>
    %c4_672 = arith.constant 4 : index
    %c0_673 = arith.constant 0 : index
    %c0_674 = arith.constant 0 : index
    %713 = vector.load %arg4[%c4_672, %c0_673, %c0_674] : memref<5x120x160xf32, #tpu.memory_space<vmem>>, vector<1x120x160xf32>
    %714 = vector.shape_cast %713 : vector<1x120x160xf32> to vector<120x160xf32>
    %715 = vector.extract_strided_slice %670 {offsets = [2, 0], sizes = [4, 120], strides = [1, 1]} : vector<6x120xf32> to vector<4x120xf32>
    %cst_675 = arith.constant dense<0.000000e+00> : vector<4x160xf32>
    %716 = tpu.matmul %715, %714, %cst_675 {dimension_numbers = #tpu.dot_dimension_numbers<[1], [0], [0], [1], [0, 0, 1, 1], [], []>} : vector<4x120xf32>, vector<120x160xf32>, vector<4x160xf32> -> vector<4x160xf32>
    %717 = arith.addf %709, %716 : vector<4x160xf32>
    %718 = vector.extract_strided_slice %678 {offsets = [2, 0], sizes = [4, 120], strides = [1, 1]} : vector<6x120xf32> to vector<4x120xf32>
    %cst_676 = arith.constant dense<0.000000e+00> : vector<4x160xf32>
    %719 = tpu.matmul %718, %714, %cst_676 {dimension_numbers = #tpu.dot_dimension_numbers<[1], [0], [0], [1], [0, 0, 1, 1], [], []>} : vector<4x120xf32>, vector<120x160xf32>, vector<4x160xf32> -> vector<4x160xf32>
    %720 = arith.addf %712, %719 : vector<4x160xf32>
    %721 = arith.maximumf %717, %720 : vector<4x160xf32>
    %722 = vector.extract_strided_slice %721 {offsets = [0, 0], sizes = [4, 80], strides = [1, 1]} : vector<4x160xf32> to vector<4x80xf32>
    %723 = vector.extract_strided_slice %721 {offsets = [0, 80], sizes = [4, 80], strides = [1, 1]} : vector<4x160xf32> to vector<4x80xf32>
    %724 = arith.maximumf %722, %723 : vector<4x80xf32>
    %c0_677 = arith.constant 0 : index
    %c0_678 = arith.constant 0 : index
    %725 = vector.load %arg5[%c0_677, %c0_678] : memref<1x80xf32, #tpu.memory_space<vmem>>, vector<1x80xf32>
    %726 = vector.broadcast %725 : vector<1x80xf32> to vector<4x80xf32>
    %727 = arith.addf %724, %726 : vector<4x80xf32>
    %cst_679 = arith.constant 0.000000e+00 : f32
    %728 = vector.broadcast %cst_679 : f32 to vector<4x80xf32>
    %729 = arith.maximumf %727, %728 : vector<4x80xf32>
    %cst_680 = arith.constant 0.000000e+00 : f32
    %730 = vector.broadcast %cst_680 : f32 to vector<1x50xf32>
    %731 = vector.extract_strided_slice %729 {offsets = [0, 0], sizes = [1, 80], strides = [1, 1]} : vector<4x80xf32> to vector<1x80xf32>
    %c0_681 = arith.constant 0 : index
    %c0_682 = arith.constant 0 : index
    %c0_683 = arith.constant 0 : index
    %732 = vector.load %arg6[%c0_681, %c0_682, %c0_683] : memref<4x80x50xf32, #tpu.memory_space<vmem>>, vector<1x80x50xf32>
    %733 = vector.shape_cast %732 : vector<1x80x50xf32> to vector<80x50xf32>
    %cst_684 = arith.constant dense<0.000000e+00> : vector<1x50xf32>
    %734 = tpu.matmul %731, %733, %cst_684 {dimension_numbers = #tpu.dot_dimension_numbers<[1], [0], [0], [1], [0, 0, 1, 1], [], []>} : vector<1x80xf32>, vector<80x50xf32>, vector<1x50xf32> -> vector<1x50xf32>
    %735 = arith.addf %730, %734 : vector<1x50xf32>
    %736 = vector.extract_strided_slice %729 {offsets = [1, 0], sizes = [1, 80], strides = [1, 1]} : vector<4x80xf32> to vector<1x80xf32>
    %c1_685 = arith.constant 1 : index
    %c0_686 = arith.constant 0 : index
    %c0_687 = arith.constant 0 : index
    %737 = vector.load %arg6[%c1_685, %c0_686, %c0_687] : memref<4x80x50xf32, #tpu.memory_space<vmem>>, vector<1x80x50xf32>
    %738 = vector.shape_cast %737 : vector<1x80x50xf32> to vector<80x50xf32>
    %cst_688 = arith.constant dense<0.000000e+00> : vector<1x50xf32>
    %739 = tpu.matmul %736, %738, %cst_688 {dimension_numbers = #tpu.dot_dimension_numbers<[1], [0], [0], [1], [0, 0, 1, 1], [], []>} : vector<1x80xf32>, vector<80x50xf32>, vector<1x50xf32> -> vector<1x50xf32>
    %740 = arith.addf %735, %739 : vector<1x50xf32>
    %741 = vector.extract_strided_slice %729 {offsets = [2, 0], sizes = [1, 80], strides = [1, 1]} : vector<4x80xf32> to vector<1x80xf32>
    %c2_689 = arith.constant 2 : index
    %c0_690 = arith.constant 0 : index
    %c0_691 = arith.constant 0 : index
    %742 = vector.load %arg6[%c2_689, %c0_690, %c0_691] : memref<4x80x50xf32, #tpu.memory_space<vmem>>, vector<1x80x50xf32>
    %743 = vector.shape_cast %742 : vector<1x80x50xf32> to vector<80x50xf32>
    %cst_692 = arith.constant dense<0.000000e+00> : vector<1x50xf32>
    %744 = tpu.matmul %741, %743, %cst_692 {dimension_numbers = #tpu.dot_dimension_numbers<[1], [0], [0], [1], [0, 0, 1, 1], [], []>} : vector<1x80xf32>, vector<80x50xf32>, vector<1x50xf32> -> vector<1x50xf32>
    %745 = arith.addf %740, %744 : vector<1x50xf32>
    %746 = vector.extract_strided_slice %729 {offsets = [3, 0], sizes = [1, 80], strides = [1, 1]} : vector<4x80xf32> to vector<1x80xf32>
    %c3_693 = arith.constant 3 : index
    %c0_694 = arith.constant 0 : index
    %c0_695 = arith.constant 0 : index
    %747 = vector.load %arg6[%c3_693, %c0_694, %c0_695] : memref<4x80x50xf32, #tpu.memory_space<vmem>>, vector<1x80x50xf32>
    %748 = vector.shape_cast %747 : vector<1x80x50xf32> to vector<80x50xf32>
    %cst_696 = arith.constant dense<0.000000e+00> : vector<1x50xf32>
    %749 = tpu.matmul %746, %748, %cst_696 {dimension_numbers = #tpu.dot_dimension_numbers<[1], [0], [0], [1], [0, 0, 1, 1], [], []>} : vector<1x80xf32>, vector<80x50xf32>, vector<1x50xf32> -> vector<1x50xf32>
    %750 = arith.addf %745, %749 : vector<1x50xf32>
    %c0_697 = arith.constant 0 : index
    %c0_698 = arith.constant 0 : index
    %751 = vector.load %arg7[%c0_697, %c0_698] : memref<1x50xf32, #tpu.memory_space<vmem>>, vector<1x50xf32>
    %752 = arith.addf %750, %751 : vector<1x50xf32>
    %cst_699 = arith.constant 0.000000e+00 : f32
    %753 = vector.broadcast %cst_699 : f32 to vector<1x50xf32>
    %754 = arith.maximumf %752, %753 : vector<1x50xf32>
    %c3_700 = arith.constant 3 : index
    %c0_701 = arith.constant 0 : index
    %755 = vector.load %arg11[%c3_700, %c0_701] : memref<4x50xf32, #tpu.memory_space<vmem>>, vector<1x50xf32>
    tpu.vector_store %arg11[%c3_700, %c0_701], %754 {strides = array<i32>} : memref<4x50xf32, #tpu.memory_space<vmem>>, vector<1x50xf32>,
    %c0_702 = arith.constant 0 : index
    %c0_703 = arith.constant 0 : index
    %756 = vector.load %arg11[%c0_702, %c0_703] : memref<4x50xf32, #tpu.memory_space<vmem>>, vector<4x50xf32>
    %c0_704 = arith.constant 0 : index
    %c0_705 = arith.constant 0 : index
    %757 = vector.load %arg8[%c0_704, %c0_705] : memref<50x10xf32, #tpu.memory_space<vmem>>, vector<50x10xf32>
    %cst_706 = arith.constant dense<0.000000e+00> : vector<4x10xf32>
    %758 = tpu.matmul %756, %757, %cst_706 {dimension_numbers = #tpu.dot_dimension_numbers<[1], [0], [0], [1], [0, 0, 1, 1], [], []>} : vector<4x50xf32>, vector<50x10xf32>, vector<4x10xf32> -> vector<4x10xf32>
    %c0_707 = arith.constant 0 : index
    %c0_708 = arith.constant 0 : index
    %759 = vector.load %arg9[%c0_707, %c0_708] : memref<1x10xf32, #tpu.memory_space<vmem>>, vector<1x10xf32>
    %760 = vector.broadcast %759 : vector<1x10xf32> to vector<4x10xf32>
    %761 = arith.addf %758, %760 : vector<4x10xf32>
    %cst_709 = arith.constant dense<0xFF800000> : vector<4xf32>
    %762 = vector.multi_reduction <maximumf>, %761, %cst_709 [1] : vector<4x10xf32> to vector<4xf32>
    %763 = vector.shape_cast %762 : vector<4xf32> to vector<4x1xf32>
    %764 = vector.broadcast %763 : vector<4x1xf32> to vector<4x10xf32>
    %765 = arith.subf %761, %764 : vector<4x10xf32>
    %766 = math.exp %765 : vector<4x10xf32>
    %cst_710 = arith.constant dense<0.000000e+00> : vector<4xf32>
    %767 = vector.multi_reduction <add>, %766, %cst_710 [1] : vector<4x10xf32> to vector<4xf32>
    %768 = vector.shape_cast %767 : vector<4xf32> to vector<4x1xf32>
    %769 = math.log %768 : vector<4x1xf32>
    %770 = vector.broadcast %769 : vector<4x1xf32> to vector<4x10xf32>
    %771 = arith.subf %765, %770 : vector<4x10xf32>
    %c0_711 = arith.constant 0 : index
    %c0_712 = arith.constant 0 : index
    %c0_713 = arith.constant 0 : index
    %772 = vector.load %arg10[%c0_711, %c0_712, %c0_713] : memref<1x4x10xf32, #tpu.memory_space<vmem>>, vector<1x4x10xf32>
    %773 = vector.shape_cast %772 : vector<1x4x10xf32> to vector<4x10xf32>
    %774 = vector.shape_cast %771 : vector<4x10xf32> to vector<1x4x10xf32>
    tpu.vector_store %arg10[%c0_711, %c0_712, %c0_713], %774 {strides = array<i32>} : memref<1x4x10xf32, #tpu.memory_space<vmem>>, vector<1x4x10xf32>,
    return
  }
  func.func @transform_0(%arg0: i32) -> (i32, i32, i32, i32) {
    %c0_i32 = arith.constant 0 : i32
    %c0_i32_0 = arith.constant 0 : i32
    %c0_i32_1 = arith.constant 0 : i32
    %c0_i32_2 = arith.constant 0 : i32
    return %arg0, %c0_i32, %c0_i32_0, %c0_i32_1 : i32, i32, i32, i32
  }
  func.func @transform_1(%arg0: i32) -> (i32, i32, i32) {
    %c0_i32 = arith.constant 0 : i32
    %c0_i32_0 = arith.constant 0 : i32
    %c0_i32_1 = arith.constant 0 : i32
    %c0_i32_2 = arith.constant 0 : i32
    return %c0_i32, %c0_i32_0, %c0_i32_1 : i32, i32, i32
  }
  func.func @transform_2(%arg0: i32) -> (i32, i32) {
    %c0_i32 = arith.constant 0 : i32
    %c0_i32_0 = arith.constant 0 : i32
    %c0_i32_1 = arith.constant 0 : i32
    return %c0_i32, %c0_i32_0 : i32, i32
  }
  func.func @transform_3(%arg0: i32) -> (i32, i32, i32) {
    %c0_i32 = arith.constant 0 : i32
    %c0_i32_0 = arith.constant 0 : i32
    %c0_i32_1 = arith.constant 0 : i32
    %c0_i32_2 = arith.constant 0 : i32
    return %c0_i32, %c0_i32_0, %c0_i32_1 : i32, i32, i32
  }
  func.func @transform_4(%arg0: i32) -> (i32, i32) {
    %c0_i32 = arith.constant 0 : i32
    %c0_i32_0 = arith.constant 0 : i32
    %c0_i32_1 = arith.constant 0 : i32
    return %c0_i32, %c0_i32_0 : i32, i32
  }
  func.func @transform_5(%arg0: i32) -> (i32, i32, i32) {
    %c0_i32 = arith.constant 0 : i32
    %c0_i32_0 = arith.constant 0 : i32
    %c0_i32_1 = arith.constant 0 : i32
    %c0_i32_2 = arith.constant 0 : i32
    return %c0_i32, %c0_i32_0, %c0_i32_1 : i32, i32, i32
  }
  func.func @transform_6(%arg0: i32) -> (i32, i32) {
    %c0_i32 = arith.constant 0 : i32
    %c0_i32_0 = arith.constant 0 : i32
    %c0_i32_1 = arith.constant 0 : i32
    return %c0_i32, %c0_i32_0 : i32, i32
  }
  func.func @transform_7(%arg0: i32) -> (i32, i32) {
    %c0_i32 = arith.constant 0 : i32
    %c0_i32_0 = arith.constant 0 : i32
    %c0_i32_1 = arith.constant 0 : i32
    return %c0_i32, %c0_i32_0 : i32, i32
  }
  func.func @transform_8(%arg0: i32) -> (i32, i32) {
    %c0_i32 = arith.constant 0 : i32
    %c0_i32_0 = arith.constant 0 : i32
    %c0_i32_1 = arith.constant 0 : i32
    return %c0_i32, %c0_i32_0 : i32, i32
  }
  func.func @transform_9(%arg0: i32) -> (i32, i32, i32) {
    %c0_i32 = arith.constant 0 : i32
    %c0_i32_0 = arith.constant 0 : i32
    %c0_i32_1 = arith.constant 0 : i32
    return %arg0, %c0_i32, %c0_i32_0 : i32, i32, i32
  }
}

</mosaic_0001>

<llo_original>
// kernel: net_forward.1
$region0: #{net_forward.1}
  #allocation0 [shape = 'u32[]', space=smem, size = 0x4, offset = 0x4, fixed_abs, tag = 'smem constant byte address 0x4 - core index']
  #allocation1 [shape = 'u32[72,128]{1,0:T(1,128)}', space=vmem, size = 0x9000, scoped, tag = 'internal scratch']
  #allocation2 [shape = 'f32[4,50]{1,0:T(4,128)}', space=vmem, size = 0x800, scoped, tag = 'scratch operand']
  %s0 = inlined_call_operand.vmem [shape: f32[8,4,7,28], index: 0, kind: input, shape index: {}]
  %s1 = inlined_call_operand.vmem [shape: f32[5,28,240], index: 1, kind: input, shape index: {}]
  %s2 = inlined_call_operand.vmem [shape: f32[1,120], index: 2, kind: input, shape index: {}]
  %s3 = inlined_call_operand.vmem [shape: f32[5,120,160], index: 3, kind: input, shape index: {}]
  %s4 = inlined_call_operand.vmem [shape: f32[1,80], index: 4, kind: input, shape index: {}]
  %s5 = inlined_call_operand.vmem [shape: f32[4,80,50], index: 5, kind: input, shape index: {}]
  %s6 = inlined_call_operand.vmem [shape: f32[1,50], index: 6, kind: input, shape index: {}]
  %s7 = inlined_call_operand.vmem [shape: f32[50,10], index: 7, kind: input, shape index: {}]
  %s8 = inlined_call_operand.vmem [shape: f32[1,10], index: 8, kind: input, shape index: {}]
  %s9 = inlined_call_operand.hbm [shape: f32[2,4,10], index: 9, kind: output, shape index: {}]
  %s10 = sld [smem:[#allocation0]]
  $region69: #{net_forward.1} parent=0
    _
  %s12 = ssub.s32 1, %s10
  %s13 = scalar_select 0, %s12, %s10
  $region1: #{net_forward.1} parent=0
    #allocation3 [shape = 'u8[4096]{0}', space=vmem, size = 0x1000, scoped, tag = 'output window, operand 0']
    #allocation4 [shape = 's32[2]{0}', space=sflag, size = 0x8, scoped, tag = 'scoped memory for net_forward.1']
    %14 = vsyncpa [#allocation4], 0
    %s15 = scalar_lea.sflag [#allocation4], 1
    %16 = vsyncpa %s15, 0
    loop: start=0, step=1, limit=4
    $region2: #{net_forward.1} parent=1 // loop_pre_header
      _
    $region3: #{net_forward.1} parent=1 // loop_header
      %s18 = sphi 0, %s22
      %p19 = scmp.ge.s32.totalorder %s18, 4
      %s28 = sphi 0, %s30
      %s31 = sphi 0, %s28
      %s32 = sphi 0, %s31
      %s48 = sphi 0, %s32
      %s52 = sphi 0, %s52
      %s54 = sphi 0, %s52
      %s55 = sphi 0, %s54
      %s69 = sphi 0, %s55
      %s73 = sphi 0, %s73
      %s75 = sphi 0, %s73
      %s76 = sphi 0, %s75
      %s90 = sphi 0, %s76
      %s94 = sphi 0, %s94
      %s96 = sphi 0, %s94
      %s97 = sphi 0, %s96
      %s111 = sphi 0, %s97
      %s115 = sphi 0, %s115
      %s117 = sphi 0, %s115
      %s118 = sphi 0, %s117
      %s132 = sphi 0, %s118
      %s136 = sphi 0, %s136
      %s138 = sphi 0, %s136
      %s139 = sphi 0, %s138
      %s153 = sphi 0, %s139
      %s157 = sphi 0, %s157
      %s159 = sphi 0, %s157
      %s160 = sphi 0, %s159
      %s174 = sphi 0, %s160
      %s178 = sphi 0, %s178
      %s180 = sphi 0, %s178
      %s181 = sphi 0, %s180
      %s195 = sphi 0, %s181
      %s199 = sphi 0, %s199
      %s201 = sphi 0, %s199
      %s202 = sphi 0, %s201
      %s216 = sphi 0, %s202
      %s222 = sphi 0, %s224
      %s225 = sphi 0, %s222
      %s226 = sphi 0, %s225
      %s242 = sphi 0, %s226
    $region4: #{net_forward.1} parent=1 // loop_header_branch
      %21 = sbr.rel (%p19) target = $region8
    $region5: #{net_forward.1} parent=1 // loop_body
      %s23 = ssub.s32 %s18, 1
      %s24 = ssub.s32 %s18, 2
      %s25 = sadd.s32 %s18, 1
      %s26 = ssub.s32 %s18, %s25
      %p27 = scmp.eq.s32.totalorder %s26, 0
      %s29 = sadd.s32 %s28, 1
      %s30 = scalar_select %p27, %s28, %s29
      %p33 = pneg %p27
      %p34 = scmp.eq.s32.totalorder %s18, 1
      %p35 = por %p33, %p34
      %p36 = scmp.ne.s32.totalorder %s28, %s31
      %p37 = scmp.eq.s32.totalorder %s18, 0
      %p38 = por %p36, %p37
      %p39 = scmp.ne.s32.totalorder %s28, %s31
      %p40 = scmp.eq.s32.totalorder %s23, 1
      %p41 = por %p39, %p40
      %p42 = scmp.ne.s32.totalorder %s31, %s32
      %p43 = scmp.eq.s32.totalorder %s23, 0
      %p44 = por %p42, %p43
      %p45 = scmp.ne.s32.totalorder %s31, %s32
      %p46 = scmp.eq.s32.totalorder %s24, 1
      %p47 = por %p45, %p46
      %p49 = scmp.ne.s32.totalorder %s32, %s48
      %p50 = scmp.eq.s32.totalorder %s24, 0
      %p51 = por %p49, %p50
      %s53 = sadd.s32 %s52, 1
      %p56 = scmp.eq.s32.totalorder %s18, 1
      %p57 = scmp.ne.s32.totalorder %s52, %s54
      %p58 = scmp.eq.s32.totalorder %s18, 0
      %p59 = por %p57, %p58
      %p60 = scmp.ne.s32.totalorder %s52, %s54
      %p61 = scmp.eq.s32.totalorder %s23, 1
      %p62 = por %p60, %p61
      %p63 = scmp.ne.s32.totalorder %s54, %s55
      %p64 = scmp.eq.s32.totalorder %s23, 0
      %p65 = por %p63, %p64
      %p66 = scmp.ne.s32.totalorder %s54, %s55
      %p67 = scmp.eq.s32.totalorder %s24, 1
      %p68 = por %p66, %p67
      %p70 = scmp.ne.s32.totalorder %s55, %s69
      %p71 = scmp.eq.s32.totalorder %s24, 0
      %p72 = por %p70, %p71
      %s74 = sadd.s32 %s73, 1
      %p77 = scmp.eq.s32.totalorder %s18, 1
      %p78 = scmp.ne.s32.totalorder %s73, %s75
      %p79 = scmp.eq.s32.totalorder %s18, 0
      %p80 = por %p78, %p79
      %p81 = scmp.ne.s32.totalorder %s73, %s75
      %p82 = scmp.eq.s32.totalorder %s23, 1
      %p83 = por %p81, %p82
      %p84 = scmp.ne.s32.totalorder %s75, %s76
      %p85 = scmp.eq.s32.totalorder %s23, 0
      %p86 = por %p84, %p85
      %p87 = scmp.ne.s32.totalorder %s75, %s76
      %p88 = scmp.eq.s32.totalorder %s24, 1
      %p89 = por %p87, %p88
      %p91 = scmp.ne.s32.totalorder %s76, %s90
      %p92 = scmp.eq.s32.totalorder %s24, 0
      %p93 = por %p91, %p92
      %s95 = sadd.s32 %s94, 1
      %p98 = scmp.eq.s32.totalorder %s18, 1
      %p99 = scmp.ne.s32.totalorder %s94, %s96
      %p100 = scmp.eq.s32.totalorder %s18, 0
      %p101 = por %p99, %p100
      %p102 = scmp.ne.s32.totalorder %s94, %s96
      %p103 = scmp.eq.s32.totalorder %s23, 1
      %p104 = por %p102, %p103
      %p105 = scmp.ne.s32.totalorder %s96, %s97
      %p106 = scmp.eq.s32.totalorder %s23, 0
      %p107 = por %p105, %p106
      %p108 = scmp.ne.s32.totalorder %s96, %s97
      %p109 = scmp.eq.s32.totalorder %s24, 1
      %p110 = por %p108, %p109
      %p112 = scmp.ne.s32.totalorder %s97, %s111
      %p113 = scmp.eq.s32.totalorder %s24, 0
      %p114 = por %p112, %p113
      %s116 = sadd.s32 %s115, 1
      %p119 = scmp.eq.s32.totalorder %s18, 1
      %p120 = scmp.ne.s32.totalorder %s115, %s117
      %p121 = scmp.eq.s32.totalorder %s18, 0
      %p122 = por %p120, %p121
      %p123 = scmp.ne.s32.totalorder %s115, %s117
      %p124 = scmp.eq.s32.totalorder %s23, 1
      %p125 = por %p123, %p124
      %p126 = scmp.ne.s32.totalorder %s117, %s118
      %p127 = scmp.eq.s32.totalorder %s23, 0
      %p128 = por %p126, %p127
      %p129 = scmp.ne.s32.totalorder %s117, %s118
      %p130 = scmp.eq.s32.totalorder %s24, 1
      %p131 = por %p129, %p130
      %p133 = scmp.ne.s32.totalorder %s118, %s132
      %p134 = scmp.eq.s32.totalorder %s24, 0
      %p135 = por %p133, %p134
      %s137 = sadd.s32 %s136, 1
      %p140 = scmp.eq.s32.totalorder %s18, 1
      %p141 = scmp.ne.s32.totalorder %s136, %s138
      %p142 = scmp.eq.s32.totalorder %s18, 0
      %p143 = por %p141, %p142
      %p144 = scmp.ne.s32.totalorder %s136, %s138
      %p145 = scmp.eq.s32.totalorder %s23, 1
      %p146 = por %p144, %p145
      %p147 = scmp.ne.s32.totalorder %s138, %s139
      %p148 = scmp.eq.s32.totalorder %s23, 0
      %p149 = por %p147, %p148
      %p150 = scmp.ne.s32.totalorder %s138, %s139
      %p151 = scmp.eq.s32.totalorder %s24, 1
      %p152 = por %p150, %p151
      %p154 = scmp.ne.s32.totalorder %s139, %s153
      %p155 = scmp.eq.s32.totalorder %s24, 0
      %p156 = por %p154, %p155
      %s158 = sadd.s32 %s157, 1
      %p161 = scmp.eq.s32.totalorder %s18, 1
      %p162 = scmp.ne.s32.totalorder %s157, %s159
      %p163 = scmp.eq.s32.totalorder %s18, 0
      %p164 = por %p162, %p163
      %p165 = scmp.ne.s32.totalorder %s157, %s159
      %p166 = scmp.eq.s32.totalorder %s23, 1
      %p167 = por %p165, %p166
      %p168 = scmp.ne.s32.totalorder %s159, %s160
      %p169 = scmp.eq.s32.totalorder %s23, 0
      %p170 = por %p168, %p169
      %p171 = scmp.ne.s32.totalorder %s159, %s160
      %p172 = scmp.eq.s32.totalorder %s24, 1
      %p173 = por %p171, %p172
      %p175 = scmp.ne.s32.totalorder %s160, %s174
      %p176 = scmp.eq.s32.totalorder %s24, 0
      %p177 = por %p175, %p176
      %s179 = sadd.s32 %s178, 1
      %p182 = scmp.eq.s32.totalorder %s18, 1
      %p183 = scmp.ne.s32.totalorder %s178, %s180
      %p184 = scmp.eq.s32.totalorder %s18, 0
      %p185 = por %p183, %p184
      %p186 = scmp.ne.s32.totalorder %s178, %s180
      %p187 = scmp.eq.s32.totalorder %s23, 1
      %p188 = por %p186, %p187
      %p189 = scmp.ne.s32.totalorder %s180, %s181
      %p190 = scmp.eq.s32.totalorder %s23, 0
      %p191 = por %p189, %p190
      %p192 = scmp.ne.s32.totalorder %s180, %s181
      %p193 = scmp.eq.s32.totalorder %s24, 1
      %p194 = por %p192, %p193
      %p196 = scmp.ne.s32.totalorder %s181, %s195
      %p197 = scmp.eq.s32.totalorder %s24, 0
      %p198 = por %p196, %p197
      %s200 = sadd.s32 %s199, 1
      %p203 = scmp.eq.s32.totalorder %s18, 1
      %p204 = scmp.ne.s32.totalorder %s199, %s201
      %p205 = scmp.eq.s32.totalorder %s18, 0
      %p206 = por %p204, %p205
      %p207 = scmp.ne.s32.totalorder %s199, %s201
      %p208 = scmp.eq.s32.totalorder %s23, 1
      %p209 = por %p207, %p208
      %p210 = scmp.ne.s32.totalorder %s201, %s202
      %p211 = scmp.eq.s32.totalorder %s23, 0
      %p212 = por %p210, %p211
      %p213 = scmp.ne.s32.totalorder %s201, %s202
      %p214 = scmp.eq.s32.totalorder %s24, 1
      %p215 = por %p213, %p214
      %p217 = scmp.ne.s32.totalorder %s202, %s216
      %p218 = scmp.eq.s32.totalorder %s24, 0
      %p219 = por %p217, %p218
      %s220 = ssub.s32 %s18, %s25
      %p221 = scmp.eq.s32.totalorder %s220, 0
      %s223 = sadd.s32 %s222, 1
      %s224 = scalar_select %p221, %s222, %s223
      %p227 = pneg %p221
      %p228 = scmp.eq.s32.totalorder %s18, 1
      %p229 = por %p227, %p228
      %p230 = scmp.ne.s32.totalorder %s222, %s225
      %p231 = scmp.eq.s32.totalorder %s18, 0
      %p232 = por %p230, %p231
      %p233 = scmp.ne.s32.totalorder %s222, %s225
      %p234 = scmp.eq.s32.totalorder %s23, 1
      %p235 = por %p233, %p234
      %p236 = scmp.ne.s32.totalorder %s225, %s226
      %p237 = scmp.eq.s32.totalorder %s23, 0
      %p238 = por %p236, %p237
      %p239 = scmp.ne.s32.totalorder %s225, %s226
      %p240 = scmp.eq.s32.totalorder %s24, 1
      %p241 = por %p239, %p240
      %p243 = scmp.ne.s32.totalorder %s226, %s242
      %p244 = scmp.eq.s32.totalorder %s24, 0
      %p245 = por %p243, %p244
      %p246 = scmp.le.s32.totalorder 1, %s18
      %p247 = scmp.lt.s32.totalorder %s18, 3
      %p248 = pnand %p246, %p247
      %p249 = pneg %p248
      // Predicated region
      $region9: #{net_forward.1} parent=5 // pred_check
        _
      $region10: #{net_forward.1} parent=5 // pred_check_branch
        %251 = sbr.rel (%p248) target = $region12
      $region11: #{net_forward.1} parent=5 // pred_region
        %s252 = ssub.s32 %s18, 1
        // Predicated region
        $region13: #{net_forward.1} parent=11 // pred_check
          %p253 = pneg %p65
        $region14: #{net_forward.1} parent=11 // pred_check_branch
          %255 = sbr.rel (%p253) target = $region16
        $region15: #{net_forward.1} parent=11 // pred_region
          _
        $region16: #{net_forward.1} parent=11 // pred_fallthru
          _
        // Predicated region
        $region17: #{net_forward.1} parent=11 // pred_check
          %p256 = pneg %p86
        $region18: #{net_forward.1} parent=11 // pred_check_branch
          %258 = sbr.rel (%p256) target = $region20
        $region19: #{net_forward.1} parent=11 // pred_region
          _
        $region20: #{net_forward.1} parent=11 // pred_fallthru
          _
        // Predicated region
        $region21: #{net_forward.1} parent=11 // pred_check
          %p259 = pneg %p107
        $region22: #{net_forward.1} parent=11 // pred_check_branch
          %261 = sbr.rel (%p259) target = $region24
        $region23: #{net_forward.1} parent=11 // pred_region
          _
        $region24: #{net_forward.1} parent=11 // pred_fallthru
          _
        // Predicated region
        $region25: #{net_forward.1} parent=11 // pred_check
          %p262 = pneg %p128
        $region26: #{net_forward.1} parent=11 // pred_check_branch
          %264 = sbr.rel (%p262) target = $region28
        $region27: #{net_forward.1} parent=11 // pred_region
          _
        $region28: #{net_forward.1} parent=11 // pred_fallthru
          _
        // Predicated region
        $region29: #{net_forward.1} parent=11 // pred_check
          %p265 = pneg %p149
        $region30: #{net_forward.1} parent=11 // pred_check_branch
          %267 = sbr.rel (%p265) target = $region32
        $region31: #{net_forward.1} parent=11 // pred_region
          _
        $region32: #{net_forward.1} parent=11 // pred_fallthru
          _
        // Predicated region
        $region33: #{net_forward.1} parent=11 // pred_check
          %p268 = pneg %p170
        $region34: #{net_forward.1} parent=11 // pred_check_branch
          %270 = sbr.rel (%p268) target = $region36
        $region35: #{net_forward.1} parent=11 // pred_region
          _
        $region36: #{net_forward.1} parent=11 // pred_fallthru
          _
        // Predicated region
        $region37: #{net_forward.1} parent=11 // pred_check
          %p271 = pneg %p191
        $region38: #{net_forward.1} parent=11 // pred_check_branch
          %273 = sbr.rel (%p271) target = $region40
        $region39: #{net_forward.1} parent=11 // pred_region
          _
        $region40: #{net_forward.1} parent=11 // pred_fallthru
          _
        // Predicated region
        $region41: #{net_forward.1} parent=11 // pred_check
          %p274 = pneg %p212
        $region42: #{net_forward.1} parent=11 // pred_check_branch
          %276 = sbr.rel (%p274) target = $region44
        $region43: #{net_forward.1} parent=11 // pred_region
          _
        $region44: #{net_forward.1} parent=11 // pred_fallthru
          _
      $region12: #{net_forward.1} parent=5 // pred_fallthru
        _
      %p277 = scmp.lt.s32.totalorder %s18, 2
      // Predicated region
      $region45: #{net_forward.1} parent=5 // pred_check
        %p278 = pneg %p277
      $region46: #{net_forward.1} parent=5 // pred_check_branch
        %280 = sbr.rel (%p278) target = $region48
      $region47: #{net_forward.1} parent=5 // pred_region
        // Predicated region
        $region49: #{net_forward.1} parent=47 // pred_check
          %p281 = pneg %p38
        $region50: #{net_forward.1} parent=47 // pred_check_branch
          %283 = sbr.rel (%p281) target = $region52
        $region51: #{net_forward.1} parent=47 // pred_region
          %s284 = smul.u32 4, %s18
          %p285 = scmp.lt.s32.totalorder %s284, 7
          %s286 = scalar_select %p285, %s284, 7
          %s287 = smul.addr %s286, 4
          %s288 = smul.addr %s287, 8
          %s289 = scalar_lea.vmem %s0, %s288
          %s290 = smul.u32 4, %s18
        $region52: #{net_forward.1} parent=47 // pred_fallthru
          _
      $region48: #{net_forward.1} parent=5 // pred_fallthru
        _
      %p291 = scmp.le.s32.totalorder 1, %s18
      %p292 = scmp.lt.s32.totalorder %s18, 3
      %p293 = pnand %p291, %p292
      %p294 = pneg %p293
      // Predicated region
      $region53: #{net_forward.1} parent=5 // pred_check
        _
      $region54: #{net_forward.1} parent=5 // pred_check_branch
        %296 = sbr.rel (%p293) target = $region56
      $region55: #{net_forward.1} parent=5 // pred_region
        %s297 = ssub.s32 %s18, 1
        %s298 = smul.u32 4, %s23
        %p299 = scmp.lt.s32.totalorder %s298, 7
        %s300 = scalar_select %p299, %s298, 7
        %s301 = smul.addr %s300, 4
        %s302 = smul.addr %s301, 8
        %s303 = scalar_lea.vmem %s0, %s302
        %p304 = pneg %p44
        %p305 = pneg %p41
        %p306 = pneg %p65
        %p307 = pneg %p62
        %p308 = pneg %p86
        %p309 = pneg %p83
        %p310 = pneg %p107
        %p311 = pneg %p104
        %p312 = pneg %p128
        %p313 = pneg %p125
        %p314 = pneg %p149
        %p315 = pneg %p146
        %p316 = pneg %p170
        %p317 = pneg %p167
        %p318 = pneg %p191
        %p319 = pneg %p188
        %p320 = pneg %p212
        %p321 = pneg %p209
        %p322 = pneg %p238
        %p323 = pneg %p235
        %s324 = sand.u32 %s225, 1
        %s325 = scalar_lea.sflag [#allocation4], %s324
        %s326 = sand.u32 %s225, 1
        %s327 = smul.addr %s326, 4
        %s328 = scalar_lea.vmem [#allocation3], %s327
        %s329 = smul.u32 4, %s23
        %p330 = scmp.lt.s32.totalorder %s329, 7
        %s331 = scalar_select %p330, %s329, 7
        %s332 = smul.addr %s331, 4
        %s333 = smul.addr %s332, 8
        %s334 = scalar_lea.vmem %s0, %s333
        %s335 = smul.u32 4, %s23
        %v336 = vld [vmem:[%s1] sm:$0xff]
        %v337 = vld [vmem:[%s1 + $0x8] sm:$0xff]
        %v338 = vld [vmem:[%s1 + $0x10] sm:$0xff]
        %v339 = vld [vmem:[%s1 + $0x18] sm:$0xff]
        %v340 = vld [vmem:[%s1 + $0x20] sm:$0xff]
        %v341 = vld [vmem:[%s1 + $0x28] sm:$0xff]
        %v342 = vld [vmem:[%s1 + $0x30] sm:$0xf]
        %v343 = vld [vmem:[%s1 + $0x38] sm:$0xf]
        %v344 = vld [vmem:[%s334] sm:$0x3f]
        %s345 = scalar_lea.vmem %s334, 8
        %v346 = vld [vmem:[%s345] sm:$0x3f]
        %s347 = scalar_lea.vmem %s334, 16
        %v348 = vld [vmem:[%s347] sm:$0x3f]
        %s349 = scalar_lea.vmem %s334, 24
        %v350 = vld [vmem:[%s349] sm:$0x3f]
        %s351 = scalar_lea.vmem %s1, 64
        %v352 = vld [vmem:[%s351] sm:$0xff]
        %v353 = vld [vmem:[%s351 + $0x8] sm:$0xff]
        %v354 = vld [vmem:[%s351 + $0x10] sm:$0xff]
        %v355 = vld [vmem:[%s351 + $0x18] sm:$0xff]
        %v356 = vld [vmem:[%s351 + $0x20] sm:$0xff]
        %v357 = vld [vmem:[%s351 + $0x28] sm:$0xff]
        %v358 = vld [vmem:[%s351 + $0x30] sm:$0xf]
        %v359 = vld [vmem:[%s351 + $0x38] sm:$0xf]
        %vm360 = vcmask 228352
        %v362 = vsel %vm360, %v346, 0
        %vm364 = vcmask 1043456
        %v366 = vsel %vm364, %v358, 0
        %v369 = vsel %vm364, %v359, 0
        %371 = vmatpush.msra.mxu0 0.0
        %372 = vmatpush.msra.mxu0 0.0
        %373 = vmatpush.msra.mxu0 0.0
        %374 = vmatpush.msra.mxu0 0.0
        %375 = vmatpush.msra.mxu0 0.0
        %376 = vmatpush.msra.mxu0 0.0
        %377 = vmatpush.msra.mxu0 0.0
        %378 = vmatpush.msra.mxu0 0.0
        %379 = vmatpush.msra.mxu0 0.0
        %380 = vmatpush.msra.mxu0 0.0
        %381 = vmatpush.msra.mxu0 0.0
        %382 = vmatpush.msra.mxu0 0.0
        %383 = vmatpush.msra.mxu0 %v366
        %384 = vmatpush.msra.mxu0 %v356
        %385 = vmatpush.msra.mxu0 %v354
        %386 = vmatpush.msra.mxu0 %v352
        %387 = vmatmul.f32.gmra.mxu0 %v362
        %v388 = vpop.f32.mrf.mxu0
        %v389 = vadd.f32 0.0, %v388
        %390 = vdwg.mxu0
        %391 = vmatpush.msra.mxu0 0.0
        %392 = vmatpush.msra.mxu0 0.0
        %393 = vmatpush.msra.mxu0 0.0
        %394 = vmatpush.msra.mxu0 0.0
        %395 = vmatpush.msra.mxu0 0.0
        %396 = vmatpush.msra.mxu0 0.0
        %397 = vmatpush.msra.mxu0 0.0
        %398 = vmatpush.msra.mxu0 0.0
        %399 = vmatpush.msra.mxu0 0.0
        %400 = vmatpush.msra.mxu0 0.0
        %401 = vmatpush.msra.mxu0 0.0
        %402 = vmatpush.msra.mxu0 0.0
        %403 = vmatpush.msra.mxu0 %v369
        %404 = vmatpush.msra.mxu0 %v357
        %405 = vmatpush.msra.mxu0 %v355
        %406 = vmatpush.msra.mxu0 %v353
        %407 = vmatmul.f32.gmra.mxu0 %v362
        %v408 = vpop.f32.mrf.mxu0
        %v409 = vadd.f32 0.0, %v408
        %410 = vdwg.mxu0
        %v412 = vsel %vm360, %v344, 0
        %v415 = vsel %vm364, %v342, 0
        %v418 = vsel %vm364, %v343, 0
        %420 = vmatpush.msra.mxu0 0.0
        %421 = vmatpush.msra.mxu0 0.0
        %422 = vmatpush.msra.mxu0 0.0
        %423 = vmatpush.msra.mxu0 0.0
        %424 = vmatpush.msra.mxu0 0.0
        %425 = vmatpush.msra.mxu0 0.0
        %426 = vmatpush.msra.mxu0 0.0
        %427 = vmatpush.msra.mxu0 0.0
        %428 = vmatpush.msra.mxu0 0.0
        %429 = vmatpush.msra.mxu0 0.0
        %430 = vmatpush.msra.mxu0 0.0
        %431 = vmatpush.msra.mxu0 0.0
        %432 = vmatpush.msra.mxu0 %v415
        %433 = vmatpush.msra.mxu0 %v340
        %434 = vmatpush.msra.mxu0 %v338
        %435 = vmatpush.msra.mxu0 %v336
        %436 = vmatmul.f32.gmra.mxu0 %v412
        %v437 = vpop.f32.mrf.mxu0
        %v438 = vadd.f32 %v389, %v437
        %439 = vdwg.mxu0
        %440 = vmatpush.msra.mxu0 0.0
        %441 = vmatpush.msra.mxu0 0.0
        %442 = vmatpush.msra.mxu0 0.0
        %443 = vmatpush.msra.mxu0 0.0
        %444 = vmatpush.msra.mxu0 0.0
        %445 = vmatpush.msra.mxu0 0.0
        %446 = vmatpush.msra.mxu0 0.0
        %447 = vmatpush.msra.mxu0 0.0
        %448 = vmatpush.msra.mxu0 0.0
        %449 = vmatpush.msra.mxu0 0.0
        %450 = vmatpush.msra.mxu0 0.0
        %451 = vmatpush.msra.mxu0 0.0
        %452 = vmatpush.msra.mxu0 %v418
        %453 = vmatpush.msra.mxu0 %v341
        %454 = vmatpush.msra.mxu0 %v339
        %455 = vmatpush.msra.mxu0 %v337
        %456 = vmatmul.f32.gmra.mxu0 %v412
        %v457 = vpop.f32.mrf.mxu0
        %v458 = vadd.f32 %v409, %v457
        %459 = vdwg.mxu0
        %v461 = vsel %vm360, %v348, 0
        %463 = vmatpush.msra.mxu0 0.0
        %464 = vmatpush.msra.mxu0 0.0
        %465 = vmatpush.msra.mxu0 0.0
        %466 = vmatpush.msra.mxu0 0.0
        %467 = vmatpush.msra.mxu0 0.0
        %468 = vmatpush.msra.mxu0 0.0
        %469 = vmatpush.msra.mxu0 0.0
        %470 = vmatpush.msra.mxu0 0.0
        %471 = vmatpush.msra.mxu0 0.0
        %472 = vmatpush.msra.mxu0 0.0
        %473 = vmatpush.msra.mxu0 0.0
        %474 = vmatpush.msra.mxu0 0.0
        %475 = vmatpush.msra.mxu0 %v366
        %476 = vmatpush.msra.mxu0 %v356
        %477 = vmatpush.msra.mxu0 %v354
        %478 = vmatpush.msra.mxu0 %v352
        %479 = vmatmul.f32.gmra.mxu0 %v461
        %v480 = vpop.f32.mrf.mxu0
        %v481 = vadd.f32 0.0, %v480
        %482 = vdwg.mxu0
        %483 = vmatpush.msra.mxu0 0.0
        %484 = vmatpush.msra.mxu0 0.0
        %485 = vmatpush.msra.mxu0 0.0
        %486 = vmatpush.msra.mxu0 0.0
        %487 = vmatpush.msra.mxu0 0.0
        %488 = vmatpush.msra.mxu0 0.0
        %489 = vmatpush.msra.mxu0 0.0
        %490 = vmatpush.msra.mxu0 0.0
        %491 = vmatpush.msra.mxu0 0.0
        %492 = vmatpush.msra.mxu0 0.0
        %493 = vmatpush.msra.mxu0 0.0
        %494 = vmatpush.msra.mxu0 0.0
        %495 = vmatpush.msra.mxu0 %v369
        %496 = vmatpush.msra.mxu0 %v357
        %497 = vmatpush.msra.mxu0 %v355
        %498 = vmatpush.msra.mxu0 %v353
        %499 = vmatmul.f32.gmra.mxu0 %v461
        %v500 = vpop.f32.mrf.mxu0
        %v501 = vadd.f32 0.0, %v500
        %502 = vdwg.mxu0
        %503 = vmatpush.msra.mxu0 0.0
        %504 = vmatpush.msra.mxu0 0.0
        %505 = vmatpush.msra.mxu0 0.0
        %506 = vmatpush.msra.mxu0 0.0
        %507 = vmatpush.msra.mxu0 0.0
        %508 = vmatpush.msra.mxu0 0.0
        %509 = vmatpush.msra.mxu0 0.0
        %510 = vmatpush.msra.mxu0 0.0
        %511 = vmatpush.msra.mxu0 0.0
        %512 = vmatpush.msra.mxu0 0.0
        %513 = vmatpush.msra.mxu0 0.0
        %514 = vmatpush.msra.mxu0 0.0
        %515 = vmatpush.msra.mxu0 %v415
        %516 = vmatpush.msra.mxu0 %v340
        %517 = vmatpush.msra.mxu0 %v338
        %518 = vmatpush.msra.mxu0 %v336
        %519 = vmatmul.f32.gmra.mxu0 %v362
        %v520 = vpop.f32.mrf.mxu0
        %v521 = vadd.f32 %v481, %v520
        %522 = vdwg.mxu0
        %523 = vmatpush.msra.mxu0 0.0
        %524 = vmatpush.msra.mxu0 0.0
        %525 = vmatpush.msra.mxu0 0.0
        %526 = vmatpush.msra.mxu0 0.0
        %527 = vmatpush.msra.mxu0 0.0
        %528 = vmatpush.msra.mxu0 0.0
        %529 = vmatpush.msra.mxu0 0.0
        %530 = vmatpush.msra.mxu0 0.0
        %531 = vmatpush.msra.mxu0 0.0
        %532 = vmatpush.msra.mxu0 0.0
        %533 = vmatpush.msra.mxu0 0.0
        %534 = vmatpush.msra.mxu0 0.0
        %535 = vmatpush.msra.mxu0 %v418
        %536 = vmatpush.msra.mxu0 %v341
        %537 = vmatpush.msra.mxu0 %v339
        %538 = vmatpush.msra.mxu0 %v337
        %539 = vmatmul.f32.gmra.mxu0 %v362
        %v540 = vpop.f32.mrf.mxu0
        %v541 = vadd.f32 %v501, %v540
        %542 = vdwg.mxu0
        %v544 = vsel %vm360, %v350, 0
        %546 = vmatpush.msra.mxu0 0.0
        %547 = vmatpush.msra.mxu0 0.0
        %548 = vmatpush.msra.mxu0 0.0
        %549 = vmatpush.msra.mxu0 0.0
        %550 = vmatpush.msra.mxu0 0.0
        %551 = vmatpush.msra.mxu0 0.0
        %552 = vmatpush.msra.mxu0 0.0
        %553 = vmatpush.msra.mxu0 0.0
        %554 = vmatpush.msra.mxu0 0.0
        %555 = vmatpush.msra.mxu0 0.0
        %556 = vmatpush.msra.mxu0 0.0
        %557 = vmatpush.msra.mxu0 0.0
        %558 = vmatpush.msra.mxu0 %v366
        %559 = vmatpush.msra.mxu0 %v356
        %560 = vmatpush.msra.mxu0 %v354
        %561 = vmatpush.msra.mxu0 %v352
        %562 = vmatmul.f32.gmra.mxu0 %v544
        %v563 = vpop.f32.mrf.mxu0
        %v564 = vadd.f32 0.0, %v563
        %565 = vdwg.mxu0
        %566 = vmatpush.msra.mxu0 0.0
        %567 = vmatpush.msra.mxu0 0.0
        %568 = vmatpush.msra.mxu0 0.0
        %569 = vmatpush.msra.mxu0 0.0
        %570 = vmatpush.msra.mxu0 0.0
        %571 = vmatpush.msra.mxu0 0.0
        %572 = vmatpush.msra.mxu0 0.0
        %573 = vmatpush.msra.mxu0 0.0
        %574 = vmatpush.msra.mxu0 0.0
        %575 = vmatpush.msra.mxu0 0.0
        %576 = vmatpush.msra.mxu0 0.0
        %577 = vmatpush.msra.mxu0 0.0
        %578 = vmatpush.msra.mxu0 %v369
        %579 = vmatpush.msra.mxu0 %v357
        %580 = vmatpush.msra.mxu0 %v355
        %581 = vmatpush.msra.mxu0 %v353
        %582 = vmatmul.f32.gmra.mxu0 %v544
        %v583 = vpop.f32.mrf.mxu0
        %v584 = vadd.f32 0.0, %v583
        %585 = vdwg.mxu0
        %586 = vmatpush.msra.mxu0 0.0
        %587 = vmatpush.msra.mxu0 0.0
        %588 = vmatpush.msra.mxu0 0.0
        %589 = vmatpush.msra.mxu0 0.0
        %590 = vmatpush.msra.mxu0 0.0
        %591 = vmatpush.msra.mxu0 0.0
        %592 = vmatpush.msra.mxu0 0.0
        %593 = vmatpush.msra.mxu0 0.0
        %594 = vmatpush.msra.mxu0 0.0
        %595 = vmatpush.msra.mxu0 0.0
        %596 = vmatpush.msra.mxu0 0.0
        %597 = vmatpush.msra.mxu0 0.0
        %598 = vmatpush.msra.mxu0 %v415
        %599 = vmatpush.msra.mxu0 %v340
        %600 = vmatpush.msra.mxu0 %v338
        %601 = vmatpush.msra.mxu0 %v336
        %602 = vmatmul.f32.gmra.mxu0 %v461
        %v603 = vpop.f32.mrf.mxu0
        %v604 = vadd.f32 %v564, %v603
        %605 = vdwg.mxu0
        %606 = vmatpush.msra.mxu0 0.0
        %607 = vmatpush.msra.mxu0 0.0
        %608 = vmatpush.msra.mxu0 0.0
        %609 = vmatpush.msra.mxu0 0.0
        %610 = vmatpush.msra.mxu0 0.0
        %611 = vmatpush.msra.mxu0 0.0
        %612 = vmatpush.msra.mxu0 0.0
        %613 = vmatpush.msra.mxu0 0.0
        %614 = vmatpush.msra.mxu0 0.0
        %615 = vmatpush.msra.mxu0 0.0
        %616 = vmatpush.msra.mxu0 0.0
        %617 = vmatpush.msra.mxu0 0.0
        %618 = vmatpush.msra.mxu0 %v418
        %619 = vmatpush.msra.mxu0 %v341
        %620 = vmatpush.msra.mxu0 %v339
        %621 = vmatpush.msra.mxu0 %v337
        %622 = vmatmul.f32.gmra.mxu0 %v461
        %v623 = vpop.f32.mrf.mxu0
        %v624 = vadd.f32 %v584, %v623
        %625 = vdwg.mxu0
        %v626 = vld [vmem:[%s334 + $0x1] sm:$0x3f]
        %v628 = vsel %vm360, %v626, 0
        %630 = vmatpush.msra.mxu0 0.0
        %631 = vmatpush.msra.mxu0 0.0
        %632 = vmatpush.msra.mxu0 0.0
        %633 = vmatpush.msra.mxu0 0.0
        %634 = vmatpush.msra.mxu0 0.0
        %635 = vmatpush.msra.mxu0 0.0
        %636 = vmatpush.msra.mxu0 0.0
        %637 = vmatpush.msra.mxu0 0.0
        %638 = vmatpush.msra.mxu0 0.0
        %639 = vmatpush.msra.mxu0 0.0
        %640 = vmatpush.msra.mxu0 0.0
        %641 = vmatpush.msra.mxu0 0.0
        %642 = vmatpush.msra.mxu0 %v366
        %643 = vmatpush.msra.mxu0 %v356
        %644 = vmatpush.msra.mxu0 %v354
        %645 = vmatpush.msra.mxu0 %v352
        %646 = vmatmul.f32.gmra.mxu0 %v628
        %v647 = vpop.f32.mrf.mxu0
        %v648 = vadd.f32 0.0, %v647
        %649 = vdwg.mxu0
        %650 = vmatpush.msra.mxu0 0.0
        %651 = vmatpush.msra.mxu0 0.0
        %652 = vmatpush.msra.mxu0 0.0
        %653 = vmatpush.msra.mxu0 0.0
        %654 = vmatpush.msra.mxu0 0.0
        %655 = vmatpush.msra.mxu0 0.0
        %656 = vmatpush.msra.mxu0 0.0
        %657 = vmatpush.msra.mxu0 0.0
        %658 = vmatpush.msra.mxu0 0.0
        %659 = vmatpush.msra.mxu0 0.0
        %660 = vmatpush.msra.mxu0 0.0
        %661 = vmatpush.msra.mxu0 0.0
        %662 = vmatpush.msra.mxu0 %v369
        %663 = vmatpush.msra.mxu0 %v357
        %664 = vmatpush.msra.mxu0 %v355
        %665 = vmatpush.msra.mxu0 %v353
        %666 = vmatmul.f32.gmra.mxu0 %v628
        %v667 = vpop.f32.mrf.mxu0
        %v668 = vadd.f32 0.0, %v667
        %669 = vdwg.mxu0
        %670 = vmatpush.msra.mxu0 0.0
        %671 = vmatpush.msra.mxu0 0.0
        %672 = vmatpush.msra.mxu0 0.0
        %673 = vmatpush.msra.mxu0 0.0
        %674 = vmatpush.msra.mxu0 0.0
        %675 = vmatpush.msra.mxu0 0.0
        %676 = vmatpush.msra.mxu0 0.0
        %677 = vmatpush.msra.mxu0 0.0
        %678 = vmatpush.msra.mxu0 0.0
        %679 = vmatpush.msra.mxu0 0.0
        %680 = vmatpush.msra.mxu0 0.0
        %681 = vmatpush.msra.mxu0 0.0
        %682 = vmatpush.msra.mxu0 %v415
        %683 = vmatpush.msra.mxu0 %v340
        %684 = vmatpush.msra.mxu0 %v338
        %685 = vmatpush.msra.mxu0 %v336
        %686 = vmatmul.f32.gmra.mxu0 %v544
        %v687 = vpop.f32.mrf.mxu0
        %v688 = vadd.f32 %v648, %v687
        %689 = vdwg.mxu0
        %690 = vmatpush.msra.mxu0 0.0
        %691 = vmatpush.msra.mxu0 0.0
        %692 = vmatpush.msra.mxu0 0.0
        %693 = vmatpush.msra.mxu0 0.0
        %694 = vmatpush.msra.mxu0 0.0
        %695 = vmatpush.msra.mxu0 0.0
        %696 = vmatpush.msra.mxu0 0.0
        %697 = vmatpush.msra.mxu0 0.0
        %698 = vmatpush.msra.mxu0 0.0
        %699 = vmatpush.msra.mxu0 0.0
        %700 = vmatpush.msra.mxu0 0.0
        %701 = vmatpush.msra.mxu0 0.0
        %702 = vmatpush.msra.mxu0 %v418
        %703 = vmatpush.msra.mxu0 %v341
        %704 = vmatpush.msra.mxu0 %v339
        %705 = vmatpush.msra.mxu0 %v337
        %706 = vmatmul.f32.gmra.mxu0 %v544
        %v707 = vpop.f32.mrf.mxu0
        %v708 = vadd.f32 %v668, %v707
        %709 = vdwg.mxu0
        %s710 = scalar_lea.vmem %s1, 128
        %v711 = vld [vmem:[%s710] sm:$0xff]
        %v712 = vld [vmem:[%s710 + $0x8] sm:$0xff]
        %v713 = vld [vmem:[%s710 + $0x10] sm:$0xff]
        %v714 = vld [vmem:[%s710 + $0x18] sm:$0xff]
        %v715 = vld [vmem:[%s710 + $0x20] sm:$0xff]
        %v716 = vld [vmem:[%s710 + $0x28] sm:$0xff]
        %v717 = vld [vmem:[%s710 + $0x30] sm:$0xf]
        %v718 = vld [vmem:[%s710 + $0x38] sm:$0xf]
        %v720 = vsel %vm364, %v717, 0
        %v723 = vsel %vm364, %v718, 0
        %725 = vmatpush.msra.mxu0 0.0
        %726 = vmatpush.msra.mxu0 0.0
        %727 = vmatpush.msra.mxu0 0.0
        %728 = vmatpush.msra.mxu0 0.0
        %729 = vmatpush.msra.mxu0 0.0
        %730 = vmatpush.msra.mxu0 0.0
        %731 = vmatpush.msra.mxu0 0.0
        %732 = vmatpush.msra.mxu0 0.0
        %733 = vmatpush.msra.mxu0 0.0
        %734 = vmatpush.msra.mxu0 0.0
        %735 = vmatpush.msra.mxu0 0.0
        %736 = vmatpush.msra.mxu0 0.0
        %737 = vmatpush.msra.mxu0 %v720
        %738 = vmatpush.msra.mxu0 %v715
        %739 = vmatpush.msra.mxu0 %v713
        %740 = vmatpush.msra.mxu0 %v711
        %741 = vmatmul.f32.gmra.mxu0 %v461
        %v742 = vpop.f32.mrf.mxu0
        %v743 = vadd.f32 0.0, %v742
        %744 = vdwg.mxu0
        %745 = vmatpush.msra.mxu0 0.0
        %746 = vmatpush.msra.mxu0 0.0
        %747 = vmatpush.msra.mxu0 0.0
        %748 = vmatpush.msra.mxu0 0.0
        %749 = vmatpush.msra.mxu0 0.0
        %750 = vmatpush.msra.mxu0 0.0
        %751 = vmatpush.msra.mxu0 0.0
        %752 = vmatpush.msra.mxu0 0.0
        %753 = vmatpush.msra.mxu0 0.0
        %754 = vmatpush.msra.mxu0 0.0
        %755 = vmatpush.msra.mxu0 0.0
        %756 = vmatpush.msra.mxu0 0.0
        %757 = vmatpush.msra.mxu0 %v723
        %758 = vmatpush.msra.mxu0 %v716
        %759 = vmatpush.msra.mxu0 %v714
        %760 = vmatpush.msra.mxu0 %v712
        %761 = vmatmul.f32.gmra.mxu0 %v461
        %v762 = vpop.f32.mrf.mxu0
        %v763 = vadd.f32 0.0, %v762
        %764 = vdwg.mxu0
        %v765 = vadd.f32 %v438, %v743
        %v766 = vadd.f32 %v458, %v763
        %767 = vmatpush.msra.mxu0 0.0
        %768 = vmatpush.msra.mxu0 0.0
        %769 = vmatpush.msra.mxu0 0.0
        %770 = vmatpush.msra.mxu0 0.0
        %771 = vmatpush.msra.mxu0 0.0
        %772 = vmatpush.msra.mxu0 0.0
        %773 = vmatpush.msra.mxu0 0.0
        %774 = vmatpush.msra.mxu0 0.0
        %775 = vmatpush.msra.mxu0 0.0
        %776 = vmatpush.msra.mxu0 0.0
        %777 = vmatpush.msra.mxu0 0.0
        %778 = vmatpush.msra.mxu0 0.0
        %779 = vmatpush.msra.mxu0 %v720
        %780 = vmatpush.msra.mxu0 %v715
        %781 = vmatpush.msra.mxu0 %v713
        %782 = vmatpush.msra.mxu0 %v711
        %783 = vmatmul.f32.gmra.mxu0 %v544
        %v784 = vpop.f32.mrf.mxu0
        %v785 = vadd.f32 0.0, %v784
        %786 = vdwg.mxu0
        %787 = vmatpush.msra.mxu0 0.0
        %788 = vmatpush.msra.mxu0 0.0
        %789 = vmatpush.msra.mxu0 0.0
        %790 = vmatpush.msra.mxu0 0.0
        %791 = vmatpush.msra.mxu0 0.0
        %792 = vmatpush.msra.mxu0 0.0
        %793 = vmatpush.msra.mxu0 0.0
        %794 = vmatpush.msra.mxu0 0.0
        %795 = vmatpush.msra.mxu0 0.0
        %796 = vmatpush.msra.mxu0 0.0
        %797 = vmatpush.msra.mxu0 0.0
        %798 = vmatpush.msra.mxu0 0.0
        %799 = vmatpush.msra.mxu0 %v723
        %800 = vmatpush.msra.mxu0 %v716
        %801 = vmatpush.msra.mxu0 %v714
        %802 = vmatpush.msra.mxu0 %v712
        %803 = vmatmul.f32.gmra.mxu0 %v544
        %v804 = vpop.f32.mrf.mxu0
        %v805 = vadd.f32 0.0, %v804
        %806 = vdwg.mxu0
        %v807 = vadd.f32 %v521, %v785
        %v808 = vadd.f32 %v541, %v805
        %809 = vmatpush.msra.mxu0 0.0
        %810 = vmatpush.msra.mxu0 0.0
        %811 = vmatpush.msra.mxu0 0.0
        %812 = vmatpush.msra.mxu0 0.0
        %813 = vmatpush.msra.mxu0 0.0
        %814 = vmatpush.msra.mxu0 0.0
        %815 = vmatpush.msra.mxu0 0.0
        %816 = vmatpush.msra.mxu0 0.0
        %817 = vmatpush.msra.mxu0 0.0
        %818 = vmatpush.msra.mxu0 0.0
        %819 = vmatpush.msra.mxu0 0.0
        %820 = vmatpush.msra.mxu0 0.0
        %821 = vmatpush.msra.mxu0 %v720
        %822 = vmatpush.msra.mxu0 %v715
        %823 = vmatpush.msra.mxu0 %v713
        %824 = vmatpush.msra.mxu0 %v711
        %825 = vmatmul.f32.gmra.mxu0 %v628
        %v826 = vpop.f32.mrf.mxu0
        %v827 = vadd.f32 0.0, %v826
        %828 = vdwg.mxu0
        %829 = vmatpush.msra.mxu0 0.0
        %830 = vmatpush.msra.mxu0 0.0
        %831 = vmatpush.msra.mxu0 0.0
        %832 = vmatpush.msra.mxu0 0.0
        %833 = vmatpush.msra.mxu0 0.0
        %834 = vmatpush.msra.mxu0 0.0
        %835 = vmatpush.msra.mxu0 0.0
        %836 = vmatpush.msra.mxu0 0.0
        %837 = vmatpush.msra.mxu0 0.0
        %838 = vmatpush.msra.mxu0 0.0
        %839 = vmatpush.msra.mxu0 0.0
        %840 = vmatpush.msra.mxu0 0.0
        %841 = vmatpush.msra.mxu0 %v723
        %842 = vmatpush.msra.mxu0 %v716
        %843 = vmatpush.msra.mxu0 %v714
        %844 = vmatpush.msra.mxu0 %v712
        %845 = vmatmul.f32.gmra.mxu0 %v628
        %v846 = vpop.f32.mrf.mxu0
        %v847 = vadd.f32 0.0, %v846
        %848 = vdwg.mxu0
        %v849 = vadd.f32 %v604, %v827
        %v850 = vadd.f32 %v624, %v847
        %v851 = vld [vmem:[%s345 + $0x1] sm:$0x3f]
        %v853 = vsel %vm360, %v851, 0
        %855 = vmatpush.msra.mxu0 0.0
        %856 = vmatpush.msra.mxu0 0.0
        %857 = vmatpush.msra.mxu0 0.0
        %858 = vmatpush.msra.mxu0 0.0
        %859 = vmatpush.msra.mxu0 0.0
        %860 = vmatpush.msra.mxu0 0.0
        %861 = vmatpush.msra.mxu0 0.0
        %862 = vmatpush.msra.mxu0 0.0
        %863 = vmatpush.msra.mxu0 0.0
        %864 = vmatpush.msra.mxu0 0.0
        %865 = vmatpush.msra.mxu0 0.0
        %866 = vmatpush.msra.mxu0 0.0
        %867 = vmatpush.msra.mxu0 %v720
        %868 = vmatpush.msra.mxu0 %v715
        %869 = vmatpush.msra.mxu0 %v713
        %870 = vmatpush.msra.mxu0 %v711
        %871 = vmatmul.f32.gmra.mxu0 %v853
        %v872 = vpop.f32.mrf.mxu0
        %v873 = vadd.f32 0.0, %v872
        %874 = vdwg.mxu0
        %875 = vmatpush.msra.mxu0 0.0
        %876 = vmatpush.msra.mxu0 0.0
        %877 = vmatpush.msra.mxu0 0.0
        %878 = vmatpush.msra.mxu0 0.0
        %879 = vmatpush.msra.mxu0 0.0
        %880 = vmatpush.msra.mxu0 0.0
        %881 = vmatpush.msra.mxu0 0.0
        %882 = vmatpush.msra.mxu0 0.0
        %883 = vmatpush.msra.mxu0 0.0
        %884 = vmatpush.msra.mxu0 0.0
        %885 = vmatpush.msra.mxu0 0.0
        %886 = vmatpush.msra.mxu0 0.0
        %887 = vmatpush.msra.mxu0 %v723
        %888 = vmatpush.msra.mxu0 %v716
        %889 = vmatpush.msra.mxu0 %v714
        %890 = vmatpush.msra.mxu0 %v712
        %891 = vmatmul.f32.gmra.mxu0 %v853
        %v892 = vpop.f32.mrf.mxu0
        %v893 = vadd.f32 0.0, %v892
        %894 = vdwg.mxu0
        %v895 = vadd.f32 %v688, %v873
        %v896 = vadd.f32 %v708, %v893
        %s897 = scalar_lea.vmem %s1, 192
        %v898 = vld [vmem:[%s897] sm:$0xff]
        %v899 = vld [vmem:[%s897 + $0x8] sm:$0xff]
        %v900 = vld [vmem:[%s897 + $0x10] sm:$0xff]
        %v901 = vld [vmem:[%s897 + $0x18] sm:$0xff]
        %v902 = vld [vmem:[%s897 + $0x20] sm:$0xff]
        %v903 = vld [vmem:[%s897 + $0x28] sm:$0xff]
        %v904 = vld [vmem:[%s897 + $0x30] sm:$0xf]
        %v905 = vld [vmem:[%s897 + $0x38] sm:$0xf]
        %v907 = vsel %vm364, %v904, 0
        %v910 = vsel %vm364, %v905, 0
        %912 = vmatpush.msra.mxu0 0.0
        %913 = vmatpush.msra.mxu0 0.0
        %914 = vmatpush.msra.mxu0 0.0
        %915 = vmatpush.msra.mxu0 0.0
        %916 = vmatpush.msra.mxu0 0.0
        %917 = vmatpush.msra.mxu0 0.0
        %918 = vmatpush.msra.mxu0 0.0
        %919 = vmatpush.msra.mxu0 0.0
        %920 = vmatpush.msra.mxu0 0.0
        %921 = vmatpush.msra.mxu0 0.0
        %922 = vmatpush.msra.mxu0 0.0
        %923 = vmatpush.msra.mxu0 0.0
        %924 = vmatpush.msra.mxu0 %v907
        %925 = vmatpush.msra.mxu0 %v902
        %926 = vmatpush.msra.mxu0 %v900
        %927 = vmatpush.msra.mxu0 %v898
        %928 = vmatmul.f32.gmra.mxu0 %v544
        %v929 = vpop.f32.mrf.mxu0
        %v930 = vadd.f32 0.0, %v929
        %931 = vdwg.mxu0
        %932 = vmatpush.msra.mxu0 0.0
        %933 = vmatpush.msra.mxu0 0.0
        %934 = vmatpush.msra.mxu0 0.0
        %935 = vmatpush.msra.mxu0 0.0
        %936 = vmatpush.msra.mxu0 0.0
        %937 = vmatpush.msra.mxu0 0.0
        %938 = vmatpush.msra.mxu0 0.0
        %939 = vmatpush.msra.mxu0 0.0
        %940 = vmatpush.msra.mxu0 0.0
        %941 = vmatpush.msra.mxu0 0.0
        %942 = vmatpush.msra.mxu0 0.0
        %943 = vmatpush.msra.mxu0 0.0
        %944 = vmatpush.msra.mxu0 %v910
        %945 = vmatpush.msra.mxu0 %v903
        %946 = vmatpush.msra.mxu0 %v901
        %947 = vmatpush.msra.mxu0 %v899
        %948 = vmatmul.f32.gmra.mxu0 %v544
        %v949 = vpop.f32.mrf.mxu0
        %v950 = vadd.f32 0.0, %v949
        %951 = vdwg.mxu0
        %v952 = vadd.f32 %v765, %v930
        %v953 = vadd.f32 %v766, %v950
        %954 = vmatpush.msra.mxu0 0.0
        %955 = vmatpush.msra.mxu0 0.0
        %956 = vmatpush.msra.mxu0 0.0
        %957 = vmatpush.msra.mxu0 0.0
        %958 = vmatpush.msra.mxu0 0.0
        %959 = vmatpush.msra.mxu0 0.0
        %960 = vmatpush.msra.mxu0 0.0
        %961 = vmatpush.msra.mxu0 0.0
        %962 = vmatpush.msra.mxu0 0.0
        %963 = vmatpush.msra.mxu0 0.0
        %964 = vmatpush.msra.mxu0 0.0
        %965 = vmatpush.msra.mxu0 0.0
        %966 = vmatpush.msra.mxu0 %v907
        %967 = vmatpush.msra.mxu0 %v902
        %968 = vmatpush.msra.mxu0 %v900
        %969 = vmatpush.msra.mxu0 %v898
        %970 = vmatmul.f32.gmra.mxu0 %v628
        %v971 = vpop.f32.mrf.mxu0
        %v972 = vadd.f32 0.0, %v971
        %973 = vdwg.mxu0
        %974 = vmatpush.msra.mxu0 0.0
        %975 = vmatpush.msra.mxu0 0.0
        %976 = vmatpush.msra.mxu0 0.0
        %977 = vmatpush.msra.mxu0 0.0
        %978 = vmatpush.msra.mxu0 0.0
        %979 = vmatpush.msra.mxu0 0.0
        %980 = vmatpush.msra.mxu0 0.0
        %981 = vmatpush.msra.mxu0 0.0
        %982 = vmatpush.msra.mxu0 0.0
        %983 = vmatpush.msra.mxu0 0.0
        %984 = vmatpush.msra.mxu0 0.0
        %985 = vmatpush.msra.mxu0 0.0
        %986 = vmatpush.msra.mxu0 %v910
        %987 = vmatpush.msra.mxu0 %v903
        %988 = vmatpush.msra.mxu0 %v901
        %989 = vmatpush.msra.mxu0 %v899
        %990 = vmatmul.f32.gmra.mxu0 %v628
        %v991 = vpop.f32.mrf.mxu0
        %v992 = vadd.f32 0.0, %v991
        %993 = vdwg.mxu0
        %v994 = vadd.f32 %v807, %v972
        %v995 = vadd.f32 %v808, %v992
        %996 = vmatpush.msra.mxu0 0.0
        %997 = vmatpush.msra.mxu0 0.0
        %998 = vmatpush.msra.mxu0 0.0
        %999 = vmatpush.msra.mxu0 0.0
        %1000 = vmatpush.msra.mxu0 0.0
        %1001 = vmatpush.msra.mxu0 0.0
        %1002 = vmatpush.msra.mxu0 0.0
        %1003 = vmatpush.msra.mxu0 0.0
        %1004 = vmatpush.msra.mxu0 0.0
        %1005 = vmatpush.msra.mxu0 0.0
        %1006 = vmatpush.msra.mxu0 0.0
        %1007 = vmatpush.msra.mxu0 0.0
        %1008 = vmatpush.msra.mxu0 %v907
        %1009 = vmatpush.msra.mxu0 %v902
        %1010 = vmatpush.msra.mxu0 %v900
        %1011 = vmatpush.msra.mxu0 %v898
        %1012 = vmatmul.f32.gmra.mxu0 %v853
        %v1013 = vpop.f32.mrf.mxu0
        %v1014 = vadd.f32 0.0, %v1013
        %1015 = vdwg.mxu0
        %1016 = vmatpush.msra.mxu0 0.0
        %1017 = vmatpush.msra.mxu0 0.0
        %1018 = vmatpush.msra.mxu0 0.0
        %1019 = vmatpush.msra.mxu0 0.0
        %1020 = vmatpush.msra.mxu0 0.0
        %1021 = vmatpush.msra.mxu0 0.0
        %1022 = vmatpush.msra.mxu0 0.0
        %1023 = vmatpush.msra.mxu0 0.0
        %1024 = vmatpush.msra.mxu0 0.0
        %1025 = vmatpush.msra.mxu0 0.0
        %1026 = vmatpush.msra.mxu0 0.0
        %1027 = vmatpush.msra.mxu0 0.0
        %1028 = vmatpush.msra.mxu0 %v910
        %1029 = vmatpush.msra.mxu0 %v903
        %1030 = vmatpush.msra.mxu0 %v901
        %1031 = vmatpush.msra.mxu0 %v899
        %1032 = vmatmul.f32.gmra.mxu0 %v853
        %v1033 = vpop.f32.mrf.mxu0
        %v1034 = vadd.f32 0.0, %v1033
        %1035 = vdwg.mxu0
        %v1036 = vadd.f32 %v849, %v1014
        %v1037 = vadd.f32 %v850, %v1034
        %v1038 = vld [vmem:[%s347 + $0x1] sm:$0x3f]
        %v1040 = vsel %vm360, %v1038, 0
        %1042 = vmatpush.msra.mxu0 0.0
        %1043 = vmatpush.msra.mxu0 0.0
        %1044 = vmatpush.msra.mxu0 0.0
        %1045 = vmatpush.msra.mxu0 0.0
        %1046 = vmatpush.msra.mxu0 0.0
        %1047 = vmatpush.msra.mxu0 0.0
        %1048 = vmatpush.msra.mxu0 0.0
        %1049 = vmatpush.msra.mxu0 0.0
        %1050 = vmatpush.msra.mxu0 0.0
        %1051 = vmatpush.msra.mxu0 0.0
        %1052 = vmatpush.msra.mxu0 0.0
        %1053 = vmatpush.msra.mxu0 0.0
        %1054 = vmatpush.msra.mxu0 %v907
        %1055 = vmatpush.msra.mxu0 %v902
        %1056 = vmatpush.msra.mxu0 %v900
        %1057 = vmatpush.msra.mxu0 %v898
        %1058 = vmatmul.f32.gmra.mxu0 %v1040
        %v1059 = vpop.f32.mrf.mxu0
        %v1060 = vadd.f32 0.0, %v1059
        %1061 = vdwg.mxu0
        %1062 = vmatpush.msra.mxu0 0.0
        %1063 = vmatpush.msra.mxu0 0.0
        %1064 = vmatpush.msra.mxu0 0.0
        %1065 = vmatpush.msra.mxu0 0.0
        %1066 = vmatpush.msra.mxu0 0.0
        %1067 = vmatpush.msra.mxu0 0.0
        %1068 = vmatpush.msra.mxu0 0.0
        %1069 = vmatpush.msra.mxu0 0.0
        %1070 = vmatpush.msra.mxu0 0.0
        %1071 = vmatpush.msra.mxu0 0.0
        %1072 = vmatpush.msra.mxu0 0.0
        %1073 = vmatpush.msra.mxu0 0.0
        %1074 = vmatpush.msra.mxu0 %v910
        %1075 = vmatpush.msra.mxu0 %v903
        %1076 = vmatpush.msra.mxu0 %v901
        %1077 = vmatpush.msra.mxu0 %v899
        %1078 = vmatmul.f32.gmra.mxu0 %v1040
        %v1079 = vpop.f32.mrf.mxu0
        %v1080 = vadd.f32 0.0, %v1079
        %1081 = vdwg.mxu0
        %v1082 = vadd.f32 %v895, %v1060
        %v1083 = vadd.f32 %v896, %v1080
        %s1084 = scalar_lea.vmem %s1, 256
        %v1085 = vld [vmem:[%s1084] sm:$0xff]
        %v1086 = vld [vmem:[%s1084 + $0x8] sm:$0xff]
        %v1087 = vld [vmem:[%s1084 + $0x10] sm:$0xff]
        %v1088 = vld [vmem:[%s1084 + $0x18] sm:$0xff]
        %v1089 = vld [vmem:[%s1084 + $0x20] sm:$0xff]
        %v1090 = vld [vmem:[%s1084 + $0x28] sm:$0xff]
        %v1091 = vld [vmem:[%s1084 + $0x30] sm:$0xf]
        %v1092 = vld [vmem:[%s1084 + $0x38] sm:$0xf]
        %v1094 = vsel %vm364, %v1091, 0
        %v1097 = vsel %vm364, %v1092, 0
        %1099 = vmatpush.msra.mxu0 0.0
        %1100 = vmatpush.msra.mxu0 0.0
        %1101 = vmatpush.msra.mxu0 0.0
        %1102 = vmatpush.msra.mxu0 0.0
        %1103 = vmatpush.msra.mxu0 0.0
        %1104 = vmatpush.msra.mxu0 0.0
        %1105 = vmatpush.msra.mxu0 0.0
        %1106 = vmatpush.msra.mxu0 0.0
        %1107 = vmatpush.msra.mxu0 0.0
        %1108 = vmatpush.msra.mxu0 0.0
        %1109 = vmatpush.msra.mxu0 0.0
        %1110 = vmatpush.msra.mxu0 0.0
        %1111 = vmatpush.msra.mxu0 %v1094
        %1112 = vmatpush.msra.mxu0 %v1089
        %1113 = vmatpush.msra.mxu0 %v1087
        %1114 = vmatpush.msra.mxu0 %v1085
        %1115 = vmatmul.f32.gmra.mxu0 %v628
        %v1116 = vpop.f32.mrf.mxu0
        %v1117 = vadd.f32 0.0, %v1116
        %1118 = vdwg.mxu0
        %1119 = vmatpush.msra.mxu0 0.0
        %1120 = vmatpush.msra.mxu0 0.0
        %1121 = vmatpush.msra.mxu0 0.0
        %1122 = vmatpush.msra.mxu0 0.0
        %1123 = vmatpush.msra.mxu0 0.0
        %1124 = vmatpush.msra.mxu0 0.0
        %1125 = vmatpush.msra.mxu0 0.0
        %1126 = vmatpush.msra.mxu0 0.0
        %1127 = vmatpush.msra.mxu0 0.0
        %1128 = vmatpush.msra.mxu0 0.0
        %1129 = vmatpush.msra.mxu0 0.0
        %1130 = vmatpush.msra.mxu0 0.0
        %1131 = vmatpush.msra.mxu0 %v1097
        %1132 = vmatpush.msra.mxu0 %v1090
        %1133 = vmatpush.msra.mxu0 %v1088
        %1134 = vmatpush.msra.mxu0 %v1086
        %1135 = vmatmul.f32.gmra.mxu0 %v628
        %v1136 = vpop.f32.mrf.mxu0
        %v1137 = vadd.f32 0.0, %v1136
        %1138 = vdwg.mxu0
        %v1139 = vadd.f32 %v952, %v1117
        %v1140 = vadd.f32 %v953, %v1137
        %1141 = vmatpush.msra.mxu0 0.0
        %1142 = vmatpush.msra.mxu0 0.0
        %1143 = vmatpush.msra.mxu0 0.0
        %1144 = vmatpush.msra.mxu0 0.0
        %1145 = vmatpush.msra.mxu0 0.0
        %1146 = vmatpush.msra.mxu0 0.0
        %1147 = vmatpush.msra.mxu0 0.0
        %1148 = vmatpush.msra.mxu0 0.0
        %1149 = vmatpush.msra.mxu0 0.0
        %1150 = vmatpush.msra.mxu0 0.0
        %1151 = vmatpush.msra.mxu0 0.0
        %1152 = vmatpush.msra.mxu0 0.0
        %1153 = vmatpush.msra.mxu0 %v1094
        %1154 = vmatpush.msra.mxu0 %v1089
        %1155 = vmatpush.msra.mxu0 %v1087
        %1156 = vmatpush.msra.mxu0 %v1085
        %1157 = vmatmul.f32.gmra.mxu0 %v853
        %v1158 = vpop.f32.mrf.mxu0
        %v1159 = vadd.f32 0.0, %v1158
        %1160 = vdwg.mxu0
        %1161 = vmatpush.msra.mxu0 0.0
        %1162 = vmatpush.msra.mxu0 0.0
        %1163 = vmatpush.msra.mxu0 0.0
        %1164 = vmatpush.msra.mxu0 0.0
        %1165 = vmatpush.msra.mxu0 0.0
        %1166 = vmatpush.msra.mxu0 0.0
        %1167 = vmatpush.msra.mxu0 0.0
        %1168 = vmatpush.msra.mxu0 0.0
        %1169 = vmatpush.msra.mxu0 0.0
        %1170 = vmatpush.msra.mxu0 0.0
        %1171 = vmatpush.msra.mxu0 0.0
        %1172 = vmatpush.msra.mxu0 0.0
        %1173 = vmatpush.msra.mxu0 %v1097
        %1174 = vmatpush.msra.mxu0 %v1090
        %1175 = vmatpush.msra.mxu0 %v1088
        %1176 = vmatpush.msra.mxu0 %v1086
        %1177 = vmatmul.f32.gmra.mxu0 %v853
        %v1178 = vpop.f32.mrf.mxu0
        %v1179 = vadd.f32 0.0, %v1178
        %1180 = vdwg.mxu0
        %v1181 = vadd.f32 %v994, %v1159
        %v1182 = vadd.f32 %v995, %v1179
        %1183 = vmatpush.msra.mxu0 0.0
        %1184 = vmatpush.msra.mxu0 0.0
        %1185 = vmatpush.msra.mxu0 0.0
        %1186 = vmatpush.msra.mxu0 0.0
        %1187 = vmatpush.msra.mxu0 0.0
        %1188 = vmatpush.msra.mxu0 0.0
        %1189 = vmatpush.msra.mxu0 0.0
        %1190 = vmatpush.msra.mxu0 0.0
        %1191 = vmatpush.msra.mxu0 0.0
        %1192 = vmatpush.msra.mxu0 0.0
        %1193 = vmatpush.msra.mxu0 0.0
        %1194 = vmatpush.msra.mxu0 0.0
        %1195 = vmatpush.msra.mxu0 %v1094
        %1196 = vmatpush.msra.mxu0 %v1089
        %1197 = vmatpush.msra.mxu0 %v1087
        %1198 = vmatpush.msra.mxu0 %v1085
        %1199 = vmatmul.f32.gmra.mxu0 %v1040
        %v1200 = vpop.f32.mrf.mxu0
        %v1201 = vadd.f32 0.0, %v1200
        %1202 = vdwg.mxu0
        %1203 = vmatpush.msra.mxu0 0.0
        %1204 = vmatpush.msra.mxu0 0.0
        %1205 = vmatpush.msra.mxu0 0.0
        %1206 = vmatpush.msra.mxu0 0.0
        %1207 = vmatpush.msra.mxu0 0.0
        %1208 = vmatpush.msra.mxu0 0.0
        %1209 = vmatpush.msra.mxu0 0.0
        %1210 = vmatpush.msra.mxu0 0.0
        %1211 = vmatpush.msra.mxu0 0.0
        %1212 = vmatpush.msra.mxu0 0.0
        %1213 = vmatpush.msra.mxu0 0.0
        %1214 = vmatpush.msra.mxu0 0.0
        %1215 = vmatpush.msra.mxu0 %v1097
        %1216 = vmatpush.msra.mxu0 %v1090
        %1217 = vmatpush.msra.mxu0 %v1088
        %1218 = vmatpush.msra.mxu0 %v1086
        %1219 = vmatmul.f32.gmra.mxu0 %v1040
        %v1220 = vpop.f32.mrf.mxu0
        %v1221 = vadd.f32 0.0, %v1220
        %1222 = vdwg.mxu0
        %v1223 = vadd.f32 %v1036, %v1201
        %v1224 = vadd.f32 %v1037, %v1221
        %v1225 = vld [vmem:[%s349 + $0x1] sm:$0x3f]
        %v1227 = vsel %vm360, %v1225, 0
        %1229 = vmatpush.msra.mxu0 0.0
        %1230 = vmatpush.msra.mxu0 0.0
        %1231 = vmatpush.msra.mxu0 0.0
        %1232 = vmatpush.msra.mxu0 0.0
        %1233 = vmatpush.msra.mxu0 0.0
        %1234 = vmatpush.msra.mxu0 0.0
        %1235 = vmatpush.msra.mxu0 0.0
        %1236 = vmatpush.msra.mxu0 0.0
        %1237 = vmatpush.msra.mxu0 0.0
        %1238 = vmatpush.msra.mxu0 0.0
        %1239 = vmatpush.msra.mxu0 0.0
        %1240 = vmatpush.msra.mxu0 0.0
        %1241 = vmatpush.msra.mxu0 %v1094
        %1242 = vmatpush.msra.mxu0 %v1089
        %1243 = vmatpush.msra.mxu0 %v1087
        %1244 = vmatpush.msra.mxu0 %v1085
        %1245 = vmatmul.f32.gmra.mxu0 %v1227
        %v1246 = vpop.f32.mrf.mxu0
        %v1247 = vadd.f32 0.0, %v1246
        %1248 = vdwg.mxu0
        %1249 = vmatpush.msra.mxu0 0.0
        %1250 = vmatpush.msra.mxu0 0.0
        %1251 = vmatpush.msra.mxu0 0.0
        %1252 = vmatpush.msra.mxu0 0.0
        %1253 = vmatpush.msra.mxu0 0.0
        %1254 = vmatpush.msra.mxu0 0.0
        %1255 = vmatpush.msra.mxu0 0.0
        %1256 = vmatpush.msra.mxu0 0.0
        %1257 = vmatpush.msra.mxu0 0.0
        %1258 = vmatpush.msra.mxu0 0.0
        %1259 = vmatpush.msra.mxu0 0.0
        %1260 = vmatpush.msra.mxu0 0.0
        %1261 = vmatpush.msra.mxu0 %v1097
        %1262 = vmatpush.msra.mxu0 %v1090
        %1263 = vmatpush.msra.mxu0 %v1088
        %1264 = vmatpush.msra.mxu0 %v1086
        %1265 = vmatmul.f32.gmra.mxu0 %v1227
        %v1266 = vpop.f32.mrf.mxu0
        %v1267 = vadd.f32 0.0, %v1266
        %1268 = vdwg.mxu0
        %v1269 = vadd.f32 %v1082, %v1247
        %v1270 = vadd.f32 %v1083, %v1267
        %v1271 = vmax.f32 %v1139, %v1181
        %v1272 = vmax.f32 %v1140, %v1182
        %v1273 = vmax.f32 %v1223, %v1269
        %v1274 = vmax.f32 %v1224, %v1270
        %1277 = vrot.lane.b32.xlu0 %v1271, 8
        %v1278 = vpop.permute.xlu0 %1277
        %1279 = vrot.lane.b32.xlu0 %v1272, 8
        %v1280 = vpop.permute.xlu0 %1279
        %vm1281 = vcmask 64512
        %v1282 = vsel %vm1281, %v1278, %v1280
        %v1284 = vmax.f32 %v1271, %v1282
        %v1285 = vld [vmem:[%s2] sm:$0x1]
        %v1287 = vperm.slane %v1285, 0
        %v1289 = vadd.f32 %v1284, %v1287
        %v1290 = vmax.f32 %v1289, 0.0
        %1293 = vrot.lane.b32.xlu0 %v1273, 8
        %v1294 = vpop.permute.xlu0 %1293
        %1295 = vrot.lane.b32.xlu0 %v1274, 8
        %v1296 = vpop.permute.xlu0 %1295
        %v1297 = vsel %vm1281, %v1294, %v1296
        %v1299 = vmax.f32 %v1273, %v1297
        %v1300 = vadd.f32 %v1299, %v1287
        %v1301 = vmax.f32 %v1300, 0.0
        %v1302 = vld [vmem:[%s3] sm:$0xff]
        %v1303 = vld [vmem:[%s3 + $0x8] sm:$0xff]
        %v1304 = vld [vmem:[%s3 + $0x10] sm:$0xff]
        %v1305 = vld [vmem:[%s3 + $0x18] sm:$0xff]
        %v1306 = vld [vmem:[%s3 + $0x20] sm:$0xff]
        %v1307 = vld [vmem:[%s3 + $0x28] sm:$0xff]
        %v1308 = vld [vmem:[%s3 + $0x30] sm:$0xff]
        %v1309 = vld [vmem:[%s3 + $0x38] sm:$0xff]
        %v1310 = vld [vmem:[%s3 + $0x40] sm:$0xff]
        %v1311 = vld [vmem:[%s3 + $0x48] sm:$0xff]
        %v1312 = vld [vmem:[%s3 + $0x50] sm:$0xff]
        %v1313 = vld [vmem:[%s3 + $0x58] sm:$0xff]
        %v1314 = vld [vmem:[%s3 + $0x60] sm:$0xff]
        %v1315 = vld [vmem:[%s3 + $0x68] sm:$0xff]
        %v1316 = vld [vmem:[%s3 + $0x70] sm:$0xff]
        %v1317 = vld [vmem:[%s3 + $0x78] sm:$0xff]
        %v1318 = vld [vmem:[%s3 + $0x80] sm:$0xff]
        %v1319 = vld [vmem:[%s3 + $0x88] sm:$0xff]
        %v1320 = vld [vmem:[%s3 + $0x90] sm:$0xff]
        %v1321 = vld [vmem:[%s3 + $0x98] sm:$0xff]
        %v1322 = vld [vmem:[%s3 + $0xa0] sm:$0xff]
        %v1323 = vld [vmem:[%s3 + $0xa8] sm:$0xff]
        %v1324 = vld [vmem:[%s3 + $0xb0] sm:$0xff]
        %v1325 = vld [vmem:[%s3 + $0xb8] sm:$0xff]
        %v1326 = vld [vmem:[%s3 + $0xc0] sm:$0xff]
        %v1327 = vld [vmem:[%s3 + $0xc8] sm:$0xff]
        %v1328 = vld [vmem:[%s3 + $0xd0] sm:$0xff]
        %v1329 = vld [vmem:[%s3 + $0xd8] sm:$0xff]
        %v1330 = vld [vmem:[%s3 + $0xe0] sm:$0xff]
        %v1331 = vld [vmem:[%s3 + $0xe8] sm:$0xff]
        %s1332 = scalar_lea.vmem %s3, 240
        %v1333 = vld [vmem:[%s1332] sm:$0xff]
        %v1334 = vld [vmem:[%s1332 + $0x8] sm:$0xff]
        %v1335 = vld [vmem:[%s1332 + $0x10] sm:$0xff]
        %v1336 = vld [vmem:[%s1332 + $0x18] sm:$0xff]
        %v1337 = vld [vmem:[%s1332 + $0x20] sm:$0xff]
        %v1338 = vld [vmem:[%s1332 + $0x28] sm:$0xff]
        %v1339 = vld [vmem:[%s1332 + $0x30] sm:$0xff]
        %v1340 = vld [vmem:[%s1332 + $0x38] sm:$0xff]
        %v1341 = vld [vmem:[%s1332 + $0x40] sm:$0xff]
        %v1342 = vld [vmem:[%s1332 + $0x48] sm:$0xff]
        %v1343 = vld [vmem:[%s1332 + $0x50] sm:$0xff]
        %v1344 = vld [vmem:[%s1332 + $0x58] sm:$0xff]
        %v1345 = vld [vmem:[%s1332 + $0x60] sm:$0xff]
        %v1346 = vld [vmem:[%s1332 + $0x68] sm:$0xff]
        %v1347 = vld [vmem:[%s1332 + $0x70] sm:$0xff]
        %v1348 = vld [vmem:[%s1332 + $0x78] sm:$0xff]
        %v1349 = vld [vmem:[%s1332 + $0x80] sm:$0xff]
        %v1350 = vld [vmem:[%s1332 + $0x88] sm:$0xff]
        %v1351 = vld [vmem:[%s1332 + $0x90] sm:$0xff]
        %v1352 = vld [vmem:[%s1332 + $0x98] sm:$0xff]
        %v1353 = vld [vmem:[%s1332 + $0xa0] sm:$0xff]
        %v1354 = vld [vmem:[%s1332 + $0xa8] sm:$0xff]
        %v1355 = vld [vmem:[%s1332 + $0xb0] sm:$0xff]
        %v1356 = vld [vmem:[%s1332 + $0xb8] sm:$0xff]
        %v1357 = vld [vmem:[%s1332 + $0xc0] sm:$0xff]
        %v1358 = vld [vmem:[%s1332 + $0xc8] sm:$0xff]
        %v1359 = vld [vmem:[%s1332 + $0xd0] sm:$0xff]
        %v1360 = vld [vmem:[%s1332 + $0xd8] sm:$0xff]
        %v1361 = vld [vmem:[%s1332 + $0xe0] sm:$0xff]
        %v1362 = vld [vmem:[%s1332 + $0xe8] sm:$0xff]
        %vm1363 = vcmask 982016
        %v1365 = vsel %vm1363, %v1301, 0
        %1367 = vmatpush.msra.mxu0 0.0
        %1368 = vmatpush.msra.mxu0 %v1361
        %1369 = vmatpush.msra.mxu0 %v1359
        %1370 = vmatpush.msra.mxu0 %v1357
        %1371 = vmatpush.msra.mxu0 %v1355
        %1372 = vmatpush.msra.mxu0 %v1353
        %1373 = vmatpush.msra.mxu0 %v1351
        %1374 = vmatpush.msra.mxu0 %v1349
        %1375 = vmatpush.msra.mxu0 %v1347
        %1376 = vmatpush.msra.mxu0 %v1345
        %1377 = vmatpush.msra.mxu0 %v1343
        %1378 = vmatpush.msra.mxu0 %v1341
        %1379 = vmatpush.msra.mxu0 %v1339
        %1380 = vmatpush.msra.mxu0 %v1337
        %1381 = vmatpush.msra.mxu0 %v1335
        %1382 = vmatpush.msra.mxu0 %v1333
        %1383 = vmatmul.f32.gmra.mxu0 %v1365
        %v1384 = vpop.f32.mrf.mxu0
        %v1385 = vadd.f32 0.0, %v1384
        %1386 = vdwg.mxu0
        %1387 = vmatpush.msra.mxu0 0.0
        %1388 = vmatpush.msra.mxu0 %v1362
        %1389 = vmatpush.msra.mxu0 %v1360
        %1390 = vmatpush.msra.mxu0 %v1358
        %1391 = vmatpush.msra.mxu0 %v1356
        %1392 = vmatpush.msra.mxu0 %v1354
        %1393 = vmatpush.msra.mxu0 %v1352
        %1394 = vmatpush.msra.mxu0 %v1350
        %1395 = vmatpush.msra.mxu0 %v1348
        %1396 = vmatpush.msra.mxu0 %v1346
        %1397 = vmatpush.msra.mxu0 %v1344
        %1398 = vmatpush.msra.mxu0 %v1342
        %1399 = vmatpush.msra.mxu0 %v1340
        %1400 = vmatpush.msra.mxu0 %v1338
        %1401 = vmatpush.msra.mxu0 %v1336
        %1402 = vmatpush.msra.mxu0 %v1334
        %1403 = vmatmul.f32.gmra.mxu0 %v1365
        %v1404 = vpop.f32.mrf.mxu0
        %v1405 = vadd.f32 0.0, %v1404
        %1406 = vdwg.mxu0
        %v1408 = vsel %vm1363, %v1290, 0
        %1410 = vmatpush.msra.mxu0 0.0
        %1411 = vmatpush.msra.mxu0 %v1330
        %1412 = vmatpush.msra.mxu0 %v1328
        %1413 = vmatpush.msra.mxu0 %v1326
        %1414 = vmatpush.msra.mxu0 %v1324
        %1415 = vmatpush.msra.mxu0 %v1322
        %1416 = vmatpush.msra.mxu0 %v1320
        %1417 = vmatpush.msra.mxu0 %v1318
        %1418 = vmatpush.msra.mxu0 %v1316
        %1419 = vmatpush.msra.mxu0 %v1314
        %1420 = vmatpush.msra.mxu0 %v1312
        %1421 = vmatpush.msra.mxu0 %v1310
        %1422 = vmatpush.msra.mxu0 %v1308
        %1423 = vmatpush.msra.mxu0 %v1306
        %1424 = vmatpush.msra.mxu0 %v1304
        %1425 = vmatpush.msra.mxu0 %v1302
        %1426 = vmatmul.f32.gmra.mxu0 %v1408
        %v1427 = vpop.f32.mrf.mxu0
        %v1428 = vadd.f32 %v1385, %v1427
        %1429 = vdwg.mxu0
        %1430 = vmatpush.msra.mxu0 0.0
        %1431 = vmatpush.msra.mxu0 %v1331
        %1432 = vmatpush.msra.mxu0 %v1329
        %1433 = vmatpush.msra.mxu0 %v1327
        %1434 = vmatpush.msra.mxu0 %v1325
        %1435 = vmatpush.msra.mxu0 %v1323
        %1436 = vmatpush.msra.mxu0 %v1321
        %1437 = vmatpush.msra.mxu0 %v1319
        %1438 = vmatpush.msra.mxu0 %v1317
        %1439 = vmatpush.msra.mxu0 %v1315
        %1440 = vmatpush.msra.mxu0 %v1313
        %1441 = vmatpush.msra.mxu0 %v1311
        %1442 = vmatpush.msra.mxu0 %v1309
        %1443 = vmatpush.msra.mxu0 %v1307
        %1444 = vmatpush.msra.mxu0 %v1305
        %1445 = vmatpush.msra.mxu0 %v1303
        %1446 = vmatmul.f32.gmra.mxu0 %v1408
        %v1447 = vpop.f32.mrf.mxu0
        %v1448 = vadd.f32 %v1405, %v1447
        %1449 = vdwg.mxu0
        %v1450 = vrot.slane %v1290, 1
        %v1451 = vsel %vm1363, %v1450, 0
        %1453 = vmatpush.msra.mxu0 0.0
        %1454 = vmatpush.msra.mxu0 %v1361
        %1455 = vmatpush.msra.mxu0 %v1359
        %1456 = vmatpush.msra.mxu0 %v1357
        %1457 = vmatpush.msra.mxu0 %v1355
        %1458 = vmatpush.msra.mxu0 %v1353
        %1459 = vmatpush.msra.mxu0 %v1351
        %1460 = vmatpush.msra.mxu0 %v1349
        %1461 = vmatpush.msra.mxu0 %v1347
        %1462 = vmatpush.msra.mxu0 %v1345
        %1463 = vmatpush.msra.mxu0 %v1343
        %1464 = vmatpush.msra.mxu0 %v1341
        %1465 = vmatpush.msra.mxu0 %v1339
        %1466 = vmatpush.msra.mxu0 %v1337
        %1467 = vmatpush.msra.mxu0 %v1335
        %1468 = vmatpush.msra.mxu0 %v1333
        %1469 = vmatmul.f32.gmra.mxu0 %v1451
        %v1470 = vpop.f32.mrf.mxu0
        %v1471 = vadd.f32 0.0, %v1470
        %1472 = vdwg.mxu0
        %1473 = vmatpush.msra.mxu0 0.0
        %1474 = vmatpush.msra.mxu0 %v1362
        %1475 = vmatpush.msra.mxu0 %v1360
        %1476 = vmatpush.msra.mxu0 %v1358
        %1477 = vmatpush.msra.mxu0 %v1356
        %1478 = vmatpush.msra.mxu0 %v1354
        %1479 = vmatpush.msra.mxu0 %v1352
        %1480 = vmatpush.msra.mxu0 %v1350
        %1481 = vmatpush.msra.mxu0 %v1348
        %1482 = vmatpush.msra.mxu0 %v1346
        %1483 = vmatpush.msra.mxu0 %v1344
        %1484 = vmatpush.msra.mxu0 %v1342
        %1485 = vmatpush.msra.mxu0 %v1340
        %1486 = vmatpush.msra.mxu0 %v1338
        %1487 = vmatpush.msra.mxu0 %v1336
        %1488 = vmatpush.msra.mxu0 %v1334
        %1489 = vmatmul.f32.gmra.mxu0 %v1451
        %v1490 = vpop.f32.mrf.mxu0
        %v1491 = vadd.f32 0.0, %v1490
        %1492 = vdwg.mxu0
        %1493 = vmatpush.msra.mxu0 0.0
        %1494 = vmatpush.msra.mxu0 %v1330
        %1495 = vmatpush.msra.mxu0 %v1328
        %1496 = vmatpush.msra.mxu0 %v1326
        %1497 = vmatpush.msra.mxu0 %v1324
        %1498 = vmatpush.msra.mxu0 %v1322
        %1499 = vmatpush.msra.mxu0 %v1320
        %1500 = vmatpush.msra.mxu0 %v1318
        %1501 = vmatpush.msra.mxu0 %v1316
        %1502 = vmatpush.msra.mxu0 %v1314
        %1503 = vmatpush.msra.mxu0 %v1312
        %1504 = vmatpush.msra.mxu0 %v1310
        %1505 = vmatpush.msra.mxu0 %v1308
        %1506 = vmatpush.msra.mxu0 %v1306
        %1507 = vmatpush.msra.mxu0 %v1304
        %1508 = vmatpush.msra.mxu0 %v1302
        %1509 = vmatmul.f32.gmra.mxu0 %v1365
        %v1510 = vpop.f32.mrf.mxu0
        %v1511 = vadd.f32 %v1471, %v1510
        %1512 = vdwg.mxu0
        %1513 = vmatpush.msra.mxu0 0.0
        %1514 = vmatpush.msra.mxu0 %v1331
        %1515 = vmatpush.msra.mxu0 %v1329
        %1516 = vmatpush.msra.mxu0 %v1327
        %1517 = vmatpush.msra.mxu0 %v1325
        %1518 = vmatpush.msra.mxu0 %v1323
        %1519 = vmatpush.msra.mxu0 %v1321
        %1520 = vmatpush.msra.mxu0 %v1319
        %1521 = vmatpush.msra.mxu0 %v1317
        %1522 = vmatpush.msra.mxu0 %v1315
        %1523 = vmatpush.msra.mxu0 %v1313
        %1524 = vmatpush.msra.mxu0 %v1311
        %1525 = vmatpush.msra.mxu0 %v1309
        %1526 = vmatpush.msra.mxu0 %v1307
        %1527 = vmatpush.msra.mxu0 %v1305
        %1528 = vmatpush.msra.mxu0 %v1303
        %1529 = vmatmul.f32.gmra.mxu0 %v1365
        %v1530 = vpop.f32.mrf.mxu0
        %v1531 = vadd.f32 %v1491, %v1530
        %1532 = vdwg.mxu0
        %s1533 = scalar_lea.vmem %s3, 480
        %v1534 = vld [vmem:[%s1533] sm:$0xff]
        %v1535 = vld [vmem:[%s1533 + $0x8] sm:$0xff]
        %v1536 = vld [vmem:[%s1533 + $0x10] sm:$0xff]
        %v1537 = vld [vmem:[%s1533 + $0x18] sm:$0xff]
        %v1538 = vld [vmem:[%s1533 + $0x20] sm:$0xff]
        %v1539 = vld [vmem:[%s1533 + $0x28] sm:$0xff]
        %v1540 = vld [vmem:[%s1533 + $0x30] sm:$0xff]
        %v1541 = vld [vmem:[%s1533 + $0x38] sm:$0xff]
        %v1542 = vld [vmem:[%s1533 + $0x40] sm:$0xff]
        %v1543 = vld [vmem:[%s1533 + $0x48] sm:$0xff]
        %v1544 = vld [vmem:[%s1533 + $0x50] sm:$0xff]
        %v1545 = vld [vmem:[%s1533 + $0x58] sm:$0xff]
        %v1546 = vld [vmem:[%s1533 + $0x60] sm:$0xff]
        %v1547 = vld [vmem:[%s1533 + $0x68] sm:$0xff]
        %v1548 = vld [vmem:[%s1533 + $0x70] sm:$0xff]
        %v1549 = vld [vmem:[%s1533 + $0x78] sm:$0xff]
        %v1550 = vld [vmem:[%s1533 + $0x80] sm:$0xff]
        %v1551 = vld [vmem:[%s1533 + $0x88] sm:$0xff]
        %v1552 = vld [vmem:[%s1533 + $0x90] sm:$0xff]
        %v1553 = vld [vmem:[%s1533 + $0x98] sm:$0xff]
        %v1554 = vld [vmem:[%s1533 + $0xa0] sm:$0xff]
        %v1555 = vld [vmem:[%s1533 + $0xa8] sm:$0xff]
        %v1556 = vld [vmem:[%s1533 + $0xb0] sm:$0xff]
        %v1557 = vld [vmem:[%s1533 + $0xb8] sm:$0xff]
        %v1558 = vld [vmem:[%s1533 + $0xc0] sm:$0xff]
        %v1559 = vld [vmem:[%s1533 + $0xc8] sm:$0xff]
        %v1560 = vld [vmem:[%s1533 + $0xd0] sm:$0xff]
        %v1561 = vld [vmem:[%s1533 + $0xd8] sm:$0xff]
        %v1562 = vld [vmem:[%s1533 + $0xe0] sm:$0xff]
        %v1563 = vld [vmem:[%s1533 + $0xe8] sm:$0xff]
        %1564 = vmatpush.msra.mxu0 0.0
        %1565 = vmatpush.msra.mxu0 %v1562
        %1566 = vmatpush.msra.mxu0 %v1560
        %1567 = vmatpush.msra.mxu0 %v1558
        %1568 = vmatpush.msra.mxu0 %v1556
        %1569 = vmatpush.msra.mxu0 %v1554
        %1570 = vmatpush.msra.mxu0 %v1552
        %1571 = vmatpush.msra.mxu0 %v1550
        %1572 = vmatpush.msra.mxu0 %v1548
        %1573 = vmatpush.msra.mxu0 %v1546
        %1574 = vmatpush.msra.mxu0 %v1544
        %1575 = vmatpush.msra.mxu0 %v1542
        %1576 = vmatpush.msra.mxu0 %v1540
        %1577 = vmatpush.msra.mxu0 %v1538
        %1578 = vmatpush.msra.mxu0 %v1536
        %1579 = vmatpush.msra.mxu0 %v1534
        %1580 = vmatmul.f32.gmra.mxu0 %v1451
        %v1581 = vpop.f32.mrf.mxu0
        %v1582 = vadd.f32 0.0, %v1581
        %1583 = vdwg.mxu0
        %1584 = vmatpush.msra.mxu0 0.0
        %1585 = vmatpush.msra.mxu0 %v1563
        %1586 = vmatpush.msra.mxu0 %v1561
        %1587 = vmatpush.msra.mxu0 %v1559
        %1588 = vmatpush.msra.mxu0 %v1557
        %1589 = vmatpush.msra.mxu0 %v1555
        %1590 = vmatpush.msra.mxu0 %v1553
        %1591 = vmatpush.msra.mxu0 %v1551
        %1592 = vmatpush.msra.mxu0 %v1549
        %1593 = vmatpush.msra.mxu0 %v1547
        %1594 = vmatpush.msra.mxu0 %v1545
        %1595 = vmatpush.msra.mxu0 %v1543
        %1596 = vmatpush.msra.mxu0 %v1541
        %1597 = vmatpush.msra.mxu0 %v1539
        %1598 = vmatpush.msra.mxu0 %v1537
        %1599 = vmatpush.msra.mxu0 %v1535
        %1600 = vmatmul.f32.gmra.mxu0 %v1451
        %v1601 = vpop.f32.mrf.mxu0
        %v1602 = vadd.f32 0.0, %v1601
        %1603 = vdwg.mxu0
        %v1604 = vadd.f32 %v1428, %v1582
        %v1605 = vadd.f32 %v1448, %v1602
        %v1606 = vrot.slane %v1301, 1
        %v1607 = vsel %vm1363, %v1606, 0
        %1609 = vmatpush.msra.mxu0 0.0
        %1610 = vmatpush.msra.mxu0 %v1562
        %1611 = vmatpush.msra.mxu0 %v1560
        %1612 = vmatpush.msra.mxu0 %v1558
        %1613 = vmatpush.msra.mxu0 %v1556
        %1614 = vmatpush.msra.mxu0 %v1554
        %1615 = vmatpush.msra.mxu0 %v1552
        %1616 = vmatpush.msra.mxu0 %v1550
        %1617 = vmatpush.msra.mxu0 %v1548
        %1618 = vmatpush.msra.mxu0 %v1546
        %1619 = vmatpush.msra.mxu0 %v1544
        %1620 = vmatpush.msra.mxu0 %v1542
        %1621 = vmatpush.msra.mxu0 %v1540
        %1622 = vmatpush.msra.mxu0 %v1538
        %1623 = vmatpush.msra.mxu0 %v1536
        %1624 = vmatpush.msra.mxu0 %v1534
        %1625 = vmatmul.f32.gmra.mxu0 %v1607
        %v1626 = vpop.f32.mrf.mxu0
        %v1627 = vadd.f32 0.0, %v1626
        %1628 = vdwg.mxu0
        %1629 = vmatpush.msra.mxu0 0.0
        %1630 = vmatpush.msra.mxu0 %v1563
        %1631 = vmatpush.msra.mxu0 %v1561
        %1632 = vmatpush.msra.mxu0 %v1559
        %1633 = vmatpush.msra.mxu0 %v1557
        %1634 = vmatpush.msra.mxu0 %v1555
        %1635 = vmatpush.msra.mxu0 %v1553
        %1636 = vmatpush.msra.mxu0 %v1551
        %1637 = vmatpush.msra.mxu0 %v1549
        %1638 = vmatpush.msra.mxu0 %v1547
        %1639 = vmatpush.msra.mxu0 %v1545
        %1640 = vmatpush.msra.mxu0 %v1543
        %1641 = vmatpush.msra.mxu0 %v1541
        %1642 = vmatpush.msra.mxu0 %v1539
        %1643 = vmatpush.msra.mxu0 %v1537
        %1644 = vmatpush.msra.mxu0 %v1535
        %1645 = vmatmul.f32.gmra.mxu0 %v1607
        %v1646 = vpop.f32.mrf.mxu0
        %v1647 = vadd.f32 0.0, %v1646
        %1648 = vdwg.mxu0
        %v1649 = vadd.f32 %v1511, %v1627
        %v1650 = vadd.f32 %v1531, %v1647
        %s1651 = scalar_lea.vmem %s3, 720
        %v1652 = vld [vmem:[%s1651] sm:$0xff]
        %v1653 = vld [vmem:[%s1651 + $0x8] sm:$0xff]
        %v1654 = vld [vmem:[%s1651 + $0x10] sm:$0xff]
        %v1655 = vld [vmem:[%s1651 + $0x18] sm:$0xff]
        %v1656 = vld [vmem:[%s1651 + $0x20] sm:$0xff]
        %v1657 = vld [vmem:[%s1651 + $0x28] sm:$0xff]
        %v1658 = vld [vmem:[%s1651 + $0x30] sm:$0xff]
        %v1659 = vld [vmem:[%s1651 + $0x38] sm:$0xff]
        %v1660 = vld [vmem:[%s1651 + $0x40] sm:$0xff]
        %v1661 = vld [vmem:[%s1651 + $0x48] sm:$0xff]
        %v1662 = vld [vmem:[%s1651 + $0x50] sm:$0xff]
        %v1663 = vld [vmem:[%s1651 + $0x58] sm:$0xff]
        %v1664 = vld [vmem:[%s1651 + $0x60] sm:$0xff]
        %v1665 = vld [vmem:[%s1651 + $0x68] sm:$0xff]
        %v1666 = vld [vmem:[%s1651 + $0x70] sm:$0xff]
        %v1667 = vld [vmem:[%s1651 + $0x78] sm:$0xff]
        %v1668 = vld [vmem:[%s1651 + $0x80] sm:$0xff]
        %v1669 = vld [vmem:[%s1651 + $0x88] sm:$0xff]
        %v1670 = vld [vmem:[%s1651 + $0x90] sm:$0xff]
        %v1671 = vld [vmem:[%s1651 + $0x98] sm:$0xff]
        %v1672 = vld [vmem:[%s1651 + $0xa0] sm:$0xff]
        %v1673 = vld [vmem:[%s1651 + $0xa8] sm:$0xff]
        %v1674 = vld [vmem:[%s1651 + $0xb0] sm:$0xff]
        %v1675 = vld [vmem:[%s1651 + $0xb8] sm:$0xff]
        %v1676 = vld [vmem:[%s1651 + $0xc0] sm:$0xff]
        %v1677 = vld [vmem:[%s1651 + $0xc8] sm:$0xff]
        %v1678 = vld [vmem:[%s1651 + $0xd0] sm:$0xff]
        %v1679 = vld [vmem:[%s1651 + $0xd8] sm:$0xff]
        %v1680 = vld [vmem:[%s1651 + $0xe0] sm:$0xff]
        %v1681 = vld [vmem:[%s1651 + $0xe8] sm:$0xff]
        %1682 = vmatpush.msra.mxu0 0.0
        %1683 = vmatpush.msra.mxu0 %v1680
        %1684 = vmatpush.msra.mxu0 %v1678
        %1685 = vmatpush.msra.mxu0 %v1676
        %1686 = vmatpush.msra.mxu0 %v1674
        %1687 = vmatpush.msra.mxu0 %v1672
        %1688 = vmatpush.msra.mxu0 %v1670
        %1689 = vmatpush.msra.mxu0 %v1668
        %1690 = vmatpush.msra.mxu0 %v1666
        %1691 = vmatpush.msra.mxu0 %v1664
        %1692 = vmatpush.msra.mxu0 %v1662
        %1693 = vmatpush.msra.mxu0 %v1660
        %1694 = vmatpush.msra.mxu0 %v1658
        %1695 = vmatpush.msra.mxu0 %v1656
        %1696 = vmatpush.msra.mxu0 %v1654
        %1697 = vmatpush.msra.mxu0 %v1652
        %1698 = vmatmul.f32.gmra.mxu0 %v1607
        %v1699 = vpop.f32.mrf.mxu0
        %v1700 = vadd.f32 0.0, %v1699
        %1701 = vdwg.mxu0
        %1702 = vmatpush.msra.mxu0 0.0
        %1703 = vmatpush.msra.mxu0 %v1681
        %1704 = vmatpush.msra.mxu0 %v1679
        %1705 = vmatpush.msra.mxu0 %v1677
        %1706 = vmatpush.msra.mxu0 %v1675
        %1707 = vmatpush.msra.mxu0 %v1673
        %1708 = vmatpush.msra.mxu0 %v1671
        %1709 = vmatpush.msra.mxu0 %v1669
        %1710 = vmatpush.msra.mxu0 %v1667
        %1711 = vmatpush.msra.mxu0 %v1665
        %1712 = vmatpush.msra.mxu0 %v1663
        %1713 = vmatpush.msra.mxu0 %v1661
        %1714 = vmatpush.msra.mxu0 %v1659
        %1715 = vmatpush.msra.mxu0 %v1657
        %1716 = vmatpush.msra.mxu0 %v1655
        %1717 = vmatpush.msra.mxu0 %v1653
        %1718 = vmatmul.f32.gmra.mxu0 %v1607
        %v1719 = vpop.f32.mrf.mxu0
        %v1720 = vadd.f32 0.0, %v1719
        %1721 = vdwg.mxu0
        %v1722 = vadd.f32 %v1604, %v1700
        %v1723 = vadd.f32 %v1605, %v1720
        %v1724 = vrot.slane %v1290, 2
        %v1725 = vsel %vm1363, %v1724, 0
        %1727 = vmatpush.msra.mxu0 0.0
        %1728 = vmatpush.msra.mxu0 %v1680
        %1729 = vmatpush.msra.mxu0 %v1678
        %1730 = vmatpush.msra.mxu0 %v1676
        %1731 = vmatpush.msra.mxu0 %v1674
        %1732 = vmatpush.msra.mxu0 %v1672
        %1733 = vmatpush.msra.mxu0 %v1670
        %1734 = vmatpush.msra.mxu0 %v1668
        %1735 = vmatpush.msra.mxu0 %v1666
        %1736 = vmatpush.msra.mxu0 %v1664
        %1737 = vmatpush.msra.mxu0 %v1662
        %1738 = vmatpush.msra.mxu0 %v1660
        %1739 = vmatpush.msra.mxu0 %v1658
        %1740 = vmatpush.msra.mxu0 %v1656
        %1741 = vmatpush.msra.mxu0 %v1654
        %1742 = vmatpush.msra.mxu0 %v1652
        %1743 = vmatmul.f32.gmra.mxu0 %v1725
        %v1744 = vpop.f32.mrf.mxu0
        %v1745 = vadd.f32 0.0, %v1744
        %1746 = vdwg.mxu0
        %1747 = vmatpush.msra.mxu0 0.0
        %1748 = vmatpush.msra.mxu0 %v1681
        %1749 = vmatpush.msra.mxu0 %v1679
        %1750 = vmatpush.msra.mxu0 %v1677
        %1751 = vmatpush.msra.mxu0 %v1675
        %1752 = vmatpush.msra.mxu0 %v1673
        %1753 = vmatpush.msra.mxu0 %v1671
        %1754 = vmatpush.msra.mxu0 %v1669
        %1755 = vmatpush.msra.mxu0 %v1667
        %1756 = vmatpush.msra.mxu0 %v1665
        %1757 = vmatpush.msra.mxu0 %v1663
        %1758 = vmatpush.msra.mxu0 %v1661
        %1759 = vmatpush.msra.mxu0 %v1659
        %1760 = vmatpush.msra.mxu0 %v1657
        %1761 = vmatpush.msra.mxu0 %v1655
        %1762 = vmatpush.msra.mxu0 %v1653
        %1763 = vmatmul.f32.gmra.mxu0 %v1725
        %v1764 = vpop.f32.mrf.mxu0
        %v1765 = vadd.f32 0.0, %v1764
        %1766 = vdwg.mxu0
        %v1767 = vadd.f32 %v1649, %v1745
        %v1768 = vadd.f32 %v1650, %v1765
        %s1769 = scalar_lea.vmem %s3, 960
        %v1770 = vld [vmem:[%s1769] sm:$0xff]
        %v1771 = vld [vmem:[%s1769 + $0x8] sm:$0xff]
        %v1772 = vld [vmem:[%s1769 + $0x10] sm:$0xff]
        %v1773 = vld [vmem:[%s1769 + $0x18] sm:$0xff]
        %v1774 = vld [vmem:[%s1769 + $0x20] sm:$0xff]
        %v1775 = vld [vmem:[%s1769 + $0x28] sm:$0xff]
        %v1776 = vld [vmem:[%s1769 + $0x30] sm:$0xff]
        %v1777 = vld [vmem:[%s1769 + $0x38] sm:$0xff]
        %v1778 = vld [vmem:[%s1769 + $0x40] sm:$0xff]
        %v1779 = vld [vmem:[%s1769 + $0x48] sm:$0xff]
        %v1780 = vld [vmem:[%s1769 + $0x50] sm:$0xff]
        %v1781 = vld [vmem:[%s1769 + $0x58] sm:$0xff]
        %v1782 = vld [vmem:[%s1769 + $0x60] sm:$0xff]
        %v1783 = vld [vmem:[%s1769 + $0x68] sm:$0xff]
        %v1784 = vld [vmem:[%s1769 + $0x70] sm:$0xff]
        %v1785 = vld [vmem:[%s1769 + $0x78] sm:$0xff]
        %v1786 = vld [vmem:[%s1769 + $0x80] sm:$0xff]
        %v1787 = vld [vmem:[%s1769 + $0x88] sm:$0xff]
        %v1788 = vld [vmem:[%s1769 + $0x90] sm:$0xff]
        %v1789 = vld [vmem:[%s1769 + $0x98] sm:$0xff]
        %v1790 = vld [vmem:[%s1769 + $0xa0] sm:$0xff]
        %v1791 = vld [vmem:[%s1769 + $0xa8] sm:$0xff]
        %v1792 = vld [vmem:[%s1769 + $0xb0] sm:$0xff]
        %v1793 = vld [vmem:[%s1769 + $0xb8] sm:$0xff]
        %v1794 = vld [vmem:[%s1769 + $0xc0] sm:$0xff]
        %v1795 = vld [vmem:[%s1769 + $0xc8] sm:$0xff]
        %v1796 = vld [vmem:[%s1769 + $0xd0] sm:$0xff]
        %v1797 = vld [vmem:[%s1769 + $0xd8] sm:$0xff]
        %v1798 = vld [vmem:[%s1769 + $0xe0] sm:$0xff]
        %v1799 = vld [vmem:[%s1769 + $0xe8] sm:$0xff]
        %1800 = vmatpush.msra.mxu0 0.0
        %1801 = vmatpush.msra.mxu0 %v1798
        %1802 = vmatpush.msra.mxu0 %v1796
        %1803 = vmatpush.msra.mxu0 %v1794
        %1804 = vmatpush.msra.mxu0 %v1792
        %1805 = vmatpush.msra.mxu0 %v1790
        %1806 = vmatpush.msra.mxu0 %v1788
        %1807 = vmatpush.msra.mxu0 %v1786
        %1808 = vmatpush.msra.mxu0 %v1784
        %1809 = vmatpush.msra.mxu0 %v1782
        %1810 = vmatpush.msra.mxu0 %v1780
        %1811 = vmatpush.msra.mxu0 %v1778
        %1812 = vmatpush.msra.mxu0 %v1776
        %1813 = vmatpush.msra.mxu0 %v1774
        %1814 = vmatpush.msra.mxu0 %v1772
        %1815 = vmatpush.msra.mxu0 %v1770
        %1816 = vmatmul.f32.gmra.mxu0 %v1725
        %v1817 = vpop.f32.mrf.mxu0
        %v1818 = vadd.f32 0.0, %v1817
        %1819 = vdwg.mxu0
        %1820 = vmatpush.msra.mxu0 0.0
        %1821 = vmatpush.msra.mxu0 %v1799
        %1822 = vmatpush.msra.mxu0 %v1797
        %1823 = vmatpush.msra.mxu0 %v1795
        %1824 = vmatpush.msra.mxu0 %v1793
        %1825 = vmatpush.msra.mxu0 %v1791
        %1826 = vmatpush.msra.mxu0 %v1789
        %1827 = vmatpush.msra.mxu0 %v1787
        %1828 = vmatpush.msra.mxu0 %v1785
        %1829 = vmatpush.msra.mxu0 %v1783
        %1830 = vmatpush.msra.mxu0 %v1781
        %1831 = vmatpush.msra.mxu0 %v1779
        %1832 = vmatpush.msra.mxu0 %v1777
        %1833 = vmatpush.msra.mxu0 %v1775
        %1834 = vmatpush.msra.mxu0 %v1773
        %1835 = vmatpush.msra.mxu0 %v1771
        %1836 = vmatmul.f32.gmra.mxu0 %v1725
        %v1837 = vpop.f32.mrf.mxu0
        %v1838 = vadd.f32 0.0, %v1837
        %1839 = vdwg.mxu0
        %v1840 = vadd.f32 %v1722, %v1818
        %v1841 = vadd.f32 %v1723, %v1838
        %v1842 = vrot.slane %v1301, 2
        %v1843 = vsel %vm1363, %v1842, 0
        %1845 = vmatpush.msra.mxu0 0.0
        %1846 = vmatpush.msra.mxu0 %v1798
        %1847 = vmatpush.msra.mxu0 %v1796
        %1848 = vmatpush.msra.mxu0 %v1794
        %1849 = vmatpush.msra.mxu0 %v1792
        %1850 = vmatpush.msra.mxu0 %v1790
        %1851 = vmatpush.msra.mxu0 %v1788
        %1852 = vmatpush.msra.mxu0 %v1786
        %1853 = vmatpush.msra.mxu0 %v1784
        %1854 = vmatpush.msra.mxu0 %v1782
        %1855 = vmatpush.msra.mxu0 %v1780
        %1856 = vmatpush.msra.mxu0 %v1778
        %1857 = vmatpush.msra.mxu0 %v1776
        %1858 = vmatpush.msra.mxu0 %v1774
        %1859 = vmatpush.msra.mxu0 %v1772
        %1860 = vmatpush.msra.mxu0 %v1770
        %1861 = vmatmul.f32.gmra.mxu0 %v1843
        %v1862 = vpop.f32.mrf.mxu0
        %v1863 = vadd.f32 0.0, %v1862
        %1864 = vdwg.mxu0
        %1865 = vmatpush.msra.mxu0 0.0
        %1866 = vmatpush.msra.mxu0 %v1799
        %1867 = vmatpush.msra.mxu0 %v1797
        %1868 = vmatpush.msra.mxu0 %v1795
        %1869 = vmatpush.msra.mxu0 %v1793
        %1870 = vmatpush.msra.mxu0 %v1791
        %1871 = vmatpush.msra.mxu0 %v1789
        %1872 = vmatpush.msra.mxu0 %v1787
        %1873 = vmatpush.msra.mxu0 %v1785
        %1874 = vmatpush.msra.mxu0 %v1783
        %1875 = vmatpush.msra.mxu0 %v1781
        %1876 = vmatpush.msra.mxu0 %v1779
        %1877 = vmatpush.msra.mxu0 %v1777
        %1878 = vmatpush.msra.mxu0 %v1775
        %1879 = vmatpush.msra.mxu0 %v1773
        %1880 = vmatpush.msra.mxu0 %v1771
        %1881 = vmatmul.f32.gmra.mxu0 %v1843
        %v1882 = vpop.f32.mrf.mxu0
        %v1883 = vadd.f32 0.0, %v1882
        %1884 = vdwg.mxu0
        %v1885 = vadd.f32 %v1767, %v1863
        %v1886 = vadd.f32 %v1768, %v1883
        %v1887 = vmax.f32 %v1840, %v1885
        %v1888 = vmax.f32 %v1841, %v1886
        %1891 = vrot.lane.b32.xlu0 %v1887, 48
        %v1892 = vpop.permute.xlu0 %1891
        %1893 = vrot.lane.b32.xlu0 %v1888, 48
        %v1894 = vpop.permute.xlu0 %1893
        %vm1895 = vcmask 392192
        %v1896 = vsel %vm1895, %v1892, %v1894
        %v1898 = vmax.f32 %v1887, %v1896
        %v1899 = vld [vmem:[%s4] sm:$0x1]
        %v1901 = vperm.slane %v1899, 0
        %v1903 = vadd.f32 %v1898, %v1901
        %v1904 = vmax.f32 %v1903, 0.0
        %v1905 = vld [vmem:[%s5] sm:$0xff]
        %v1906 = vld [vmem:[%s5 + $0x8] sm:$0xff]
        %v1907 = vld [vmem:[%s5 + $0x10] sm:$0xff]
        %v1908 = vld [vmem:[%s5 + $0x18] sm:$0xff]
        %v1909 = vld [vmem:[%s5 + $0x20] sm:$0xff]
        %v1910 = vld [vmem:[%s5 + $0x28] sm:$0xff]
        %v1911 = vld [vmem:[%s5 + $0x30] sm:$0xff]
        %v1912 = vld [vmem:[%s5 + $0x38] sm:$0xff]
        %v1913 = vld [vmem:[%s5 + $0x40] sm:$0xff]
        %v1914 = vld [vmem:[%s5 + $0x48] sm:$0xff]
        %s1915 = scalar_lea.vmem %s5, 80
        %v1916 = vld [vmem:[%s1915] sm:$0xff]
        %v1917 = vld [vmem:[%s1915 + $0x8] sm:$0xff]
        %v1918 = vld [vmem:[%s1915 + $0x10] sm:$0xff]
        %v1919 = vld [vmem:[%s1915 + $0x18] sm:$0xff]
        %v1920 = vld [vmem:[%s1915 + $0x20] sm:$0xff]
        %v1921 = vld [vmem:[%s1915 + $0x28] sm:$0xff]
        %v1922 = vld [vmem:[%s1915 + $0x30] sm:$0xff]
        %v1923 = vld [vmem:[%s1915 + $0x38] sm:$0xff]
        %v1924 = vld [vmem:[%s1915 + $0x40] sm:$0xff]
        %v1925 = vld [vmem:[%s1915 + $0x48] sm:$0xff]
        %v1927 = vrot.slane %v1904, 1
        %vm1928 = vcmask 654336
        %v1929 = vsel %vm1928, %v1927, 0
        %1931 = vmatpush.msra.mxu0 0.0
        %1932 = vmatpush.msra.mxu0 0.0
        %1933 = vmatpush.msra.mxu0 0.0
        %1934 = vmatpush.msra.mxu0 0.0
        %1935 = vmatpush.msra.mxu0 0.0
        %1936 = vmatpush.msra.mxu0 0.0
        %1937 = vmatpush.msra.mxu0 %v1925
        %1938 = vmatpush.msra.mxu0 %v1924
        %1939 = vmatpush.msra.mxu0 %v1923
        %1940 = vmatpush.msra.mxu0 %v1922
        %1941 = vmatpush.msra.mxu0 %v1921
        %1942 = vmatpush.msra.mxu0 %v1920
        %1943 = vmatpush.msra.mxu0 %v1919
        %1944 = vmatpush.msra.mxu0 %v1918
        %1945 = vmatpush.msra.mxu0 %v1917
        %1946 = vmatpush.msra.mxu0 %v1916
        %1947 = vmatmul.f32.gmra.mxu0 %v1929
        %v1948 = vpop.f32.mrf.mxu0
        %v1949 = vadd.f32 0.0, %v1948
        %1950 = vdwg.mxu0
        %v1951 = vsel %vm1928, %v1904, 0
        %1953 = vmatpush.msra.mxu0 0.0
        %1954 = vmatpush.msra.mxu0 0.0
        %1955 = vmatpush.msra.mxu0 0.0
        %1956 = vmatpush.msra.mxu0 0.0
        %1957 = vmatpush.msra.mxu0 0.0
        %1958 = vmatpush.msra.mxu0 0.0
        %1959 = vmatpush.msra.mxu0 %v1914
        %1960 = vmatpush.msra.mxu0 %v1913
        %1961 = vmatpush.msra.mxu0 %v1912
        %1962 = vmatpush.msra.mxu0 %v1911
        %1963 = vmatpush.msra.mxu0 %v1910
        %1964 = vmatpush.msra.mxu0 %v1909
        %1965 = vmatpush.msra.mxu0 %v1908
        %1966 = vmatpush.msra.mxu0 %v1907
        %1967 = vmatpush.msra.mxu0 %v1906
        %1968 = vmatpush.msra.mxu0 %v1905
        %1969 = vmatmul.f32.gmra.mxu0 %v1951
        %v1970 = vpop.f32.mrf.mxu0
        %v1971 = vadd.f32 %v1949, %v1970
        %1972 = vdwg.mxu0
        %s1973 = scalar_lea.vmem %s5, 160
        %v1974 = vld [vmem:[%s1973] sm:$0xff]
        %v1975 = vld [vmem:[%s1973 + $0x8] sm:$0xff]
        %v1976 = vld [vmem:[%s1973 + $0x10] sm:$0xff]
        %v1977 = vld [vmem:[%s1973 + $0x18] sm:$0xff]
        %v1978 = vld [vmem:[%s1973 + $0x20] sm:$0xff]
        %v1979 = vld [vmem:[%s1973 + $0x28] sm:$0xff]
        %v1980 = vld [vmem:[%s1973 + $0x30] sm:$0xff]
        %v1981 = vld [vmem:[%s1973 + $0x38] sm:$0xff]
        %v1982 = vld [vmem:[%s1973 + $0x40] sm:$0xff]
        %v1983 = vld [vmem:[%s1973 + $0x48] sm:$0xff]
        %v1984 = vrot.slane %v1904, 2
        %v1985 = vsel %vm1928, %v1984, 0
        %1987 = vmatpush.msra.mxu0 0.0
        %1988 = vmatpush.msra.mxu0 0.0
        %1989 = vmatpush.msra.mxu0 0.0
        %1990 = vmatpush.msra.mxu0 0.0
        %1991 = vmatpush.msra.mxu0 0.0
        %1992 = vmatpush.msra.mxu0 0.0
        %1993 = vmatpush.msra.mxu0 %v1983
        %1994 = vmatpush.msra.mxu0 %v1982
        %1995 = vmatpush.msra.mxu0 %v1981
        %1996 = vmatpush.msra.mxu0 %v1980
        %1997 = vmatpush.msra.mxu0 %v1979
        %1998 = vmatpush.msra.mxu0 %v1978
        %1999 = vmatpush.msra.mxu0 %v1977
        %2000 = vmatpush.msra.mxu0 %v1976
        %2001 = vmatpush.msra.mxu0 %v1975
        %2002 = vmatpush.msra.mxu0 %v1974
        %2003 = vmatmul.f32.gmra.mxu0 %v1985
        %v2004 = vpop.f32.mrf.mxu0
        %v2005 = vadd.f32 0.0, %v2004
        %2006 = vdwg.mxu0
        %v2007 = vadd.f32 %v1971, %v2005
        %s2008 = scalar_lea.vmem %s5, 240
        %v2009 = vld [vmem:[%s2008] sm:$0xff]
        %v2010 = vld [vmem:[%s2008 + $0x8] sm:$0xff]
        %v2011 = vld [vmem:[%s2008 + $0x10] sm:$0xff]
        %v2012 = vld [vmem:[%s2008 + $0x18] sm:$0xff]
        %v2013 = vld [vmem:[%s2008 + $0x20] sm:$0xff]
        %v2014 = vld [vmem:[%s2008 + $0x28] sm:$0xff]
        %v2015 = vld [vmem:[%s2008 + $0x30] sm:$0xff]
        %v2016 = vld [vmem:[%s2008 + $0x38] sm:$0xff]
        %v2017 = vld [vmem:[%s2008 + $0x40] sm:$0xff]
        %v2018 = vld [vmem:[%s2008 + $0x48] sm:$0xff]
        %v2019 = vrot.slane %v1904, 3
        %v2020 = vsel %vm1928, %v2019, 0
        %2022 = vmatpush.msra.mxu0 0.0
        %2023 = vmatpush.msra.mxu0 0.0
        %2024 = vmatpush.msra.mxu0 0.0
        %2025 = vmatpush.msra.mxu0 0.0
        %2026 = vmatpush.msra.mxu0 0.0
        %2027 = vmatpush.msra.mxu0 0.0
        %2028 = vmatpush.msra.mxu0 %v2018
        %2029 = vmatpush.msra.mxu0 %v2017
        %2030 = vmatpush.msra.mxu0 %v2016
        %2031 = vmatpush.msra.mxu0 %v2015
        %2032 = vmatpush.msra.mxu0 %v2014
        %2033 = vmatpush.msra.mxu0 %v2013
        %2034 = vmatpush.msra.mxu0 %v2012
        %2035 = vmatpush.msra.mxu0 %v2011
        %2036 = vmatpush.msra.mxu0 %v2010
        %2037 = vmatpush.msra.mxu0 %v2009
        %2038 = vmatmul.f32.gmra.mxu0 %v2020
        %v2039 = vpop.f32.mrf.mxu0
        %v2040 = vadd.f32 0.0, %v2039
        %2041 = vdwg.mxu0
        %v2042 = vadd.f32 %v2007, %v2040
        %v2043 = vld [vmem:[%s6] sm:$0x1]
        %v2044 = vadd.f32 %v2042, %v2043
        %v2045 = vmax.f32 %v2044, 0.0
        %vm2046 = vcmask 401408
        %2047 = vst.msk [vmem:[#allocation2] sm:$0x1] %vm2046, %v2045
        %v2048 = vld [vmem:[%s1] sm:$0xff]
        %v2049 = vld [vmem:[%s1 + $0x8] sm:$0xff]
        %v2050 = vld [vmem:[%s1 + $0x10] sm:$0xff]
        %v2051 = vld [vmem:[%s1 + $0x18] sm:$0xff]
        %v2052 = vld [vmem:[%s1 + $0x20] sm:$0xff]
        %v2053 = vld [vmem:[%s1 + $0x28] sm:$0xff]
        %v2054 = vld [vmem:[%s1 + $0x30] sm:$0xf]
        %v2055 = vld [vmem:[%s1 + $0x38] sm:$0xf]
        %s2056 = scalar_lea.vmem %s334, 32
        %v2057 = vld [vmem:[%s2056] sm:$0x3f]
        %s2058 = scalar_lea.vmem %s334, 40
        %v2059 = vld [vmem:[%s2058] sm:$0x3f]
        %s2060 = scalar_lea.vmem %s334, 48
        %v2061 = vld [vmem:[%s2060] sm:$0x3f]
        %s2062 = scalar_lea.vmem %s334, 56
        %v2063 = vld [vmem:[%s2062] sm:$0x3f]
        %v2064 = vld [vmem:[%s351] sm:$0xff]
        %v2065 = vld [vmem:[%s351 + $0x8] sm:$0xff]
        %v2066 = vld [vmem:[%s351 + $0x10] sm:$0xff]
        %v2067 = vld [vmem:[%s351 + $0x18] sm:$0xff]
        %v2068 = vld [vmem:[%s351 + $0x20] sm:$0xff]
        %v2069 = vld [vmem:[%s351 + $0x28] sm:$0xff]
        %v2070 = vld [vmem:[%s351 + $0x30] sm:$0xf]
        %v2071 = vld [vmem:[%s351 + $0x38] sm:$0xf]
        %v2073 = vsel %vm360, %v2059, 0
        %v2076 = vsel %vm364, %v2070, 0
        %v2079 = vsel %vm364, %v2071, 0
        %2081 = vmatpush.msra.mxu0 0.0
        %2082 = vmatpush.msra.mxu0 0.0
        %2083 = vmatpush.msra.mxu0 0.0
        %2084 = vmatpush.msra.mxu0 0.0
        %2085 = vmatpush.msra.mxu0 0.0
        %2086 = vmatpush.msra.mxu0 0.0
        %2087 = vmatpush.msra.mxu0 0.0
        %2088 = vmatpush.msra.mxu0 0.0
        %2089 = vmatpush.msra.mxu0 0.0
        %2090 = vmatpush.msra.mxu0 0.0
        %2091 = vmatpush.msra.mxu0 0.0
        %2092 = vmatpush.msra.mxu0 0.0
        %2093 = vmatpush.msra.mxu0 %v2076
        %2094 = vmatpush.msra.mxu0 %v2068
        %2095 = vmatpush.msra.mxu0 %v2066
        %2096 = vmatpush.msra.mxu0 %v2064
        %2097 = vmatmul.f32.gmra.mxu0 %v2073
        %v2098 = vpop.f32.mrf.mxu0
        %v2099 = vadd.f32 0.0, %v2098
        %2100 = vdwg.mxu0
        %2101 = vmatpush.msra.mxu0 0.0
        %2102 = vmatpush.msra.mxu0 0.0
        %2103 = vmatpush.msra.mxu0 0.0
        %2104 = vmatpush.msra.mxu0 0.0
        %2105 = vmatpush.msra.mxu0 0.0
        %2106 = vmatpush.msra.mxu0 0.0
        %2107 = vmatpush.msra.mxu0 0.0
        %2108 = vmatpush.msra.mxu0 0.0
        %2109 = vmatpush.msra.mxu0 0.0
        %2110 = vmatpush.msra.mxu0 0.0
        %2111 = vmatpush.msra.mxu0 0.0
        %2112 = vmatpush.msra.mxu0 0.0
        %2113 = vmatpush.msra.mxu0 %v2079
        %2114 = vmatpush.msra.mxu0 %v2069
        %2115 = vmatpush.msra.mxu0 %v2067
        %2116 = vmatpush.msra.mxu0 %v2065
        %2117 = vmatmul.f32.gmra.mxu0 %v2073
        %v2118 = vpop.f32.mrf.mxu0
        %v2119 = vadd.f32 0.0, %v2118
        %2120 = vdwg.mxu0
        %v2122 = vsel %vm360, %v2057, 0
        %v2125 = vsel %vm364, %v2054, 0
        %v2128 = vsel %vm364, %v2055, 0
        %2130 = vmatpush.msra.mxu0 0.0
        %2131 = vmatpush.msra.mxu0 0.0
        %2132 = vmatpush.msra.mxu0 0.0
        %2133 = vmatpush.msra.mxu0 0.0
        %2134 = vmatpush.msra.mxu0 0.0
        %2135 = vmatpush.msra.mxu0 0.0
        %2136 = vmatpush.msra.mxu0 0.0
        %2137 = vmatpush.msra.mxu0 0.0
        %2138 = vmatpush.msra.mxu0 0.0
        %2139 = vmatpush.msra.mxu0 0.0
        %2140 = vmatpush.msra.mxu0 0.0
        %2141 = vmatpush.msra.mxu0 0.0
        %2142 = vmatpush.msra.mxu0 %v2125
        %2143 = vmatpush.msra.mxu0 %v2052
        %2144 = vmatpush.msra.mxu0 %v2050
        %2145 = vmatpush.msra.mxu0 %v2048
        %2146 = vmatmul.f32.gmra.mxu0 %v2122
        %v2147 = vpop.f32.mrf.mxu0
        %v2148 = vadd.f32 %v2099, %v2147
        %2149 = vdwg.mxu0
        %2150 = vmatpush.msra.mxu0 0.0
        %2151 = vmatpush.msra.mxu0 0.0
        %2152 = vmatpush.msra.mxu0 0.0
        %2153 = vmatpush.msra.mxu0 0.0
        %2154 = vmatpush.msra.mxu0 0.0
        %2155 = vmatpush.msra.mxu0 0.0
        %2156 = vmatpush.msra.mxu0 0.0
        %2157 = vmatpush.msra.mxu0 0.0
        %2158 = vmatpush.msra.mxu0 0.0
        %2159 = vmatpush.msra.mxu0 0.0
        %2160 = vmatpush.msra.mxu0 0.0
        %2161 = vmatpush.msra.mxu0 0.0
        %2162 = vmatpush.msra.mxu0 %v2128
        %2163 = vmatpush.msra.mxu0 %v2053
        %2164 = vmatpush.msra.mxu0 %v2051
        %2165 = vmatpush.msra.mxu0 %v2049
        %2166 = vmatmul.f32.gmra.mxu0 %v2122
        %v2167 = vpop.f32.mrf.mxu0
        %v2168 = vadd.f32 %v2119, %v2167
        %2169 = vdwg.mxu0
        %v2171 = vsel %vm360, %v2061, 0
        %2173 = vmatpush.msra.mxu0 0.0
        %2174 = vmatpush.msra.mxu0 0.0
        %2175 = vmatpush.msra.mxu0 0.0
        %2176 = vmatpush.msra.mxu0 0.0
        %2177 = vmatpush.msra.mxu0 0.0
        %2178 = vmatpush.msra.mxu0 0.0
        %2179 = vmatpush.msra.mxu0 0.0
        %2180 = vmatpush.msra.mxu0 0.0
        %2181 = vmatpush.msra.mxu0 0.0
        %2182 = vmatpush.msra.mxu0 0.0
        %2183 = vmatpush.msra.mxu0 0.0
        %2184 = vmatpush.msra.mxu0 0.0
        %2185 = vmatpush.msra.mxu0 %v2076
        %2186 = vmatpush.msra.mxu0 %v2068
        %2187 = vmatpush.msra.mxu0 %v2066
        %2188 = vmatpush.msra.mxu0 %v2064
        %2189 = vmatmul.f32.gmra.mxu0 %v2171
        %v2190 = vpop.f32.mrf.mxu0
        %v2191 = vadd.f32 0.0, %v2190
        %2192 = vdwg.mxu0
        %2193 = vmatpush.msra.mxu0 0.0
        %2194 = vmatpush.msra.mxu0 0.0
        %2195 = vmatpush.msra.mxu0 0.0
        %2196 = vmatpush.msra.mxu0 0.0
        %2197 = vmatpush.msra.mxu0 0.0
        %2198 = vmatpush.msra.mxu0 0.0
        %2199 = vmatpush.msra.mxu0 0.0
        %2200 = vmatpush.msra.mxu0 0.0
        %2201 = vmatpush.msra.mxu0 0.0
        %2202 = vmatpush.msra.mxu0 0.0
        %2203 = vmatpush.msra.mxu0 0.0
        %2204 = vmatpush.msra.mxu0 0.0
        %2205 = vmatpush.msra.mxu0 %v2079
        %2206 = vmatpush.msra.mxu0 %v2069
        %2207 = vmatpush.msra.mxu0 %v2067
        %2208 = vmatpush.msra.mxu0 %v2065
        %2209 = vmatmul.f32.gmra.mxu0 %v2171
        %v2210 = vpop.f32.mrf.mxu0
        %v2211 = vadd.f32 0.0, %v2210
        %2212 = vdwg.mxu0
        %2213 = vmatpush.msra.mxu0 0.0
        %2214 = vmatpush.msra.mxu0 0.0
        %2215 = vmatpush.msra.mxu0 0.0
        %2216 = vmatpush.msra.mxu0 0.0
        %2217 = vmatpush.msra.mxu0 0.0
        %2218 = vmatpush.msra.mxu0 0.0
        %2219 = vmatpush.msra.mxu0 0.0
        %2220 = vmatpush.msra.mxu0 0.0
        %2221 = vmatpush.msra.mxu0 0.0
        %2222 = vmatpush.msra.mxu0 0.0
        %2223 = vmatpush.msra.mxu0 0.0
        %2224 = vmatpush.msra.mxu0 0.0
        %2225 = vmatpush.msra.mxu0 %v2125
        %2226 = vmatpush.msra.mxu0 %v2052
        %2227 = vmatpush.msra.mxu0 %v2050
        %2228 = vmatpush.msra.mxu0 %v2048
        %2229 = vmatmul.f32.gmra.mxu0 %v2073
        %v2230 = vpop.f32.mrf.mxu0
        %v2231 = vadd.f32 %v2191, %v2230
        %2232 = vdwg.mxu0
        %2233 = vmatpush.msra.mxu0 0.0
        %2234 = vmatpush.msra.mxu0 0.0
        %2235 = vmatpush.msra.mxu0 0.0
        %2236 = vmatpush.msra.mxu0 0.0
        %2237 = vmatpush.msra.mxu0 0.0
        %2238 = vmatpush.msra.mxu0 0.0
        %2239 = vmatpush.msra.mxu0 0.0
        %2240 = vmatpush.msra.mxu0 0.0
        %2241 = vmatpush.msra.mxu0 0.0
        %2242 = vmatpush.msra.mxu0 0.0
        %2243 = vmatpush.msra.mxu0 0.0
        %2244 = vmatpush.msra.mxu0 0.0
        %2245 = vmatpush.msra.mxu0 %v2128
        %2246 = vmatpush.msra.mxu0 %v2053
        %2247 = vmatpush.msra.mxu0 %v2051
        %2248 = vmatpush.msra.mxu0 %v2049
        %2249 = vmatmul.f32.gmra.mxu0 %v2073
        %v2250 = vpop.f32.mrf.mxu0
        %v2251 = vadd.f32 %v2211, %v2250
        %2252 = vdwg.mxu0
        %v2254 = vsel %vm360, %v2063, 0
        %2256 = vmatpush.msra.mxu0 0.0
        %2257 = vmatpush.msra.mxu0 0.0
        %2258 = vmatpush.msra.mxu0 0.0
        %2259 = vmatpush.msra.mxu0 0.0
        %2260 = vmatpush.msra.mxu0 0.0
        %2261 = vmatpush.msra.mxu0 0.0
        %2262 = vmatpush.msra.mxu0 0.0
        %2263 = vmatpush.msra.mxu0 0.0
        %2264 = vmatpush.msra.mxu0 0.0
        %2265 = vmatpush.msra.mxu0 0.0
        %2266 = vmatpush.msra.mxu0 0.0
        %2267 = vmatpush.msra.mxu0 0.0
        %2268 = vmatpush.msra.mxu0 %v2076
        %2269 = vmatpush.msra.mxu0 %v2068
        %2270 = vmatpush.msra.mxu0 %v2066
        %2271 = vmatpush.msra.mxu0 %v2064
        %2272 = vmatmul.f32.gmra.mxu0 %v2254
        %v2273 = vpop.f32.mrf.mxu0
        %v2274 = vadd.f32 0.0, %v2273
        %2275 = vdwg.mxu0
        %2276 = vmatpush.msra.mxu0 0.0
        %2277 = vmatpush.msra.mxu0 0.0
        %2278 = vmatpush.msra.mxu0 0.0
        %2279 = vmatpush.msra.mxu0 0.0
        %2280 = vmatpush.msra.mxu0 0.0
        %2281 = vmatpush.msra.mxu0 0.0
        %2282 = vmatpush.msra.mxu0 0.0
        %2283 = vmatpush.msra.mxu0 0.0
        %2284 = vmatpush.msra.mxu0 0.0
        %2285 = vmatpush.msra.mxu0 0.0
        %2286 = vmatpush.msra.mxu0 0.0
        %2287 = vmatpush.msra.mxu0 0.0
        %2288 = vmatpush.msra.mxu0 %v2079
        %2289 = vmatpush.msra.mxu0 %v2069
        %2290 = vmatpush.msra.mxu0 %v2067
        %2291 = vmatpush.msra.mxu0 %v2065
        %2292 = vmatmul.f32.gmra.mxu0 %v2254
        %v2293 = vpop.f32.mrf.mxu0
        %v2294 = vadd.f32 0.0, %v2293
        %2295 = vdwg.mxu0
        %2296 = vmatpush.msra.mxu0 0.0
        %2297 = vmatpush.msra.mxu0 0.0
        %2298 = vmatpush.msra.mxu0 0.0
        %2299 = vmatpush.msra.mxu0 0.0
        %2300 = vmatpush.msra.mxu0 0.0
        %2301 = vmatpush.msra.mxu0 0.0
        %2302 = vmatpush.msra.mxu0 0.0
        %2303 = vmatpush.msra.mxu0 0.0
        %2304 = vmatpush.msra.mxu0 0.0
        %2305 = vmatpush.msra.mxu0 0.0
        %2306 = vmatpush.msra.mxu0 0.0
        %2307 = vmatpush.msra.mxu0 0.0
        %2308 = vmatpush.msra.mxu0 %v2125
        %2309 = vmatpush.msra.mxu0 %v2052
        %2310 = vmatpush.msra.mxu0 %v2050
        %2311 = vmatpush.msra.mxu0 %v2048
        %2312 = vmatmul.f32.gmra.mxu0 %v2171
        %v2313 = vpop.f32.mrf.mxu0
        %v2314 = vadd.f32 %v2274, %v2313
        %2315 = vdwg.mxu0
        %2316 = vmatpush.msra.mxu0 0.0
        %2317 = vmatpush.msra.mxu0 0.0
        %2318 = vmatpush.msra.mxu0 0.0
        %2319 = vmatpush.msra.mxu0 0.0
        %2320 = vmatpush.msra.mxu0 0.0
        %2321 = vmatpush.msra.mxu0 0.0
        %2322 = vmatpush.msra.mxu0 0.0
        %2323 = vmatpush.msra.mxu0 0.0
        %2324 = vmatpush.msra.mxu0 0.0
        %2325 = vmatpush.msra.mxu0 0.0
        %2326 = vmatpush.msra.mxu0 0.0
        %2327 = vmatpush.msra.mxu0 0.0
        %2328 = vmatpush.msra.mxu0 %v2128
        %2329 = vmatpush.msra.mxu0 %v2053
        %2330 = vmatpush.msra.mxu0 %v2051
        %2331 = vmatpush.msra.mxu0 %v2049
        %2332 = vmatmul.f32.gmra.mxu0 %v2171
        %v2333 = vpop.f32.mrf.mxu0
        %v2334 = vadd.f32 %v2294, %v2333
        %2335 = vdwg.mxu0
        %v2336 = vld [vmem:[%s2056 + $0x1] sm:$0x3f]
        %v2338 = vsel %vm360, %v2336, 0
        %2340 = vmatpush.msra.mxu0 0.0
        %2341 = vmatpush.msra.mxu0 0.0
        %2342 = vmatpush.msra.mxu0 0.0
        %2343 = vmatpush.msra.mxu0 0.0
        %2344 = vmatpush.msra.mxu0 0.0
        %2345 = vmatpush.msra.mxu0 0.0
        %2346 = vmatpush.msra.mxu0 0.0
        %2347 = vmatpush.msra.mxu0 0.0
        %2348 = vmatpush.msra.mxu0 0.0
        %2349 = vmatpush.msra.mxu0 0.0
        %2350 = vmatpush.msra.mxu0 0.0
        %2351 = vmatpush.msra.mxu0 0.0
        %2352 = vmatpush.msra.mxu0 %v2076
        %2353 = vmatpush.msra.mxu0 %v2068
        %2354 = vmatpush.msra.mxu0 %v2066
        %2355 = vmatpush.msra.mxu0 %v2064
        %2356 = vmatmul.f32.gmra.mxu0 %v2338
        %v2357 = vpop.f32.mrf.mxu0
        %v2358 = vadd.f32 0.0, %v2357
        %2359 = vdwg.mxu0
        %2360 = vmatpush.msra.mxu0 0.0
        %2361 = vmatpush.msra.mxu0 0.0
        %2362 = vmatpush.msra.mxu0 0.0
        %2363 = vmatpush.msra.mxu0 0.0
        %2364 = vmatpush.msra.mxu0 0.0
        %2365 = vmatpush.msra.mxu0 0.0
        %2366 = vmatpush.msra.mxu0 0.0
        %2367 = vmatpush.msra.mxu0 0.0
        %2368 = vmatpush.msra.mxu0 0.0
        %2369 = vmatpush.msra.mxu0 0.0
        %2370 = vmatpush.msra.mxu0 0.0
        %2371 = vmatpush.msra.mxu0 0.0
        %2372 = vmatpush.msra.mxu0 %v2079
        %2373 = vmatpush.msra.mxu0 %v2069
        %2374 = vmatpush.msra.mxu0 %v2067
        %2375 = vmatpush.msra.mxu0 %v2065
        %2376 = vmatmul.f32.gmra.mxu0 %v2338
        %v2377 = vpop.f32.mrf.mxu0
        %v2378 = vadd.f32 0.0, %v2377
        %2379 = vdwg.mxu0
        %2380 = vmatpush.msra.mxu0 0.0
        %2381 = vmatpush.msra.mxu0 0.0
        %2382 = vmatpush.msra.mxu0 0.0
        %2383 = vmatpush.msra.mxu0 0.0
        %2384 = vmatpush.msra.mxu0 0.0
        %2385 = vmatpush.msra.mxu0 0.0
        %2386 = vmatpush.msra.mxu0 0.0
        %2387 = vmatpush.msra.mxu0 0.0
        %2388 = vmatpush.msra.mxu0 0.0
        %2389 = vmatpush.msra.mxu0 0.0
        %2390 = vmatpush.msra.mxu0 0.0
        %2391 = vmatpush.msra.mxu0 0.0
        %2392 = vmatpush.msra.mxu0 %v2125
        %2393 = vmatpush.msra.mxu0 %v2052
        %2394 = vmatpush.msra.mxu0 %v2050
        %2395 = vmatpush.msra.mxu0 %v2048
        %2396 = vmatmul.f32.gmra.mxu0 %v2254
        %v2397 = vpop.f32.mrf.mxu0
        %v2398 = vadd.f32 %v2358, %v2397
        %2399 = vdwg.mxu0
        %2400 = vmatpush.msra.mxu0 0.0
        %2401 = vmatpush.msra.mxu0 0.0
        %2402 = vmatpush.msra.mxu0 0.0
        %2403 = vmatpush.msra.mxu0 0.0
        %2404 = vmatpush.msra.mxu0 0.0
        %2405 = vmatpush.msra.mxu0 0.0
        %2406 = vmatpush.msra.mxu0 0.0
        %2407 = vmatpush.msra.mxu0 0.0
        %2408 = vmatpush.msra.mxu0 0.0
        %2409 = vmatpush.msra.mxu0 0.0
        %2410 = vmatpush.msra.mxu0 0.0
        %2411 = vmatpush.msra.mxu0 0.0
        %2412 = vmatpush.msra.mxu0 %v2128
        %2413 = vmatpush.msra.mxu0 %v2053
        %2414 = vmatpush.msra.mxu0 %v2051
        %2415 = vmatpush.msra.mxu0 %v2049
        %2416 = vmatmul.f32.gmra.mxu0 %v2254
        %v2417 = vpop.f32.mrf.mxu0
        %v2418 = vadd.f32 %v2378, %v2417
        %2419 = vdwg.mxu0
        %v2420 = vld [vmem:[%s710] sm:$0xff]
        %v2421 = vld [vmem:[%s710 + $0x8] sm:$0xff]
        %v2422 = vld [vmem:[%s710 + $0x10] sm:$0xff]
        %v2423 = vld [vmem:[%s710 + $0x18] sm:$0xff]
        %v2424 = vld [vmem:[%s710 + $0x20] sm:$0xff]
        %v2425 = vld [vmem:[%s710 + $0x28] sm:$0xff]
        %v2426 = vld [vmem:[%s710 + $0x30] sm:$0xf]
        %v2427 = vld [vmem:[%s710 + $0x38] sm:$0xf]
        %v2429 = vsel %vm364, %v2426, 0
        %v2432 = vsel %vm364, %v2427, 0
        %2434 = vmatpush.msra.mxu0 0.0
        %2435 = vmatpush.msra.mxu0 0.0
        %2436 = vmatpush.msra.mxu0 0.0
        %2437 = vmatpush.msra.mxu0 0.0
        %2438 = vmatpush.msra.mxu0 0.0
        %2439 = vmatpush.msra.mxu0 0.0
        %2440 = vmatpush.msra.mxu0 0.0
        %2441 = vmatpush.msra.mxu0 0.0
        %2442 = vmatpush.msra.mxu0 0.0
        %2443 = vmatpush.msra.mxu0 0.0
        %2444 = vmatpush.msra.mxu0 0.0
        %2445 = vmatpush.msra.mxu0 0.0
        %2446 = vmatpush.msra.mxu0 %v2429
        %2447 = vmatpush.msra.mxu0 %v2424
        %2448 = vmatpush.msra.mxu0 %v2422
        %2449 = vmatpush.msra.mxu0 %v2420
        %2450 = vmatmul.f32.gmra.mxu0 %v2171
        %v2451 = vpop.f32.mrf.mxu0
        %v2452 = vadd.f32 0.0, %v2451
        %2453 = vdwg.mxu0
        %2454 = vmatpush.msra.mxu0 0.0
        %2455 = vmatpush.msra.mxu0 0.0
        %2456 = vmatpush.msra.mxu0 0.0
        %2457 = vmatpush.msra.mxu0 0.0
        %2458 = vmatpush.msra.mxu0 0.0
        %2459 = vmatpush.msra.mxu0 0.0
        %2460 = vmatpush.msra.mxu0 0.0
        %2461 = vmatpush.msra.mxu0 0.0
        %2462 = vmatpush.msra.mxu0 0.0
        %2463 = vmatpush.msra.mxu0 0.0
        %2464 = vmatpush.msra.mxu0 0.0
        %2465 = vmatpush.msra.mxu0 0.0
        %2466 = vmatpush.msra.mxu0 %v2432
        %2467 = vmatpush.msra.mxu0 %v2425
        %2468 = vmatpush.msra.mxu0 %v2423
        %2469 = vmatpush.msra.mxu0 %v2421
        %2470 = vmatmul.f32.gmra.mxu0 %v2171
        %v2471 = vpop.f32.mrf.mxu0
        %v2472 = vadd.f32 0.0, %v2471
        %2473 = vdwg.mxu0
        %v2474 = vadd.f32 %v2148, %v2452
        %v2475 = vadd.f32 %v2168, %v2472
        %2476 = vmatpush.msra.mxu0 0.0
        %2477 = vmatpush.msra.mxu0 0.0
        %2478 = vmatpush.msra.mxu0 0.0
        %2479 = vmatpush.msra.mxu0 0.0
        %2480 = vmatpush.msra.mxu0 0.0
        %2481 = vmatpush.msra.mxu0 0.0
        %2482 = vmatpush.msra.mxu0 0.0
        %2483 = vmatpush.msra.mxu0 0.0
        %2484 = vmatpush.msra.mxu0 0.0
        %2485 = vmatpush.msra.mxu0 0.0
        %2486 = vmatpush.msra.mxu0 0.0
        %2487 = vmatpush.msra.mxu0 0.0
        %2488 = vmatpush.msra.mxu0 %v2429
        %2489 = vmatpush.msra.mxu0 %v2424
        %2490 = vmatpush.msra.mxu0 %v2422
        %2491 = vmatpush.msra.mxu0 %v2420
        %2492 = vmatmul.f32.gmra.mxu0 %v2254
        %v2493 = vpop.f32.mrf.mxu0
        %v2494 = vadd.f32 0.0, %v2493
        %2495 = vdwg.mxu0
        %2496 = vmatpush.msra.mxu0 0.0
        %2497 = vmatpush.msra.mxu0 0.0
        %2498 = vmatpush.msra.mxu0 0.0
        %2499 = vmatpush.msra.mxu0 0.0
        %2500 = vmatpush.msra.mxu0 0.0
        %2501 = vmatpush.msra.mxu0 0.0
        %2502 = vmatpush.msra.mxu0 0.0
        %2503 = vmatpush.msra.mxu0 0.0
        %2504 = vmatpush.msra.mxu0 0.0
        %2505 = vmatpush.msra.mxu0 0.0
        %2506 = vmatpush.msra.mxu0 0.0
        %2507 = vmatpush.msra.mxu0 0.0
        %2508 = vmatpush.msra.mxu0 %v2432
        %2509 = vmatpush.msra.mxu0 %v2425
        %2510 = vmatpush.msra.mxu0 %v2423
        %2511 = vmatpush.msra.mxu0 %v2421
        %2512 = vmatmul.f32.gmra.mxu0 %v2254
        %v2513 = vpop.f32.mrf.mxu0
        %v2514 = vadd.f32 0.0, %v2513
        %2515 = vdwg.mxu0
        %v2516 = vadd.f32 %v2231, %v2494
        %v2517 = vadd.f32 %v2251, %v2514
        %2518 = vmatpush.msra.mxu0 0.0
        %2519 = vmatpush.msra.mxu0 0.0
        %2520 = vmatpush.msra.mxu0 0.0
        %2521 = vmatpush.msra.mxu0 0.0
        %2522 = vmatpush.msra.mxu0 0.0
        %2523 = vmatpush.msra.mxu0 0.0
        %2524 = vmatpush.msra.mxu0 0.0
        %2525 = vmatpush.msra.mxu0 0.0
        %2526 = vmatpush.msra.mxu0 0.0
        %2527 = vmatpush.msra.mxu0 0.0
        %2528 = vmatpush.msra.mxu0 0.0
        %2529 = vmatpush.msra.mxu0 0.0
        %2530 = vmatpush.msra.mxu0 %v2429
        %2531 = vmatpush.msra.mxu0 %v2424
        %2532 = vmatpush.msra.mxu0 %v2422
        %2533 = vmatpush.msra.mxu0 %v2420
        %2534 = vmatmul.f32.gmra.mxu0 %v2338
        %v2535 = vpop.f32.mrf.mxu0
        %v2536 = vadd.f32 0.0, %v2535
        %2537 = vdwg.mxu0
        %2538 = vmatpush.msra.mxu0 0.0
        %2539 = vmatpush.msra.mxu0 0.0
        %2540 = vmatpush.msra.mxu0 0.0
        %2541 = vmatpush.msra.mxu0 0.0
        %2542 = vmatpush.msra.mxu0 0.0
        %2543 = vmatpush.msra.mxu0 0.0
        %2544 = vmatpush.msra.mxu0 0.0
        %2545 = vmatpush.msra.mxu0 0.0
        %2546 = vmatpush.msra.mxu0 0.0
        %2547 = vmatpush.msra.mxu0 0.0
        %2548 = vmatpush.msra.mxu0 0.0
        %2549 = vmatpush.msra.mxu0 0.0
        %2550 = vmatpush.msra.mxu0 %v2432
        %2551 = vmatpush.msra.mxu0 %v2425
        %2552 = vmatpush.msra.mxu0 %v2423
        %2553 = vmatpush.msra.mxu0 %v2421
        %2554 = vmatmul.f32.gmra.mxu0 %v2338
        %v2555 = vpop.f32.mrf.mxu0
        %v2556 = vadd.f32 0.0, %v2555
        %2557 = vdwg.mxu0
        %v2558 = vadd.f32 %v2314, %v2536
        %v2559 = vadd.f32 %v2334, %v2556
        %v2560 = vld [vmem:[%s2058 + $0x1] sm:$0x3f]
        %v2562 = vsel %vm360, %v2560, 0
        %2564 = vmatpush.msra.mxu0 0.0
        %2565 = vmatpush.msra.mxu0 0.0
        %2566 = vmatpush.msra.mxu0 0.0
        %2567 = vmatpush.msra.mxu0 0.0
        %2568 = vmatpush.msra.mxu0 0.0
        %2569 = vmatpush.msra.mxu0 0.0
        %2570 = vmatpush.msra.mxu0 0.0
        %2571 = vmatpush.msra.mxu0 0.0
        %2572 = vmatpush.msra.mxu0 0.0
        %2573 = vmatpush.msra.mxu0 0.0
        %2574 = vmatpush.msra.mxu0 0.0
        %2575 = vmatpush.msra.mxu0 0.0
        %2576 = vmatpush.msra.mxu0 %v2429
        %2577 = vmatpush.msra.mxu0 %v2424
        %2578 = vmatpush.msra.mxu0 %v2422
        %2579 = vmatpush.msra.mxu0 %v2420
        %2580 = vmatmul.f32.gmra.mxu0 %v2562
        %v2581 = vpop.f32.mrf.mxu0
        %v2582 = vadd.f32 0.0, %v2581
        %2583 = vdwg.mxu0
        %2584 = vmatpush.msra.mxu0 0.0
        %2585 = vmatpush.msra.mxu0 0.0
        %2586 = vmatpush.msra.mxu0 0.0
        %2587 = vmatpush.msra.mxu0 0.0
        %2588 = vmatpush.msra.mxu0 0.0
        %2589 = vmatpush.msra.mxu0 0.0
        %2590 = vmatpush.msra.mxu0 0.0
        %2591 = vmatpush.msra.mxu0 0.0
        %2592 = vmatpush.msra.mxu0 0.0
        %2593 = vmatpush.msra.mxu0 0.0
        %2594 = vmatpush.msra.mxu0 0.0
        %2595 = vmatpush.msra.mxu0 0.0
        %2596 = vmatpush.msra.mxu0 %v2432
        %2597 = vmatpush.msra.mxu0 %v2425
        %2598 = vmatpush.msra.mxu0 %v2423
        %2599 = vmatpush.msra.mxu0 %v2421
        %2600 = vmatmul.f32.gmra.mxu0 %v2562
        %v2601 = vpop.f32.mrf.mxu0
        %v2602 = vadd.f32 0.0, %v2601
        %2603 = vdwg.mxu0
        %v2604 = vadd.f32 %v2398, %v2582
        %v2605 = vadd.f32 %v2418, %v2602
        %v2606 = vld [vmem:[%s897] sm:$0xff]
        %v2607 = vld [vmem:[%s897 + $0x8] sm:$0xff]
        %v2608 = vld [vmem:[%s897 + $0x10] sm:$0xff]
        %v2609 = vld [vmem:[%s897 + $0x18] sm:$0xff]
        %v2610 = vld [vmem:[%s897 + $0x20] sm:$0xff]
        %v2611 = vld [vmem:[%s897 + $0x28] sm:$0xff]
        %v2612 = vld [vmem:[%s897 + $0x30] sm:$0xf]
        %v2613 = vld [vmem:[%s897 + $0x38] sm:$0xf]
        %v2615 = vsel %vm364, %v2612, 0
        %v2618 = vsel %vm364, %v2613, 0
        %2620 = vmatpush.msra.mxu0 0.0
        %2621 = vmatpush.msra.mxu0 0.0
        %2622 = vmatpush.msra.mxu0 0.0
        %2623 = vmatpush.msra.mxu0 0.0
        %2624 = vmatpush.msra.mxu0 0.0
        %2625 = vmatpush.msra.mxu0 0.0
        %2626 = vmatpush.msra.mxu0 0.0
        %2627 = vmatpush.msra.mxu0 0.0
        %2628 = vmatpush.msra.mxu0 0.0
        %2629 = vmatpush.msra.mxu0 0.0
        %2630 = vmatpush.msra.mxu0 0.0
        %2631 = vmatpush.msra.mxu0 0.0
        %2632 = vmatpush.msra.mxu0 %v2615
        %2633 = vmatpush.msra.mxu0 %v2610
        %2634 = vmatpush.msra.mxu0 %v2608
        %2635 = vmatpush.msra.mxu0 %v2606
        %2636 = vmatmul.f32.gmra.mxu0 %v2254
        %v2637 = vpop.f32.mrf.mxu0
        %v2638 = vadd.f32 0.0, %v2637
        %2639 = vdwg.mxu0
        %2640 = vmatpush.msra.mxu0 0.0
        %2641 = vmatpush.msra.mxu0 0.0
        %2642 = vmatpush.msra.mxu0 0.0
        %2643 = vmatpush.msra.mxu0 0.0
        %2644 = vmatpush.msra.mxu0 0.0
        %2645 = vmatpush.msra.mxu0 0.0
        %2646 = vmatpush.msra.mxu0 0.0
        %2647 = vmatpush.msra.mxu0 0.0
        %2648 = vmatpush.msra.mxu0 0.0
        %2649 = vmatpush.msra.mxu0 0.0
        %2650 = vmatpush.msra.mxu0 0.0
        %2651 = vmatpush.msra.mxu0 0.0
        %2652 = vmatpush.msra.mxu0 %v2618
        %2653 = vmatpush.msra.mxu0 %v2611
        %2654 = vmatpush.msra.mxu0 %v2609
        %2655 = vmatpush.msra.mxu0 %v2607
        %2656 = vmatmul.f32.gmra.mxu0 %v2254
        %v2657 = vpop.f32.mrf.mxu0
        %v2658 = vadd.f32 0.0, %v2657
        %2659 = vdwg.mxu0
        %v2660 = vadd.f32 %v2474, %v2638
        %v2661 = vadd.f32 %v2475, %v2658
        %2662 = vmatpush.msra.mxu0 0.0
        %2663 = vmatpush.msra.mxu0 0.0
        %2664 = vmatpush.msra.mxu0 0.0
        %2665 = vmatpush.msra.mxu0 0.0
        %2666 = vmatpush.msra.mxu0 0.0
        %2667 = vmatpush.msra.mxu0 0.0
        %2668 = vmatpush.msra.mxu0 0.0
        %2669 = vmatpush.msra.mxu0 0.0
        %2670 = vmatpush.msra.mxu0 0.0
        %2671 = vmatpush.msra.mxu0 0.0
        %2672 = vmatpush.msra.mxu0 0.0
        %2673 = vmatpush.msra.mxu0 0.0
        %2674 = vmatpush.msra.mxu0 %v2615
        %2675 = vmatpush.msra.mxu0 %v2610
        %2676 = vmatpush.msra.mxu0 %v2608
        %2677 = vmatpush.msra.mxu0 %v2606
        %2678 = vmatmul.f32.gmra.mxu0 %v2338
        %v2679 = vpop.f32.mrf.mxu0
        %v2680 = vadd.f32 0.0, %v2679
        %2681 = vdwg.mxu0
        %2682 = vmatpush.msra.mxu0 0.0
        %2683 = vmatpush.msra.mxu0 0.0
        %2684 = vmatpush.msra.mxu0 0.0
        %2685 = vmatpush.msra.mxu0 0.0
        %2686 = vmatpush.msra.mxu0 0.0
        %2687 = vmatpush.msra.mxu0 0.0
        %2688 = vmatpush.msra.mxu0 0.0
        %2689 = vmatpush.msra.mxu0 0.0
        %2690 = vmatpush.msra.mxu0 0.0
        %2691 = vmatpush.msra.mxu0 0.0
        %2692 = vmatpush.msra.mxu0 0.0
        %2693 = vmatpush.msra.mxu0 0.0
        %2694 = vmatpush.msra.mxu0 %v2618
        %2695 = vmatpush.msra.mxu0 %v2611
        %2696 = vmatpush.msra.mxu0 %v2609
        %2697 = vmatpush.msra.mxu0 %v2607
        %2698 = vmatmul.f32.gmra.mxu0 %v2338
        %v2699 = vpop.f32.mrf.mxu0
        %v2700 = vadd.f32 0.0, %v2699
        %2701 = vdwg.mxu0
        %v2702 = vadd.f32 %v2516, %v2680
        %v2703 = vadd.f32 %v2517, %v2700
        %2704 = vmatpush.msra.mxu0 0.0
        %2705 = vmatpush.msra.mxu0 0.0
        %2706 = vmatpush.msra.mxu0 0.0
        %2707 = vmatpush.msra.mxu0 0.0
        %2708 = vmatpush.msra.mxu0 0.0
        %2709 = vmatpush.msra.mxu0 0.0
        %2710 = vmatpush.msra.mxu0 0.0
        %2711 = vmatpush.msra.mxu0 0.0
        %2712 = vmatpush.msra.mxu0 0.0
        %2713 = vmatpush.msra.mxu0 0.0
        %2714 = vmatpush.msra.mxu0 0.0
        %2715 = vmatpush.msra.mxu0 0.0
        %2716 = vmatpush.msra.mxu0 %v2615
        %2717 = vmatpush.msra.mxu0 %v2610
        %2718 = vmatpush.msra.mxu0 %v2608
        %2719 = vmatpush.msra.mxu0 %v2606
        %2720 = vmatmul.f32.gmra.mxu0 %v2562
        %v2721 = vpop.f32.mrf.mxu0
        %v2722 = vadd.f32 0.0, %v2721
        %2723 = vdwg.mxu0
        %2724 = vmatpush.msra.mxu0 0.0
        %2725 = vmatpush.msra.mxu0 0.0
        %2726 = vmatpush.msra.mxu0 0.0
        %2727 = vmatpush.msra.mxu0 0.0
        %2728 = vmatpush.msra.mxu0 0.0
        %2729 = vmatpush.msra.mxu0 0.0
        %2730 = vmatpush.msra.mxu0 0.0
        %2731 = vmatpush.msra.mxu0 0.0
        %2732 = vmatpush.msra.mxu0 0.0
        %2733 = vmatpush.msra.mxu0 0.0
        %2734 = vmatpush.msra.mxu0 0.0
        %2735 = vmatpush.msra.mxu0 0.0
        %2736 = vmatpush.msra.mxu0 %v2618
        %2737 = vmatpush.msra.mxu0 %v2611
        %2738 = vmatpush.msra.mxu0 %v2609
        %2739 = vmatpush.msra.mxu0 %v2607
        %2740 = vmatmul.f32.gmra.mxu0 %v2562
        %v2741 = vpop.f32.mrf.mxu0
        %v2742 = vadd.f32 0.0, %v2741
        %2743 = vdwg.mxu0
        %v2744 = vadd.f32 %v2558, %v2722
        %v2745 = vadd.f32 %v2559, %v2742
        %v2746 = vld [vmem:[%s2060 + $0x1] sm:$0x3f]
        %v2748 = vsel %vm360, %v2746, 0
        %2750 = vmatpush.msra.mxu0 0.0
        %2751 = vmatpush.msra.mxu0 0.0
        %2752 = vmatpush.msra.mxu0 0.0
        %2753 = vmatpush.msra.mxu0 0.0
        %2754 = vmatpush.msra.mxu0 0.0
        %2755 = vmatpush.msra.mxu0 0.0
        %2756 = vmatpush.msra.mxu0 0.0
        %2757 = vmatpush.msra.mxu0 0.0
        %2758 = vmatpush.msra.mxu0 0.0
        %2759 = vmatpush.msra.mxu0 0.0
        %2760 = vmatpush.msra.mxu0 0.0
        %2761 = vmatpush.msra.mxu0 0.0
        %2762 = vmatpush.msra.mxu0 %v2615
        %2763 = vmatpush.msra.mxu0 %v2610
        %2764 = vmatpush.msra.mxu0 %v2608
        %2765 = vmatpush.msra.mxu0 %v2606
        %2766 = vmatmul.f32.gmra.mxu0 %v2748
        %v2767 = vpop.f32.mrf.mxu0
        %v2768 = vadd.f32 0.0, %v2767
        %2769 = vdwg.mxu0
        %2770 = vmatpush.msra.mxu0 0.0
        %2771 = vmatpush.msra.mxu0 0.0
        %2772 = vmatpush.msra.mxu0 0.0
        %2773 = vmatpush.msra.mxu0 0.0
        %2774 = vmatpush.msra.mxu0 0.0
        %2775 = vmatpush.msra.mxu0 0.0
        %2776 = vmatpush.msra.mxu0 0.0
        %2777 = vmatpush.msra.mxu0 0.0
        %2778 = vmatpush.msra.mxu0 0.0
        %2779 = vmatpush.msra.mxu0 0.0
        %2780 = vmatpush.msra.mxu0 0.0
        %2781 = vmatpush.msra.mxu0 0.0
        %2782 = vmatpush.msra.mxu0 %v2618
        %2783 = vmatpush.msra.mxu0 %v2611
        %2784 = vmatpush.msra.mxu0 %v2609
        %2785 = vmatpush.msra.mxu0 %v2607
        %2786 = vmatmul.f32.gmra.mxu0 %v2748
        %v2787 = vpop.f32.mrf.mxu0
        %v2788 = vadd.f32 0.0, %v2787
        %2789 = vdwg.mxu0
        %v2790 = vadd.f32 %v2604, %v2768
        %v2791 = vadd.f32 %v2605, %v2788
        %v2792 = vld [vmem:[%s1084] sm:$0xff]
        %v2793 = vld [vmem:[%s1084 + $0x8] sm:$0xff]
        %v2794 = vld [vmem:[%s1084 + $0x10] sm:$0xff]
        %v2795 = vld [vmem:[%s1084 + $0x18] sm:$0xff]
        %v2796 = vld [vmem:[%s1084 + $0x20] sm:$0xff]
        %v2797 = vld [vmem:[%s1084 + $0x28] sm:$0xff]
        %v2798 = vld [vmem:[%s1084 + $0x30] sm:$0xf]
        %v2799 = vld [vmem:[%s1084 + $0x38] sm:$0xf]
        %v2801 = vsel %vm364, %v2798, 0
        %v2804 = vsel %vm364, %v2799, 0
        %2806 = vmatpush.msra.mxu0 0.0
        %2807 = vmatpush.msra.mxu0 0.0
        %2808 = vmatpush.msra.mxu0 0.0
        %2809 = vmatpush.msra.mxu0 0.0
        %2810 = vmatpush.msra.mxu0 0.0
        %2811 = vmatpush.msra.mxu0 0.0
        %2812 = vmatpush.msra.mxu0 0.0
        %2813 = vmatpush.msra.mxu0 0.0
        %2814 = vmatpush.msra.mxu0 0.0
        %2815 = vmatpush.msra.mxu0 0.0
        %2816 = vmatpush.msra.mxu0 0.0
        %2817 = vmatpush.msra.mxu0 0.0
        %2818 = vmatpush.msra.mxu0 %v2801
        %2819 = vmatpush.msra.mxu0 %v2796
        %2820 = vmatpush.msra.mxu0 %v2794
        %2821 = vmatpush.msra.mxu0 %v2792
        %2822 = vmatmul.f32.gmra.mxu0 %v2338
        %v2823 = vpop.f32.mrf.mxu0
        %v2824 = vadd.f32 0.0, %v2823
        %2825 = vdwg.mxu0
        %2826 = vmatpush.msra.mxu0 0.0
        %2827 = vmatpush.msra.mxu0 0.0
        %2828 = vmatpush.msra.mxu0 0.0
        %2829 = vmatpush.msra.mxu0 0.0
        %2830 = vmatpush.msra.mxu0 0.0
        %2831 = vmatpush.msra.mxu0 0.0
        %2832 = vmatpush.msra.mxu0 0.0
        %2833 = vmatpush.msra.mxu0 0.0
        %2834 = vmatpush.msra.mxu0 0.0
        %2835 = vmatpush.msra.mxu0 0.0
        %2836 = vmatpush.msra.mxu0 0.0
        %2837 = vmatpush.msra.mxu0 0.0
        %2838 = vmatpush.msra.mxu0 %v2804
        %2839 = vmatpush.msra.mxu0 %v2797
        %2840 = vmatpush.msra.mxu0 %v2795
        %2841 = vmatpush.msra.mxu0 %v2793
        %2842 = vmatmul.f32.gmra.mxu0 %v2338
        %v2843 = vpop.f32.mrf.mxu0
        %v2844 = vadd.f32 0.0, %v2843
        %2845 = vdwg.mxu0
        %v2846 = vadd.f32 %v2660, %v2824
        %v2847 = vadd.f32 %v2661, %v2844
        %2848 = vmatpush.msra.mxu0 0.0
        %2849 = vmatpush.msra.mxu0 0.0
        %2850 = vmatpush.msra.mxu0 0.0
        %2851 = vmatpush.msra.mxu0 0.0
        %2852 = vmatpush.msra.mxu0 0.0
        %2853 = vmatpush.msra.mxu0 0.0
        %2854 = vmatpush.msra.mxu0 0.0
        %2855 = vmatpush.msra.mxu0 0.0
        %2856 = vmatpush.msra.mxu0 0.0
        %2857 = vmatpush.msra.mxu0 0.0
        %2858 = vmatpush.msra.mxu0 0.0
        %2859 = vmatpush.msra.mxu0 0.0
        %2860 = vmatpush.msra.mxu0 %v2801
        %2861 = vmatpush.msra.mxu0 %v2796
        %2862 = vmatpush.msra.mxu0 %v2794
        %2863 = vmatpush.msra.mxu0 %v2792
        %2864 = vmatmul.f32.gmra.mxu0 %v2562
        %v2865 = vpop.f32.mrf.mxu0
        %v2866 = vadd.f32 0.0, %v2865
        %2867 = vdwg.mxu0
        %2868 = vmatpush.msra.mxu0 0.0
        %2869 = vmatpush.msra.mxu0 0.0
        %2870 = vmatpush.msra.mxu0 0.0
        %2871 = vmatpush.msra.mxu0 0.0
        %2872 = vmatpush.msra.mxu0 0.0
        %2873 = vmatpush.msra.mxu0 0.0
        %2874 = vmatpush.msra.mxu0 0.0
        %2875 = vmatpush.msra.mxu0 0.0
        %2876 = vmatpush.msra.mxu0 0.0
        %2877 = vmatpush.msra.mxu0 0.0
        %2878 = vmatpush.msra.mxu0 0.0
        %2879 = vmatpush.msra.mxu0 0.0
        %2880 = vmatpush.msra.mxu0 %v2804
        %2881 = vmatpush.msra.mxu0 %v2797
        %2882 = vmatpush.msra.mxu0 %v2795
        %2883 = vmatpush.msra.mxu0 %v2793
        %2884 = vmatmul.f32.gmra.mxu0 %v2562
        %v2885 = vpop.f32.mrf.mxu0
        %v2886 = vadd.f32 0.0, %v2885
        %2887 = vdwg.mxu0
        %v2888 = vadd.f32 %v2702, %v2866
        %v2889 = vadd.f32 %v2703, %v2886
        %2890 = vmatpush.msra.mxu0 0.0
        %2891 = vmatpush.msra.mxu0 0.0
        %2892 = vmatpush.msra.mxu0 0.0
        %2893 = vmatpush.msra.mxu0 0.0
        %2894 = vmatpush.msra.mxu0 0.0
        %2895 = vmatpush.msra.mxu0 0.0
        %2896 = vmatpush.msra.mxu0 0.0
        %2897 = vmatpush.msra.mxu0 0.0
        %2898 = vmatpush.msra.mxu0 0.0
        %2899 = vmatpush.msra.mxu0 0.0
        %2900 = vmatpush.msra.mxu0 0.0
        %2901 = vmatpush.msra.mxu0 0.0
        %2902 = vmatpush.msra.mxu0 %v2801
        %2903 = vmatpush.msra.mxu0 %v2796
        %2904 = vmatpush.msra.mxu0 %v2794
        %2905 = vmatpush.msra.mxu0 %v2792
        %2906 = vmatmul.f32.gmra.mxu0 %v2748
        %v2907 = vpop.f32.mrf.mxu0
        %v2908 = vadd.f32 0.0, %v2907
        %2909 = vdwg.mxu0
        %2910 = vmatpush.msra.mxu0 0.0
        %2911 = vmatpush.msra.mxu0 0.0
        %2912 = vmatpush.msra.mxu0 0.0
        %2913 = vmatpush.msra.mxu0 0.0
        %2914 = vmatpush.msra.mxu0 0.0
        %2915 = vmatpush.msra.mxu0 0.0
        %2916 = vmatpush.msra.mxu0 0.0
        %2917 = vmatpush.msra.mxu0 0.0
        %2918 = vmatpush.msra.mxu0 0.0
        %2919 = vmatpush.msra.mxu0 0.0
        %2920 = vmatpush.msra.mxu0 0.0
        %2921 = vmatpush.msra.mxu0 0.0
        %2922 = vmatpush.msra.mxu0 %v2804
        %2923 = vmatpush.msra.mxu0 %v2797
        %2924 = vmatpush.msra.mxu0 %v2795
        %2925 = vmatpush.msra.mxu0 %v2793
        %2926 = vmatmul.f32.gmra.mxu0 %v2748
        %v2927 = vpop.f32.mrf.mxu0
        %v2928 = vadd.f32 0.0, %v2927
        %2929 = vdwg.mxu0
        %v2930 = vadd.f32 %v2744, %v2908
        %v2931 = vadd.f32 %v2745, %v2928
        %v2932 = vld [vmem:[%s2062 + $0x1] sm:$0x3f]
        %v2934 = vsel %vm360, %v2932, 0
        %2936 = vmatpush.msra.mxu0 0.0
        %2937 = vmatpush.msra.mxu0 0.0
        %2938 = vmatpush.msra.mxu0 0.0
        %2939 = vmatpush.msra.mxu0 0.0
        %2940 = vmatpush.msra.mxu0 0.0
        %2941 = vmatpush.msra.mxu0 0.0
        %2942 = vmatpush.msra.mxu0 0.0
        %2943 = vmatpush.msra.mxu0 0.0
        %2944 = vmatpush.msra.mxu0 0.0
        %2945 = vmatpush.msra.mxu0 0.0
        %2946 = vmatpush.msra.mxu0 0.0
        %2947 = vmatpush.msra.mxu0 0.0
        %2948 = vmatpush.msra.mxu0 %v2801
        %2949 = vmatpush.msra.mxu0 %v2796
        %2950 = vmatpush.msra.mxu0 %v2794
        %2951 = vmatpush.msra.mxu0 %v2792
        %2952 = vmatmul.f32.gmra.mxu0 %v2934
        %v2953 = vpop.f32.mrf.mxu0
        %v2954 = vadd.f32 0.0, %v2953
        %2955 = vdwg.mxu0
        %2956 = vmatpush.msra.mxu0 0.0
        %2957 = vmatpush.msra.mxu0 0.0
        %2958 = vmatpush.msra.mxu0 0.0
        %2959 = vmatpush.msra.mxu0 0.0
        %2960 = vmatpush.msra.mxu0 0.0
        %2961 = vmatpush.msra.mxu0 0.0
        %2962 = vmatpush.msra.mxu0 0.0
        %2963 = vmatpush.msra.mxu0 0.0
        %2964 = vmatpush.msra.mxu0 0.0
        %2965 = vmatpush.msra.mxu0 0.0
        %2966 = vmatpush.msra.mxu0 0.0
        %2967 = vmatpush.msra.mxu0 0.0
        %2968 = vmatpush.msra.mxu0 %v2804
        %2969 = vmatpush.msra.mxu0 %v2797
        %2970 = vmatpush.msra.mxu0 %v2795
        %2971 = vmatpush.msra.mxu0 %v2793
        %2972 = vmatmul.f32.gmra.mxu0 %v2934
        %v2973 = vpop.f32.mrf.mxu0
        %v2974 = vadd.f32 0.0, %v2973
        %2975 = vdwg.mxu0
        %v2976 = vadd.f32 %v2790, %v2954
        %v2977 = vadd.f32 %v2791, %v2974
        %v2978 = vmax.f32 %v2846, %v2888
        %v2979 = vmax.f32 %v2847, %v2889
        %v2980 = vmax.f32 %v2930, %v2976
        %v2981 = vmax.f32 %v2931, %v2977
        %2984 = vrot.lane.b32.xlu0 %v2978, 8
        %v2985 = vpop.permute.xlu0 %2984
        %2986 = vrot.lane.b32.xlu0 %v2979, 8
        %v2987 = vpop.permute.xlu0 %2986
        %v2988 = vsel %vm1281, %v2985, %v2987
        %v2990 = vmax.f32 %v2978, %v2988
        %v2991 = vld [vmem:[%s2] sm:$0x1]
        %v2993 = vperm.slane %v2991, 0
        %v2995 = vadd.f32 %v2990, %v2993
        %v2996 = vmax.f32 %v2995, 0.0
        %2999 = vrot.lane.b32.xlu0 %v2980, 8
        %v3000 = vpop.permute.xlu0 %2999
        %3001 = vrot.lane.b32.xlu0 %v2981, 8
        %v3002 = vpop.permute.xlu0 %3001
        %v3003 = vsel %vm1281, %v3000, %v3002
        %v3005 = vmax.f32 %v2980, %v3003
        %v3006 = vadd.f32 %v3005, %v2993
        %v3007 = vmax.f32 %v3006, 0.0
        %v3008 = vld [vmem:[%s3] sm:$0xff]
        %v3009 = vld [vmem:[%s3 + $0x8] sm:$0xff]
        %v3010 = vld [vmem:[%s3 + $0x10] sm:$0xff]
        %v3011 = vld [vmem:[%s3 + $0x18] sm:$0xff]
        %v3012 = vld [vmem:[%s3 + $0x20] sm:$0xff]
        %v3013 = vld [vmem:[%s3 + $0x28] sm:$0xff]
        %v3014 = vld [vmem:[%s3 + $0x30] sm:$0xff]
        %v3015 = vld [vmem:[%s3 + $0x38] sm:$0xff]
        %v3016 = vld [vmem:[%s3 + $0x40] sm:$0xff]
        %v3017 = vld [vmem:[%s3 + $0x48] sm:$0xff]
        %v3018 = vld [vmem:[%s3 + $0x50] sm:$0xff]
        %v3019 = vld [vmem:[%s3 + $0x58] sm:$0xff]
        %v3020 = vld [vmem:[%s3 + $0x60] sm:$0xff]
        %v3021 = vld [vmem:[%s3 + $0x68] sm:$0xff]
        %v3022 = vld [vmem:[%s3 + $0x70] sm:$0xff]
        %v3023 = vld [vmem:[%s3 + $0x78] sm:$0xff]
        %v3024 = vld [vmem:[%s3 + $0x80] sm:$0xff]
        %v3025 = vld [vmem:[%s3 + $0x88] sm:$0xff]
        %v3026 = vld [vmem:[%s3 + $0x90] sm:$0xff]
        %v3027 = vld [vmem:[%s3 + $0x98] sm:$0xff]
        %v3028 = vld [vmem:[%s3 + $0xa0] sm:$0xff]
        %v3029 = vld [vmem:[%s3 + $0xa8] sm:$0xff]
        %v3030 = vld [vmem:[%s3 + $0xb0] sm:$0xff]
        %v3031 = vld [vmem:[%s3 + $0xb8] sm:$0xff]
        %v3032 = vld [vmem:[%s3 + $0xc0] sm:$0xff]
        %v3033 = vld [vmem:[%s3 + $0xc8] sm:$0xff]
        %v3034 = vld [vmem:[%s3 + $0xd0] sm:$0xff]
        %v3035 = vld [vmem:[%s3 + $0xd8] sm:$0xff]
        %v3036 = vld [vmem:[%s3 + $0xe0] sm:$0xff]
        %v3037 = vld [vmem:[%s3 + $0xe8] sm:$0xff]
        %v3038 = vld [vmem:[%s1332] sm:$0xff]
        %v3039 = vld [vmem:[%s1332 + $0x8] sm:$0xff]
        %v3040 = vld [vmem:[%s1332 + $0x10] sm:$0xff]
        %v3041 = vld [vmem:[%s1332 + $0x18] sm:$0xff]
        %v3042 = vld [vmem:[%s1332 + $0x20] sm:$0xff]
        %v3043 = vld [vmem:[%s1332 + $0x28] sm:$0xff]
        %v3044 = vld [vmem:[%s1332 + $0x30] sm:$0xff]
        %v3045 = vld [vmem:[%s1332 + $0x38] sm:$0xff]
        %v3046 = vld [vmem:[%s1332 + $0x40] sm:$0xff]
        %v3047 = vld [vmem:[%s1332 + $0x48] sm:$0xff]
        %v3048 = vld [vmem:[%s1332 + $0x50] sm:$0xff]
        %v3049 = vld [vmem:[%s1332 + $0x58] sm:$0xff]
        %v3050 = vld [vmem:[%s1332 + $0x60] sm:$0xff]
        %v3051 = vld [vmem:[%s1332 + $0x68] sm:$0xff]
        %v3052 = vld [vmem:[%s1332 + $0x70] sm:$0xff]
        %v3053 = vld [vmem:[%s1332 + $0x78] sm:$0xff]
        %v3054 = vld [vmem:[%s1332 + $0x80] sm:$0xff]
        %v3055 = vld [vmem:[%s1332 + $0x88] sm:$0xff]
        %v3056 = vld [vmem:[%s1332 + $0x90] sm:$0xff]
        %v3057 = vld [vmem:[%s1332 + $0x98] sm:$0xff]
        %v3058 = vld [vmem:[%s1332 + $0xa0] sm:$0xff]
        %v3059 = vld [vmem:[%s1332 + $0xa8] sm:$0xff]
        %v3060 = vld [vmem:[%s1332 + $0xb0] sm:$0xff]
        %v3061 = vld [vmem:[%s1332 + $0xb8] sm:$0xff]
        %v3062 = vld [vmem:[%s1332 + $0xc0] sm:$0xff]
        %v3063 = vld [vmem:[%s1332 + $0xc8] sm:$0xff]
        %v3064 = vld [vmem:[%s1332 + $0xd0] sm:$0xff]
        %v3065 = vld [vmem:[%s1332 + $0xd8] sm:$0xff]
        %v3066 = vld [vmem:[%s1332 + $0xe0] sm:$0xff]
        %v3067 = vld [vmem:[%s1332 + $0xe8] sm:$0xff]
        %v3069 = vsel %vm1363, %v3007, 0
        %3071 = vmatpush.msra.mxu0 0.0
        %3072 = vmatpush.msra.mxu0 %v3066
        %3073 = vmatpush.msra.mxu0 %v3064
        %3074 = vmatpush.msra.mxu0 %v3062
        %3075 = vmatpush.msra.mxu0 %v3060
        %3076 = vmatpush.msra.mxu0 %v3058
        %3077 = vmatpush.msra.mxu0 %v3056
        %3078 = vmatpush.msra.mxu0 %v3054
        %3079 = vmatpush.msra.mxu0 %v3052
        %3080 = vmatpush.msra.mxu0 %v3050
        %3081 = vmatpush.msra.mxu0 %v3048
        %3082 = vmatpush.msra.mxu0 %v3046
        %3083 = vmatpush.msra.mxu0 %v3044
        %3084 = vmatpush.msra.mxu0 %v3042
        %3085 = vmatpush.msra.mxu0 %v3040
        %3086 = vmatpush.msra.mxu0 %v3038
        %3087 = vmatmul.f32.gmra.mxu0 %v3069
        %v3088 = vpop.f32.mrf.mxu0
        %v3089 = vadd.f32 0.0, %v3088
        %3090 = vdwg.mxu0
        %3091 = vmatpush.msra.mxu0 0.0
        %3092 = vmatpush.msra.mxu0 %v3067
        %3093 = vmatpush.msra.mxu0 %v3065
        %3094 = vmatpush.msra.mxu0 %v3063
        %3095 = vmatpush.msra.mxu0 %v3061
        %3096 = vmatpush.msra.mxu0 %v3059
        %3097 = vmatpush.msra.mxu0 %v3057
        %3098 = vmatpush.msra.mxu0 %v3055
        %3099 = vmatpush.msra.mxu0 %v3053
        %3100 = vmatpush.msra.mxu0 %v3051
        %3101 = vmatpush.msra.mxu0 %v3049
        %3102 = vmatpush.msra.mxu0 %v3047
        %3103 = vmatpush.msra.mxu0 %v3045
        %3104 = vmatpush.msra.mxu0 %v3043
        %3105 = vmatpush.msra.mxu0 %v3041
        %3106 = vmatpush.msra.mxu0 %v3039
        %3107 = vmatmul.f32.gmra.mxu0 %v3069
        %v3108 = vpop.f32.mrf.mxu0
        %v3109 = vadd.f32 0.0, %v3108
        %3110 = vdwg.mxu0
        %v3112 = vsel %vm1363, %v2996, 0
        %3114 = vmatpush.msra.mxu0 0.0
        %3115 = vmatpush.msra.mxu0 %v3036
        %3116 = vmatpush.msra.mxu0 %v3034
        %3117 = vmatpush.msra.mxu0 %v3032
        %3118 = vmatpush.msra.mxu0 %v3030
        %3119 = vmatpush.msra.mxu0 %v3028
        %3120 = vmatpush.msra.mxu0 %v3026
        %3121 = vmatpush.msra.mxu0 %v3024
        %3122 = vmatpush.msra.mxu0 %v3022
        %3123 = vmatpush.msra.mxu0 %v3020
        %3124 = vmatpush.msra.mxu0 %v3018
        %3125 = vmatpush.msra.mxu0 %v3016
        %3126 = vmatpush.msra.mxu0 %v3014
        %3127 = vmatpush.msra.mxu0 %v3012
        %3128 = vmatpush.msra.mxu0 %v3010
        %3129 = vmatpush.msra.mxu0 %v3008
        %3130 = vmatmul.f32.gmra.mxu0 %v3112
        %v3131 = vpop.f32.mrf.mxu0
        %v3132 = vadd.f32 %v3089, %v3131
        %3133 = vdwg.mxu0
        %3134 = vmatpush.msra.mxu0 0.0
        %3135 = vmatpush.msra.mxu0 %v3037
        %3136 = vmatpush.msra.mxu0 %v3035
        %3137 = vmatpush.msra.mxu0 %v3033
        %3138 = vmatpush.msra.mxu0 %v3031
        %3139 = vmatpush.msra.mxu0 %v3029
        %3140 = vmatpush.msra.mxu0 %v3027
        %3141 = vmatpush.msra.mxu0 %v3025
        %3142 = vmatpush.msra.mxu0 %v3023
        %3143 = vmatpush.msra.mxu0 %v3021
        %3144 = vmatpush.msra.mxu0 %v3019
        %3145 = vmatpush.msra.mxu0 %v3017
        %3146 = vmatpush.msra.mxu0 %v3015
        %3147 = vmatpush.msra.mxu0 %v3013
        %3148 = vmatpush.msra.mxu0 %v3011
        %3149 = vmatpush.msra.mxu0 %v3009
        %3150 = vmatmul.f32.gmra.mxu0 %v3112
        %v3151 = vpop.f32.mrf.mxu0
        %v3152 = vadd.f32 %v3109, %v3151
        %3153 = vdwg.mxu0
        %v3154 = vrot.slane %v2996, 1
        %v3155 = vsel %vm1363, %v3154, 0
        %3157 = vmatpush.msra.mxu0 0.0
        %3158 = vmatpush.msra.mxu0 %v3066
        %3159 = vmatpush.msra.mxu0 %v3064
        %3160 = vmatpush.msra.mxu0 %v3062
        %3161 = vmatpush.msra.mxu0 %v3060
        %3162 = vmatpush.msra.mxu0 %v3058
        %3163 = vmatpush.msra.mxu0 %v3056
        %3164 = vmatpush.msra.mxu0 %v3054
        %3165 = vmatpush.msra.mxu0 %v3052
        %3166 = vmatpush.msra.mxu0 %v3050
        %3167 = vmatpush.msra.mxu0 %v3048
        %3168 = vmatpush.msra.mxu0 %v3046
        %3169 = vmatpush.msra.mxu0 %v3044
        %3170 = vmatpush.msra.mxu0 %v3042
        %3171 = vmatpush.msra.mxu0 %v3040
        %3172 = vmatpush.msra.mxu0 %v3038
        %3173 = vmatmul.f32.gmra.mxu0 %v3155
        %v3174 = vpop.f32.mrf.mxu0
        %v3175 = vadd.f32 0.0, %v3174
        %3176 = vdwg.mxu0
        %3177 = vmatpush.msra.mxu0 0.0
        %3178 = vmatpush.msra.mxu0 %v3067
        %3179 = vmatpush.msra.mxu0 %v3065
        %3180 = vmatpush.msra.mxu0 %v3063
        %3181 = vmatpush.msra.mxu0 %v3061
        %3182 = vmatpush.msra.mxu0 %v3059
        %3183 = vmatpush.msra.mxu0 %v3057
        %3184 = vmatpush.msra.mxu0 %v3055
        %3185 = vmatpush.msra.mxu0 %v3053
        %3186 = vmatpush.msra.mxu0 %v3051
        %3187 = vmatpush.msra.mxu0 %v3049
        %3188 = vmatpush.msra.mxu0 %v3047
        %3189 = vmatpush.msra.mxu0 %v3045
        %3190 = vmatpush.msra.mxu0 %v3043
        %3191 = vmatpush.msra.mxu0 %v3041
        %3192 = vmatpush.msra.mxu0 %v3039
        %3193 = vmatmul.f32.gmra.mxu0 %v3155
        %v3194 = vpop.f32.mrf.mxu0
        %v3195 = vadd.f32 0.0, %v3194
        %3196 = vdwg.mxu0
        %3197 = vmatpush.msra.mxu0 0.0
        %3198 = vmatpush.msra.mxu0 %v3036
        %3199 = vmatpush.msra.mxu0 %v3034
        %3200 = vmatpush.msra.mxu0 %v3032
        %3201 = vmatpush.msra.mxu0 %v3030
        %3202 = vmatpush.msra.mxu0 %v3028
        %3203 = vmatpush.msra.mxu0 %v3026
        %3204 = vmatpush.msra.mxu0 %v3024
        %3205 = vmatpush.msra.mxu0 %v3022
        %3206 = vmatpush.msra.mxu0 %v3020
        %3207 = vmatpush.msra.mxu0 %v3018
        %3208 = vmatpush.msra.mxu0 %v3016
        %3209 = vmatpush.msra.mxu0 %v3014
        %3210 = vmatpush.msra.mxu0 %v3012
        %3211 = vmatpush.msra.mxu0 %v3010
        %3212 = vmatpush.msra.mxu0 %v3008
        %3213 = vmatmul.f32.gmra.mxu0 %v3069
        %v3214 = vpop.f32.mrf.mxu0
        %v3215 = vadd.f32 %v3175, %v3214
        %3216 = vdwg.mxu0
        %3217 = vmatpush.msra.mxu0 0.0
        %3218 = vmatpush.msra.mxu0 %v3037
        %3219 = vmatpush.msra.mxu0 %v3035
        %3220 = vmatpush.msra.mxu0 %v3033
        %3221 = vmatpush.msra.mxu0 %v3031
        %3222 = vmatpush.msra.mxu0 %v3029
        %3223 = vmatpush.msra.mxu0 %v3027
        %3224 = vmatpush.msra.mxu0 %v3025
        %3225 = vmatpush.msra.mxu0 %v3023
        %3226 = vmatpush.msra.mxu0 %v3021
        %3227 = vmatpush.msra.mxu0 %v3019
        %3228 = vmatpush.msra.mxu0 %v3017
        %3229 = vmatpush.msra.mxu0 %v3015
        %3230 = vmatpush.msra.mxu0 %v3013
        %3231 = vmatpush.msra.mxu0 %v3011
        %3232 = vmatpush.msra.mxu0 %v3009
        %3233 = vmatmul.f32.gmra.mxu0 %v3069
        %v3234 = vpop.f32.mrf.mxu0
        %v3235 = vadd.f32 %v3195, %v3234
        %3236 = vdwg.mxu0
        %v3237 = vld [vmem:[%s1533] sm:$0xff]
        %v3238 = vld [vmem:[%s1533 + $0x8] sm:$0xff]
        %v3239 = vld [vmem:[%s1533 + $0x10] sm:$0xff]
        %v3240 = vld [vmem:[%s1533 + $0x18] sm:$0xff]
        %v3241 = vld [vmem:[%s1533 + $0x20] sm:$0xff]
        %v3242 = vld [vmem:[%s1533 + $0x28] sm:$0xff]
        %v3243 = vld [vmem:[%s1533 + $0x30] sm:$0xff]
        %v3244 = vld [vmem:[%s1533 + $0x38] sm:$0xff]
        %v3245 = vld [vmem:[%s1533 + $0x40] sm:$0xff]
        %v3246 = vld [vmem:[%s1533 + $0x48] sm:$0xff]
        %v3247 = vld [vmem:[%s1533 + $0x50] sm:$0xff]
        %v3248 = vld [vmem:[%s1533 + $0x58] sm:$0xff]
        %v3249 = vld [vmem:[%s1533 + $0x60] sm:$0xff]
        %v3250 = vld [vmem:[%s1533 + $0x68] sm:$0xff]
        %v3251 = vld [vmem:[%s1533 + $0x70] sm:$0xff]
        %v3252 = vld [vmem:[%s1533 + $0x78] sm:$0xff]
        %v3253 = vld [vmem:[%s1533 + $0x80] sm:$0xff]
        %v3254 = vld [vmem:[%s1533 + $0x88] sm:$0xff]
        %v3255 = vld [vmem:[%s1533 + $0x90] sm:$0xff]
        %v3256 = vld [vmem:[%s1533 + $0x98] sm:$0xff]
        %v3257 = vld [vmem:[%s1533 + $0xa0] sm:$0xff]
        %v3258 = vld [vmem:[%s1533 + $0xa8] sm:$0xff]
        %v3259 = vld [vmem:[%s1533 + $0xb0] sm:$0xff]
        %v3260 = vld [vmem:[%s1533 + $0xb8] sm:$0xff]
        %v3261 = vld [vmem:[%s1533 + $0xc0] sm:$0xff]
        %v3262 = vld [vmem:[%s1533 + $0xc8] sm:$0xff]
        %v3263 = vld [vmem:[%s1533 + $0xd0] sm:$0xff]
        %v3264 = vld [vmem:[%s1533 + $0xd8] sm:$0xff]
        %v3265 = vld [vmem:[%s1533 + $0xe0] sm:$0xff]
        %v3266 = vld [vmem:[%s1533 + $0xe8] sm:$0xff]
        %3267 = vmatpush.msra.mxu0 0.0
        %3268 = vmatpush.msra.mxu0 %v3265
        %3269 = vmatpush.msra.mxu0 %v3263
        %3270 = vmatpush.msra.mxu0 %v3261
        %3271 = vmatpush.msra.mxu0 %v3259
        %3272 = vmatpush.msra.mxu0 %v3257
        %3273 = vmatpush.msra.mxu0 %v3255
        %3274 = vmatpush.msra.mxu0 %v3253
        %3275 = vmatpush.msra.mxu0 %v3251
        %3276 = vmatpush.msra.mxu0 %v3249
        %3277 = vmatpush.msra.mxu0 %v3247
        %3278 = vmatpush.msra.mxu0 %v3245
        %3279 = vmatpush.msra.mxu0 %v3243
        %3280 = vmatpush.msra.mxu0 %v3241
        %3281 = vmatpush.msra.mxu0 %v3239
        %3282 = vmatpush.msra.mxu0 %v3237
        %3283 = vmatmul.f32.gmra.mxu0 %v3155
        %v3284 = vpop.f32.mrf.mxu0
        %v3285 = vadd.f32 0.0, %v3284
        %3286 = vdwg.mxu0
        %3287 = vmatpush.msra.mxu0 0.0
        %3288 = vmatpush.msra.mxu0 %v3266
        %3289 = vmatpush.msra.mxu0 %v3264
        %3290 = vmatpush.msra.mxu0 %v3262
        %3291 = vmatpush.msra.mxu0 %v3260
        %3292 = vmatpush.msra.mxu0 %v3258
        %3293 = vmatpush.msra.mxu0 %v3256
        %3294 = vmatpush.msra.mxu0 %v3254
        %3295 = vmatpush.msra.mxu0 %v3252
        %3296 = vmatpush.msra.mxu0 %v3250
        %3297 = vmatpush.msra.mxu0 %v3248
        %3298 = vmatpush.msra.mxu0 %v3246
        %3299 = vmatpush.msra.mxu0 %v3244
        %3300 = vmatpush.msra.mxu0 %v3242
        %3301 = vmatpush.msra.mxu0 %v3240
        %3302 = vmatpush.msra.mxu0 %v3238
        %3303 = vmatmul.f32.gmra.mxu0 %v3155
        %v3304 = vpop.f32.mrf.mxu0
        %v3305 = vadd.f32 0.0, %v3304
        %3306 = vdwg.mxu0
        %v3307 = vadd.f32 %v3132, %v3285
        %v3308 = vadd.f32 %v3152, %v3305
        %v3309 = vrot.slane %v3007, 1
        %v3310 = vsel %vm1363, %v3309, 0
        %3312 = vmatpush.msra.mxu0 0.0
        %3313 = vmatpush.msra.mxu0 %v3265
        %3314 = vmatpush.msra.mxu0 %v3263
        %3315 = vmatpush.msra.mxu0 %v3261
        %3316 = vmatpush.msra.mxu0 %v3259
        %3317 = vmatpush.msra.mxu0 %v3257
        %3318 = vmatpush.msra.mxu0 %v3255
        %3319 = vmatpush.msra.mxu0 %v3253
        %3320 = vmatpush.msra.mxu0 %v3251
        %3321 = vmatpush.msra.mxu0 %v3249
        %3322 = vmatpush.msra.mxu0 %v3247
        %3323 = vmatpush.msra.mxu0 %v3245
        %3324 = vmatpush.msra.mxu0 %v3243
        %3325 = vmatpush.msra.mxu0 %v3241
        %3326 = vmatpush.msra.mxu0 %v3239
        %3327 = vmatpush.msra.mxu0 %v3237
        %3328 = vmatmul.f32.gmra.mxu0 %v3310
        %v3329 = vpop.f32.mrf.mxu0
        %v3330 = vadd.f32 0.0, %v3329
        %3331 = vdwg.mxu0
        %3332 = vmatpush.msra.mxu0 0.0
        %3333 = vmatpush.msra.mxu0 %v3266
        %3334 = vmatpush.msra.mxu0 %v3264
        %3335 = vmatpush.msra.mxu0 %v3262
        %3336 = vmatpush.msra.mxu0 %v3260
        %3337 = vmatpush.msra.mxu0 %v3258
        %3338 = vmatpush.msra.mxu0 %v3256
        %3339 = vmatpush.msra.mxu0 %v3254
        %3340 = vmatpush.msra.mxu0 %v3252
        %3341 = vmatpush.msra.mxu0 %v3250
        %3342 = vmatpush.msra.mxu0 %v3248
        %3343 = vmatpush.msra.mxu0 %v3246
        %3344 = vmatpush.msra.mxu0 %v3244
        %3345 = vmatpush.msra.mxu0 %v3242
        %3346 = vmatpush.msra.mxu0 %v3240
        %3347 = vmatpush.msra.mxu0 %v3238
        %3348 = vmatmul.f32.gmra.mxu0 %v3310
        %v3349 = vpop.f32.mrf.mxu0
        %v3350 = vadd.f32 0.0, %v3349
        %3351 = vdwg.mxu0
        %v3352 = vadd.f32 %v3215, %v3330
        %v3353 = vadd.f32 %v3235, %v3350
        %v3354 = vld [vmem:[%s1651] sm:$0xff]
        %v3355 = vld [vmem:[%s1651 + $0x8] sm:$0xff]
        %v3356 = vld [vmem:[%s1651 + $0x10] sm:$0xff]
        %v3357 = vld [vmem:[%s1651 + $0x18] sm:$0xff]
        %v3358 = vld [vmem:[%s1651 + $0x20] sm:$0xff]
        %v3359 = vld [vmem:[%s1651 + $0x28] sm:$0xff]
        %v3360 = vld [vmem:[%s1651 + $0x30] sm:$0xff]
        %v3361 = vld [vmem:[%s1651 + $0x38] sm:$0xff]
        %v3362 = vld [vmem:[%s1651 + $0x40] sm:$0xff]
        %v3363 = vld [vmem:[%s1651 + $0x48] sm:$0xff]
        %v3364 = vld [vmem:[%s1651 + $0x50] sm:$0xff]
        %v3365 = vld [vmem:[%s1651 + $0x58] sm:$0xff]
        %v3366 = vld [vmem:[%s1651 + $0x60] sm:$0xff]
        %v3367 = vld [vmem:[%s1651 + $0x68] sm:$0xff]
        %v3368 = vld [vmem:[%s1651 + $0x70] sm:$0xff]
        %v3369 = vld [vmem:[%s1651 + $0x78] sm:$0xff]
        %v3370 = vld [vmem:[%s1651 + $0x80] sm:$0xff]
        %v3371 = vld [vmem:[%s1651 + $0x88] sm:$0xff]
        %v3372 = vld [vmem:[%s1651 + $0x90] sm:$0xff]
        %v3373 = vld [vmem:[%s1651 + $0x98] sm:$0xff]
        %v3374 = vld [vmem:[%s1651 + $0xa0] sm:$0xff]
        %v3375 = vld [vmem:[%s1651 + $0xa8] sm:$0xff]
        %v3376 = vld [vmem:[%s1651 + $0xb0] sm:$0xff]
        %v3377 = vld [vmem:[%s1651 + $0xb8] sm:$0xff]
        %v3378 = vld [vmem:[%s1651 + $0xc0] sm:$0xff]
        %v3379 = vld [vmem:[%s1651 + $0xc8] sm:$0xff]
        %v3380 = vld [vmem:[%s1651 + $0xd0] sm:$0xff]
        %v3381 = vld [vmem:[%s1651 + $0xd8] sm:$0xff]
        %v3382 = vld [vmem:[%s1651 + $0xe0] sm:$0xff]
        %v3383 = vld [vmem:[%s1651 + $0xe8] sm:$0xff]
        %3384 = vmatpush.msra.mxu0 0.0
        %3385 = vmatpush.msra.mxu0 %v3382
        %3386 = vmatpush.msra.mxu0 %v3380
        %3387 = vmatpush.msra.mxu0 %v3378
        %3388 = vmatpush.msra.mxu0 %v3376
        %3389 = vmatpush.msra.mxu0 %v3374
        %3390 = vmatpush.msra.mxu0 %v3372
        %3391 = vmatpush.msra.mxu0 %v3370
        %3392 = vmatpush.msra.mxu0 %v3368
        %3393 = vmatpush.msra.mxu0 %v3366
        %3394 = vmatpush.msra.mxu0 %v3364
        %3395 = vmatpush.msra.mxu0 %v3362
        %3396 = vmatpush.msra.mxu0 %v3360
        %3397 = vmatpush.msra.mxu0 %v3358
        %3398 = vmatpush.msra.mxu0 %v3356
        %3399 = vmatpush.msra.mxu0 %v3354
        %3400 = vmatmul.f32.gmra.mxu0 %v3310
        %v3401 = vpop.f32.mrf.mxu0
        %v3402 = vadd.f32 0.0, %v3401
        %3403 = vdwg.mxu0
        %3404 = vmatpush.msra.mxu0 0.0
        %3405 = vmatpush.msra.mxu0 %v3383
        %3406 = vmatpush.msra.mxu0 %v3381
        %3407 = vmatpush.msra.mxu0 %v3379
        %3408 = vmatpush.msra.mxu0 %v3377
        %3409 = vmatpush.msra.mxu0 %v3375
        %3410 = vmatpush.msra.mxu0 %v3373
        %3411 = vmatpush.msra.mxu0 %v3371
        %3412 = vmatpush.msra.mxu0 %v3369
        %3413 = vmatpush.msra.mxu0 %v3367
        %3414 = vmatpush.msra.mxu0 %v3365
        %3415 = vmatpush.msra.mxu0 %v3363
        %3416 = vmatpush.msra.mxu0 %v3361
        %3417 = vmatpush.msra.mxu0 %v3359
        %3418 = vmatpush.msra.mxu0 %v3357
        %3419 = vmatpush.msra.mxu0 %v3355
        %3420 = vmatmul.f32.gmra.mxu0 %v3310
        %v3421 = vpop.f32.mrf.mxu0
        %v3422 = vadd.f32 0.0, %v3421
        %3423 = vdwg.mxu0
        %v3424 = vadd.f32 %v3307, %v3402
        %v3425 = vadd.f32 %v3308, %v3422
        %v3426 = vrot.slane %v2996, 2
        %v3427 = vsel %vm1363, %v3426, 0
        %3429 = vmatpush.msra.mxu0 0.0
        %3430 = vmatpush.msra.mxu0 %v3382
        %3431 = vmatpush.msra.mxu0 %v3380
        %3432 = vmatpush.msra.mxu0 %v3378
        %3433 = vmatpush.msra.mxu0 %v3376
        %3434 = vmatpush.msra.mxu0 %v3374
        %3435 = vmatpush.msra.mxu0 %v3372
        %3436 = vmatpush.msra.mxu0 %v3370
        %3437 = vmatpush.msra.mxu0 %v3368
        %3438 = vmatpush.msra.mxu0 %v3366
        %3439 = vmatpush.msra.mxu0 %v3364
        %3440 = vmatpush.msra.mxu0 %v3362
        %3441 = vmatpush.msra.mxu0 %v3360
        %3442 = vmatpush.msra.mxu0 %v3358
        %3443 = vmatpush.msra.mxu0 %v3356
        %3444 = vmatpush.msra.mxu0 %v3354
        %3445 = vmatmul.f32.gmra.mxu0 %v3427
        %v3446 = vpop.f32.mrf.mxu0
        %v3447 = vadd.f32 0.0, %v3446
        %3448 = vdwg.mxu0
        %3449 = vmatpush.msra.mxu0 0.0
        %3450 = vmatpush.msra.mxu0 %v3383
        %3451 = vmatpush.msra.mxu0 %v3381
        %3452 = vmatpush.msra.mxu0 %v3379
        %3453 = vmatpush.msra.mxu0 %v3377
        %3454 = vmatpush.msra.mxu0 %v3375
        %3455 = vmatpush.msra.mxu0 %v3373
        %3456 = vmatpush.msra.mxu0 %v3371
        %3457 = vmatpush.msra.mxu0 %v3369
        %3458 = vmatpush.msra.mxu0 %v3367
        %3459 = vmatpush.msra.mxu0 %v3365
        %3460 = vmatpush.msra.mxu0 %v3363
        %3461 = vmatpush.msra.mxu0 %v3361
        %3462 = vmatpush.msra.mxu0 %v3359
        %3463 = vmatpush.msra.mxu0 %v3357
        %3464 = vmatpush.msra.mxu0 %v3355
        %3465 = vmatmul.f32.gmra.mxu0 %v3427
        %v3466 = vpop.f32.mrf.mxu0
        %v3467 = vadd.f32 0.0, %v3466
        %3468 = vdwg.mxu0
        %v3469 = vadd.f32 %v3352, %v3447
        %v3470 = vadd.f32 %v3353, %v3467
        %v3471 = vld [vmem:[%s1769] sm:$0xff]
        %v3472 = vld [vmem:[%s1769 + $0x8] sm:$0xff]
        %v3473 = vld [vmem:[%s1769 + $0x10] sm:$0xff]
        %v3474 = vld [vmem:[%s1769 + $0x18] sm:$0xff]
        %v3475 = vld [vmem:[%s1769 + $0x20] sm:$0xff]
        %v3476 = vld [vmem:[%s1769 + $0x28] sm:$0xff]
        %v3477 = vld [vmem:[%s1769 + $0x30] sm:$0xff]
        %v3478 = vld [vmem:[%s1769 + $0x38] sm:$0xff]
        %v3479 = vld [vmem:[%s1769 + $0x40] sm:$0xff]
        %v3480 = vld [vmem:[%s1769 + $0x48] sm:$0xff]
        %v3481 = vld [vmem:[%s1769 + $0x50] sm:$0xff]
        %v3482 = vld [vmem:[%s1769 + $0x58] sm:$0xff]
        %v3483 = vld [vmem:[%s1769 + $0x60] sm:$0xff]
        %v3484 = vld [vmem:[%s1769 + $0x68] sm:$0xff]
        %v3485 = vld [vmem:[%s1769 + $0x70] sm:$0xff]
        %v3486 = vld [vmem:[%s1769 + $0x78] sm:$0xff]
        %v3487 = vld [vmem:[%s1769 + $0x80] sm:$0xff]
        %v3488 = vld [vmem:[%s1769 + $0x88] sm:$0xff]
        %v3489 = vld [vmem:[%s1769 + $0x90] sm:$0xff]
        %v3490 = vld [vmem:[%s1769 + $0x98] sm:$0xff]
        %v3491 = vld [vmem:[%s1769 + $0xa0] sm:$0xff]
        %v3492 = vld [vmem:[%s1769 + $0xa8] sm:$0xff]
        %v3493 = vld [vmem:[%s1769 + $0xb0] sm:$0xff]
        %v3494 = vld [vmem:[%s1769 + $0xb8] sm:$0xff]
        %v3495 = vld [vmem:[%s1769 + $0xc0] sm:$0xff]
        %v3496 = vld [vmem:[%s1769 + $0xc8] sm:$0xff]
        %v3497 = vld [vmem:[%s1769 + $0xd0] sm:$0xff]
        %v3498 = vld [vmem:[%s1769 + $0xd8] sm:$0xff]
        %v3499 = vld [vmem:[%s1769 + $0xe0] sm:$0xff]
        %v3500 = vld [vmem:[%s1769 + $0xe8] sm:$0xff]
        %3501 = vmatpush.msra.mxu0 0.0
        %3502 = vmatpush.msra.mxu0 %v3499
        %3503 = vmatpush.msra.mxu0 %v3497
        %3504 = vmatpush.msra.mxu0 %v3495
        %3505 = vmatpush.msra.mxu0 %v3493
        %3506 = vmatpush.msra.mxu0 %v3491
        %3507 = vmatpush.msra.mxu0 %v3489
        %3508 = vmatpush.msra.mxu0 %v3487
        %3509 = vmatpush.msra.mxu0 %v3485
        %3510 = vmatpush.msra.mxu0 %v3483
        %3511 = vmatpush.msra.mxu0 %v3481
        %3512 = vmatpush.msra.mxu0 %v3479
        %3513 = vmatpush.msra.mxu0 %v3477
        %3514 = vmatpush.msra.mxu0 %v3475
        %3515 = vmatpush.msra.mxu0 %v3473
        %3516 = vmatpush.msra.mxu0 %v3471
        %3517 = vmatmul.f32.gmra.mxu0 %v3427
        %v3518 = vpop.f32.mrf.mxu0
        %v3519 = vadd.f32 0.0, %v3518
        %3520 = vdwg.mxu0
        %3521 = vmatpush.msra.mxu0 0.0
        %3522 = vmatpush.msra.mxu0 %v3500
        %3523 = vmatpush.msra.mxu0 %v3498
        %3524 = vmatpush.msra.mxu0 %v3496
        %3525 = vmatpush.msra.mxu0 %v3494
        %3526 = vmatpush.msra.mxu0 %v3492
        %3527 = vmatpush.msra.mxu0 %v3490
        %3528 = vmatpush.msra.mxu0 %v3488
        %3529 = vmatpush.msra.mxu0 %v3486
        %3530 = vmatpush.msra.mxu0 %v3484
        %3531 = vmatpush.msra.mxu0 %v3482
        %3532 = vmatpush.msra.mxu0 %v3480
        %3533 = vmatpush.msra.mxu0 %v3478
        %3534 = vmatpush.msra.mxu0 %v3476
        %3535 = vmatpush.msra.mxu0 %v3474
        %3536 = vmatpush.msra.mxu0 %v3472
        %3537 = vmatmul.f32.gmra.mxu0 %v3427
        %v3538 = vpop.f32.mrf.mxu0
        %v3539 = vadd.f32 0.0, %v3538
        %3540 = vdwg.mxu0
        %v3541 = vadd.f32 %v3424, %v3519
        %v3542 = vadd.f32 %v3425, %v3539
        %v3543 = vrot.slane %v3007, 2
        %v3544 = vsel %vm1363, %v3543, 0
        %3546 = vmatpush.msra.mxu0 0.0
        %3547 = vmatpush.msra.mxu0 %v3499
        %3548 = vmatpush.msra.mxu0 %v3497
        %3549 = vmatpush.msra.mxu0 %v3495
        %3550 = vmatpush.msra.mxu0 %v3493
        %3551 = vmatpush.msra.mxu0 %v3491
        %3552 = vmatpush.msra.mxu0 %v3489
        %3553 = vmatpush.msra.mxu0 %v3487
        %3554 = vmatpush.msra.mxu0 %v3485
        %3555 = vmatpush.msra.mxu0 %v3483
        %3556 = vmatpush.msra.mxu0 %v3481
        %3557 = vmatpush.msra.mxu0 %v3479
        %3558 = vmatpush.msra.mxu0 %v3477
        %3559 = vmatpush.msra.mxu0 %v3475
        %3560 = vmatpush.msra.mxu0 %v3473
        %3561 = vmatpush.msra.mxu0 %v3471
        %3562 = vmatmul.f32.gmra.mxu0 %v3544
        %v3563 = vpop.f32.mrf.mxu0
        %v3564 = vadd.f32 0.0, %v3563
        %3565 = vdwg.mxu0
        %3566 = vmatpush.msra.mxu0 0.0
        %3567 = vmatpush.msra.mxu0 %v3500
        %3568 = vmatpush.msra.mxu0 %v3498
        %3569 = vmatpush.msra.mxu0 %v3496
        %3570 = vmatpush.msra.mxu0 %v3494
        %3571 = vmatpush.msra.mxu0 %v3492
        %3572 = vmatpush.msra.mxu0 %v3490
        %3573 = vmatpush.msra.mxu0 %v3488
        %3574 = vmatpush.msra.mxu0 %v3486
        %3575 = vmatpush.msra.mxu0 %v3484
        %3576 = vmatpush.msra.mxu0 %v3482
        %3577 = vmatpush.msra.mxu0 %v3480
        %3578 = vmatpush.msra.mxu0 %v3478
        %3579 = vmatpush.msra.mxu0 %v3476
        %3580 = vmatpush.msra.mxu0 %v3474
        %3581 = vmatpush.msra.mxu0 %v3472
        %3582 = vmatmul.f32.gmra.mxu0 %v3544
        %v3583 = vpop.f32.mrf.mxu0
        %v3584 = vadd.f32 0.0, %v3583
        %3585 = vdwg.mxu0
        %v3586 = vadd.f32 %v3469, %v3564
        %v3587 = vadd.f32 %v3470, %v3584
        %v3588 = vmax.f32 %v3541, %v3586
        %v3589 = vmax.f32 %v3542, %v3587
        %3592 = vrot.lane.b32.xlu0 %v3588, 48
        %v3593 = vpop.permute.xlu0 %3592
        %3594 = vrot.lane.b32.xlu0 %v3589, 48
        %v3595 = vpop.permute.xlu0 %3594
        %v3596 = vsel %vm1895, %v3593, %v3595
        %v3598 = vmax.f32 %v3588, %v3596
        %v3599 = vld [vmem:[%s4] sm:$0x1]
        %v3601 = vperm.slane %v3599, 0
        %v3603 = vadd.f32 %v3598, %v3601
        %v3604 = vmax.f32 %v3603, 0.0
        %v3605 = vld [vmem:[%s5] sm:$0xff]
        %v3606 = vld [vmem:[%s5 + $0x8] sm:$0xff]
        %v3607 = vld [vmem:[%s5 + $0x10] sm:$0xff]
        %v3608 = vld [vmem:[%s5 + $0x18] sm:$0xff]
        %v3609 = vld [vmem:[%s5 + $0x20] sm:$0xff]
        %v3610 = vld [vmem:[%s5 + $0x28] sm:$0xff]
        %v3611 = vld [vmem:[%s5 + $0x30] sm:$0xff]
        %v3612 = vld [vmem:[%s5 + $0x38] sm:$0xff]
        %v3613 = vld [vmem:[%s5 + $0x40] sm:$0xff]
        %v3614 = vld [vmem:[%s5 + $0x48] sm:$0xff]
        %v3615 = vld [vmem:[%s1915] sm:$0xff]
        %v3616 = vld [vmem:[%s1915 + $0x8] sm:$0xff]
        %v3617 = vld [vmem:[%s1915 + $0x10] sm:$0xff]
        %v3618 = vld [vmem:[%s1915 + $0x18] sm:$0xff]
        %v3619 = vld [vmem:[%s1915 + $0x20] sm:$0xff]
        %v3620 = vld [vmem:[%s1915 + $0x28] sm:$0xff]
        %v3621 = vld [vmem:[%s1915 + $0x30] sm:$0xff]
        %v3622 = vld [vmem:[%s1915 + $0x38] sm:$0xff]
        %v3623 = vld [vmem:[%s1915 + $0x40] sm:$0xff]
        %v3624 = vld [vmem:[%s1915 + $0x48] sm:$0xff]
        %v3626 = vrot.slane %v3604, 1
        %v3627 = vsel %vm1928, %v3626, 0
        %3629 = vmatpush.msra.mxu0 0.0
        %3630 = vmatpush.msra.mxu0 0.0
        %3631 = vmatpush.msra.mxu0 0.0
        %3632 = vmatpush.msra.mxu0 0.0
        %3633 = vmatpush.msra.mxu0 0.0
        %3634 = vmatpush.msra.mxu0 0.0
        %3635 = vmatpush.msra.mxu0 %v3624
        %3636 = vmatpush.msra.mxu0 %v3623
        %3637 = vmatpush.msra.mxu0 %v3622
        %3638 = vmatpush.msra.mxu0 %v3621
        %3639 = vmatpush.msra.mxu0 %v3620
        %3640 = vmatpush.msra.mxu0 %v3619
        %3641 = vmatpush.msra.mxu0 %v3618
        %3642 = vmatpush.msra.mxu0 %v3617
        %3643 = vmatpush.msra.mxu0 %v3616
        %3644 = vmatpush.msra.mxu0 %v3615
        %3645 = vmatmul.f32.gmra.mxu0 %v3627
        %v3646 = vpop.f32.mrf.mxu0
        %v3647 = vadd.f32 0.0, %v3646
        %3648 = vdwg.mxu0
        %v3649 = vsel %vm1928, %v3604, 0
        %3651 = vmatpush.msra.mxu0 0.0
        %3652 = vmatpush.msra.mxu0 0.0
        %3653 = vmatpush.msra.mxu0 0.0
        %3654 = vmatpush.msra.mxu0 0.0
        %3655 = vmatpush.msra.mxu0 0.0
        %3656 = vmatpush.msra.mxu0 0.0
        %3657 = vmatpush.msra.mxu0 %v3614
        %3658 = vmatpush.msra.mxu0 %v3613
        %3659 = vmatpush.msra.mxu0 %v3612
        %3660 = vmatpush.msra.mxu0 %v3611
        %3661 = vmatpush.msra.mxu0 %v3610
        %3662 = vmatpush.msra.mxu0 %v3609
        %3663 = vmatpush.msra.mxu0 %v3608
        %3664 = vmatpush.msra.mxu0 %v3607
        %3665 = vmatpush.msra.mxu0 %v3606
        %3666 = vmatpush.msra.mxu0 %v3605
        %3667 = vmatmul.f32.gmra.mxu0 %v3649
        %v3668 = vpop.f32.mrf.mxu0
        %v3669 = vadd.f32 %v3647, %v3668
        %3670 = vdwg.mxu0
        %v3671 = vld [vmem:[%s1973] sm:$0xff]
        %v3672 = vld [vmem:[%s1973 + $0x8] sm:$0xff]
        %v3673 = vld [vmem:[%s1973 + $0x10] sm:$0xff]
        %v3674 = vld [vmem:[%s1973 + $0x18] sm:$0xff]
        %v3675 = vld [vmem:[%s1973 + $0x20] sm:$0xff]
        %v3676 = vld [vmem:[%s1973 + $0x28] sm:$0xff]
        %v3677 = vld [vmem:[%s1973 + $0x30] sm:$0xff]
        %v3678 = vld [vmem:[%s1973 + $0x38] sm:$0xff]
        %v3679 = vld [vmem:[%s1973 + $0x40] sm:$0xff]
        %v3680 = vld [vmem:[%s1973 + $0x48] sm:$0xff]
        %v3681 = vrot.slane %v3604, 2
        %v3682 = vsel %vm1928, %v3681, 0
        %3684 = vmatpush.msra.mxu0 0.0
        %3685 = vmatpush.msra.mxu0 0.0
        %3686 = vmatpush.msra.mxu0 0.0
        %3687 = vmatpush.msra.mxu0 0.0
        %3688 = vmatpush.msra.mxu0 0.0
        %3689 = vmatpush.msra.mxu0 0.0
        %3690 = vmatpush.msra.mxu0 %v3680
        %3691 = vmatpush.msra.mxu0 %v3679
        %3692 = vmatpush.msra.mxu0 %v3678
        %3693 = vmatpush.msra.mxu0 %v3677
        %3694 = vmatpush.msra.mxu0 %v3676
        %3695 = vmatpush.msra.mxu0 %v3675
        %3696 = vmatpush.msra.mxu0 %v3674
        %3697 = vmatpush.msra.mxu0 %v3673
        %3698 = vmatpush.msra.mxu0 %v3672
        %3699 = vmatpush.msra.mxu0 %v3671
        %3700 = vmatmul.f32.gmra.mxu0 %v3682
        %v3701 = vpop.f32.mrf.mxu0
        %v3702 = vadd.f32 0.0, %v3701
        %3703 = vdwg.mxu0
        %v3704 = vadd.f32 %v3669, %v3702
        %v3705 = vld [vmem:[%s2008] sm:$0xff]
        %v3706 = vld [vmem:[%s2008 + $0x8] sm:$0xff]
        %v3707 = vld [vmem:[%s2008 + $0x10] sm:$0xff]
        %v3708 = vld [vmem:[%s2008 + $0x18] sm:$0xff]
        %v3709 = vld [vmem:[%s2008 + $0x20] sm:$0xff]
        %v3710 = vld [vmem:[%s2008 + $0x28] sm:$0xff]
        %v3711 = vld [vmem:[%s2008 + $0x30] sm:$0xff]
        %v3712 = vld [vmem:[%s2008 + $0x38] sm:$0xff]
        %v3713 = vld [vmem:[%s2008 + $0x40] sm:$0xff]
        %v3714 = vld [vmem:[%s2008 + $0x48] sm:$0xff]
        %v3715 = vrot.slane %v3604, 3
        %v3716 = vsel %vm1928, %v3715, 0
        %3718 = vmatpush.msra.mxu0 0.0
        %3719 = vmatpush.msra.mxu0 0.0
        %3720 = vmatpush.msra.mxu0 0.0
        %3721 = vmatpush.msra.mxu0 0.0
        %3722 = vmatpush.msra.mxu0 0.0
        %3723 = vmatpush.msra.mxu0 0.0
        %3724 = vmatpush.msra.mxu0 %v3714
        %3725 = vmatpush.msra.mxu0 %v3713
        %3726 = vmatpush.msra.mxu0 %v3712
        %3727 = vmatpush.msra.mxu0 %v3711
        %3728 = vmatpush.msra.mxu0 %v3710
        %3729 = vmatpush.msra.mxu0 %v3709
        %3730 = vmatpush.msra.mxu0 %v3708
        %3731 = vmatpush.msra.mxu0 %v3707
        %3732 = vmatpush.msra.mxu0 %v3706
        %3733 = vmatpush.msra.mxu0 %v3705
        %3734 = vmatmul.f32.gmra.mxu0 %v3716
        %v3735 = vpop.f32.mrf.mxu0
        %v3736 = vadd.f32 0.0, %v3735
        %3737 = vdwg.mxu0
        %v3738 = vadd.f32 %v3704, %v3736
        %v3739 = vld [vmem:[%s6] sm:$0x1]
        %v3740 = vadd.f32 %v3738, %v3739
        %v3741 = vmax.f32 %v3740, 0.0
        %3742 = vst.msk [vmem:[#allocation2 + $0x1] sm:$0x1] %vm2046, %v3741
        %v3743 = vld [vmem:[%s1] sm:$0xff]
        %v3744 = vld [vmem:[%s1 + $0x8] sm:$0xff]
        %v3745 = vld [vmem:[%s1 + $0x10] sm:$0xff]
        %v3746 = vld [vmem:[%s1 + $0x18] sm:$0xff]
        %v3747 = vld [vmem:[%s1 + $0x20] sm:$0xff]
        %v3748 = vld [vmem:[%s1 + $0x28] sm:$0xff]
        %v3749 = vld [vmem:[%s1 + $0x30] sm:$0xf]
        %v3750 = vld [vmem:[%s1 + $0x38] sm:$0xf]
        %s3751 = scalar_lea.vmem %s334, 64
        %v3752 = vld [vmem:[%s3751] sm:$0x3f]
        %s3753 = scalar_lea.vmem %s334, 72
        %v3754 = vld [vmem:[%s3753] sm:$0x3f]
        %s3755 = scalar_lea.vmem %s334, 80
        %v3756 = vld [vmem:[%s3755] sm:$0x3f]
        %s3757 = scalar_lea.vmem %s334, 88
        %v3758 = vld [vmem:[%s3757] sm:$0x3f]
        %v3759 = vld [vmem:[%s351] sm:$0xff]
        %v3760 = vld [vmem:[%s351 + $0x8] sm:$0xff]
        %v3761 = vld [vmem:[%s351 + $0x10] sm:$0xff]
        %v3762 = vld [vmem:[%s351 + $0x18] sm:$0xff]
        %v3763 = vld [vmem:[%s351 + $0x20] sm:$0xff]
        %v3764 = vld [vmem:[%s351 + $0x28] sm:$0xff]
        %v3765 = vld [vmem:[%s351 + $0x30] sm:$0xf]
        %v3766 = vld [vmem:[%s351 + $0x38] sm:$0xf]
        %v3768 = vsel %vm360, %v3754, 0
        %v3771 = vsel %vm364, %v3765, 0
        %v3774 = vsel %vm364, %v3766, 0
        %3776 = vmatpush.msra.mxu0 0.0
        %3777 = vmatpush.msra.mxu0 0.0
        %3778 = vmatpush.msra.mxu0 0.0
        %3779 = vmatpush.msra.mxu0 0.0
        %3780 = vmatpush.msra.mxu0 0.0
        %3781 = vmatpush.msra.mxu0 0.0
        %3782 = vmatpush.msra.mxu0 0.0
        %3783 = vmatpush.msra.mxu0 0.0
        %3784 = vmatpush.msra.mxu0 0.0
        %3785 = vmatpush.msra.mxu0 0.0
        %3786 = vmatpush.msra.mxu0 0.0
        %3787 = vmatpush.msra.mxu0 0.0
        %3788 = vmatpush.msra.mxu0 %v3771
        %3789 = vmatpush.msra.mxu0 %v3763
        %3790 = vmatpush.msra.mxu0 %v3761
        %3791 = vmatpush.msra.mxu0 %v3759
        %3792 = vmatmul.f32.gmra.mxu0 %v3768
        %v3793 = vpop.f32.mrf.mxu0
        %v3794 = vadd.f32 0.0, %v3793
        %3795 = vdwg.mxu0
        %3796 = vmatpush.msra.mxu0 0.0
        %3797 = vmatpush.msra.mxu0 0.0
        %3798 = vmatpush.msra.mxu0 0.0
        %3799 = vmatpush.msra.mxu0 0.0
        %3800 = vmatpush.msra.mxu0 0.0
        %3801 = vmatpush.msra.mxu0 0.0
        %3802 = vmatpush.msra.mxu0 0.0
        %3803 = vmatpush.msra.mxu0 0.0
        %3804 = vmatpush.msra.mxu0 0.0
        %3805 = vmatpush.msra.mxu0 0.0
        %3806 = vmatpush.msra.mxu0 0.0
        %3807 = vmatpush.msra.mxu0 0.0
        %3808 = vmatpush.msra.mxu0 %v3774
        %3809 = vmatpush.msra.mxu0 %v3764
        %3810 = vmatpush.msra.mxu0 %v3762
        %3811 = vmatpush.msra.mxu0 %v3760
        %3812 = vmatmul.f32.gmra.mxu0 %v3768
        %v3813 = vpop.f32.mrf.mxu0
        %v3814 = vadd.f32 0.0, %v3813
        %3815 = vdwg.mxu0
        %v3817 = vsel %vm360, %v3752, 0
        %v3820 = vsel %vm364, %v3749, 0
        %v3823 = vsel %vm364, %v3750, 0
        %3825 = vmatpush.msra.mxu0 0.0
        %3826 = vmatpush.msra.mxu0 0.0
        %3827 = vmatpush.msra.mxu0 0.0
        %3828 = vmatpush.msra.mxu0 0.0
        %3829 = vmatpush.msra.mxu0 0.0
        %3830 = vmatpush.msra.mxu0 0.0
        %3831 = vmatpush.msra.mxu0 0.0
        %3832 = vmatpush.msra.mxu0 0.0
        %3833 = vmatpush.msra.mxu0 0.0
        %3834 = vmatpush.msra.mxu0 0.0
        %3835 = vmatpush.msra.mxu0 0.0
        %3836 = vmatpush.msra.mxu0 0.0
        %3837 = vmatpush.msra.mxu0 %v3820
        %3838 = vmatpush.msra.mxu0 %v3747
        %3839 = vmatpush.msra.mxu0 %v3745
        %3840 = vmatpush.msra.mxu0 %v3743
        %3841 = vmatmul.f32.gmra.mxu0 %v3817
        %v3842 = vpop.f32.mrf.mxu0
        %v3843 = vadd.f32 %v3794, %v3842
        %3844 = vdwg.mxu0
        %3845 = vmatpush.msra.mxu0 0.0
        %3846 = vmatpush.msra.mxu0 0.0
        %3847 = vmatpush.msra.mxu0 0.0
        %3848 = vmatpush.msra.mxu0 0.0
        %3849 = vmatpush.msra.mxu0 0.0
        %3850 = vmatpush.msra.mxu0 0.0
        %3851 = vmatpush.msra.mxu0 0.0
        %3852 = vmatpush.msra.mxu0 0.0
        %3853 = vmatpush.msra.mxu0 0.0
        %3854 = vmatpush.msra.mxu0 0.0
        %3855 = vmatpush.msra.mxu0 0.0
        %3856 = vmatpush.msra.mxu0 0.0
        %3857 = vmatpush.msra.mxu0 %v3823
        %3858 = vmatpush.msra.mxu0 %v3748
        %3859 = vmatpush.msra.mxu0 %v3746
        %3860 = vmatpush.msra.mxu0 %v3744
        %3861 = vmatmul.f32.gmra.mxu0 %v3817
        %v3862 = vpop.f32.mrf.mxu0
        %v3863 = vadd.f32 %v3814, %v3862
        %3864 = vdwg.mxu0
        %v3866 = vsel %vm360, %v3756, 0
        %3868 = vmatpush.msra.mxu0 0.0
        %3869 = vmatpush.msra.mxu0 0.0
        %3870 = vmatpush.msra.mxu0 0.0
        %3871 = vmatpush.msra.mxu0 0.0
        %3872 = vmatpush.msra.mxu0 0.0
        %3873 = vmatpush.msra.mxu0 0.0
        %3874 = vmatpush.msra.mxu0 0.0
        %3875 = vmatpush.msra.mxu0 0.0
        %3876 = vmatpush.msra.mxu0 0.0
        %3877 = vmatpush.msra.mxu0 0.0
        %3878 = vmatpush.msra.mxu0 0.0
        %3879 = vmatpush.msra.mxu0 0.0
        %3880 = vmatpush.msra.mxu0 %v3771
        %3881 = vmatpush.msra.mxu0 %v3763
        %3882 = vmatpush.msra.mxu0 %v3761
        %3883 = vmatpush.msra.mxu0 %v3759
        %3884 = vmatmul.f32.gmra.mxu0 %v3866
        %v3885 = vpop.f32.mrf.mxu0
        %v3886 = vadd.f32 0.0, %v3885
        %3887 = vdwg.mxu0
        %3888 = vmatpush.msra.mxu0 0.0
        %3889 = vmatpush.msra.mxu0 0.0
        %3890 = vmatpush.msra.mxu0 0.0
        %3891 = vmatpush.msra.mxu0 0.0
        %3892 = vmatpush.msra.mxu0 0.0
        %3893 = vmatpush.msra.mxu0 0.0
        %3894 = vmatpush.msra.mxu0 0.0
        %3895 = vmatpush.msra.mxu0 0.0
        %3896 = vmatpush.msra.mxu0 0.0
        %3897 = vmatpush.msra.mxu0 0.0
        %3898 = vmatpush.msra.mxu0 0.0
        %3899 = vmatpush.msra.mxu0 0.0
        %3900 = vmatpush.msra.mxu0 %v3774
        %3901 = vmatpush.msra.mxu0 %v3764
        %3902 = vmatpush.msra.mxu0 %v3762
        %3903 = vmatpush.msra.mxu0 %v3760
        %3904 = vmatmul.f32.gmra.mxu0 %v3866
        %v3905 = vpop.f32.mrf.mxu0
        %v3906 = vadd.f32 0.0, %v3905
        %3907 = vdwg.mxu0
        %3908 = vmatpush.msra.mxu0 0.0
        %3909 = vmatpush.msra.mxu0 0.0
        %3910 = vmatpush.msra.mxu0 0.0
        %3911 = vmatpush.msra.mxu0 0.0
        %3912 = vmatpush.msra.mxu0 0.0
        %3913 = vmatpush.msra.mxu0 0.0
        %3914 = vmatpush.msra.mxu0 0.0
        %3915 = vmatpush.msra.mxu0 0.0
        %3916 = vmatpush.msra.mxu0 0.0
        %3917 = vmatpush.msra.mxu0 0.0
        %3918 = vmatpush.msra.mxu0 0.0
        %3919 = vmatpush.msra.mxu0 0.0
        %3920 = vmatpush.msra.mxu0 %v3820
        %3921 = vmatpush.msra.mxu0 %v3747
        %3922 = vmatpush.msra.mxu0 %v3745
        %3923 = vmatpush.msra.mxu0 %v3743
        %3924 = vmatmul.f32.gmra.mxu0 %v3768
        %v3925 = vpop.f32.mrf.mxu0
        %v3926 = vadd.f32 %v3886, %v3925
        %3927 = vdwg.mxu0
        %3928 = vmatpush.msra.mxu0 0.0
        %3929 = vmatpush.msra.mxu0 0.0
        %3930 = vmatpush.msra.mxu0 0.0
        %3931 = vmatpush.msra.mxu0 0.0
        %3932 = vmatpush.msra.mxu0 0.0
        %3933 = vmatpush.msra.mxu0 0.0
        %3934 = vmatpush.msra.mxu0 0.0
        %3935 = vmatpush.msra.mxu0 0.0
        %3936 = vmatpush.msra.mxu0 0.0
        %3937 = vmatpush.msra.mxu0 0.0
        %3938 = vmatpush.msra.mxu0 0.0
        %3939 = vmatpush.msra.mxu0 0.0
        %3940 = vmatpush.msra.mxu0 %v3823
        %3941 = vmatpush.msra.mxu0 %v3748
        %3942 = vmatpush.msra.mxu0 %v3746
        %3943 = vmatpush.msra.mxu0 %v3744
        %3944 = vmatmul.f32.gmra.mxu0 %v3768
        %v3945 = vpop.f32.mrf.mxu0
        %v3946 = vadd.f32 %v3906, %v3945
        %3947 = vdwg.mxu0
        %v3949 = vsel %vm360, %v3758, 0
        %3951 = vmatpush.msra.mxu0 0.0
        %3952 = vmatpush.msra.mxu0 0.0
        %3953 = vmatpush.msra.mxu0 0.0
        %3954 = vmatpush.msra.mxu0 0.0
        %3955 = vmatpush.msra.mxu0 0.0
        %3956 = vmatpush.msra.mxu0 0.0
        %3957 = vmatpush.msra.mxu0 0.0
        %3958 = vmatpush.msra.mxu0 0.0
        %3959 = vmatpush.msra.mxu0 0.0
        %3960 = vmatpush.msra.mxu0 0.0
        %3961 = vmatpush.msra.mxu0 0.0
        %3962 = vmatpush.msra.mxu0 0.0
        %3963 = vmatpush.msra.mxu0 %v3771
        %3964 = vmatpush.msra.mxu0 %v3763
        %3965 = vmatpush.msra.mxu0 %v3761
        %3966 = vmatpush.msra.mxu0 %v3759
        %3967 = vmatmul.f32.gmra.mxu0 %v3949
        %v3968 = vpop.f32.mrf.mxu0
        %v3969 = vadd.f32 0.0, %v3968
        %3970 = vdwg.mxu0
        %3971 = vmatpush.msra.mxu0 0.0
        %3972 = vmatpush.msra.mxu0 0.0
        %3973 = vmatpush.msra.mxu0 0.0
        %3974 = vmatpush.msra.mxu0 0.0
        %3975 = vmatpush.msra.mxu0 0.0
        %3976 = vmatpush.msra.mxu0 0.0
        %3977 = vmatpush.msra.mxu0 0.0
        %3978 = vmatpush.msra.mxu0 0.0
        %3979 = vmatpush.msra.mxu0 0.0
        %3980 = vmatpush.msra.mxu0 0.0
        %3981 = vmatpush.msra.mxu0 0.0
        %3982 = vmatpush.msra.mxu0 0.0
        %3983 = vmatpush.msra.mxu0 %v3774
        %3984 = vmatpush.msra.mxu0 %v3764
        %3985 = vmatpush.msra.mxu0 %v3762
        %3986 = vmatpush.msra.mxu0 %v3760
        %3987 = vmatmul.f32.gmra.mxu0 %v3949
        %v3988 = vpop.f32.mrf.mxu0
        %v3989 = vadd.f32 0.0, %v3988
        %3990 = vdwg.mxu0
        %3991 = vmatpush.msra.mxu0 0.0
        %3992 = vmatpush.msra.mxu0 0.0
        %3993 = vmatpush.msra.mxu0 0.0
        %3994 = vmatpush.msra.mxu0 0.0
        %3995 = vmatpush.msra.mxu0 0.0
        %3996 = vmatpush.msra.mxu0 0.0
        %3997 = vmatpush.msra.mxu0 0.0
        %3998 = vmatpush.msra.mxu0 0.0
        %3999 = vmatpush.msra.mxu0 0.0
        %4000 = vmatpush.msra.mxu0 0.0
        %4001 = vmatpush.msra.mxu0 0.0
        %4002 = vmatpush.msra.mxu0 0.0
        %4003 = vmatpush.msra.mxu0 %v3820
        %4004 = vmatpush.msra.mxu0 %v3747
        %4005 = vmatpush.msra.mxu0 %v3745
        %4006 = vmatpush.msra.mxu0 %v3743
        %4007 = vmatmul.f32.gmra.mxu0 %v3866
        %v4008 = vpop.f32.mrf.mxu0
        %v4009 = vadd.f32 %v3969, %v4008
        %4010 = vdwg.mxu0
        %4011 = vmatpush.msra.mxu0 0.0
        %4012 = vmatpush.msra.mxu0 0.0
        %4013 = vmatpush.msra.mxu0 0.0
        %4014 = vmatpush.msra.mxu0 0.0
        %4015 = vmatpush.msra.mxu0 0.0
        %4016 = vmatpush.msra.mxu0 0.0
        %4017 = vmatpush.msra.mxu0 0.0
        %4018 = vmatpush.msra.mxu0 0.0
        %4019 = vmatpush.msra.mxu0 0.0
        %4020 = vmatpush.msra.mxu0 0.0
        %4021 = vmatpush.msra.mxu0 0.0
        %4022 = vmatpush.msra.mxu0 0.0
        %4023 = vmatpush.msra.mxu0 %v3823
        %4024 = vmatpush.msra.mxu0 %v3748
        %4025 = vmatpush.msra.mxu0 %v3746
        %4026 = vmatpush.msra.mxu0 %v3744
        %4027 = vmatmul.f32.gmra.mxu0 %v3866
        %v4028 = vpop.f32.mrf.mxu0
        %v4029 = vadd.f32 %v3989, %v4028
        %4030 = vdwg.mxu0
        %v4031 = vld [vmem:[%s3751 + $0x1] sm:$0x3f]
        %v4033 = vsel %vm360, %v4031, 0
        %4035 = vmatpush.msra.mxu0 0.0
        %4036 = vmatpush.msra.mxu0 0.0
        %4037 = vmatpush.msra.mxu0 0.0
        %4038 = vmatpush.msra.mxu0 0.0
        %4039 = vmatpush.msra.mxu0 0.0
        %4040 = vmatpush.msra.mxu0 0.0
        %4041 = vmatpush.msra.mxu0 0.0
        %4042 = vmatpush.msra.mxu0 0.0
        %4043 = vmatpush.msra.mxu0 0.0
        %4044 = vmatpush.msra.mxu0 0.0
        %4045 = vmatpush.msra.mxu0 0.0
        %4046 = vmatpush.msra.mxu0 0.0
        %4047 = vmatpush.msra.mxu0 %v3771
        %4048 = vmatpush.msra.mxu0 %v3763
        %4049 = vmatpush.msra.mxu0 %v3761
        %4050 = vmatpush.msra.mxu0 %v3759
        %4051 = vmatmul.f32.gmra.mxu0 %v4033
        %v4052 = vpop.f32.mrf.mxu0
        %v4053 = vadd.f32 0.0, %v4052
        %4054 = vdwg.mxu0
        %4055 = vmatpush.msra.mxu0 0.0
        %4056 = vmatpush.msra.mxu0 0.0
        %4057 = vmatpush.msra.mxu0 0.0
        %4058 = vmatpush.msra.mxu0 0.0
        %4059 = vmatpush.msra.mxu0 0.0
        %4060 = vmatpush.msra.mxu0 0.0
        %4061 = vmatpush.msra.mxu0 0.0
        %4062 = vmatpush.msra.mxu0 0.0
        %4063 = vmatpush.msra.mxu0 0.0
        %4064 = vmatpush.msra.mxu0 0.0
        %4065 = vmatpush.msra.mxu0 0.0
        %4066 = vmatpush.msra.mxu0 0.0
        %4067 = vmatpush.msra.mxu0 %v3774
        %4068 = vmatpush.msra.mxu0 %v3764
        %4069 = vmatpush.msra.mxu0 %v3762
        %4070 = vmatpush.msra.mxu0 %v3760
        %4071 = vmatmul.f32.gmra.mxu0 %v4033
        %v4072 = vpop.f32.mrf.mxu0
        %v4073 = vadd.f32 0.0, %v4072
        %4074 = vdwg.mxu0
        %4075 = vmatpush.msra.mxu0 0.0
        %4076 = vmatpush.msra.mxu0 0.0
        %4077 = vmatpush.msra.mxu0 0.0
        %4078 = vmatpush.msra.mxu0 0.0
        %4079 = vmatpush.msra.mxu0 0.0
        %4080 = vmatpush.msra.mxu0 0.0
        %4081 = vmatpush.msra.mxu0 0.0
        %4082 = vmatpush.msra.mxu0 0.0
        %4083 = vmatpush.msra.mxu0 0.0
        %4084 = vmatpush.msra.mxu0 0.0
        %4085 = vmatpush.msra.mxu0 0.0
        %4086 = vmatpush.msra.mxu0 0.0
        %4087 = vmatpush.msra.mxu0 %v3820
        %4088 = vmatpush.msra.mxu0 %v3747
        %4089 = vmatpush.msra.mxu0 %v3745
        %4090 = vmatpush.msra.mxu0 %v3743
        %4091 = vmatmul.f32.gmra.mxu0 %v3949
        %v4092 = vpop.f32.mrf.mxu0
        %v4093 = vadd.f32 %v4053, %v4092
        %4094 = vdwg.mxu0
        %4095 = vmatpush.msra.mxu0 0.0
        %4096 = vmatpush.msra.mxu0 0.0
        %4097 = vmatpush.msra.mxu0 0.0
        %4098 = vmatpush.msra.mxu0 0.0
        %4099 = vmatpush.msra.mxu0 0.0
        %4100 = vmatpush.msra.mxu0 0.0
        %4101 = vmatpush.msra.mxu0 0.0
        %4102 = vmatpush.msra.mxu0 0.0
        %4103 = vmatpush.msra.mxu0 0.0
        %4104 = vmatpush.msra.mxu0 0.0
        %4105 = vmatpush.msra.mxu0 0.0
        %4106 = vmatpush.msra.mxu0 0.0
        %4107 = vmatpush.msra.mxu0 %v3823
        %4108 = vmatpush.msra.mxu0 %v3748
        %4109 = vmatpush.msra.mxu0 %v3746
        %4110 = vmatpush.msra.mxu0 %v3744
        %4111 = vmatmul.f32.gmra.mxu0 %v3949
        %v4112 = vpop.f32.mrf.mxu0
        %v4113 = vadd.f32 %v4073, %v4112
        %4114 = vdwg.mxu0
        %v4115 = vld [vmem:[%s710] sm:$0xff]
        %v4116 = vld [vmem:[%s710 + $0x8] sm:$0xff]
        %v4117 = vld [vmem:[%s710 + $0x10] sm:$0xff]
        %v4118 = vld [vmem:[%s710 + $0x18] sm:$0xff]
        %v4119 = vld [vmem:[%s710 + $0x20] sm:$0xff]
        %v4120 = vld [vmem:[%s710 + $0x28] sm:$0xff]
        %v4121 = vld [vmem:[%s710 + $0x30] sm:$0xf]
        %v4122 = vld [vmem:[%s710 + $0x38] sm:$0xf]
        %v4124 = vsel %vm364, %v4121, 0
        %v4127 = vsel %vm364, %v4122, 0
        %4129 = vmatpush.msra.mxu0 0.0
        %4130 = vmatpush.msra.mxu0 0.0
        %4131 = vmatpush.msra.mxu0 0.0
        %4132 = vmatpush.msra.mxu0 0.0
        %4133 = vmatpush.msra.mxu0 0.0
        %4134 = vmatpush.msra.mxu0 0.0
        %4135 = vmatpush.msra.mxu0 0.0
        %4136 = vmatpush.msra.mxu0 0.0
        %4137 = vmatpush.msra.mxu0 0.0
        %4138 = vmatpush.msra.mxu0 0.0
        %4139 = vmatpush.msra.mxu0 0.0
        %4140 = vmatpush.msra.mxu0 0.0
        %4141 = vmatpush.msra.mxu0 %v4124
        %4142 = vmatpush.msra.mxu0 %v4119
        %4143 = vmatpush.msra.mxu0 %v4117
        %4144 = vmatpush.msra.mxu0 %v4115
        %4145 = vmatmul.f32.gmra.mxu0 %v3866
        %v4146 = vpop.f32.mrf.mxu0
        %v4147 = vadd.f32 0.0, %v4146
        %4148 = vdwg.mxu0
        %4149 = vmatpush.msra.mxu0 0.0
        %4150 = vmatpush.msra.mxu0 0.0
        %4151 = vmatpush.msra.mxu0 0.0
        %4152 = vmatpush.msra.mxu0 0.0
        %4153 = vmatpush.msra.mxu0 0.0
        %4154 = vmatpush.msra.mxu0 0.0
        %4155 = vmatpush.msra.mxu0 0.0
        %4156 = vmatpush.msra.mxu0 0.0
        %4157 = vmatpush.msra.mxu0 0.0
        %4158 = vmatpush.msra.mxu0 0.0
        %4159 = vmatpush.msra.mxu0 0.0
        %4160 = vmatpush.msra.mxu0 0.0
        %4161 = vmatpush.msra.mxu0 %v4127
        %4162 = vmatpush.msra.mxu0 %v4120
        %4163 = vmatpush.msra.mxu0 %v4118
        %4164 = vmatpush.msra.mxu0 %v4116
        %4165 = vmatmul.f32.gmra.mxu0 %v3866
        %v4166 = vpop.f32.mrf.mxu0
        %v4167 = vadd.f32 0.0, %v4166
        %4168 = vdwg.mxu0
        %v4169 = vadd.f32 %v3843, %v4147
        %v4170 = vadd.f32 %v3863, %v4167
        %4171 = vmatpush.msra.mxu0 0.0
        %4172 = vmatpush.msra.mxu0 0.0
        %4173 = vmatpush.msra.mxu0 0.0
        %4174 = vmatpush.msra.mxu0 0.0
        %4175 = vmatpush.msra.mxu0 0.0
        %4176 = vmatpush.msra.mxu0 0.0
        %4177 = vmatpush.msra.mxu0 0.0
        %4178 = vmatpush.msra.mxu0 0.0
        %4179 = vmatpush.msra.mxu0 0.0
        %4180 = vmatpush.msra.mxu0 0.0
        %4181 = vmatpush.msra.mxu0 0.0
        %4182 = vmatpush.msra.mxu0 0.0
        %4183 = vmatpush.msra.mxu0 %v4124
        %4184 = vmatpush.msra.mxu0 %v4119
        %4185 = vmatpush.msra.mxu0 %v4117
        %4186 = vmatpush.msra.mxu0 %v4115
        %4187 = vmatmul.f32.gmra.mxu0 %v3949
        %v4188 = vpop.f32.mrf.mxu0
        %v4189 = vadd.f32 0.0, %v4188
        %4190 = vdwg.mxu0
        %4191 = vmatpush.msra.mxu0 0.0
        %4192 = vmatpush.msra.mxu0 0.0
        %4193 = vmatpush.msra.mxu0 0.0
        %4194 = vmatpush.msra.mxu0 0.0
        %4195 = vmatpush.msra.mxu0 0.0
        %4196 = vmatpush.msra.mxu0 0.0
        %4197 = vmatpush.msra.mxu0 0.0
        %4198 = vmatpush.msra.mxu0 0.0
        %4199 = vmatpush.msra.mxu0 0.0
        %4200 = vmatpush.msra.mxu0 0.0
        %4201 = vmatpush.msra.mxu0 0.0
        %4202 = vmatpush.msra.mxu0 0.0
        %4203 = vmatpush.msra.mxu0 %v4127
        %4204 = vmatpush.msra.mxu0 %v4120
        %4205 = vmatpush.msra.mxu0 %v4118
        %4206 = vmatpush.msra.mxu0 %v4116
        %4207 = vmatmul.f32.gmra.mxu0 %v3949
        %v4208 = vpop.f32.mrf.mxu0
        %v4209 = vadd.f32 0.0, %v4208
        %4210 = vdwg.mxu0
        %v4211 = vadd.f32 %v3926, %v4189
        %v4212 = vadd.f32 %v3946, %v4209
        %4213 = vmatpush.msra.mxu0 0.0
        %4214 = vmatpush.msra.mxu0 0.0
        %4215 = vmatpush.msra.mxu0 0.0
        %4216 = vmatpush.msra.mxu0 0.0
        %4217 = vmatpush.msra.mxu0 0.0
        %4218 = vmatpush.msra.mxu0 0.0
        %4219 = vmatpush.msra.mxu0 0.0
        %4220 = vmatpush.msra.mxu0 0.0
        %4221 = vmatpush.msra.mxu0 0.0
        %4222 = vmatpush.msra.mxu0 0.0
        %4223 = vmatpush.msra.mxu0 0.0
        %4224 = vmatpush.msra.mxu0 0.0
        %4225 = vmatpush.msra.mxu0 %v4124
        %4226 = vmatpush.msra.mxu0 %v4119
        %4227 = vmatpush.msra.mxu0 %v4117
        %4228 = vmatpush.msra.mxu0 %v4115
        %4229 = vmatmul.f32.gmra.mxu0 %v4033
        %v4230 = vpop.f32.mrf.mxu0
        %v4231 = vadd.f32 0.0, %v4230
        %4232 = vdwg.mxu0
        %4233 = vmatpush.msra.mxu0 0.0
        %4234 = vmatpush.msra.mxu0 0.0
        %4235 = vmatpush.msra.mxu0 0.0
        %4236 = vmatpush.msra.mxu0 0.0
        %4237 = vmatpush.msra.mxu0 0.0
        %4238 = vmatpush.msra.mxu0 0.0
        %4239 = vmatpush.msra.mxu0 0.0
        %4240 = vmatpush.msra.mxu0 0.0
        %4241 = vmatpush.msra.mxu0 0.0
        %4242 = vmatpush.msra.mxu0 0.0
        %4243 = vmatpush.msra.mxu0 0.0
        %4244 = vmatpush.msra.mxu0 0.0
        %4245 = vmatpush.msra.mxu0 %v4127
        %4246 = vmatpush.msra.mxu0 %v4120
        %4247 = vmatpush.msra.mxu0 %v4118
        %4248 = vmatpush.msra.mxu0 %v4116
        %4249 = vmatmul.f32.gmra.mxu0 %v4033
        %v4250 = vpop.f32.mrf.mxu0
        %v4251 = vadd.f32 0.0, %v4250
        %4252 = vdwg.mxu0
        %v4253 = vadd.f32 %v4009, %v4231
        %v4254 = vadd.f32 %v4029, %v4251
        %v4255 = vld [vmem:[%s3753 + $0x1] sm:$0x3f]
        %v4257 = vsel %vm360, %v4255, 0
        %4259 = vmatpush.msra.mxu0 0.0
        %4260 = vmatpush.msra.mxu0 0.0
        %4261 = vmatpush.msra.mxu0 0.0
        %4262 = vmatpush.msra.mxu0 0.0
        %4263 = vmatpush.msra.mxu0 0.0
        %4264 = vmatpush.msra.mxu0 0.0
        %4265 = vmatpush.msra.mxu0 0.0
        %4266 = vmatpush.msra.mxu0 0.0
        %4267 = vmatpush.msra.mxu0 0.0
        %4268 = vmatpush.msra.mxu0 0.0
        %4269 = vmatpush.msra.mxu0 0.0
        %4270 = vmatpush.msra.mxu0 0.0
        %4271 = vmatpush.msra.mxu0 %v4124
        %4272 = vmatpush.msra.mxu0 %v4119
        %4273 = vmatpush.msra.mxu0 %v4117
        %4274 = vmatpush.msra.mxu0 %v4115
        %4275 = vmatmul.f32.gmra.mxu0 %v4257
        %v4276 = vpop.f32.mrf.mxu0
        %v4277 = vadd.f32 0.0, %v4276
        %4278 = vdwg.mxu0
        %4279 = vmatpush.msra.mxu0 0.0
        %4280 = vmatpush.msra.mxu0 0.0
        %4281 = vmatpush.msra.mxu0 0.0
        %4282 = vmatpush.msra.mxu0 0.0
        %4283 = vmatpush.msra.mxu0 0.0
        %4284 = vmatpush.msra.mxu0 0.0
        %4285 = vmatpush.msra.mxu0 0.0
        %4286 = vmatpush.msra.mxu0 0.0
        %4287 = vmatpush.msra.mxu0 0.0
        %4288 = vmatpush.msra.mxu0 0.0
        %4289 = vmatpush.msra.mxu0 0.0
        %4290 = vmatpush.msra.mxu0 0.0
        %4291 = vmatpush.msra.mxu0 %v4127
        %4292 = vmatpush.msra.mxu0 %v4120
        %4293 = vmatpush.msra.mxu0 %v4118
        %4294 = vmatpush.msra.mxu0 %v4116
        %4295 = vmatmul.f32.gmra.mxu0 %v4257
        %v4296 = vpop.f32.mrf.mxu0
        %v4297 = vadd.f32 0.0, %v4296
        %4298 = vdwg.mxu0
        %v4299 = vadd.f32 %v4093, %v4277
        %v4300 = vadd.f32 %v4113, %v4297
        %v4301 = vld [vmem:[%s897] sm:$0xff]
        %v4302 = vld [vmem:[%s897 + $0x8] sm:$0xff]
        %v4303 = vld [vmem:[%s897 + $0x10] sm:$0xff]
        %v4304 = vld [vmem:[%s897 + $0x18] sm:$0xff]
        %v4305 = vld [vmem:[%s897 + $0x20] sm:$0xff]
        %v4306 = vld [vmem:[%s897 + $0x28] sm:$0xff]
        %v4307 = vld [vmem:[%s897 + $0x30] sm:$0xf]
        %v4308 = vld [vmem:[%s897 + $0x38] sm:$0xf]
        %v4310 = vsel %vm364, %v4307, 0
        %v4313 = vsel %vm364, %v4308, 0
        %4315 = vmatpush.msra.mxu0 0.0
        %4316 = vmatpush.msra.mxu0 0.0
        %4317 = vmatpush.msra.mxu0 0.0
        %4318 = vmatpush.msra.mxu0 0.0
        %4319 = vmatpush.msra.mxu0 0.0
        %4320 = vmatpush.msra.mxu0 0.0
        %4321 = vmatpush.msra.mxu0 0.0
        %4322 = vmatpush.msra.mxu0 0.0
        %4323 = vmatpush.msra.mxu0 0.0
        %4324 = vmatpush.msra.mxu0 0.0
        %4325 = vmatpush.msra.mxu0 0.0
        %4326 = vmatpush.msra.mxu0 0.0
        %4327 = vmatpush.msra.mxu0 %v4310
        %4328 = vmatpush.msra.mxu0 %v4305
        %4329 = vmatpush.msra.mxu0 %v4303
        %4330 = vmatpush.msra.mxu0 %v4301
        %4331 = vmatmul.f32.gmra.mxu0 %v3949
        %v4332 = vpop.f32.mrf.mxu0
        %v4333 = vadd.f32 0.0, %v4332
        %4334 = vdwg.mxu0
        %4335 = vmatpush.msra.mxu0 0.0
        %4336 = vmatpush.msra.mxu0 0.0
        %4337 = vmatpush.msra.mxu0 0.0
        %4338 = vmatpush.msra.mxu0 0.0
        %4339 = vmatpush.msra.mxu0 0.0
        %4340 = vmatpush.msra.mxu0 0.0
        %4341 = vmatpush.msra.mxu0 0.0
        %4342 = vmatpush.msra.mxu0 0.0
        %4343 = vmatpush.msra.mxu0 0.0
        %4344 = vmatpush.msra.mxu0 0.0
        %4345 = vmatpush.msra.mxu0 0.0
        %4346 = vmatpush.msra.mxu0 0.0
        %4347 = vmatpush.msra.mxu0 %v4313
        %4348 = vmatpush.msra.mxu0 %v4306
        %4349 = vmatpush.msra.mxu0 %v4304
        %4350 = vmatpush.msra.mxu0 %v4302
        %4351 = vmatmul.f32.gmra.mxu0 %v3949
        %v4352 = vpop.f32.mrf.mxu0
        %v4353 = vadd.f32 0.0, %v4352
        %4354 = vdwg.mxu0
        %v4355 = vadd.f32 %v4169, %v4333
        %v4356 = vadd.f32 %v4170, %v4353
        %4357 = vmatpush.msra.mxu0 0.0
        %4358 = vmatpush.msra.mxu0 0.0
        %4359 = vmatpush.msra.mxu0 0.0
        %4360 = vmatpush.msra.mxu0 0.0
        %4361 = vmatpush.msra.mxu0 0.0
        %4362 = vmatpush.msra.mxu0 0.0
        %4363 = vmatpush.msra.mxu0 0.0
        %4364 = vmatpush.msra.mxu0 0.0
        %4365 = vmatpush.msra.mxu0 0.0
        %4366 = vmatpush.msra.mxu0 0.0
        %4367 = vmatpush.msra.mxu0 0.0
        %4368 = vmatpush.msra.mxu0 0.0
        %4369 = vmatpush.msra.mxu0 %v4310
        %4370 = vmatpush.msra.mxu0 %v4305
        %4371 = vmatpush.msra.mxu0 %v4303
        %4372 = vmatpush.msra.mxu0 %v4301
        %4373 = vmatmul.f32.gmra.mxu0 %v4033
        %v4374 = vpop.f32.mrf.mxu0
        %v4375 = vadd.f32 0.0, %v4374
        %4376 = vdwg.mxu0
        %4377 = vmatpush.msra.mxu0 0.0
        %4378 = vmatpush.msra.mxu0 0.0
        %4379 = vmatpush.msra.mxu0 0.0
        %4380 = vmatpush.msra.mxu0 0.0
        %4381 = vmatpush.msra.mxu0 0.0
        %4382 = vmatpush.msra.mxu0 0.0
        %4383 = vmatpush.msra.mxu0 0.0
        %4384 = vmatpush.msra.mxu0 0.0
        %4385 = vmatpush.msra.mxu0 0.0
        %4386 = vmatpush.msra.mxu0 0.0
        %4387 = vmatpush.msra.mxu0 0.0
        %4388 = vmatpush.msra.mxu0 0.0
        %4389 = vmatpush.msra.mxu0 %v4313
        %4390 = vmatpush.msra.mxu0 %v4306
        %4391 = vmatpush.msra.mxu0 %v4304
        %4392 = vmatpush.msra.mxu0 %v4302
        %4393 = vmatmul.f32.gmra.mxu0 %v4033
        %v4394 = vpop.f32.mrf.mxu0
        %v4395 = vadd.f32 0.0, %v4394
        %4396 = vdwg.mxu0
        %v4397 = vadd.f32 %v4211, %v4375
        %v4398 = vadd.f32 %v4212, %v4395
        %4399 = vmatpush.msra.mxu0 0.0
        %4400 = vmatpush.msra.mxu0 0.0
        %4401 = vmatpush.msra.mxu0 0.0
        %4402 = vmatpush.msra.mxu0 0.0
        %4403 = vmatpush.msra.mxu0 0.0
        %4404 = vmatpush.msra.mxu0 0.0
        %4405 = vmatpush.msra.mxu0 0.0
        %4406 = vmatpush.msra.mxu0 0.0
        %4407 = vmatpush.msra.mxu0 0.0
        %4408 = vmatpush.msra.mxu0 0.0
        %4409 = vmatpush.msra.mxu0 0.0
        %4410 = vmatpush.msra.mxu0 0.0
        %4411 = vmatpush.msra.mxu0 %v4310
        %4412 = vmatpush.msra.mxu0 %v4305
        %4413 = vmatpush.msra.mxu0 %v4303
        %4414 = vmatpush.msra.mxu0 %v4301
        %4415 = vmatmul.f32.gmra.mxu0 %v4257
        %v4416 = vpop.f32.mrf.mxu0
        %v4417 = vadd.f32 0.0, %v4416
        %4418 = vdwg.mxu0
        %4419 = vmatpush.msra.mxu0 0.0
        %4420 = vmatpush.msra.mxu0 0.0
        %4421 = vmatpush.msra.mxu0 0.0
        %4422 = vmatpush.msra.mxu0 0.0
        %4423 = vmatpush.msra.mxu0 0.0
        %4424 = vmatpush.msra.mxu0 0.0
        %4425 = vmatpush.msra.mxu0 0.0
        %4426 = vmatpush.msra.mxu0 0.0
        %4427 = vmatpush.msra.mxu0 0.0
        %4428 = vmatpush.msra.mxu0 0.0
        %4429 = vmatpush.msra.mxu0 0.0
        %4430 = vmatpush.msra.mxu0 0.0
        %4431 = vmatpush.msra.mxu0 %v4313
        %4432 = vmatpush.msra.mxu0 %v4306
        %4433 = vmatpush.msra.mxu0 %v4304
        %4434 = vmatpush.msra.mxu0 %v4302
        %4435 = vmatmul.f32.gmra.mxu0 %v4257
        %v4436 = vpop.f32.mrf.mxu0
        %v4437 = vadd.f32 0.0, %v4436
        %4438 = vdwg.mxu0
        %v4439 = vadd.f32 %v4253, %v4417
        %v4440 = vadd.f32 %v4254, %v4437
        %v4441 = vld [vmem:[%s3755 + $0x1] sm:$0x3f]
        %v4443 = vsel %vm360, %v4441, 0
        %4445 = vmatpush.msra.mxu0 0.0
        %4446 = vmatpush.msra.mxu0 0.0
        %4447 = vmatpush.msra.mxu0 0.0
        %4448 = vmatpush.msra.mxu0 0.0
        %4449 = vmatpush.msra.mxu0 0.0
        %4450 = vmatpush.msra.mxu0 0.0
        %4451 = vmatpush.msra.mxu0 0.0
        %4452 = vmatpush.msra.mxu0 0.0
        %4453 = vmatpush.msra.mxu0 0.0
        %4454 = vmatpush.msra.mxu0 0.0
        %4455 = vmatpush.msra.mxu0 0.0
        %4456 = vmatpush.msra.mxu0 0.0
        %4457 = vmatpush.msra.mxu0 %v4310
        %4458 = vmatpush.msra.mxu0 %v4305
        %4459 = vmatpush.msra.mxu0 %v4303
        %4460 = vmatpush.msra.mxu0 %v4301
        %4461 = vmatmul.f32.gmra.mxu0 %v4443
        %v4462 = vpop.f32.mrf.mxu0
        %v4463 = vadd.f32 0.0, %v4462
        %4464 = vdwg.mxu0
        %4465 = vmatpush.msra.mxu0 0.0
        %4466 = vmatpush.msra.mxu0 0.0
        %4467 = vmatpush.msra.mxu0 0.0
        %4468 = vmatpush.msra.mxu0 0.0
        %4469 = vmatpush.msra.mxu0 0.0
        %4470 = vmatpush.msra.mxu0 0.0
        %4471 = vmatpush.msra.mxu0 0.0
        %4472 = vmatpush.msra.mxu0 0.0
        %4473 = vmatpush.msra.mxu0 0.0
        %4474 = vmatpush.msra.mxu0 0.0
        %4475 = vmatpush.msra.mxu0 0.0
        %4476 = vmatpush.msra.mxu0 0.0
        %4477 = vmatpush.msra.mxu0 %v4313
        %4478 = vmatpush.msra.mxu0 %v4306
        %4479 = vmatpush.msra.mxu0 %v4304
        %4480 = vmatpush.msra.mxu0 %v4302
        %4481 = vmatmul.f32.gmra.mxu0 %v4443
        %v4482 = vpop.f32.mrf.mxu0
        %v4483 = vadd.f32 0.0, %v4482
        %4484 = vdwg.mxu0
        %v4485 = vadd.f32 %v4299, %v4463
        %v4486 = vadd.f32 %v4300, %v4483
        %v4487 = vld [vmem:[%s1084] sm:$0xff]
        %v4488 = vld [vmem:[%s1084 + $0x8] sm:$0xff]
        %v4489 = vld [vmem:[%s1084 + $0x10] sm:$0xff]
        %v4490 = vld [vmem:[%s1084 + $0x18] sm:$0xff]
        %v4491 = vld [vmem:[%s1084 + $0x20] sm:$0xff]
        %v4492 = vld [vmem:[%s1084 + $0x28] sm:$0xff]
        %v4493 = vld [vmem:[%s1084 + $0x30] sm:$0xf]
        %v4494 = vld [vmem:[%s1084 + $0x38] sm:$0xf]
        %v4496 = vsel %vm364, %v4493, 0
        %v4499 = vsel %vm364, %v4494, 0
        %4501 = vmatpush.msra.mxu0 0.0
        %4502 = vmatpush.msra.mxu0 0.0
        %4503 = vmatpush.msra.mxu0 0.0
        %4504 = vmatpush.msra.mxu0 0.0
        %4505 = vmatpush.msra.mxu0 0.0
        %4506 = vmatpush.msra.mxu0 0.0
        %4507 = vmatpush.msra.mxu0 0.0
        %4508 = vmatpush.msra.mxu0 0.0
        %4509 = vmatpush.msra.mxu0 0.0
        %4510 = vmatpush.msra.mxu0 0.0
        %4511 = vmatpush.msra.mxu0 0.0
        %4512 = vmatpush.msra.mxu0 0.0
        %4513 = vmatpush.msra.mxu0 %v4496
        %4514 = vmatpush.msra.mxu0 %v4491
        %4515 = vmatpush.msra.mxu0 %v4489
        %4516 = vmatpush.msra.mxu0 %v4487
        %4517 = vmatmul.f32.gmra.mxu0 %v4033
        %v4518 = vpop.f32.mrf.mxu0
        %v4519 = vadd.f32 0.0, %v4518
        %4520 = vdwg.mxu0
        %4521 = vmatpush.msra.mxu0 0.0
        %4522 = vmatpush.msra.mxu0 0.0
        %4523 = vmatpush.msra.mxu0 0.0
        %4524 = vmatpush.msra.mxu0 0.0
        %4525 = vmatpush.msra.mxu0 0.0
        %4526 = vmatpush.msra.mxu0 0.0
        %4527 = vmatpush.msra.mxu0 0.0
        %4528 = vmatpush.msra.mxu0 0.0
        %4529 = vmatpush.msra.mxu0 0.0
        %4530 = vmatpush.msra.mxu0 0.0
        %4531 = vmatpush.msra.mxu0 0.0
        %4532 = vmatpush.msra.mxu0 0.0
        %4533 = vmatpush.msra.mxu0 %v4499
        %4534 = vmatpush.msra.mxu0 %v4492
        %4535 = vmatpush.msra.mxu0 %v4490
        %4536 = vmatpush.msra.mxu0 %v4488
        %4537 = vmatmul.f32.gmra.mxu0 %v4033
        %v4538 = vpop.f32.mrf.mxu0
        %v4539 = vadd.f32 0.0, %v4538
        %4540 = vdwg.mxu0
        %v4541 = vadd.f32 %v4355, %v4519
        %v4542 = vadd.f32 %v4356, %v4539
        %4543 = vmatpush.msra.mxu0 0.0
        %4544 = vmatpush.msra.mxu0 0.0
        %4545 = vmatpush.msra.mxu0 0.0
        %4546 = vmatpush.msra.mxu0 0.0
        %4547 = vmatpush.msra.mxu0 0.0
        %4548 = vmatpush.msra.mxu0 0.0
        %4549 = vmatpush.msra.mxu0 0.0
        %4550 = vmatpush.msra.mxu0 0.0
        %4551 = vmatpush.msra.mxu0 0.0
        %4552 = vmatpush.msra.mxu0 0.0
        %4553 = vmatpush.msra.mxu0 0.0
        %4554 = vmatpush.msra.mxu0 0.0
        %4555 = vmatpush.msra.mxu0 %v4496
        %4556 = vmatpush.msra.mxu0 %v4491
        %4557 = vmatpush.msra.mxu0 %v4489
        %4558 = vmatpush.msra.mxu0 %v4487
        %4559 = vmatmul.f32.gmra.mxu0 %v4257
        %v4560 = vpop.f32.mrf.mxu0
        %v4561 = vadd.f32 0.0, %v4560
        %4562 = vdwg.mxu0
        %4563 = vmatpush.msra.mxu0 0.0
        %4564 = vmatpush.msra.mxu0 0.0
        %4565 = vmatpush.msra.mxu0 0.0
        %4566 = vmatpush.msra.mxu0 0.0
        %4567 = vmatpush.msra.mxu0 0.0
        %4568 = vmatpush.msra.mxu0 0.0
        %4569 = vmatpush.msra.mxu0 0.0
        %4570 = vmatpush.msra.mxu0 0.0
        %4571 = vmatpush.msra.mxu0 0.0
        %4572 = vmatpush.msra.mxu0 0.0
        %4573 = vmatpush.msra.mxu0 0.0
        %4574 = vmatpush.msra.mxu0 0.0
        %4575 = vmatpush.msra.mxu0 %v4499
        %4576 = vmatpush.msra.mxu0 %v4492
        %4577 = vmatpush.msra.mxu0 %v4490
        %4578 = vmatpush.msra.mxu0 %v4488
        %4579 = vmatmul.f32.gmra.mxu0 %v4257
        %v4580 = vpop.f32.mrf.mxu0
        %v4581 = vadd.f32 0.0, %v4580
        %4582 = vdwg.mxu0
        %v4583 = vadd.f32 %v4397, %v4561
        %v4584 = vadd.f32 %v4398, %v4581
        %4585 = vmatpush.msra.mxu0 0.0
        %4586 = vmatpush.msra.mxu0 0.0
        %4587 = vmatpush.msra.mxu0 0.0
        %4588 = vmatpush.msra.mxu0 0.0
        %4589 = vmatpush.msra.mxu0 0.0
        %4590 = vmatpush.msra.mxu0 0.0
        %4591 = vmatpush.msra.mxu0 0.0
        %4592 = vmatpush.msra.mxu0 0.0
        %4593 = vmatpush.msra.mxu0 0.0
        %4594 = vmatpush.msra.mxu0 0.0
        %4595 = vmatpush.msra.mxu0 0.0
        %4596 = vmatpush.msra.mxu0 0.0
        %4597 = vmatpush.msra.mxu0 %v4496
        %4598 = vmatpush.msra.mxu0 %v4491
        %4599 = vmatpush.msra.mxu0 %v4489
        %4600 = vmatpush.msra.mxu0 %v4487
        %4601 = vmatmul.f32.gmra.mxu0 %v4443
        %v4602 = vpop.f32.mrf.mxu0
        %v4603 = vadd.f32 0.0, %v4602
        %4604 = vdwg.mxu0
        %4605 = vmatpush.msra.mxu0 0.0
        %4606 = vmatpush.msra.mxu0 0.0
        %4607 = vmatpush.msra.mxu0 0.0
        %4608 = vmatpush.msra.mxu0 0.0
        %4609 = vmatpush.msra.mxu0 0.0
        %4610 = vmatpush.msra.mxu0 0.0
        %4611 = vmatpush.msra.mxu0 0.0
        %4612 = vmatpush.msra.mxu0 0.0
        %4613 = vmatpush.msra.mxu0 0.0
        %4614 = vmatpush.msra.mxu0 0.0
        %4615 = vmatpush.msra.mxu0 0.0
        %4616 = vmatpush.msra.mxu0 0.0
        %4617 = vmatpush.msra.mxu0 %v4499
        %4618 = vmatpush.msra.mxu0 %v4492
        %4619 = vmatpush.msra.mxu0 %v4490
        %4620 = vmatpush.msra.mxu0 %v4488
        %4621 = vmatmul.f32.gmra.mxu0 %v4443
        %v4622 = vpop.f32.mrf.mxu0
        %v4623 = vadd.f32 0.0, %v4622
        %4624 = vdwg.mxu0
        %v4625 = vadd.f32 %v4439, %v4603
        %v4626 = vadd.f32 %v4440, %v4623
        %v4627 = vld [vmem:[%s3757 + $0x1] sm:$0x3f]
        %v4629 = vsel %vm360, %v4627, 0
        %4631 = vmatpush.msra.mxu0 0.0
        %4632 = vmatpush.msra.mxu0 0.0
        %4633 = vmatpush.msra.mxu0 0.0
        %4634 = vmatpush.msra.mxu0 0.0
        %4635 = vmatpush.msra.mxu0 0.0
        %4636 = vmatpush.msra.mxu0 0.0
        %4637 = vmatpush.msra.mxu0 0.0
        %4638 = vmatpush.msra.mxu0 0.0
        %4639 = vmatpush.msra.mxu0 0.0
        %4640 = vmatpush.msra.mxu0 0.0
        %4641 = vmatpush.msra.mxu0 0.0
        %4642 = vmatpush.msra.mxu0 0.0
        %4643 = vmatpush.msra.mxu0 %v4496
        %4644 = vmatpush.msra.mxu0 %v4491
        %4645 = vmatpush.msra.mxu0 %v4489
        %4646 = vmatpush.msra.mxu0 %v4487
        %4647 = vmatmul.f32.gmra.mxu0 %v4629
        %v4648 = vpop.f32.mrf.mxu0
        %v4649 = vadd.f32 0.0, %v4648
        %4650 = vdwg.mxu0
        %4651 = vmatpush.msra.mxu0 0.0
        %4652 = vmatpush.msra.mxu0 0.0
        %4653 = vmatpush.msra.mxu0 0.0
        %4654 = vmatpush.msra.mxu0 0.0
        %4655 = vmatpush.msra.mxu0 0.0
        %4656 = vmatpush.msra.mxu0 0.0
        %4657 = vmatpush.msra.mxu0 0.0
        %4658 = vmatpush.msra.mxu0 0.0
        %4659 = vmatpush.msra.mxu0 0.0
        %4660 = vmatpush.msra.mxu0 0.0
        %4661 = vmatpush.msra.mxu0 0.0
        %4662 = vmatpush.msra.mxu0 0.0
        %4663 = vmatpush.msra.mxu0 %v4499
        %4664 = vmatpush.msra.mxu0 %v4492
        %4665 = vmatpush.msra.mxu0 %v4490
        %4666 = vmatpush.msra.mxu0 %v4488
        %4667 = vmatmul.f32.gmra.mxu0 %v4629
        %v4668 = vpop.f32.mrf.mxu0
        %v4669 = vadd.f32 0.0, %v4668
        %4670 = vdwg.mxu0
        %v4671 = vadd.f32 %v4485, %v4649
        %v4672 = vadd.f32 %v4486, %v4669
        %v4673 = vmax.f32 %v4541, %v4583
        %v4674 = vmax.f32 %v4542, %v4584
        %v4675 = vmax.f32 %v4625, %v4671
        %v4676 = vmax.f32 %v4626, %v4672
        %4679 = vrot.lane.b32.xlu0 %v4673, 8
        %v4680 = vpop.permute.xlu0 %4679
        %4681 = vrot.lane.b32.xlu0 %v4674, 8
        %v4682 = vpop.permute.xlu0 %4681
        %v4683 = vsel %vm1281, %v4680, %v4682
        %v4685 = vmax.f32 %v4673, %v4683
        %v4686 = vld [vmem:[%s2] sm:$0x1]
        %v4688 = vperm.slane %v4686, 0
        %v4690 = vadd.f32 %v4685, %v4688
        %v4691 = vmax.f32 %v4690, 0.0
        %4694 = vrot.lane.b32.xlu0 %v4675, 8
        %v4695 = vpop.permute.xlu0 %4694
        %4696 = vrot.lane.b32.xlu0 %v4676, 8
        %v4697 = vpop.permute.xlu0 %4696
        %v4698 = vsel %vm1281, %v4695, %v4697
        %v4700 = vmax.f32 %v4675, %v4698
        %v4701 = vadd.f32 %v4700, %v4688
        %v4702 = vmax.f32 %v4701, 0.0
        %v4703 = vld [vmem:[%s3] sm:$0xff]
        %v4704 = vld [vmem:[%s3 + $0x8] sm:$0xff]
        %v4705 = vld [vmem:[%s3 + $0x10] sm:$0xff]
        %v4706 = vld [vmem:[%s3 + $0x18] sm:$0xff]
        %v4707 = vld [vmem:[%s3 + $0x20] sm:$0xff]
        %v4708 = vld [vmem:[%s3 + $0x28] sm:$0xff]
        %v4709 = vld [vmem:[%s3 + $0x30] sm:$0xff]
        %v4710 = vld [vmem:[%s3 + $0x38] sm:$0xff]
        %v4711 = vld [vmem:[%s3 + $0x40] sm:$0xff]
        %v4712 = vld [vmem:[%s3 + $0x48] sm:$0xff]
        %v4713 = vld [vmem:[%s3 + $0x50] sm:$0xff]
        %v4714 = vld [vmem:[%s3 + $0x58] sm:$0xff]
        %v4715 = vld [vmem:[%s3 + $0x60] sm:$0xff]
        %v4716 = vld [vmem:[%s3 + $0x68] sm:$0xff]
        %v4717 = vld [vmem:[%s3 + $0x70] sm:$0xff]
        %v4718 = vld [vmem:[%s3 + $0x78] sm:$0xff]
        %v4719 = vld [vmem:[%s3 + $0x80] sm:$0xff]
        %v4720 = vld [vmem:[%s3 + $0x88] sm:$0xff]
        %v4721 = vld [vmem:[%s3 + $0x90] sm:$0xff]
        %v4722 = vld [vmem:[%s3 + $0x98] sm:$0xff]
        %v4723 = vld [vmem:[%s3 + $0xa0] sm:$0xff]
        %v4724 = vld [vmem:[%s3 + $0xa8] sm:$0xff]
        %v4725 = vld [vmem:[%s3 + $0xb0] sm:$0xff]
        %v4726 = vld [vmem:[%s3 + $0xb8] sm:$0xff]
        %v4727 = vld [vmem:[%s3 + $0xc0] sm:$0xff]
        %v4728 = vld [vmem:[%s3 + $0xc8] sm:$0xff]
        %v4729 = vld [vmem:[%s3 + $0xd0] sm:$0xff]
        %v4730 = vld [vmem:[%s3 + $0xd8] sm:$0xff]
        %v4731 = vld [vmem:[%s3 + $0xe0] sm:$0xff]
        %v4732 = vld [vmem:[%s3 + $0xe8] sm:$0xff]
        %v4733 = vld [vmem:[%s1332] sm:$0xff]
        %v4734 = vld [vmem:[%s1332 + $0x8] sm:$0xff]
        %v4735 = vld [vmem:[%s1332 + $0x10] sm:$0xff]
        %v4736 = vld [vmem:[%s1332 + $0x18] sm:$0xff]
        %v4737 = vld [vmem:[%s1332 + $0x20] sm:$0xff]
        %v4738 = vld [vmem:[%s1332 + $0x28] sm:$0xff]
        %v4739 = vld [vmem:[%s1332 + $0x30] sm:$0xff]
        %v4740 = vld [vmem:[%s1332 + $0x38] sm:$0xff]
        %v4741 = vld [vmem:[%s1332 + $0x40] sm:$0xff]
        %v4742 = vld [vmem:[%s1332 + $0x48] sm:$0xff]
        %v4743 = vld [vmem:[%s1332 + $0x50] sm:$0xff]
        %v4744 = vld [vmem:[%s1332 + $0x58] sm:$0xff]
        %v4745 = vld [vmem:[%s1332 + $0x60] sm:$0xff]
        %v4746 = vld [vmem:[%s1332 + $0x68] sm:$0xff]
        %v4747 = vld [vmem:[%s1332 + $0x70] sm:$0xff]
        %v4748 = vld [vmem:[%s1332 + $0x78] sm:$0xff]
        %v4749 = vld [vmem:[%s1332 + $0x80] sm:$0xff]
        %v4750 = vld [vmem:[%s1332 + $0x88] sm:$0xff]
        %v4751 = vld [vmem:[%s1332 + $0x90] sm:$0xff]
        %v4752 = vld [vmem:[%s1332 + $0x98] sm:$0xff]
        %v4753 = vld [vmem:[%s1332 + $0xa0] sm:$0xff]
        %v4754 = vld [vmem:[%s1332 + $0xa8] sm:$0xff]
        %v4755 = vld [vmem:[%s1332 + $0xb0] sm:$0xff]
        %v4756 = vld [vmem:[%s1332 + $0xb8] sm:$0xff]
        %v4757 = vld [vmem:[%s1332 + $0xc0] sm:$0xff]
        %v4758 = vld [vmem:[%s1332 + $0xc8] sm:$0xff]
        %v4759 = vld [vmem:[%s1332 + $0xd0] sm:$0xff]
        %v4760 = vld [vmem:[%s1332 + $0xd8] sm:$0xff]
        %v4761 = vld [vmem:[%s1332 + $0xe0] sm:$0xff]
        %v4762 = vld [vmem:[%s1332 + $0xe8] sm:$0xff]
        %v4764 = vsel %vm1363, %v4702, 0
        %4766 = vmatpush.msra.mxu0 0.0
        %4767 = vmatpush.msra.mxu0 %v4761
        %4768 = vmatpush.msra.mxu0 %v4759
        %4769 = vmatpush.msra.mxu0 %v4757
        %4770 = vmatpush.msra.mxu0 %v4755
        %4771 = vmatpush.msra.mxu0 %v4753
        %4772 = vmatpush.msra.mxu0 %v4751
        %4773 = vmatpush.msra.mxu0 %v4749
        %4774 = vmatpush.msra.mxu0 %v4747
        %4775 = vmatpush.msra.mxu0 %v4745
        %4776 = vmatpush.msra.mxu0 %v4743
        %4777 = vmatpush.msra.mxu0 %v4741
        %4778 = vmatpush.msra.mxu0 %v4739
        %4779 = vmatpush.msra.mxu0 %v4737
        %4780 = vmatpush.msra.mxu0 %v4735
        %4781 = vmatpush.msra.mxu0 %v4733
        %4782 = vmatmul.f32.gmra.mxu0 %v4764
        %v4783 = vpop.f32.mrf.mxu0
        %v4784 = vadd.f32 0.0, %v4783
        %4785 = vdwg.mxu0
        %4786 = vmatpush.msra.mxu0 0.0
        %4787 = vmatpush.msra.mxu0 %v4762
        %4788 = vmatpush.msra.mxu0 %v4760
        %4789 = vmatpush.msra.mxu0 %v4758
        %4790 = vmatpush.msra.mxu0 %v4756
        %4791 = vmatpush.msra.mxu0 %v4754
        %4792 = vmatpush.msra.mxu0 %v4752
        %4793 = vmatpush.msra.mxu0 %v4750
        %4794 = vmatpush.msra.mxu0 %v4748
        %4795 = vmatpush.msra.mxu0 %v4746
        %4796 = vmatpush.msra.mxu0 %v4744
        %4797 = vmatpush.msra.mxu0 %v4742
        %4798 = vmatpush.msra.mxu0 %v4740
        %4799 = vmatpush.msra.mxu0 %v4738
        %4800 = vmatpush.msra.mxu0 %v4736
        %4801 = vmatpush.msra.mxu0 %v4734
        %4802 = vmatmul.f32.gmra.mxu0 %v4764
        %v4803 = vpop.f32.mrf.mxu0
        %v4804 = vadd.f32 0.0, %v4803
        %4805 = vdwg.mxu0
        %v4807 = vsel %vm1363, %v4691, 0
        %4809 = vmatpush.msra.mxu0 0.0
        %4810 = vmatpush.msra.mxu0 %v4731
        %4811 = vmatpush.msra.mxu0 %v4729
        %4812 = vmatpush.msra.mxu0 %v4727
        %4813 = vmatpush.msra.mxu0 %v4725
        %4814 = vmatpush.msra.mxu0 %v4723
        %4815 = vmatpush.msra.mxu0 %v4721
        %4816 = vmatpush.msra.mxu0 %v4719
        %4817 = vmatpush.msra.mxu0 %v4717
        %4818 = vmatpush.msra.mxu0 %v4715
        %4819 = vmatpush.msra.mxu0 %v4713
        %4820 = vmatpush.msra.mxu0 %v4711
        %4821 = vmatpush.msra.mxu0 %v4709
        %4822 = vmatpush.msra.mxu0 %v4707
        %4823 = vmatpush.msra.mxu0 %v4705
        %4824 = vmatpush.msra.mxu0 %v4703
        %4825 = vmatmul.f32.gmra.mxu0 %v4807
        %v4826 = vpop.f32.mrf.mxu0
        %v4827 = vadd.f32 %v4784, %v4826
        %4828 = vdwg.mxu0
        %4829 = vmatpush.msra.mxu0 0.0
        %4830 = vmatpush.msra.mxu0 %v4732
        %4831 = vmatpush.msra.mxu0 %v4730
        %4832 = vmatpush.msra.mxu0 %v4728
        %4833 = vmatpush.msra.mxu0 %v4726
        %4834 = vmatpush.msra.mxu0 %v4724
        %4835 = vmatpush.msra.mxu0 %v4722
        %4836 = vmatpush.msra.mxu0 %v4720
        %4837 = vmatpush.msra.mxu0 %v4718
        %4838 = vmatpush.msra.mxu0 %v4716
        %4839 = vmatpush.msra.mxu0 %v4714
        %4840 = vmatpush.msra.mxu0 %v4712
        %4841 = vmatpush.msra.mxu0 %v4710
        %4842 = vmatpush.msra.mxu0 %v4708
        %4843 = vmatpush.msra.mxu0 %v4706
        %4844 = vmatpush.msra.mxu0 %v4704
        %4845 = vmatmul.f32.gmra.mxu0 %v4807
        %v4846 = vpop.f32.mrf.mxu0
        %v4847 = vadd.f32 %v4804, %v4846
        %4848 = vdwg.mxu0
        %v4849 = vrot.slane %v4691, 1
        %v4850 = vsel %vm1363, %v4849, 0
        %4852 = vmatpush.msra.mxu0 0.0
        %4853 = vmatpush.msra.mxu0 %v4761
        %4854 = vmatpush.msra.mxu0 %v4759
        %4855 = vmatpush.msra.mxu0 %v4757
        %4856 = vmatpush.msra.mxu0 %v4755
        %4857 = vmatpush.msra.mxu0 %v4753
        %4858 = vmatpush.msra.mxu0 %v4751
        %4859 = vmatpush.msra.mxu0 %v4749
        %4860 = vmatpush.msra.mxu0 %v4747
        %4861 = vmatpush.msra.mxu0 %v4745
        %4862 = vmatpush.msra.mxu0 %v4743
        %4863 = vmatpush.msra.mxu0 %v4741
        %4864 = vmatpush.msra.mxu0 %v4739
        %4865 = vmatpush.msra.mxu0 %v4737
        %4866 = vmatpush.msra.mxu0 %v4735
        %4867 = vmatpush.msra.mxu0 %v4733
        %4868 = vmatmul.f32.gmra.mxu0 %v4850
        %v4869 = vpop.f32.mrf.mxu0
        %v4870 = vadd.f32 0.0, %v4869
        %4871 = vdwg.mxu0
        %4872 = vmatpush.msra.mxu0 0.0
        %4873 = vmatpush.msra.mxu0 %v4762
        %4874 = vmatpush.msra.mxu0 %v4760
        %4875 = vmatpush.msra.mxu0 %v4758
        %4876 = vmatpush.msra.mxu0 %v4756
        %4877 = vmatpush.msra.mxu0 %v4754
        %4878 = vmatpush.msra.mxu0 %v4752
        %4879 = vmatpush.msra.mxu0 %v4750
        %4880 = vmatpush.msra.mxu0 %v4748
        %4881 = vmatpush.msra.mxu0 %v4746
        %4882 = vmatpush.msra.mxu0 %v4744
        %4883 = vmatpush.msra.mxu0 %v4742
        %4884 = vmatpush.msra.mxu0 %v4740
        %4885 = vmatpush.msra.mxu0 %v4738
        %4886 = vmatpush.msra.mxu0 %v4736
        %4887 = vmatpush.msra.mxu0 %v4734
        %4888 = vmatmul.f32.gmra.mxu0 %v4850
        %v4889 = vpop.f32.mrf.mxu0
        %v4890 = vadd.f32 0.0, %v4889
        %4891 = vdwg.mxu0
        %4892 = vmatpush.msra.mxu0 0.0
        %4893 = vmatpush.msra.mxu0 %v4731
        %4894 = vmatpush.msra.mxu0 %v4729
        %4895 = vmatpush.msra.mxu0 %v4727
        %4896 = vmatpush.msra.mxu0 %v4725
        %4897 = vmatpush.msra.mxu0 %v4723
        %4898 = vmatpush.msra.mxu0 %v4721
        %4899 = vmatpush.msra.mxu0 %v4719
        %4900 = vmatpush.msra.mxu0 %v4717
        %4901 = vmatpush.msra.mxu0 %v4715
        %4902 = vmatpush.msra.mxu0 %v4713
        %4903 = vmatpush.msra.mxu0 %v4711
        %4904 = vmatpush.msra.mxu0 %v4709
        %4905 = vmatpush.msra.mxu0 %v4707
        %4906 = vmatpush.msra.mxu0 %v4705
        %4907 = vmatpush.msra.mxu0 %v4703
        %4908 = vmatmul.f32.gmra.mxu0 %v4764
        %v4909 = vpop.f32.mrf.mxu0
        %v4910 = vadd.f32 %v4870, %v4909
        %4911 = vdwg.mxu0
        %4912 = vmatpush.msra.mxu0 0.0
        %4913 = vmatpush.msra.mxu0 %v4732
        %4914 = vmatpush.msra.mxu0 %v4730
        %4915 = vmatpush.msra.mxu0 %v4728
        %4916 = vmatpush.msra.mxu0 %v4726
        %4917 = vmatpush.msra.mxu0 %v4724
        %4918 = vmatpush.msra.mxu0 %v4722
        %4919 = vmatpush.msra.mxu0 %v4720
        %4920 = vmatpush.msra.mxu0 %v4718
        %4921 = vmatpush.msra.mxu0 %v4716
        %4922 = vmatpush.msra.mxu0 %v4714
        %4923 = vmatpush.msra.mxu0 %v4712
        %4924 = vmatpush.msra.mxu0 %v4710
        %4925 = vmatpush.msra.mxu0 %v4708
        %4926 = vmatpush.msra.mxu0 %v4706
        %4927 = vmatpush.msra.mxu0 %v4704
        %4928 = vmatmul.f32.gmra.mxu0 %v4764
        %v4929 = vpop.f32.mrf.mxu0
        %v4930 = vadd.f32 %v4890, %v4929
        %4931 = vdwg.mxu0
        %v4932 = vld [vmem:[%s1533] sm:$0xff]
        %v4933 = vld [vmem:[%s1533 + $0x8] sm:$0xff]
        %v4934 = vld [vmem:[%s1533 + $0x10] sm:$0xff]
        %v4935 = vld [vmem:[%s1533 + $0x18] sm:$0xff]
        %v4936 = vld [vmem:[%s1533 + $0x20] sm:$0xff]
        %v4937 = vld [vmem:[%s1533 + $0x28] sm:$0xff]
        %v4938 = vld [vmem:[%s1533 + $0x30] sm:$0xff]
        %v4939 = vld [vmem:[%s1533 + $0x38] sm:$0xff]
        %v4940 = vld [vmem:[%s1533 + $0x40] sm:$0xff]
        %v4941 = vld [vmem:[%s1533 + $0x48] sm:$0xff]
        %v4942 = vld [vmem:[%s1533 + $0x50] sm:$0xff]
        %v4943 = vld [vmem:[%s1533 + $0x58] sm:$0xff]
        %v4944 = vld [vmem:[%s1533 + $0x60] sm:$0xff]
        %v4945 = vld [vmem:[%s1533 + $0x68] sm:$0xff]
        %v4946 = vld [vmem:[%s1533 + $0x70] sm:$0xff]
        %v4947 = vld [vmem:[%s1533 + $0x78] sm:$0xff]
        %v4948 = vld [vmem:[%s1533 + $0x80] sm:$0xff]
        %v4949 = vld [vmem:[%s1533 + $0x88] sm:$0xff]
        %v4950 = vld [vmem:[%s1533 + $0x90] sm:$0xff]
        %v4951 = vld [vmem:[%s1533 + $0x98] sm:$0xff]
        %v4952 = vld [vmem:[%s1533 + $0xa0] sm:$0xff]
        %v4953 = vld [vmem:[%s1533 + $0xa8] sm:$0xff]
        %v4954 = vld [vmem:[%s1533 + $0xb0] sm:$0xff]
        %v4955 = vld [vmem:[%s1533 + $0xb8] sm:$0xff]
        %v4956 = vld [vmem:[%s1533 + $0xc0] sm:$0xff]
        %v4957 = vld [vmem:[%s1533 + $0xc8] sm:$0xff]
        %v4958 = vld [vmem:[%s1533 + $0xd0] sm:$0xff]
        %v4959 = vld [vmem:[%s1533 + $0xd8] sm:$0xff]
        %v4960 = vld [vmem:[%s1533 + $0xe0] sm:$0xff]
        %v4961 = vld [vmem:[%s1533 + $0xe8] sm:$0xff]
        %4962 = vmatpush.msra.mxu0 0.0
        %4963 = vmatpush.msra.mxu0 %v4960
        %4964 = vmatpush.msra.mxu0 %v4958
        %4965 = vmatpush.msra.mxu0 %v4956
        %4966 = vmatpush.msra.mxu0 %v4954
        %4967 = vmatpush.msra.mxu0 %v4952
        %4968 = vmatpush.msra.mxu0 %v4950
        %4969 = vmatpush.msra.mxu0 %v4948
        %4970 = vmatpush.msra.mxu0 %v4946
        %4971 = vmatpush.msra.mxu0 %v4944
        %4972 = vmatpush.msra.mxu0 %v4942
        %4973 = vmatpush.msra.mxu0 %v4940
        %4974 = vmatpush.msra.mxu0 %v4938
        %4975 = vmatpush.msra.mxu0 %v4936
        %4976 = vmatpush.msra.mxu0 %v4934
        %4977 = vmatpush.msra.mxu0 %v4932
        %4978 = vmatmul.f32.gmra.mxu0 %v4850
        %v4979 = vpop.f32.mrf.mxu0
        %v4980 = vadd.f32 0.0, %v4979
        %4981 = vdwg.mxu0
        %4982 = vmatpush.msra.mxu0 0.0
        %4983 = vmatpush.msra.mxu0 %v4961
        %4984 = vmatpush.msra.mxu0 %v4959
        %4985 = vmatpush.msra.mxu0 %v4957
        %4986 = vmatpush.msra.mxu0 %v4955
        %4987 = vmatpush.msra.mxu0 %v4953
        %4988 = vmatpush.msra.mxu0 %v4951
        %4989 = vmatpush.msra.mxu0 %v4949
        %4990 = vmatpush.msra.mxu0 %v4947
        %4991 = vmatpush.msra.mxu0 %v4945
        %4992 = vmatpush.msra.mxu0 %v4943
        %4993 = vmatpush.msra.mxu0 %v4941
        %4994 = vmatpush.msra.mxu0 %v4939
        %4995 = vmatpush.msra.mxu0 %v4937
        %4996 = vmatpush.msra.mxu0 %v4935
        %4997 = vmatpush.msra.mxu0 %v4933
        %4998 = vmatmul.f32.gmra.mxu0 %v4850
        %v4999 = vpop.f32.mrf.mxu0
        %v5000 = vadd.f32 0.0, %v4999
        %5001 = vdwg.mxu0
        %v5002 = vadd.f32 %v4827, %v4980
        %v5003 = vadd.f32 %v4847, %v5000
        %v5004 = vrot.slane %v4702, 1
        %v5005 = vsel %vm1363, %v5004, 0
        %5007 = vmatpush.msra.mxu0 0.0
        %5008 = vmatpush.msra.mxu0 %v4960
        %5009 = vmatpush.msra.mxu0 %v4958
        %5010 = vmatpush.msra.mxu0 %v4956
        %5011 = vmatpush.msra.mxu0 %v4954
        %5012 = vmatpush.msra.mxu0 %v4952
        %5013 = vmatpush.msra.mxu0 %v4950
        %5014 = vmatpush.msra.mxu0 %v4948
        %5015 = vmatpush.msra.mxu0 %v4946
        %5016 = vmatpush.msra.mxu0 %v4944
        %5017 = vmatpush.msra.mxu0 %v4942
        %5018 = vmatpush.msra.mxu0 %v4940
        %5019 = vmatpush.msra.mxu0 %v4938
        %5020 = vmatpush.msra.mxu0 %v4936
        %5021 = vmatpush.msra.mxu0 %v4934
        %5022 = vmatpush.msra.mxu0 %v4932
        %5023 = vmatmul.f32.gmra.mxu0 %v5005
        %v5024 = vpop.f32.mrf.mxu0
        %v5025 = vadd.f32 0.0, %v5024
        %5026 = vdwg.mxu0
        %5027 = vmatpush.msra.mxu0 0.0
        %5028 = vmatpush.msra.mxu0 %v4961
        %5029 = vmatpush.msra.mxu0 %v4959
        %5030 = vmatpush.msra.mxu0 %v4957
        %5031 = vmatpush.msra.mxu0 %v4955
        %5032 = vmatpush.msra.mxu0 %v4953
        %5033 = vmatpush.msra.mxu0 %v4951
        %5034 = vmatpush.msra.mxu0 %v4949
        %5035 = vmatpush.msra.mxu0 %v4947
        %5036 = vmatpush.msra.mxu0 %v4945
        %5037 = vmatpush.msra.mxu0 %v4943
        %5038 = vmatpush.msra.mxu0 %v4941
        %5039 = vmatpush.msra.mxu0 %v4939
        %5040 = vmatpush.msra.mxu0 %v4937
        %5041 = vmatpush.msra.mxu0 %v4935
        %5042 = vmatpush.msra.mxu0 %v4933
        %5043 = vmatmul.f32.gmra.mxu0 %v5005
        %v5044 = vpop.f32.mrf.mxu0
        %v5045 = vadd.f32 0.0, %v5044
        %5046 = vdwg.mxu0
        %v5047 = vadd.f32 %v4910, %v5025
        %v5048 = vadd.f32 %v4930, %v5045
        %v5049 = vld [vmem:[%s1651] sm:$0xff]
        %v5050 = vld [vmem:[%s1651 + $0x8] sm:$0xff]
        %v5051 = vld [vmem:[%s1651 + $0x10] sm:$0xff]
        %v5052 = vld [vmem:[%s1651 + $0x18] sm:$0xff]
        %v5053 = vld [vmem:[%s1651 + $0x20] sm:$0xff]
        %v5054 = vld [vmem:[%s1651 + $0x28] sm:$0xff]
        %v5055 = vld [vmem:[%s1651 + $0x30] sm:$0xff]
        %v5056 = vld [vmem:[%s1651 + $0x38] sm:$0xff]
        %v5057 = vld [vmem:[%s1651 + $0x40] sm:$0xff]
        %v5058 = vld [vmem:[%s1651 + $0x48] sm:$0xff]
        %v5059 = vld [vmem:[%s1651 + $0x50] sm:$0xff]
        %v5060 = vld [vmem:[%s1651 + $0x58] sm:$0xff]
        %v5061 = vld [vmem:[%s1651 + $0x60] sm:$0xff]
        %v5062 = vld [vmem:[%s1651 + $0x68] sm:$0xff]
        %v5063 = vld [vmem:[%s1651 + $0x70] sm:$0xff]
        %v5064 = vld [vmem:[%s1651 + $0x78] sm:$0xff]
        %v5065 = vld [vmem:[%s1651 + $0x80] sm:$0xff]
        %v5066 = vld [vmem:[%s1651 + $0x88] sm:$0xff]
        %v5067 = vld [vmem:[%s1651 + $0x90] sm:$0xff]
        %v5068 = vld [vmem:[%s1651 + $0x98] sm:$0xff]
        %v5069 = vld [vmem:[%s1651 + $0xa0] sm:$0xff]
        %v5070 = vld [vmem:[%s1651 + $0xa8] sm:$0xff]
        %v5071 = vld [vmem:[%s1651 + $0xb0] sm:$0xff]
        %v5072 = vld [vmem:[%s1651 + $0xb8] sm:$0xff]
        %v5073 = vld [vmem:[%s1651 + $0xc0] sm:$0xff]
        %v5074 = vld [vmem:[%s1651 + $0xc8] sm:$0xff]
        %v5075 = vld [vmem:[%s1651 + $0xd0] sm:$0xff]
        %v5076 = vld [vmem:[%s1651 + $0xd8] sm:$0xff]
        %v5077 = vld [vmem:[%s1651 + $0xe0] sm:$0xff]
        %v5078 = vld [vmem:[%s1651 + $0xe8] sm:$0xff]
        %5079 = vmatpush.msra.mxu0 0.0
        %5080 = vmatpush.msra.mxu0 %v5077
        %5081 = vmatpush.msra.mxu0 %v5075
        %5082 = vmatpush.msra.mxu0 %v5073
        %5083 = vmatpush.msra.mxu0 %v5071
        %5084 = vmatpush.msra.mxu0 %v5069
        %5085 = vmatpush.msra.mxu0 %v5067
        %5086 = vmatpush.msra.mxu0 %v5065
        %5087 = vmatpush.msra.mxu0 %v5063
        %5088 = vmatpush.msra.mxu0 %v5061
        %5089 = vmatpush.msra.mxu0 %v5059
        %5090 = vmatpush.msra.mxu0 %v5057
        %5091 = vmatpush.msra.mxu0 %v5055
        %5092 = vmatpush.msra.mxu0 %v5053
        %5093 = vmatpush.msra.mxu0 %v5051
        %5094 = vmatpush.msra.mxu0 %v5049
        %5095 = vmatmul.f32.gmra.mxu0 %v5005
        %v5096 = vpop.f32.mrf.mxu0
        %v5097 = vadd.f32 0.0, %v5096
        %5098 = vdwg.mxu0
        %5099 = vmatpush.msra.mxu0 0.0
        %5100 = vmatpush.msra.mxu0 %v5078
        %5101 = vmatpush.msra.mxu0 %v5076
        %5102 = vmatpush.msra.mxu0 %v5074
        %5103 = vmatpush.msra.mxu0 %v5072
        %5104 = vmatpush.msra.mxu0 %v5070
        %5105 = vmatpush.msra.mxu0 %v5068
        %5106 = vmatpush.msra.mxu0 %v5066
        %5107 = vmatpush.msra.mxu0 %v5064
        %5108 = vmatpush.msra.mxu0 %v5062
        %5109 = vmatpush.msra.mxu0 %v5060
        %5110 = vmatpush.msra.mxu0 %v5058
        %5111 = vmatpush.msra.mxu0 %v5056
        %5112 = vmatpush.msra.mxu0 %v5054
        %5113 = vmatpush.msra.mxu0 %v5052
        %5114 = vmatpush.msra.mxu0 %v5050
        %5115 = vmatmul.f32.gmra.mxu0 %v5005
        %v5116 = vpop.f32.mrf.mxu0
        %v5117 = vadd.f32 0.0, %v5116
        %5118 = vdwg.mxu0
        %v5119 = vadd.f32 %v5002, %v5097
        %v5120 = vadd.f32 %v5003, %v5117
        %v5121 = vrot.slane %v4691, 2
        %v5122 = vsel %vm1363, %v5121, 0
        %5124 = vmatpush.msra.mxu0 0.0
        %5125 = vmatpush.msra.mxu0 %v5077
        %5126 = vmatpush.msra.mxu0 %v5075
        %5127 = vmatpush.msra.mxu0 %v5073
        %5128 = vmatpush.msra.mxu0 %v5071
        %5129 = vmatpush.msra.mxu0 %v5069
        %5130 = vmatpush.msra.mxu0 %v5067
        %5131 = vmatpush.msra.mxu0 %v5065
        %5132 = vmatpush.msra.mxu0 %v5063
        %5133 = vmatpush.msra.mxu0 %v5061
        %5134 = vmatpush.msra.mxu0 %v5059
        %5135 = vmatpush.msra.mxu0 %v5057
        %5136 = vmatpush.msra.mxu0 %v5055
        %5137 = vmatpush.msra.mxu0 %v5053
        %5138 = vmatpush.msra.mxu0 %v5051
        %5139 = vmatpush.msra.mxu0 %v5049
        %5140 = vmatmul.f32.gmra.mxu0 %v5122
        %v5141 = vpop.f32.mrf.mxu0
        %v5142 = vadd.f32 0.0, %v5141
        %5143 = vdwg.mxu0
        %5144 = vmatpush.msra.mxu0 0.0
        %5145 = vmatpush.msra.mxu0 %v5078
        %5146 = vmatpush.msra.mxu0 %v5076
        %5147 = vmatpush.msra.mxu0 %v5074
        %5148 = vmatpush.msra.mxu0 %v5072
        %5149 = vmatpush.msra.mxu0 %v5070
        %5150 = vmatpush.msra.mxu0 %v5068
        %5151 = vmatpush.msra.mxu0 %v5066
        %5152 = vmatpush.msra.mxu0 %v5064
        %5153 = vmatpush.msra.mxu0 %v5062
        %5154 = vmatpush.msra.mxu0 %v5060
        %5155 = vmatpush.msra.mxu0 %v5058
        %5156 = vmatpush.msra.mxu0 %v5056
        %5157 = vmatpush.msra.mxu0 %v5054
        %5158 = vmatpush.msra.mxu0 %v5052
        %5159 = vmatpush.msra.mxu0 %v5050
        %5160 = vmatmul.f32.gmra.mxu0 %v5122
        %v5161 = vpop.f32.mrf.mxu0
        %v5162 = vadd.f32 0.0, %v5161
        %5163 = vdwg.mxu0
        %v5164 = vadd.f32 %v5047, %v5142
        %v5165 = vadd.f32 %v5048, %v5162
        %v5166 = vld [vmem:[%s1769] sm:$0xff]
        %v5167 = vld [vmem:[%s1769 + $0x8] sm:$0xff]
        %v5168 = vld [vmem:[%s1769 + $0x10] sm:$0xff]
        %v5169 = vld [vmem:[%s1769 + $0x18] sm:$0xff]
        %v5170 = vld [vmem:[%s1769 + $0x20] sm:$0xff]
        %v5171 = vld [vmem:[%s1769 + $0x28] sm:$0xff]
        %v5172 = vld [vmem:[%s1769 + $0x30] sm:$0xff]
        %v5173 = vld [vmem:[%s1769 + $0x38] sm:$0xff]
        %v5174 = vld [vmem:[%s1769 + $0x40] sm:$0xff]
        %v5175 = vld [vmem:[%s1769 + $0x48] sm:$0xff]
        %v5176 = vld [vmem:[%s1769 + $0x50] sm:$0xff]
        %v5177 = vld [vmem:[%s1769 + $0x58] sm:$0xff]
        %v5178 = vld [vmem:[%s1769 + $0x60] sm:$0xff]
        %v5179 = vld [vmem:[%s1769 + $0x68] sm:$0xff]
        %v5180 = vld [vmem:[%s1769 + $0x70] sm:$0xff]
        %v5181 = vld [vmem:[%s1769 + $0x78] sm:$0xff]
        %v5182 = vld [vmem:[%s1769 + $0x80] sm:$0xff]
        %v5183 = vld [vmem:[%s1769 + $0x88] sm:$0xff]
        %v5184 = vld [vmem:[%s1769 + $0x90] sm:$0xff]
        %v5185 = vld [vmem:[%s1769 + $0x98] sm:$0xff]
        %v5186 = vld [vmem:[%s1769 + $0xa0] sm:$0xff]
        %v5187 = vld [vmem:[%s1769 + $0xa8] sm:$0xff]
        %v5188 = vld [vmem:[%s1769 + $0xb0] sm:$0xff]
        %v5189 = vld [vmem:[%s1769 + $0xb8] sm:$0xff]
        %v5190 = vld [vmem:[%s1769 + $0xc0] sm:$0xff]
        %v5191 = vld [vmem:[%s1769 + $0xc8] sm:$0xff]
        %v5192 = vld [vmem:[%s1769 + $0xd0] sm:$0xff]
        %v5193 = vld [vmem:[%s1769 + $0xd8] sm:$0xff]
        %v5194 = vld [vmem:[%s1769 + $0xe0] sm:$0xff]
        %v5195 = vld [vmem:[%s1769 + $0xe8] sm:$0xff]
        %5196 = vmatpush.msra.mxu0 0.0
        %5197 = vmatpush.msra.mxu0 %v5194
        %5198 = vmatpush.msra.mxu0 %v5192
        %5199 = vmatpush.msra.mxu0 %v5190
        %5200 = vmatpush.msra.mxu0 %v5188
        %5201 = vmatpush.msra.mxu0 %v5186
        %5202 = vmatpush.msra.mxu0 %v5184
        %5203 = vmatpush.msra.mxu0 %v5182
        %5204 = vmatpush.msra.mxu0 %v5180
        %5205 = vmatpush.msra.mxu0 %v5178
        %5206 = vmatpush.msra.mxu0 %v5176
        %5207 = vmatpush.msra.mxu0 %v5174
        %5208 = vmatpush.msra.mxu0 %v5172
        %5209 = vmatpush.msra.mxu0 %v5170
        %5210 = vmatpush.msra.mxu0 %v5168
        %5211 = vmatpush.msra.mxu0 %v5166
        %5212 = vmatmul.f32.gmra.mxu0 %v5122
        %v5213 = vpop.f32.mrf.mxu0
        %v5214 = vadd.f32 0.0, %v5213
        %5215 = vdwg.mxu0
        %5216 = vmatpush.msra.mxu0 0.0
        %5217 = vmatpush.msra.mxu0 %v5195
        %5218 = vmatpush.msra.mxu0 %v5193
        %5219 = vmatpush.msra.mxu0 %v5191
        %5220 = vmatpush.msra.mxu0 %v5189
        %5221 = vmatpush.msra.mxu0 %v5187
        %5222 = vmatpush.msra.mxu0 %v5185
        %5223 = vmatpush.msra.mxu0 %v5183
        %5224 = vmatpush.msra.mxu0 %v5181
        %5225 = vmatpush.msra.mxu0 %v5179
        %5226 = vmatpush.msra.mxu0 %v5177
        %5227 = vmatpush.msra.mxu0 %v5175
        %5228 = vmatpush.msra.mxu0 %v5173
        %5229 = vmatpush.msra.mxu0 %v5171
        %5230 = vmatpush.msra.mxu0 %v5169
        %5231 = vmatpush.msra.mxu0 %v5167
        %5232 = vmatmul.f32.gmra.mxu0 %v5122
        %v5233 = vpop.f32.mrf.mxu0
        %v5234 = vadd.f32 0.0, %v5233
        %5235 = vdwg.mxu0
        %v5236 = vadd.f32 %v5119, %v5214
        %v5237 = vadd.f32 %v5120, %v5234
        %v5238 = vrot.slane %v4702, 2
        %v5239 = vsel %vm1363, %v5238, 0
        %5241 = vmatpush.msra.mxu0 0.0
        %5242 = vmatpush.msra.mxu0 %v5194
        %5243 = vmatpush.msra.mxu0 %v5192
        %5244 = vmatpush.msra.mxu0 %v5190
        %5245 = vmatpush.msra.mxu0 %v5188
        %5246 = vmatpush.msra.mxu0 %v5186
        %5247 = vmatpush.msra.mxu0 %v5184
        %5248 = vmatpush.msra.mxu0 %v5182
        %5249 = vmatpush.msra.mxu0 %v5180
        %5250 = vmatpush.msra.mxu0 %v5178
        %5251 = vmatpush.msra.mxu0 %v5176
        %5252 = vmatpush.msra.mxu0 %v5174
        %5253 = vmatpush.msra.mxu0 %v5172
        %5254 = vmatpush.msra.mxu0 %v5170
        %5255 = vmatpush.msra.mxu0 %v5168
        %5256 = vmatpush.msra.mxu0 %v5166
        %5257 = vmatmul.f32.gmra.mxu0 %v5239
        %v5258 = vpop.f32.mrf.mxu0
        %v5259 = vadd.f32 0.0, %v5258
        %5260 = vdwg.mxu0
        %5261 = vmatpush.msra.mxu0 0.0
        %5262 = vmatpush.msra.mxu0 %v5195
        %5263 = vmatpush.msra.mxu0 %v5193
        %5264 = vmatpush.msra.mxu0 %v5191
        %5265 = vmatpush.msra.mxu0 %v5189
        %5266 = vmatpush.msra.mxu0 %v5187
        %5267 = vmatpush.msra.mxu0 %v5185
        %5268 = vmatpush.msra.mxu0 %v5183
        %5269 = vmatpush.msra.mxu0 %v5181
        %5270 = vmatpush.msra.mxu0 %v5179
        %5271 = vmatpush.msra.mxu0 %v5177
        %5272 = vmatpush.msra.mxu0 %v5175
        %5273 = vmatpush.msra.mxu0 %v5173
        %5274 = vmatpush.msra.mxu0 %v5171
        %5275 = vmatpush.msra.mxu0 %v5169
        %5276 = vmatpush.msra.mxu0 %v5167
        %5277 = vmatmul.f32.gmra.mxu0 %v5239
        %v5278 = vpop.f32.mrf.mxu0
        %v5279 = vadd.f32 0.0, %v5278
        %5280 = vdwg.mxu0
        %v5281 = vadd.f32 %v5164, %v5259
        %v5282 = vadd.f32 %v5165, %v5279
        %v5283 = vmax.f32 %v5236, %v5281
        %v5284 = vmax.f32 %v5237, %v5282
        %5287 = vrot.lane.b32.xlu0 %v5283, 48
        %v5288 = vpop.permute.xlu0 %5287
        %5289 = vrot.lane.b32.xlu0 %v5284, 48
        %v5290 = vpop.permute.xlu0 %5289
        %v5291 = vsel %vm1895, %v5288, %v5290
        %v5293 = vmax.f32 %v5283, %v5291
        %v5294 = vld [vmem:[%s4] sm:$0x1]
        %v5296 = vperm.slane %v5294, 0
        %v5298 = vadd.f32 %v5293, %v5296
        %v5299 = vmax.f32 %v5298, 0.0
        %v5300 = vld [vmem:[%s5] sm:$0xff]
        %v5301 = vld [vmem:[%s5 + $0x8] sm:$0xff]
        %v5302 = vld [vmem:[%s5 + $0x10] sm:$0xff]
        %v5303 = vld [vmem:[%s5 + $0x18] sm:$0xff]
        %v5304 = vld [vmem:[%s5 + $0x20] sm:$0xff]
        %v5305 = vld [vmem:[%s5 + $0x28] sm:$0xff]
        %v5306 = vld [vmem:[%s5 + $0x30] sm:$0xff]
        %v5307 = vld [vmem:[%s5 + $0x38] sm:$0xff]
        %v5308 = vld [vmem:[%s5 + $0x40] sm:$0xff]
        %v5309 = vld [vmem:[%s5 + $0x48] sm:$0xff]
        %v5310 = vld [vmem:[%s1915] sm:$0xff]
        %v5311 = vld [vmem:[%s1915 + $0x8] sm:$0xff]
        %v5312 = vld [vmem:[%s1915 + $0x10] sm:$0xff]
        %v5313 = vld [vmem:[%s1915 + $0x18] sm:$0xff]
        %v5314 = vld [vmem:[%s1915 + $0x20] sm:$0xff]
        %v5315 = vld [vmem:[%s1915 + $0x28] sm:$0xff]
        %v5316 = vld [vmem:[%s1915 + $0x30] sm:$0xff]
        %v5317 = vld [vmem:[%s1915 + $0x38] sm:$0xff]
        %v5318 = vld [vmem:[%s1915 + $0x40] sm:$0xff]
        %v5319 = vld [vmem:[%s1915 + $0x48] sm:$0xff]
        %v5321 = vrot.slane %v5299, 1
        %v5322 = vsel %vm1928, %v5321, 0
        %5324 = vmatpush.msra.mxu0 0.0
        %5325 = vmatpush.msra.mxu0 0.0
        %5326 = vmatpush.msra.mxu0 0.0
        %5327 = vmatpush.msra.mxu0 0.0
        %5328 = vmatpush.msra.mxu0 0.0
        %5329 = vmatpush.msra.mxu0 0.0
        %5330 = vmatpush.msra.mxu0 %v5319
        %5331 = vmatpush.msra.mxu0 %v5318
        %5332 = vmatpush.msra.mxu0 %v5317
        %5333 = vmatpush.msra.mxu0 %v5316
        %5334 = vmatpush.msra.mxu0 %v5315
        %5335 = vmatpush.msra.mxu0 %v5314
        %5336 = vmatpush.msra.mxu0 %v5313
        %5337 = vmatpush.msra.mxu0 %v5312
        %5338 = vmatpush.msra.mxu0 %v5311
        %5339 = vmatpush.msra.mxu0 %v5310
        %5340 = vmatmul.f32.gmra.mxu0 %v5322
        %v5341 = vpop.f32.mrf.mxu0
        %v5342 = vadd.f32 0.0, %v5341
        %5343 = vdwg.mxu0
        %v5344 = vsel %vm1928, %v5299, 0
        %5346 = vmatpush.msra.mxu0 0.0
        %5347 = vmatpush.msra.mxu0 0.0
        %5348 = vmatpush.msra.mxu0 0.0
        %5349 = vmatpush.msra.mxu0 0.0
        %5350 = vmatpush.msra.mxu0 0.0
        %5351 = vmatpush.msra.mxu0 0.0
        %5352 = vmatpush.msra.mxu0 %v5309
        %5353 = vmatpush.msra.mxu0 %v5308
        %5354 = vmatpush.msra.mxu0 %v5307
        %5355 = vmatpush.msra.mxu0 %v5306
        %5356 = vmatpush.msra.mxu0 %v5305
        %5357 = vmatpush.msra.mxu0 %v5304
        %5358 = vmatpush.msra.mxu0 %v5303
        %5359 = vmatpush.msra.mxu0 %v5302
        %5360 = vmatpush.msra.mxu0 %v5301
        %5361 = vmatpush.msra.mxu0 %v5300
        %5362 = vmatmul.f32.gmra.mxu0 %v5344
        %v5363 = vpop.f32.mrf.mxu0
        %v5364 = vadd.f32 %v5342, %v5363
        %5365 = vdwg.mxu0
        %v5366 = vld [vmem:[%s1973] sm:$0xff]
        %v5367 = vld [vmem:[%s1973 + $0x8] sm:$0xff]
        %v5368 = vld [vmem:[%s1973 + $0x10] sm:$0xff]
        %v5369 = vld [vmem:[%s1973 + $0x18] sm:$0xff]
        %v5370 = vld [vmem:[%s1973 + $0x20] sm:$0xff]
        %v5371 = vld [vmem:[%s1973 + $0x28] sm:$0xff]
        %v5372 = vld [vmem:[%s1973 + $0x30] sm:$0xff]
        %v5373 = vld [vmem:[%s1973 + $0x38] sm:$0xff]
        %v5374 = vld [vmem:[%s1973 + $0x40] sm:$0xff]
        %v5375 = vld [vmem:[%s1973 + $0x48] sm:$0xff]
        %v5376 = vrot.slane %v5299, 2
        %v5377 = vsel %vm1928, %v5376, 0
        %5379 = vmatpush.msra.mxu0 0.0
        %5380 = vmatpush.msra.mxu0 0.0
        %5381 = vmatpush.msra.mxu0 0.0
        %5382 = vmatpush.msra.mxu0 0.0
        %5383 = vmatpush.msra.mxu0 0.0
        %5384 = vmatpush.msra.mxu0 0.0
        %5385 = vmatpush.msra.mxu0 %v5375
        %5386 = vmatpush.msra.mxu0 %v5374
        %5387 = vmatpush.msra.mxu0 %v5373
        %5388 = vmatpush.msra.mxu0 %v5372
        %5389 = vmatpush.msra.mxu0 %v5371
        %5390 = vmatpush.msra.mxu0 %v5370
        %5391 = vmatpush.msra.mxu0 %v5369
        %5392 = vmatpush.msra.mxu0 %v5368
        %5393 = vmatpush.msra.mxu0 %v5367
        %5394 = vmatpush.msra.mxu0 %v5366
        %5395 = vmatmul.f32.gmra.mxu0 %v5377
        %v5396 = vpop.f32.mrf.mxu0
        %v5397 = vadd.f32 0.0, %v5396
        %5398 = vdwg.mxu0
        %v5399 = vadd.f32 %v5364, %v5397
        %v5400 = vld [vmem:[%s2008] sm:$0xff]
        %v5401 = vld [vmem:[%s2008 + $0x8] sm:$0xff]
        %v5402 = vld [vmem:[%s2008 + $0x10] sm:$0xff]
        %v5403 = vld [vmem:[%s2008 + $0x18] sm:$0xff]
        %v5404 = vld [vmem:[%s2008 + $0x20] sm:$0xff]
        %v5405 = vld [vmem:[%s2008 + $0x28] sm:$0xff]
        %v5406 = vld [vmem:[%s2008 + $0x30] sm:$0xff]
        %v5407 = vld [vmem:[%s2008 + $0x38] sm:$0xff]
        %v5408 = vld [vmem:[%s2008 + $0x40] sm:$0xff]
        %v5409 = vld [vmem:[%s2008 + $0x48] sm:$0xff]
        %v5410 = vrot.slane %v5299, 3
        %v5411 = vsel %vm1928, %v5410, 0
        %5413 = vmatpush.msra.mxu0 0.0
        %5414 = vmatpush.msra.mxu0 0.0
        %5415 = vmatpush.msra.mxu0 0.0
        %5416 = vmatpush.msra.mxu0 0.0
        %5417 = vmatpush.msra.mxu0 0.0
        %5418 = vmatpush.msra.mxu0 0.0
        %5419 = vmatpush.msra.mxu0 %v5409
        %5420 = vmatpush.msra.mxu0 %v5408
        %5421 = vmatpush.msra.mxu0 %v5407
        %5422 = vmatpush.msra.mxu0 %v5406
        %5423 = vmatpush.msra.mxu0 %v5405
        %5424 = vmatpush.msra.mxu0 %v5404
        %5425 = vmatpush.msra.mxu0 %v5403
        %5426 = vmatpush.msra.mxu0 %v5402
        %5427 = vmatpush.msra.mxu0 %v5401
        %5428 = vmatpush.msra.mxu0 %v5400
        %5429 = vmatmul.f32.gmra.mxu0 %v5411
        %v5430 = vpop.f32.mrf.mxu0
        %v5431 = vadd.f32 0.0, %v5430
        %5432 = vdwg.mxu0
        %v5433 = vadd.f32 %v5399, %v5431
        %v5434 = vld [vmem:[%s6] sm:$0x1]
        %v5435 = vadd.f32 %v5433, %v5434
        %v5436 = vmax.f32 %v5435, 0.0
        %5437 = vst.msk [vmem:[#allocation2 + $0x2] sm:$0x1] %vm2046, %v5436
        %v5438 = vld [vmem:[%s1] sm:$0xff]
        %v5439 = vld [vmem:[%s1 + $0x8] sm:$0xff]
        %v5440 = vld [vmem:[%s1 + $0x10] sm:$0xff]
        %v5441 = vld [vmem:[%s1 + $0x18] sm:$0xff]
        %v5442 = vld [vmem:[%s1 + $0x20] sm:$0xff]
        %v5443 = vld [vmem:[%s1 + $0x28] sm:$0xff]
        %v5444 = vld [vmem:[%s1 + $0x30] sm:$0xf]
        %v5445 = vld [vmem:[%s1 + $0x38] sm:$0xf]
        %s5446 = scalar_lea.vmem %s334, 96
        %v5447 = vld [vmem:[%s5446] sm:$0x3f]
        %s5448 = scalar_lea.vmem %s334, 104
        %v5449 = vld [vmem:[%s5448] sm:$0x3f]
        %s5450 = scalar_lea.vmem %s334, 112
        %v5451 = vld [vmem:[%s5450] sm:$0x3f]
        %s5452 = scalar_lea.vmem %s334, 120
        %v5453 = vld [vmem:[%s5452] sm:$0x3f]
        %v5454 = vld [vmem:[%s351] sm:$0xff]
        %v5455 = vld [vmem:[%s351 + $0x8] sm:$0xff]
        %v5456 = vld [vmem:[%s351 + $0x10] sm:$0xff]
        %v5457 = vld [vmem:[%s351 + $0x18] sm:$0xff]
        %v5458 = vld [vmem:[%s351 + $0x20] sm:$0xff]
        %v5459 = vld [vmem:[%s351 + $0x28] sm:$0xff]
        %v5460 = vld [vmem:[%s351 + $0x30] sm:$0xf]
        %v5461 = vld [vmem:[%s351 + $0x38] sm:$0xf]
        %v5463 = vsel %vm360, %v5449, 0
        %v5466 = vsel %vm364, %v5460, 0
        %v5469 = vsel %vm364, %v5461, 0
        %5471 = vmatpush.msra.mxu0 0.0
        %5472 = vmatpush.msra.mxu0 0.0
        %5473 = vmatpush.msra.mxu0 0.0
        %5474 = vmatpush.msra.mxu0 0.0
        %5475 = vmatpush.msra.mxu0 0.0
        %5476 = vmatpush.msra.mxu0 0.0
        %5477 = vmatpush.msra.mxu0 0.0
        %5478 = vmatpush.msra.mxu0 0.0
        %5479 = vmatpush.msra.mxu0 0.0
        %5480 = vmatpush.msra.mxu0 0.0
        %5481 = vmatpush.msra.mxu0 0.0
        %5482 = vmatpush.msra.mxu0 0.0
        %5483 = vmatpush.msra.mxu0 %v5466
        %5484 = vmatpush.msra.mxu0 %v5458
        %5485 = vmatpush.msra.mxu0 %v5456
        %5486 = vmatpush.msra.mxu0 %v5454
        %5487 = vmatmul.f32.gmra.mxu0 %v5463
        %v5488 = vpop.f32.mrf.mxu0
        %v5489 = vadd.f32 0.0, %v5488
        %5490 = vdwg.mxu0
        %5491 = vmatpush.msra.mxu0 0.0
        %5492 = vmatpush.msra.mxu0 0.0
        %5493 = vmatpush.msra.mxu0 0.0
        %5494 = vmatpush.msra.mxu0 0.0
        %5495 = vmatpush.msra.mxu0 0.0
        %5496 = vmatpush.msra.mxu0 0.0
        %5497 = vmatpush.msra.mxu0 0.0
        %5498 = vmatpush.msra.mxu0 0.0
        %5499 = vmatpush.msra.mxu0 0.0
        %5500 = vmatpush.msra.mxu0 0.0
        %5501 = vmatpush.msra.mxu0 0.0
        %5502 = vmatpush.msra.mxu0 0.0
        %5503 = vmatpush.msra.mxu0 %v5469
        %5504 = vmatpush.msra.mxu0 %v5459
        %5505 = vmatpush.msra.mxu0 %v5457
        %5506 = vmatpush.msra.mxu0 %v5455
        %5507 = vmatmul.f32.gmra.mxu0 %v5463
        %v5508 = vpop.f32.mrf.mxu0
        %v5509 = vadd.f32 0.0, %v5508
        %5510 = vdwg.mxu0
        %v5512 = vsel %vm360, %v5447, 0
        %v5515 = vsel %vm364, %v5444, 0
        %v5518 = vsel %vm364, %v5445, 0
        %5520 = vmatpush.msra.mxu0 0.0
        %5521 = vmatpush.msra.mxu0 0.0
        %5522 = vmatpush.msra.mxu0 0.0
        %5523 = vmatpush.msra.mxu0 0.0
        %5524 = vmatpush.msra.mxu0 0.0
        %5525 = vmatpush.msra.mxu0 0.0
        %5526 = vmatpush.msra.mxu0 0.0
        %5527 = vmatpush.msra.mxu0 0.0
        %5528 = vmatpush.msra.mxu0 0.0
        %5529 = vmatpush.msra.mxu0 0.0
        %5530 = vmatpush.msra.mxu0 0.0
        %5531 = vmatpush.msra.mxu0 0.0
        %5532 = vmatpush.msra.mxu0 %v5515
        %5533 = vmatpush.msra.mxu0 %v5442
        %5534 = vmatpush.msra.mxu0 %v5440
        %5535 = vmatpush.msra.mxu0 %v5438
        %5536 = vmatmul.f32.gmra.mxu0 %v5512
        %v5537 = vpop.f32.mrf.mxu0
        %v5538 = vadd.f32 %v5489, %v5537
        %5539 = vdwg.mxu0
        %5540 = vmatpush.msra.mxu0 0.0
        %5541 = vmatpush.msra.mxu0 0.0
        %5542 = vmatpush.msra.mxu0 0.0
        %5543 = vmatpush.msra.mxu0 0.0
        %5544 = vmatpush.msra.mxu0 0.0
        %5545 = vmatpush.msra.mxu0 0.0
        %5546 = vmatpush.msra.mxu0 0.0
        %5547 = vmatpush.msra.mxu0 0.0
        %5548 = vmatpush.msra.mxu0 0.0
        %5549 = vmatpush.msra.mxu0 0.0
        %5550 = vmatpush.msra.mxu0 0.0
        %5551 = vmatpush.msra.mxu0 0.0
        %5552 = vmatpush.msra.mxu0 %v5518
        %5553 = vmatpush.msra.mxu0 %v5443
        %5554 = vmatpush.msra.mxu0 %v5441
        %5555 = vmatpush.msra.mxu0 %v5439
        %5556 = vmatmul.f32.gmra.mxu0 %v5512
        %v5557 = vpop.f32.mrf.mxu0
        %v5558 = vadd.f32 %v5509, %v5557
        %5559 = vdwg.mxu0
        %v5561 = vsel %vm360, %v5451, 0
        %5563 = vmatpush.msra.mxu0 0.0
        %5564 = vmatpush.msra.mxu0 0.0
        %5565 = vmatpush.msra.mxu0 0.0
        %5566 = vmatpush.msra.mxu0 0.0
        %5567 = vmatpush.msra.mxu0 0.0
        %5568 = vmatpush.msra.mxu0 0.0
        %5569 = vmatpush.msra.mxu0 0.0
        %5570 = vmatpush.msra.mxu0 0.0
        %5571 = vmatpush.msra.mxu0 0.0
        %5572 = vmatpush.msra.mxu0 0.0
        %5573 = vmatpush.msra.mxu0 0.0
        %5574 = vmatpush.msra.mxu0 0.0
        %5575 = vmatpush.msra.mxu0 %v5466
        %5576 = vmatpush.msra.mxu0 %v5458
        %5577 = vmatpush.msra.mxu0 %v5456
        %5578 = vmatpush.msra.mxu0 %v5454
        %5579 = vmatmul.f32.gmra.mxu0 %v5561
        %v5580 = vpop.f32.mrf.mxu0
        %v5581 = vadd.f32 0.0, %v5580
        %5582 = vdwg.mxu0
        %5583 = vmatpush.msra.mxu0 0.0
        %5584 = vmatpush.msra.mxu0 0.0
        %5585 = vmatpush.msra.mxu0 0.0
        %5586 = vmatpush.msra.mxu0 0.0
        %5587 = vmatpush.msra.mxu0 0.0
        %5588 = vmatpush.msra.mxu0 0.0
        %5589 = vmatpush.msra.mxu0 0.0
        %5590 = vmatpush.msra.mxu0 0.0
        %5591 = vmatpush.msra.mxu0 0.0
        %5592 = vmatpush.msra.mxu0 0.0
        %5593 = vmatpush.msra.mxu0 0.0
        %5594 = vmatpush.msra.mxu0 0.0
        %5595 = vmatpush.msra.mxu0 %v5469
        %5596 = vmatpush.msra.mxu0 %v5459
        %5597 = vmatpush.msra.mxu0 %v5457
        %5598 = vmatpush.msra.mxu0 %v5455
        %5599 = vmatmul.f32.gmra.mxu0 %v5561
        %v5600 = vpop.f32.mrf.mxu0
        %v5601 = vadd.f32 0.0, %v5600
        %5602 = vdwg.mxu0
        %5603 = vmatpush.msra.mxu0 0.0
        %5604 = vmatpush.msra.mxu0 0.0
        %5605 = vmatpush.msra.mxu0 0.0
        %5606 = vmatpush.msra.mxu0 0.0
        %5607 = vmatpush.msra.mxu0 0.0
        %5608 = vmatpush.msra.mxu0 0.0
        %5609 = vmatpush.msra.mxu0 0.0
        %5610 = vmatpush.msra.mxu0 0.0
        %5611 = vmatpush.msra.mxu0 0.0
        %5612 = vmatpush.msra.mxu0 0.0
        %5613 = vmatpush.msra.mxu0 0.0
        %5614 = vmatpush.msra.mxu0 0.0
        %5615 = vmatpush.msra.mxu0 %v5515
        %5616 = vmatpush.msra.mxu0 %v5442
        %5617 = vmatpush.msra.mxu0 %v5440
        %5618 = vmatpush.msra.mxu0 %v5438
        %5619 = vmatmul.f32.gmra.mxu0 %v5463
        %v5620 = vpop.f32.mrf.mxu0
        %v5621 = vadd.f32 %v5581, %v5620
        %5622 = vdwg.mxu0
        %5623 = vmatpush.msra.mxu0 0.0
        %5624 = vmatpush.msra.mxu0 0.0
        %5625 = vmatpush.msra.mxu0 0.0
        %5626 = vmatpush.msra.mxu0 0.0
        %5627 = vmatpush.msra.mxu0 0.0
        %5628 = vmatpush.msra.mxu0 0.0
        %5629 = vmatpush.msra.mxu0 0.0
        %5630 = vmatpush.msra.mxu0 0.0
        %5631 = vmatpush.msra.mxu0 0.0
        %5632 = vmatpush.msra.mxu0 0.0
        %5633 = vmatpush.msra.mxu0 0.0
        %5634 = vmatpush.msra.mxu0 0.0
        %5635 = vmatpush.msra.mxu0 %v5518
        %5636 = vmatpush.msra.mxu0 %v5443
        %5637 = vmatpush.msra.mxu0 %v5441
        %5638 = vmatpush.msra.mxu0 %v5439
        %5639 = vmatmul.f32.gmra.mxu0 %v5463
        %v5640 = vpop.f32.mrf.mxu0
        %v5641 = vadd.f32 %v5601, %v5640
        %5642 = vdwg.mxu0
        %v5644 = vsel %vm360, %v5453, 0
        %5646 = vmatpush.msra.mxu0 0.0
        %5647 = vmatpush.msra.mxu0 0.0
        %5648 = vmatpush.msra.mxu0 0.0
        %5649 = vmatpush.msra.mxu0 0.0
        %5650 = vmatpush.msra.mxu0 0.0
        %5651 = vmatpush.msra.mxu0 0.0
        %5652 = vmatpush.msra.mxu0 0.0
        %5653 = vmatpush.msra.mxu0 0.0
        %5654 = vmatpush.msra.mxu0 0.0
        %5655 = vmatpush.msra.mxu0 0.0
        %5656 = vmatpush.msra.mxu0 0.0
        %5657 = vmatpush.msra.mxu0 0.0
        %5658 = vmatpush.msra.mxu0 %v5466
        %5659 = vmatpush.msra.mxu0 %v5458
        %5660 = vmatpush.msra.mxu0 %v5456
        %5661 = vmatpush.msra.mxu0 %v5454
        %5662 = vmatmul.f32.gmra.mxu0 %v5644
        %v5663 = vpop.f32.mrf.mxu0
        %v5664 = vadd.f32 0.0, %v5663
        %5665 = vdwg.mxu0
        %5666 = vmatpush.msra.mxu0 0.0
        %5667 = vmatpush.msra.mxu0 0.0
        %5668 = vmatpush.msra.mxu0 0.0
        %5669 = vmatpush.msra.mxu0 0.0
        %5670 = vmatpush.msra.mxu0 0.0
        %5671 = vmatpush.msra.mxu0 0.0
        %5672 = vmatpush.msra.mxu0 0.0
        %5673 = vmatpush.msra.mxu0 0.0
        %5674 = vmatpush.msra.mxu0 0.0
        %5675 = vmatpush.msra.mxu0 0.0
        %5676 = vmatpush.msra.mxu0 0.0
        %5677 = vmatpush.msra.mxu0 0.0
        %5678 = vmatpush.msra.mxu0 %v5469
        %5679 = vmatpush.msra.mxu0 %v5459
        %5680 = vmatpush.msra.mxu0 %v5457
        %5681 = vmatpush.msra.mxu0 %v5455
        %5682 = vmatmul.f32.gmra.mxu0 %v5644
        %v5683 = vpop.f32.mrf.mxu0
        %v5684 = vadd.f32 0.0, %v5683
        %5685 = vdwg.mxu0
        %5686 = vmatpush.msra.mxu0 0.0
        %5687 = vmatpush.msra.mxu0 0.0
        %5688 = vmatpush.msra.mxu0 0.0
        %5689 = vmatpush.msra.mxu0 0.0
        %5690 = vmatpush.msra.mxu0 0.0
        %5691 = vmatpush.msra.mxu0 0.0
        %5692 = vmatpush.msra.mxu0 0.0
        %5693 = vmatpush.msra.mxu0 0.0
        %5694 = vmatpush.msra.mxu0 0.0
        %5695 = vmatpush.msra.mxu0 0.0
        %5696 = vmatpush.msra.mxu0 0.0
        %5697 = vmatpush.msra.mxu0 0.0
        %5698 = vmatpush.msra.mxu0 %v5515
        %5699 = vmatpush.msra.mxu0 %v5442
        %5700 = vmatpush.msra.mxu0 %v5440
        %5701 = vmatpush.msra.mxu0 %v5438
        %5702 = vmatmul.f32.gmra.mxu0 %v5561
        %v5703 = vpop.f32.mrf.mxu0
        %v5704 = vadd.f32 %v5664, %v5703
        %5705 = vdwg.mxu0
        %5706 = vmatpush.msra.mxu0 0.0
        %5707 = vmatpush.msra.mxu0 0.0
        %5708 = vmatpush.msra.mxu0 0.0
        %5709 = vmatpush.msra.mxu0 0.0
        %5710 = vmatpush.msra.mxu0 0.0
        %5711 = vmatpush.msra.mxu0 0.0
        %5712 = vmatpush.msra.mxu0 0.0
        %5713 = vmatpush.msra.mxu0 0.0
        %5714 = vmatpush.msra.mxu0 0.0
        %5715 = vmatpush.msra.mxu0 0.0
        %5716 = vmatpush.msra.mxu0 0.0
        %5717 = vmatpush.msra.mxu0 0.0
        %5718 = vmatpush.msra.mxu0 %v5518
        %5719 = vmatpush.msra.mxu0 %v5443
        %5720 = vmatpush.msra.mxu0 %v5441
        %5721 = vmatpush.msra.mxu0 %v5439
        %5722 = vmatmul.f32.gmra.mxu0 %v5561
        %v5723 = vpop.f32.mrf.mxu0
        %v5724 = vadd.f32 %v5684, %v5723
        %5725 = vdwg.mxu0
        %v5726 = vld [vmem:[%s5446 + $0x1] sm:$0x3f]
        %v5728 = vsel %vm360, %v5726, 0
        %5730 = vmatpush.msra.mxu0 0.0
        %5731 = vmatpush.msra.mxu0 0.0
        %5732 = vmatpush.msra.mxu0 0.0
        %5733 = vmatpush.msra.mxu0 0.0
        %5734 = vmatpush.msra.mxu0 0.0
        %5735 = vmatpush.msra.mxu0 0.0
        %5736 = vmatpush.msra.mxu0 0.0
        %5737 = vmatpush.msra.mxu0 0.0
        %5738 = vmatpush.msra.mxu0 0.0
        %5739 = vmatpush.msra.mxu0 0.0
        %5740 = vmatpush.msra.mxu0 0.0
        %5741 = vmatpush.msra.mxu0 0.0
        %5742 = vmatpush.msra.mxu0 %v5466
        %5743 = vmatpush.msra.mxu0 %v5458
        %5744 = vmatpush.msra.mxu0 %v5456
        %5745 = vmatpush.msra.mxu0 %v5454
        %5746 = vmatmul.f32.gmra.mxu0 %v5728
        %v5747 = vpop.f32.mrf.mxu0
        %v5748 = vadd.f32 0.0, %v5747
        %5749 = vdwg.mxu0
        %5750 = vmatpush.msra.mxu0 0.0
        %5751 = vmatpush.msra.mxu0 0.0
        %5752 = vmatpush.msra.mxu0 0.0
        %5753 = vmatpush.msra.mxu0 0.0
        %5754 = vmatpush.msra.mxu0 0.0
        %5755 = vmatpush.msra.mxu0 0.0
        %5756 = vmatpush.msra.mxu0 0.0
        %5757 = vmatpush.msra.mxu0 0.0
        %5758 = vmatpush.msra.mxu0 0.0
        %5759 = vmatpush.msra.mxu0 0.0
        %5760 = vmatpush.msra.mxu0 0.0
        %5761 = vmatpush.msra.mxu0 0.0
        %5762 = vmatpush.msra.mxu0 %v5469
        %5763 = vmatpush.msra.mxu0 %v5459
        %5764 = vmatpush.msra.mxu0 %v5457
        %5765 = vmatpush.msra.mxu0 %v5455
        %5766 = vmatmul.f32.gmra.mxu0 %v5728
        %v5767 = vpop.f32.mrf.mxu0
        %v5768 = vadd.f32 0.0, %v5767
        %5769 = vdwg.mxu0
        %5770 = vmatpush.msra.mxu0 0.0
        %5771 = vmatpush.msra.mxu0 0.0
        %5772 = vmatpush.msra.mxu0 0.0
        %5773 = vmatpush.msra.mxu0 0.0
        %5774 = vmatpush.msra.mxu0 0.0
        %5775 = vmatpush.msra.mxu0 0.0
        %5776 = vmatpush.msra.mxu0 0.0
        %5777 = vmatpush.msra.mxu0 0.0
        %5778 = vmatpush.msra.mxu0 0.0
        %5779 = vmatpush.msra.mxu0 0.0
        %5780 = vmatpush.msra.mxu0 0.0
        %5781 = vmatpush.msra.mxu0 0.0
        %5782 = vmatpush.msra.mxu0 %v5515
        %5783 = vmatpush.msra.mxu0 %v5442
        %5784 = vmatpush.msra.mxu0 %v5440
        %5785 = vmatpush.msra.mxu0 %v5438
        %5786 = vmatmul.f32.gmra.mxu0 %v5644
        %v5787 = vpop.f32.mrf.mxu0
        %v5788 = vadd.f32 %v5748, %v5787
        %5789 = vdwg.mxu0
        %5790 = vmatpush.msra.mxu0 0.0
        %5791 = vmatpush.msra.mxu0 0.0
        %5792 = vmatpush.msra.mxu0 0.0
        %5793 = vmatpush.msra.mxu0 0.0
        %5794 = vmatpush.msra.mxu0 0.0
        %5795 = vmatpush.msra.mxu0 0.0
        %5796 = vmatpush.msra.mxu0 0.0
        %5797 = vmatpush.msra.mxu0 0.0
        %5798 = vmatpush.msra.mxu0 0.0
        %5799 = vmatpush.msra.mxu0 0.0
        %5800 = vmatpush.msra.mxu0 0.0
        %5801 = vmatpush.msra.mxu0 0.0
        %5802 = vmatpush.msra.mxu0 %v5518
        %5803 = vmatpush.msra.mxu0 %v5443
        %5804 = vmatpush.msra.mxu0 %v5441
        %5805 = vmatpush.msra.mxu0 %v5439
        %5806 = vmatmul.f32.gmra.mxu0 %v5644
        %v5807 = vpop.f32.mrf.mxu0
        %v5808 = vadd.f32 %v5768, %v5807
        %5809 = vdwg.mxu0
        %v5810 = vld [vmem:[%s710] sm:$0xff]
        %v5811 = vld [vmem:[%s710 + $0x8] sm:$0xff]
        %v5812 = vld [vmem:[%s710 + $0x10] sm:$0xff]
        %v5813 = vld [vmem:[%s710 + $0x18] sm:$0xff]
        %v5814 = vld [vmem:[%s710 + $0x20] sm:$0xff]
        %v5815 = vld [vmem:[%s710 + $0x28] sm:$0xff]
        %v5816 = vld [vmem:[%s710 + $0x30] sm:$0xf]
        %v5817 = vld [vmem:[%s710 + $0x38] sm:$0xf]
        %v5819 = vsel %vm364, %v5816, 0
        %v5822 = vsel %vm364, %v5817, 0
        %5824 = vmatpush.msra.mxu0 0.0
        %5825 = vmatpush.msra.mxu0 0.0
        %5826 = vmatpush.msra.mxu0 0.0
        %5827 = vmatpush.msra.mxu0 0.0
        %5828 = vmatpush.msra.mxu0 0.0
        %5829 = vmatpush.msra.mxu0 0.0
        %5830 = vmatpush.msra.mxu0 0.0
        %5831 = vmatpush.msra.mxu0 0.0
        %5832 = vmatpush.msra.mxu0 0.0
        %5833 = vmatpush.msra.mxu0 0.0
        %5834 = vmatpush.msra.mxu0 0.0
        %5835 = vmatpush.msra.mxu0 0.0
        %5836 = vmatpush.msra.mxu0 %v5819
        %5837 = vmatpush.msra.mxu0 %v5814
        %5838 = vmatpush.msra.mxu0 %v5812
        %5839 = vmatpush.msra.mxu0 %v5810
        %5840 = vmatmul.f32.gmra.mxu0 %v5561
        %v5841 = vpop.f32.mrf.mxu0
        %v5842 = vadd.f32 0.0, %v5841
        %5843 = vdwg.mxu0
        %5844 = vmatpush.msra.mxu0 0.0
        %5845 = vmatpush.msra.mxu0 0.0
        %5846 = vmatpush.msra.mxu0 0.0
        %5847 = vmatpush.msra.mxu0 0.0
        %5848 = vmatpush.msra.mxu0 0.0
        %5849 = vmatpush.msra.mxu0 0.0
        %5850 = vmatpush.msra.mxu0 0.0
        %5851 = vmatpush.msra.mxu0 0.0
        %5852 = vmatpush.msra.mxu0 0.0
        %5853 = vmatpush.msra.mxu0 0.0
        %5854 = vmatpush.msra.mxu0 0.0
        %5855 = vmatpush.msra.mxu0 0.0
        %5856 = vmatpush.msra.mxu0 %v5822
        %5857 = vmatpush.msra.mxu0 %v5815
        %5858 = vmatpush.msra.mxu0 %v5813
        %5859 = vmatpush.msra.mxu0 %v5811
        %5860 = vmatmul.f32.gmra.mxu0 %v5561
        %v5861 = vpop.f32.mrf.mxu0
        %v5862 = vadd.f32 0.0, %v5861
        %5863 = vdwg.mxu0
        %v5864 = vadd.f32 %v5538, %v5842
        %v5865 = vadd.f32 %v5558, %v5862
        %5866 = vmatpush.msra.mxu0 0.0
        %5867 = vmatpush.msra.mxu0 0.0
        %5868 = vmatpush.msra.mxu0 0.0
        %5869 = vmatpush.msra.mxu0 0.0
        %5870 = vmatpush.msra.mxu0 0.0
        %5871 = vmatpush.msra.mxu0 0.0
        %5872 = vmatpush.msra.mxu0 0.0
        %5873 = vmatpush.msra.mxu0 0.0
        %5874 = vmatpush.msra.mxu0 0.0
        %5875 = vmatpush.msra.mxu0 0.0
        %5876 = vmatpush.msra.mxu0 0.0
        %5877 = vmatpush.msra.mxu0 0.0
        %5878 = vmatpush.msra.mxu0 %v5819
        %5879 = vmatpush.msra.mxu0 %v5814
        %5880 = vmatpush.msra.mxu0 %v5812
        %5881 = vmatpush.msra.mxu0 %v5810
        %5882 = vmatmul.f32.gmra.mxu0 %v5644
        %v5883 = vpop.f32.mrf.mxu0
        %v5884 = vadd.f32 0.0, %v5883
        %5885 = vdwg.mxu0
        %5886 = vmatpush.msra.mxu0 0.0
        %5887 = vmatpush.msra.mxu0 0.0
        %5888 = vmatpush.msra.mxu0 0.0
        %5889 = vmatpush.msra.mxu0 0.0
        %5890 = vmatpush.msra.mxu0 0.0
        %5891 = vmatpush.msra.mxu0 0.0
        %5892 = vmatpush.msra.mxu0 0.0
        %5893 = vmatpush.msra.mxu0 0.0
        %5894 = vmatpush.msra.mxu0 0.0
        %5895 = vmatpush.msra.mxu0 0.0
        %5896 = vmatpush.msra.mxu0 0.0
        %5897 = vmatpush.msra.mxu0 0.0
        %5898 = vmatpush.msra.mxu0 %v5822
        %5899 = vmatpush.msra.mxu0 %v5815
        %5900 = vmatpush.msra.mxu0 %v5813
        %5901 = vmatpush.msra.mxu0 %v5811
        %5902 = vmatmul.f32.gmra.mxu0 %v5644
        %v5903 = vpop.f32.mrf.mxu0
        %v5904 = vadd.f32 0.0, %v5903
        %5905 = vdwg.mxu0
        %v5906 = vadd.f32 %v5621, %v5884
        %v5907 = vadd.f32 %v5641, %v5904
        %5908 = vmatpush.msra.mxu0 0.0
        %5909 = vmatpush.msra.mxu0 0.0
        %5910 = vmatpush.msra.mxu0 0.0
        %5911 = vmatpush.msra.mxu0 0.0
        %5912 = vmatpush.msra.mxu0 0.0
        %5913 = vmatpush.msra.mxu0 0.0
        %5914 = vmatpush.msra.mxu0 0.0
        %5915 = vmatpush.msra.mxu0 0.0
        %5916 = vmatpush.msra.mxu0 0.0
        %5917 = vmatpush.msra.mxu0 0.0
        %5918 = vmatpush.msra.mxu0 0.0
        %5919 = vmatpush.msra.mxu0 0.0
        %5920 = vmatpush.msra.mxu0 %v5819
        %5921 = vmatpush.msra.mxu0 %v5814
        %5922 = vmatpush.msra.mxu0 %v5812
        %5923 = vmatpush.msra.mxu0 %v5810
        %5924 = vmatmul.f32.gmra.mxu0 %v5728
        %v5925 = vpop.f32.mrf.mxu0
        %v5926 = vadd.f32 0.0, %v5925
        %5927 = vdwg.mxu0
        %5928 = vmatpush.msra.mxu0 0.0
        %5929 = vmatpush.msra.mxu0 0.0
        %5930 = vmatpush.msra.mxu0 0.0
        %5931 = vmatpush.msra.mxu0 0.0
        %5932 = vmatpush.msra.mxu0 0.0
        %5933 = vmatpush.msra.mxu0 0.0
        %5934 = vmatpush.msra.mxu0 0.0
        %5935 = vmatpush.msra.mxu0 0.0
        %5936 = vmatpush.msra.mxu0 0.0
        %5937 = vmatpush.msra.mxu0 0.0
        %5938 = vmatpush.msra.mxu0 0.0
        %5939 = vmatpush.msra.mxu0 0.0
        %5940 = vmatpush.msra.mxu0 %v5822
        %5941 = vmatpush.msra.mxu0 %v5815
        %5942 = vmatpush.msra.mxu0 %v5813
        %5943 = vmatpush.msra.mxu0 %v5811
        %5944 = vmatmul.f32.gmra.mxu0 %v5728
        %v5945 = vpop.f32.mrf.mxu0
        %v5946 = vadd.f32 0.0, %v5945
        %5947 = vdwg.mxu0
        %v5948 = vadd.f32 %v5704, %v5926
        %v5949 = vadd.f32 %v5724, %v5946
        %v5950 = vld [vmem:[%s5448 + $0x1] sm:$0x3f]
        %v5952 = vsel %vm360, %v5950, 0
        %5954 = vmatpush.msra.mxu0 0.0
        %5955 = vmatpush.msra.mxu0 0.0
        %5956 = vmatpush.msra.mxu0 0.0
        %5957 = vmatpush.msra.mxu0 0.0
        %5958 = vmatpush.msra.mxu0 0.0
        %5959 = vmatpush.msra.mxu0 0.0
        %5960 = vmatpush.msra.mxu0 0.0
        %5961 = vmatpush.msra.mxu0 0.0
        %5962 = vmatpush.msra.mxu0 0.0
        %5963 = vmatpush.msra.mxu0 0.0
        %5964 = vmatpush.msra.mxu0 0.0
        %5965 = vmatpush.msra.mxu0 0.0
        %5966 = vmatpush.msra.mxu0 %v5819
        %5967 = vmatpush.msra.mxu0 %v5814
        %5968 = vmatpush.msra.mxu0 %v5812
        %5969 = vmatpush.msra.mxu0 %v5810
        %5970 = vmatmul.f32.gmra.mxu0 %v5952
        %v5971 = vpop.f32.mrf.mxu0
        %v5972 = vadd.f32 0.0, %v5971
        %5973 = vdwg.mxu0
        %5974 = vmatpush.msra.mxu0 0.0
        %5975 = vmatpush.msra.mxu0 0.0
        %5976 = vmatpush.msra.mxu0 0.0
        %5977 = vmatpush.msra.mxu0 0.0
        %5978 = vmatpush.msra.mxu0 0.0
        %5979 = vmatpush.msra.mxu0 0.0
        %5980 = vmatpush.msra.mxu0 0.0
        %5981 = vmatpush.msra.mxu0 0.0
        %5982 = vmatpush.msra.mxu0 0.0
        %5983 = vmatpush.msra.mxu0 0.0
        %5984 = vmatpush.msra.mxu0 0.0
        %5985 = vmatpush.msra.mxu0 0.0
        %5986 = vmatpush.msra.mxu0 %v5822
        %5987 = vmatpush.msra.mxu0 %v5815
        %5988 = vmatpush.msra.mxu0 %v5813
        %5989 = vmatpush.msra.mxu0 %v5811
        %5990 = vmatmul.f32.gmra.mxu0 %v5952
        %v5991 = vpop.f32.mrf.mxu0
        %v5992 = vadd.f32 0.0, %v5991
        %5993 = vdwg.mxu0
        %v5994 = vadd.f32 %v5788, %v5972
        %v5995 = vadd.f32 %v5808, %v5992
        %v5996 = vld [vmem:[%s897] sm:$0xff]
        %v5997 = vld [vmem:[%s897 + $0x8] sm:$0xff]
        %v5998 = vld [vmem:[%s897 + $0x10] sm:$0xff]
        %v5999 = vld [vmem:[%s897 + $0x18] sm:$0xff]
        %v6000 = vld [vmem:[%s897 + $0x20] sm:$0xff]
        %v6001 = vld [vmem:[%s897 + $0x28] sm:$0xff]
        %v6002 = vld [vmem:[%s897 + $0x30] sm:$0xf]
        %v6003 = vld [vmem:[%s897 + $0x38] sm:$0xf]
        %v6005 = vsel %vm364, %v6002, 0
        %v6008 = vsel %vm364, %v6003, 0
        %6010 = vmatpush.msra.mxu0 0.0
        %6011 = vmatpush.msra.mxu0 0.0
        %6012 = vmatpush.msra.mxu0 0.0
        %6013 = vmatpush.msra.mxu0 0.0
        %6014 = vmatpush.msra.mxu0 0.0
        %6015 = vmatpush.msra.mxu0 0.0
        %6016 = vmatpush.msra.mxu0 0.0
        %6017 = vmatpush.msra.mxu0 0.0
        %6018 = vmatpush.msra.mxu0 0.0
        %6019 = vmatpush.msra.mxu0 0.0
        %6020 = vmatpush.msra.mxu0 0.0
        %6021 = vmatpush.msra.mxu0 0.0
        %6022 = vmatpush.msra.mxu0 %v6005
        %6023 = vmatpush.msra.mxu0 %v6000
        %6024 = vmatpush.msra.mxu0 %v5998
        %6025 = vmatpush.msra.mxu0 %v5996
        %6026 = vmatmul.f32.gmra.mxu0 %v5644
        %v6027 = vpop.f32.mrf.mxu0
        %v6028 = vadd.f32 0.0, %v6027
        %6029 = vdwg.mxu0
        %6030 = vmatpush.msra.mxu0 0.0
        %6031 = vmatpush.msra.mxu0 0.0
        %6032 = vmatpush.msra.mxu0 0.0
        %6033 = vmatpush.msra.mxu0 0.0
        %6034 = vmatpush.msra.mxu0 0.0
        %6035 = vmatpush.msra.mxu0 0.0
        %6036 = vmatpush.msra.mxu0 0.0
        %6037 = vmatpush.msra.mxu0 0.0
        %6038 = vmatpush.msra.mxu0 0.0
        %6039 = vmatpush.msra.mxu0 0.0
        %6040 = vmatpush.msra.mxu0 0.0
        %6041 = vmatpush.msra.mxu0 0.0
        %6042 = vmatpush.msra.mxu0 %v6008
        %6043 = vmatpush.msra.mxu0 %v6001
        %6044 = vmatpush.msra.mxu0 %v5999
        %6045 = vmatpush.msra.mxu0 %v5997
        %6046 = vmatmul.f32.gmra.mxu0 %v5644
        %v6047 = vpop.f32.mrf.mxu0
        %v6048 = vadd.f32 0.0, %v6047
        %6049 = vdwg.mxu0
        %v6050 = vadd.f32 %v5864, %v6028
        %v6051 = vadd.f32 %v5865, %v6048
        %6052 = vmatpush.msra.mxu0 0.0
        %6053 = vmatpush.msra.mxu0 0.0
        %6054 = vmatpush.msra.mxu0 0.0
        %6055 = vmatpush.msra.mxu0 0.0
        %6056 = vmatpush.msra.mxu0 0.0
        %6057 = vmatpush.msra.mxu0 0.0
        %6058 = vmatpush.msra.mxu0 0.0
        %6059 = vmatpush.msra.mxu0 0.0
        %6060 = vmatpush.msra.mxu0 0.0
        %6061 = vmatpush.msra.mxu0 0.0
        %6062 = vmatpush.msra.mxu0 0.0
        %6063 = vmatpush.msra.mxu0 0.0
        %6064 = vmatpush.msra.mxu0 %v6005
        %6065 = vmatpush.msra.mxu0 %v6000
        %6066 = vmatpush.msra.mxu0 %v5998
        %6067 = vmatpush.msra.mxu0 %v5996
        %6068 = vmatmul.f32.gmra.mxu0 %v5728
        %v6069 = vpop.f32.mrf.mxu0
        %v6070 = vadd.f32 0.0, %v6069
        %6071 = vdwg.mxu0
        %6072 = vmatpush.msra.mxu0 0.0
        %6073 = vmatpush.msra.mxu0 0.0
        %6074 = vmatpush.msra.mxu0 0.0
        %6075 = vmatpush.msra.mxu0 0.0
        %6076 = vmatpush.msra.mxu0 0.0
        %6077 = vmatpush.msra.mxu0 0.0
        %6078 = vmatpush.msra.mxu0 0.0
        %6079 = vmatpush.msra.mxu0 0.0
        %6080 = vmatpush.msra.mxu0 0.0
        %6081 = vmatpush.msra.mxu0 0.0
        %6082 = vmatpush.msra.mxu0 0.0
        %6083 = vmatpush.msra.mxu0 0.0
        %6084 = vmatpush.msra.mxu0 %v6008
        %6085 = vmatpush.msra.mxu0 %v6001
        %6086 = vmatpush.msra.mxu0 %v5999
        %6087 = vmatpush.msra.mxu0 %v5997
        %6088 = vmatmul.f32.gmra.mxu0 %v5728
        %v6089 = vpop.f32.mrf.mxu0
        %v6090 = vadd.f32 0.0, %v6089
        %6091 = vdwg.mxu0
        %v6092 = vadd.f32 %v5906, %v6070
        %v6093 = vadd.f32 %v5907, %v6090
        %6094 = vmatpush.msra.mxu0 0.0
        %6095 = vmatpush.msra.mxu0 0.0
        %6096 = vmatpush.msra.mxu0 0.0
        %6097 = vmatpush.msra.mxu0 0.0
        %6098 = vmatpush.msra.mxu0 0.0
        %6099 = vmatpush.msra.mxu0 0.0
        %6100 = vmatpush.msra.mxu0 0.0
        %6101 = vmatpush.msra.mxu0 0.0
        %6102 = vmatpush.msra.mxu0 0.0
        %6103 = vmatpush.msra.mxu0 0.0
        %6104 = vmatpush.msra.mxu0 0.0
        %6105 = vmatpush.msra.mxu0 0.0
        %6106 = vmatpush.msra.mxu0 %v6005
        %6107 = vmatpush.msra.mxu0 %v6000
        %6108 = vmatpush.msra.mxu0 %v5998
        %6109 = vmatpush.msra.mxu0 %v5996
        %6110 = vmatmul.f32.gmra.mxu0 %v5952
        %v6111 = vpop.f32.mrf.mxu0
        %v6112 = vadd.f32 0.0, %v6111
        %6113 = vdwg.mxu0
        %6114 = vmatpush.msra.mxu0 0.0
        %6115 = vmatpush.msra.mxu0 0.0
        %6116 = vmatpush.msra.mxu0 0.0
        %6117 = vmatpush.msra.mxu0 0.0
        %6118 = vmatpush.msra.mxu0 0.0
        %6119 = vmatpush.msra.mxu0 0.0
        %6120 = vmatpush.msra.mxu0 0.0
        %6121 = vmatpush.msra.mxu0 0.0
        %6122 = vmatpush.msra.mxu0 0.0
        %6123 = vmatpush.msra.mxu0 0.0
        %6124 = vmatpush.msra.mxu0 0.0
        %6125 = vmatpush.msra.mxu0 0.0
        %6126 = vmatpush.msra.mxu0 %v6008
        %6127 = vmatpush.msra.mxu0 %v6001
        %6128 = vmatpush.msra.mxu0 %v5999
        %6129 = vmatpush.msra.mxu0 %v5997
        %6130 = vmatmul.f32.gmra.mxu0 %v5952
        %v6131 = vpop.f32.mrf.mxu0
        %v6132 = vadd.f32 0.0, %v6131
        %6133 = vdwg.mxu0
        %v6134 = vadd.f32 %v5948, %v6112
        %v6135 = vadd.f32 %v5949, %v6132
        %v6136 = vld [vmem:[%s5450 + $0x1] sm:$0x3f]
        %v6138 = vsel %vm360, %v6136, 0
        %6140 = vmatpush.msra.mxu0 0.0
        %6141 = vmatpush.msra.mxu0 0.0
        %6142 = vmatpush.msra.mxu0 0.0
        %6143 = vmatpush.msra.mxu0 0.0
        %6144 = vmatpush.msra.mxu0 0.0
        %6145 = vmatpush.msra.mxu0 0.0
        %6146 = vmatpush.msra.mxu0 0.0
        %6147 = vmatpush.msra.mxu0 0.0
        %6148 = vmatpush.msra.mxu0 0.0
        %6149 = vmatpush.msra.mxu0 0.0
        %6150 = vmatpush.msra.mxu0 0.0
        %6151 = vmatpush.msra.mxu0 0.0
        %6152 = vmatpush.msra.mxu0 %v6005
        %6153 = vmatpush.msra.mxu0 %v6000
        %6154 = vmatpush.msra.mxu0 %v5998
        %6155 = vmatpush.msra.mxu0 %v5996
        %6156 = vmatmul.f32.gmra.mxu0 %v6138
        %v6157 = vpop.f32.mrf.mxu0
        %v6158 = vadd.f32 0.0, %v6157
        %6159 = vdwg.mxu0
        %6160 = vmatpush.msra.mxu0 0.0
        %6161 = vmatpush.msra.mxu0 0.0
        %6162 = vmatpush.msra.mxu0 0.0
        %6163 = vmatpush.msra.mxu0 0.0
        %6164 = vmatpush.msra.mxu0 0.0
        %6165 = vmatpush.msra.mxu0 0.0
        %6166 = vmatpush.msra.mxu0 0.0
        %6167 = vmatpush.msra.mxu0 0.0
        %6168 = vmatpush.msra.mxu0 0.0
        %6169 = vmatpush.msra.mxu0 0.0
        %6170 = vmatpush.msra.mxu0 0.0
        %6171 = vmatpush.msra.mxu0 0.0
        %6172 = vmatpush.msra.mxu0 %v6008
        %6173 = vmatpush.msra.mxu0 %v6001
        %6174 = vmatpush.msra.mxu0 %v5999
        %6175 = vmatpush.msra.mxu0 %v5997
        %6176 = vmatmul.f32.gmra.mxu0 %v6138
        %v6177 = vpop.f32.mrf.mxu0
        %v6178 = vadd.f32 0.0, %v6177
        %6179 = vdwg.mxu0
        %v6180 = vadd.f32 %v5994, %v6158
        %v6181 = vadd.f32 %v5995, %v6178
        %v6182 = vld [vmem:[%s1084] sm:$0xff]
        %v6183 = vld [vmem:[%s1084 + $0x8] sm:$0xff]
        %v6184 = vld [vmem:[%s1084 + $0x10] sm:$0xff]
        %v6185 = vld [vmem:[%s1084 + $0x18] sm:$0xff]
        %v6186 = vld [vmem:[%s1084 + $0x20] sm:$0xff]
        %v6187 = vld [vmem:[%s1084 + $0x28] sm:$0xff]
        %v6188 = vld [vmem:[%s1084 + $0x30] sm:$0xf]
        %v6189 = vld [vmem:[%s1084 + $0x38] sm:$0xf]
        %v6191 = vsel %vm364, %v6188, 0
        %v6194 = vsel %vm364, %v6189, 0
        %6196 = vmatpush.msra.mxu0 0.0
        %6197 = vmatpush.msra.mxu0 0.0
        %6198 = vmatpush.msra.mxu0 0.0
        %6199 = vmatpush.msra.mxu0 0.0
        %6200 = vmatpush.msra.mxu0 0.0
        %6201 = vmatpush.msra.mxu0 0.0
        %6202 = vmatpush.msra.mxu0 0.0
        %6203 = vmatpush.msra.mxu0 0.0
        %6204 = vmatpush.msra.mxu0 0.0
        %6205 = vmatpush.msra.mxu0 0.0
        %6206 = vmatpush.msra.mxu0 0.0
        %6207 = vmatpush.msra.mxu0 0.0
        %6208 = vmatpush.msra.mxu0 %v6191
        %6209 = vmatpush.msra.mxu0 %v6186
        %6210 = vmatpush.msra.mxu0 %v6184
        %6211 = vmatpush.msra.mxu0 %v6182
        %6212 = vmatmul.f32.gmra.mxu0 %v5728
        %v6213 = vpop.f32.mrf.mxu0
        %v6214 = vadd.f32 0.0, %v6213
        %6215 = vdwg.mxu0
        %6216 = vmatpush.msra.mxu0 0.0
        %6217 = vmatpush.msra.mxu0 0.0
        %6218 = vmatpush.msra.mxu0 0.0
        %6219 = vmatpush.msra.mxu0 0.0
        %6220 = vmatpush.msra.mxu0 0.0
        %6221 = vmatpush.msra.mxu0 0.0
        %6222 = vmatpush.msra.mxu0 0.0
        %6223 = vmatpush.msra.mxu0 0.0
        %6224 = vmatpush.msra.mxu0 0.0
        %6225 = vmatpush.msra.mxu0 0.0
        %6226 = vmatpush.msra.mxu0 0.0
        %6227 = vmatpush.msra.mxu0 0.0
        %6228 = vmatpush.msra.mxu0 %v6194
        %6229 = vmatpush.msra.mxu0 %v6187
        %6230 = vmatpush.msra.mxu0 %v6185
        %6231 = vmatpush.msra.mxu0 %v6183
        %6232 = vmatmul.f32.gmra.mxu0 %v5728
        %v6233 = vpop.f32.mrf.mxu0
        %v6234 = vadd.f32 0.0, %v6233
        %6235 = vdwg.mxu0
        %v6236 = vadd.f32 %v6050, %v6214
        %v6237 = vadd.f32 %v6051, %v6234
        %6238 = vmatpush.msra.mxu0 0.0
        %6239 = vmatpush.msra.mxu0 0.0
        %6240 = vmatpush.msra.mxu0 0.0
        %6241 = vmatpush.msra.mxu0 0.0
        %6242 = vmatpush.msra.mxu0 0.0
        %6243 = vmatpush.msra.mxu0 0.0
        %6244 = vmatpush.msra.mxu0 0.0
        %6245 = vmatpush.msra.mxu0 0.0
        %6246 = vmatpush.msra.mxu0 0.0
        %6247 = vmatpush.msra.mxu0 0.0
        %6248 = vmatpush.msra.mxu0 0.0
        %6249 = vmatpush.msra.mxu0 0.0
        %6250 = vmatpush.msra.mxu0 %v6191
        %6251 = vmatpush.msra.mxu0 %v6186
        %6252 = vmatpush.msra.mxu0 %v6184
        %6253 = vmatpush.msra.mxu0 %v6182
        %6254 = vmatmul.f32.gmra.mxu0 %v5952
        %v6255 = vpop.f32.mrf.mxu0
        %v6256 = vadd.f32 0.0, %v6255
        %6257 = vdwg.mxu0
        %6258 = vmatpush.msra.mxu0 0.0
        %6259 = vmatpush.msra.mxu0 0.0
        %6260 = vmatpush.msra.mxu0 0.0
        %6261 = vmatpush.msra.mxu0 0.0
        %6262 = vmatpush.msra.mxu0 0.0
        %6263 = vmatpush.msra.mxu0 0.0
        %6264 = vmatpush.msra.mxu0 0.0
        %6265 = vmatpush.msra.mxu0 0.0
        %6266 = vmatpush.msra.mxu0 0.0
        %6267 = vmatpush.msra.mxu0 0.0
        %6268 = vmatpush.msra.mxu0 0.0
        %6269 = vmatpush.msra.mxu0 0.0
        %6270 = vmatpush.msra.mxu0 %v6194
        %6271 = vmatpush.msra.mxu0 %v6187
        %6272 = vmatpush.msra.mxu0 %v6185
        %6273 = vmatpush.msra.mxu0 %v6183
        %6274 = vmatmul.f32.gmra.mxu0 %v5952
        %v6275 = vpop.f32.mrf.mxu0
        %v6276 = vadd.f32 0.0, %v6275
        %6277 = vdwg.mxu0
        %v6278 = vadd.f32 %v6092, %v6256
        %v6279 = vadd.f32 %v6093, %v6276
        %6280 = vmatpush.msra.mxu0 0.0
        %6281 = vmatpush.msra.mxu0 0.0
        %6282 = vmatpush.msra.mxu0 0.0
        %6283 = vmatpush.msra.mxu0 0.0
        %6284 = vmatpush.msra.mxu0 0.0
        %6285 = vmatpush.msra.mxu0 0.0
        %6286 = vmatpush.msra.mxu0 0.0
        %6287 = vmatpush.msra.mxu0 0.0
        %6288 = vmatpush.msra.mxu0 0.0
        %6289 = vmatpush.msra.mxu0 0.0
        %6290 = vmatpush.msra.mxu0 0.0
        %6291 = vmatpush.msra.mxu0 0.0
        %6292 = vmatpush.msra.mxu0 %v6191
        %6293 = vmatpush.msra.mxu0 %v6186
        %6294 = vmatpush.msra.mxu0 %v6184
        %6295 = vmatpush.msra.mxu0 %v6182
        %6296 = vmatmul.f32.gmra.mxu0 %v6138
        %v6297 = vpop.f32.mrf.mxu0
        %v6298 = vadd.f32 0.0, %v6297
        %6299 = vdwg.mxu0
        %6300 = vmatpush.msra.mxu0 0.0
        %6301 = vmatpush.msra.mxu0 0.0
        %6302 = vmatpush.msra.mxu0 0.0
        %6303 = vmatpush.msra.mxu0 0.0
        %6304 = vmatpush.msra.mxu0 0.0
        %6305 = vmatpush.msra.mxu0 0.0
        %6306 = vmatpush.msra.mxu0 0.0
        %6307 = vmatpush.msra.mxu0 0.0
        %6308 = vmatpush.msra.mxu0 0.0
        %6309 = vmatpush.msra.mxu0 0.0
        %6310 = vmatpush.msra.mxu0 0.0
        %6311 = vmatpush.msra.mxu0 0.0
        %6312 = vmatpush.msra.mxu0 %v6194
        %6313 = vmatpush.msra.mxu0 %v6187
        %6314 = vmatpush.msra.mxu0 %v6185
        %6315 = vmatpush.msra.mxu0 %v6183
        %6316 = vmatmul.f32.gmra.mxu0 %v6138
        %v6317 = vpop.f32.mrf.mxu0
        %v6318 = vadd.f32 0.0, %v6317
        %6319 = vdwg.mxu0
        %v6320 = vadd.f32 %v6134, %v6298
        %v6321 = vadd.f32 %v6135, %v6318
        %v6322 = vld [vmem:[%s5452 + $0x1] sm:$0x3f]
        %v6324 = vsel %vm360, %v6322, 0
        %6326 = vmatpush.msra.mxu0 0.0
        %6327 = vmatpush.msra.mxu0 0.0
        %6328 = vmatpush.msra.mxu0 0.0
        %6329 = vmatpush.msra.mxu0 0.0
        %6330 = vmatpush.msra.mxu0 0.0
        %6331 = vmatpush.msra.mxu0 0.0
        %6332 = vmatpush.msra.mxu0 0.0
        %6333 = vmatpush.msra.mxu0 0.0
        %6334 = vmatpush.msra.mxu0 0.0
        %6335 = vmatpush.msra.mxu0 0.0
        %6336 = vmatpush.msra.mxu0 0.0
        %6337 = vmatpush.msra.mxu0 0.0
        %6338 = vmatpush.msra.mxu0 %v6191
        %6339 = vmatpush.msra.mxu0 %v6186
        %6340 = vmatpush.msra.mxu0 %v6184
        %6341 = vmatpush.msra.mxu0 %v6182
        %6342 = vmatmul.f32.gmra.mxu0 %v6324
        %v6343 = vpop.f32.mrf.mxu0
        %v6344 = vadd.f32 0.0, %v6343
        %6345 = vdwg.mxu0
        %6346 = vmatpush.msra.mxu0 0.0
        %6347 = vmatpush.msra.mxu0 0.0
        %6348 = vmatpush.msra.mxu0 0.0
        %6349 = vmatpush.msra.mxu0 0.0
        %6350 = vmatpush.msra.mxu0 0.0
        %6351 = vmatpush.msra.mxu0 0.0
        %6352 = vmatpush.msra.mxu0 0.0
        %6353 = vmatpush.msra.mxu0 0.0
        %6354 = vmatpush.msra.mxu0 0.0
        %6355 = vmatpush.msra.mxu0 0.0
        %6356 = vmatpush.msra.mxu0 0.0
        %6357 = vmatpush.msra.mxu0 0.0
        %6358 = vmatpush.msra.mxu0 %v6194
        %6359 = vmatpush.msra.mxu0 %v6187
        %6360 = vmatpush.msra.mxu0 %v6185
        %6361 = vmatpush.msra.mxu0 %v6183
        %6362 = vmatmul.f32.gmra.mxu0 %v6324
        %v6363 = vpop.f32.mrf.mxu0
        %v6364 = vadd.f32 0.0, %v6363
        %6365 = vdwg.mxu0
        %v6366 = vadd.f32 %v6180, %v6344
        %v6367 = vadd.f32 %v6181, %v6364
        %v6368 = vmax.f32 %v6236, %v6278
        %v6369 = vmax.f32 %v6237, %v6279
        %v6370 = vmax.f32 %v6320, %v6366
        %v6371 = vmax.f32 %v6321, %v6367
        %6374 = vrot.lane.b32.xlu0 %v6368, 8
        %v6375 = vpop.permute.xlu0 %6374
        %6376 = vrot.lane.b32.xlu0 %v6369, 8
        %v6377 = vpop.permute.xlu0 %6376
        %v6378 = vsel %vm1281, %v6375, %v6377
        %v6380 = vmax.f32 %v6368, %v6378
        %v6381 = vld [vmem:[%s2] sm:$0x1]
        %v6383 = vperm.slane %v6381, 0
        %v6385 = vadd.f32 %v6380, %v6383
        %v6386 = vmax.f32 %v6385, 0.0
        %6389 = vrot.lane.b32.xlu0 %v6370, 8
        %v6390 = vpop.permute.xlu0 %6389
        %6391 = vrot.lane.b32.xlu0 %v6371, 8
        %v6392 = vpop.permute.xlu0 %6391
        %v6393 = vsel %vm1281, %v6390, %v6392
        %v6395 = vmax.f32 %v6370, %v6393
        %v6396 = vadd.f32 %v6395, %v6383
        %v6397 = vmax.f32 %v6396, 0.0
        %v6398 = vld [vmem:[%s3] sm:$0xff]
        %v6399 = vld [vmem:[%s3 + $0x8] sm:$0xff]
        %v6400 = vld [vmem:[%s3 + $0x10] sm:$0xff]
        %v6401 = vld [vmem:[%s3 + $0x18] sm:$0xff]
        %v6402 = vld [vmem:[%s3 + $0x20] sm:$0xff]
        %v6403 = vld [vmem:[%s3 + $0x28] sm:$0xff]
        %v6404 = vld [vmem:[%s3 + $0x30] sm:$0xff]
        %v6405 = vld [vmem:[%s3 + $0x38] sm:$0xff]
        %v6406 = vld [vmem:[%s3 + $0x40] sm:$0xff]
        %v6407 = vld [vmem:[%s3 + $0x48] sm:$0xff]
        %v6408 = vld [vmem:[%s3 + $0x50] sm:$0xff]
        %v6409 = vld [vmem:[%s3 + $0x58] sm:$0xff]
        %v6410 = vld [vmem:[%s3 + $0x60] sm:$0xff]
        %v6411 = vld [vmem:[%s3 + $0x68] sm:$0xff]
        %v6412 = vld [vmem:[%s3 + $0x70] sm:$0xff]
        %v6413 = vld [vmem:[%s3 + $0x78] sm:$0xff]
        %v6414 = vld [vmem:[%s3 + $0x80] sm:$0xff]
        %v6415 = vld [vmem:[%s3 + $0x88] sm:$0xff]
        %v6416 = vld [vmem:[%s3 + $0x90] sm:$0xff]
        %v6417 = vld [vmem:[%s3 + $0x98] sm:$0xff]
        %v6418 = vld [vmem:[%s3 + $0xa0] sm:$0xff]
        %v6419 = vld [vmem:[%s3 + $0xa8] sm:$0xff]
        %v6420 = vld [vmem:[%s3 + $0xb0] sm:$0xff]
        %v6421 = vld [vmem:[%s3 + $0xb8] sm:$0xff]
        %v6422 = vld [vmem:[%s3 + $0xc0] sm:$0xff]
        %v6423 = vld [vmem:[%s3 + $0xc8] sm:$0xff]
        %v6424 = vld [vmem:[%s3 + $0xd0] sm:$0xff]
        %v6425 = vld [vmem:[%s3 + $0xd8] sm:$0xff]
        %v6426 = vld [vmem:[%s3 + $0xe0] sm:$0xff]
        %v6427 = vld [vmem:[%s3 + $0xe8] sm:$0xff]
        %v6428 = vld [vmem:[%s1332] sm:$0xff]
        %v6429 = vld [vmem:[%s1332 + $0x8] sm:$0xff]
        %v6430 = vld [vmem:[%s1332 + $0x10] sm:$0xff]
        %v6431 = vld [vmem:[%s1332 + $0x18] sm:$0xff]
        %v6432 = vld [vmem:[%s1332 + $0x20] sm:$0xff]
        %v6433 = vld [vmem:[%s1332 + $0x28] sm:$0xff]
        %v6434 = vld [vmem:[%s1332 + $0x30] sm:$0xff]
        %v6435 = vld [vmem:[%s1332 + $0x38] sm:$0xff]
        %v6436 = vld [vmem:[%s1332 + $0x40] sm:$0xff]
        %v6437 = vld [vmem:[%s1332 + $0x48] sm:$0xff]
        %v6438 = vld [vmem:[%s1332 + $0x50] sm:$0xff]
        %v6439 = vld [vmem:[%s1332 + $0x58] sm:$0xff]
        %v6440 = vld [vmem:[%s1332 + $0x60] sm:$0xff]
        %v6441 = vld [vmem:[%s1332 + $0x68] sm:$0xff]
        %v6442 = vld [vmem:[%s1332 + $0x70] sm:$0xff]
        %v6443 = vld [vmem:[%s1332 + $0x78] sm:$0xff]
        %v6444 = vld [vmem:[%s1332 + $0x80] sm:$0xff]
        %v6445 = vld [vmem:[%s1332 + $0x88] sm:$0xff]
        %v6446 = vld [vmem:[%s1332 + $0x90] sm:$0xff]
        %v6447 = vld [vmem:[%s1332 + $0x98] sm:$0xff]
        %v6448 = vld [vmem:[%s1332 + $0xa0] sm:$0xff]
        %v6449 = vld [vmem:[%s1332 + $0xa8] sm:$0xff]
        %v6450 = vld [vmem:[%s1332 + $0xb0] sm:$0xff]
        %v6451 = vld [vmem:[%s1332 + $0xb8] sm:$0xff]
        %v6452 = vld [vmem:[%s1332 + $0xc0] sm:$0xff]
        %v6453 = vld [vmem:[%s1332 + $0xc8] sm:$0xff]
        %v6454 = vld [vmem:[%s1332 + $0xd0] sm:$0xff]
        %v6455 = vld [vmem:[%s1332 + $0xd8] sm:$0xff]
        %v6456 = vld [vmem:[%s1332 + $0xe0] sm:$0xff]
        %v6457 = vld [vmem:[%s1332 + $0xe8] sm:$0xff]
        %v6459 = vsel %vm1363, %v6397, 0
        %6461 = vmatpush.msra.mxu0 0.0
        %6462 = vmatpush.msra.mxu0 %v6456
        %6463 = vmatpush.msra.mxu0 %v6454
        %6464 = vmatpush.msra.mxu0 %v6452
        %6465 = vmatpush.msra.mxu0 %v6450
        %6466 = vmatpush.msra.mxu0 %v6448
        %6467 = vmatpush.msra.mxu0 %v6446
        %6468 = vmatpush.msra.mxu0 %v6444
        %6469 = vmatpush.msra.mxu0 %v6442
        %6470 = vmatpush.msra.mxu0 %v6440
        %6471 = vmatpush.msra.mxu0 %v6438
        %6472 = vmatpush.msra.mxu0 %v6436
        %6473 = vmatpush.msra.mxu0 %v6434
        %6474 = vmatpush.msra.mxu0 %v6432
        %6475 = vmatpush.msra.mxu0 %v6430
        %6476 = vmatpush.msra.mxu0 %v6428
        %6477 = vmatmul.f32.gmra.mxu0 %v6459
        %v6478 = vpop.f32.mrf.mxu0
        %v6479 = vadd.f32 0.0, %v6478
        %6480 = vdwg.mxu0
        %6481 = vmatpush.msra.mxu0 0.0
        %6482 = vmatpush.msra.mxu0 %v6457
        %6483 = vmatpush.msra.mxu0 %v6455
        %6484 = vmatpush.msra.mxu0 %v6453
        %6485 = vmatpush.msra.mxu0 %v6451
        %6486 = vmatpush.msra.mxu0 %v6449
        %6487 = vmatpush.msra.mxu0 %v6447
        %6488 = vmatpush.msra.mxu0 %v6445
        %6489 = vmatpush.msra.mxu0 %v6443
        %6490 = vmatpush.msra.mxu0 %v6441
        %6491 = vmatpush.msra.mxu0 %v6439
        %6492 = vmatpush.msra.mxu0 %v6437
        %6493 = vmatpush.msra.mxu0 %v6435
        %6494 = vmatpush.msra.mxu0 %v6433
        %6495 = vmatpush.msra.mxu0 %v6431
        %6496 = vmatpush.msra.mxu0 %v6429
        %6497 = vmatmul.f32.gmra.mxu0 %v6459
        %v6498 = vpop.f32.mrf.mxu0
        %v6499 = vadd.f32 0.0, %v6498
        %6500 = vdwg.mxu0
        %v6502 = vsel %vm1363, %v6386, 0
        %6504 = vmatpush.msra.mxu0 0.0
        %6505 = vmatpush.msra.mxu0 %v6426
        %6506 = vmatpush.msra.mxu0 %v6424
        %6507 = vmatpush.msra.mxu0 %v6422
        %6508 = vmatpush.msra.mxu0 %v6420
        %6509 = vmatpush.msra.mxu0 %v6418
        %6510 = vmatpush.msra.mxu0 %v6416
        %6511 = vmatpush.msra.mxu0 %v6414
        %6512 = vmatpush.msra.mxu0 %v6412
        %6513 = vmatpush.msra.mxu0 %v6410
        %6514 = vmatpush.msra.mxu0 %v6408
        %6515 = vmatpush.msra.mxu0 %v6406
        %6516 = vmatpush.msra.mxu0 %v6404
        %6517 = vmatpush.msra.mxu0 %v6402
        %6518 = vmatpush.msra.mxu0 %v6400
        %6519 = vmatpush.msra.mxu0 %v6398
        %6520 = vmatmul.f32.gmra.mxu0 %v6502
        %v6521 = vpop.f32.mrf.mxu0
        %v6522 = vadd.f32 %v6479, %v6521
        %6523 = vdwg.mxu0
        %6524 = vmatpush.msra.mxu0 0.0
        %6525 = vmatpush.msra.mxu0 %v6427
        %6526 = vmatpush.msra.mxu0 %v6425
        %6527 = vmatpush.msra.mxu0 %v6423
        %6528 = vmatpush.msra.mxu0 %v6421
        %6529 = vmatpush.msra.mxu0 %v6419
        %6530 = vmatpush.msra.mxu0 %v6417
        %6531 = vmatpush.msra.mxu0 %v6415
        %6532 = vmatpush.msra.mxu0 %v6413
        %6533 = vmatpush.msra.mxu0 %v6411
        %6534 = vmatpush.msra.mxu0 %v6409
        %6535 = vmatpush.msra.mxu0 %v6407
        %6536 = vmatpush.msra.mxu0 %v6405
        %6537 = vmatpush.msra.mxu0 %v6403
        %6538 = vmatpush.msra.mxu0 %v6401
        %6539 = vmatpush.msra.mxu0 %v6399
        %6540 = vmatmul.f32.gmra.mxu0 %v6502
        %v6541 = vpop.f32.mrf.mxu0
        %v6542 = vadd.f32 %v6499, %v6541
        %6543 = vdwg.mxu0
        %v6544 = vrot.slane %v6386, 1
        %v6545 = vsel %vm1363, %v6544, 0
        %6547 = vmatpush.msra.mxu0 0.0
        %6548 = vmatpush.msra.mxu0 %v6456
        %6549 = vmatpush.msra.mxu0 %v6454
        %6550 = vmatpush.msra.mxu0 %v6452
        %6551 = vmatpush.msra.mxu0 %v6450
        %6552 = vmatpush.msra.mxu0 %v6448
        %6553 = vmatpush.msra.mxu0 %v6446
        %6554 = vmatpush.msra.mxu0 %v6444
        %6555 = vmatpush.msra.mxu0 %v6442
        %6556 = vmatpush.msra.mxu0 %v6440
        %6557 = vmatpush.msra.mxu0 %v6438
        %6558 = vmatpush.msra.mxu0 %v6436
        %6559 = vmatpush.msra.mxu0 %v6434
        %6560 = vmatpush.msra.mxu0 %v6432
        %6561 = vmatpush.msra.mxu0 %v6430
        %6562 = vmatpush.msra.mxu0 %v6428
        %6563 = vmatmul.f32.gmra.mxu0 %v6545
        %v6564 = vpop.f32.mrf.mxu0
        %v6565 = vadd.f32 0.0, %v6564
        %6566 = vdwg.mxu0
        %6567 = vmatpush.msra.mxu0 0.0
        %6568 = vmatpush.msra.mxu0 %v6457
        %6569 = vmatpush.msra.mxu0 %v6455
        %6570 = vmatpush.msra.mxu0 %v6453
        %6571 = vmatpush.msra.mxu0 %v6451
        %6572 = vmatpush.msra.mxu0 %v6449
        %6573 = vmatpush.msra.mxu0 %v6447
        %6574 = vmatpush.msra.mxu0 %v6445
        %6575 = vmatpush.msra.mxu0 %v6443
        %6576 = vmatpush.msra.mxu0 %v6441
        %6577 = vmatpush.msra.mxu0 %v6439
        %6578 = vmatpush.msra.mxu0 %v6437
        %6579 = vmatpush.msra.mxu0 %v6435
        %6580 = vmatpush.msra.mxu0 %v6433
        %6581 = vmatpush.msra.mxu0 %v6431
        %6582 = vmatpush.msra.mxu0 %v6429
        %6583 = vmatmul.f32.gmra.mxu0 %v6545
        %v6584 = vpop.f32.mrf.mxu0
        %v6585 = vadd.f32 0.0, %v6584
        %6586 = vdwg.mxu0
        %6587 = vmatpush.msra.mxu0 0.0
        %6588 = vmatpush.msra.mxu0 %v6426
        %6589 = vmatpush.msra.mxu0 %v6424
        %6590 = vmatpush.msra.mxu0 %v6422
        %6591 = vmatpush.msra.mxu0 %v6420
        %6592 = vmatpush.msra.mxu0 %v6418
        %6593 = vmatpush.msra.mxu0 %v6416
        %6594 = vmatpush.msra.mxu0 %v6414
        %6595 = vmatpush.msra.mxu0 %v6412
        %6596 = vmatpush.msra.mxu0 %v6410
        %6597 = vmatpush.msra.mxu0 %v6408
        %6598 = vmatpush.msra.mxu0 %v6406
        %6599 = vmatpush.msra.mxu0 %v6404
        %6600 = vmatpush.msra.mxu0 %v6402
        %6601 = vmatpush.msra.mxu0 %v6400
        %6602 = vmatpush.msra.mxu0 %v6398
        %6603 = vmatmul.f32.gmra.mxu0 %v6459
        %v6604 = vpop.f32.mrf.mxu0
        %v6605 = vadd.f32 %v6565, %v6604
        %6606 = vdwg.mxu0
        %6607 = vmatpush.msra.mxu0 0.0
        %6608 = vmatpush.msra.mxu0 %v6427
        %6609 = vmatpush.msra.mxu0 %v6425
        %6610 = vmatpush.msra.mxu0 %v6423
        %6611 = vmatpush.msra.mxu0 %v6421
        %6612 = vmatpush.msra.mxu0 %v6419
        %6613 = vmatpush.msra.mxu0 %v6417
        %6614 = vmatpush.msra.mxu0 %v6415
        %6615 = vmatpush.msra.mxu0 %v6413
        %6616 = vmatpush.msra.mxu0 %v6411
        %6617 = vmatpush.msra.mxu0 %v6409
        %6618 = vmatpush.msra.mxu0 %v6407
        %6619 = vmatpush.msra.mxu0 %v6405
        %6620 = vmatpush.msra.mxu0 %v6403
        %6621 = vmatpush.msra.mxu0 %v6401
        %6622 = vmatpush.msra.mxu0 %v6399
        %6623 = vmatmul.f32.gmra.mxu0 %v6459
        %v6624 = vpop.f32.mrf.mxu0
        %v6625 = vadd.f32 %v6585, %v6624
        %6626 = vdwg.mxu0
        %v6627 = vld [vmem:[%s1533] sm:$0xff]
        %v6628 = vld [vmem:[%s1533 + $0x8] sm:$0xff]
        %v6629 = vld [vmem:[%s1533 + $0x10] sm:$0xff]
        %v6630 = vld [vmem:[%s1533 + $0x18] sm:$0xff]
        %v6631 = vld [vmem:[%s1533 + $0x20] sm:$0xff]
        %v6632 = vld [vmem:[%s1533 + $0x28] sm:$0xff]
        %v6633 = vld [vmem:[%s1533 + $0x30] sm:$0xff]
        %v6634 = vld [vmem:[%s1533 + $0x38] sm:$0xff]
        %v6635 = vld [vmem:[%s1533 + $0x40] sm:$0xff]
        %v6636 = vld [vmem:[%s1533 + $0x48] sm:$0xff]
        %v6637 = vld [vmem:[%s1533 + $0x50] sm:$0xff]
        %v6638 = vld [vmem:[%s1533 + $0x58] sm:$0xff]
        %v6639 = vld [vmem:[%s1533 + $0x60] sm:$0xff]
        %v6640 = vld [vmem:[%s1533 + $0x68] sm:$0xff]
        %v6641 = vld [vmem:[%s1533 + $0x70] sm:$0xff]
        %v6642 = vld [vmem:[%s1533 + $0x78] sm:$0xff]
        %v6643 = vld [vmem:[%s1533 + $0x80] sm:$0xff]
        %v6644 = vld [vmem:[%s1533 + $0x88] sm:$0xff]
        %v6645 = vld [vmem:[%s1533 + $0x90] sm:$0xff]
        %v6646 = vld [vmem:[%s1533 + $0x98] sm:$0xff]
        %v6647 = vld [vmem:[%s1533 + $0xa0] sm:$0xff]
        %v6648 = vld [vmem:[%s1533 + $0xa8] sm:$0xff]
        %v6649 = vld [vmem:[%s1533 + $0xb0] sm:$0xff]
        %v6650 = vld [vmem:[%s1533 + $0xb8] sm:$0xff]
        %v6651 = vld [vmem:[%s1533 + $0xc0] sm:$0xff]
        %v6652 = vld [vmem:[%s1533 + $0xc8] sm:$0xff]
        %v6653 = vld [vmem:[%s1533 + $0xd0] sm:$0xff]
        %v6654 = vld [vmem:[%s1533 + $0xd8] sm:$0xff]
        %v6655 = vld [vmem:[%s1533 + $0xe0] sm:$0xff]
        %v6656 = vld [vmem:[%s1533 + $0xe8] sm:$0xff]
        %6657 = vmatpush.msra.mxu0 0.0
        %6658 = vmatpush.msra.mxu0 %v6655
        %6659 = vmatpush.msra.mxu0 %v6653
        %6660 = vmatpush.msra.mxu0 %v6651
        %6661 = vmatpush.msra.mxu0 %v6649
        %6662 = vmatpush.msra.mxu0 %v6647
        %6663 = vmatpush.msra.mxu0 %v6645
        %6664 = vmatpush.msra.mxu0 %v6643
        %6665 = vmatpush.msra.mxu0 %v6641
        %6666 = vmatpush.msra.mxu0 %v6639
        %6667 = vmatpush.msra.mxu0 %v6637
        %6668 = vmatpush.msra.mxu0 %v6635
        %6669 = vmatpush.msra.mxu0 %v6633
        %6670 = vmatpush.msra.mxu0 %v6631
        %6671 = vmatpush.msra.mxu0 %v6629
        %6672 = vmatpush.msra.mxu0 %v6627
        %6673 = vmatmul.f32.gmra.mxu0 %v6545
        %v6674 = vpop.f32.mrf.mxu0
        %v6675 = vadd.f32 0.0, %v6674
        %6676 = vdwg.mxu0
        %6677 = vmatpush.msra.mxu0 0.0
        %6678 = vmatpush.msra.mxu0 %v6656
        %6679 = vmatpush.msra.mxu0 %v6654
        %6680 = vmatpush.msra.mxu0 %v6652
        %6681 = vmatpush.msra.mxu0 %v6650
        %6682 = vmatpush.msra.mxu0 %v6648
        %6683 = vmatpush.msra.mxu0 %v6646
        %6684 = vmatpush.msra.mxu0 %v6644
        %6685 = vmatpush.msra.mxu0 %v6642
        %6686 = vmatpush.msra.mxu0 %v6640
        %6687 = vmatpush.msra.mxu0 %v6638
        %6688 = vmatpush.msra.mxu0 %v6636
        %6689 = vmatpush.msra.mxu0 %v6634
        %6690 = vmatpush.msra.mxu0 %v6632
        %6691 = vmatpush.msra.mxu0 %v6630
        %6692 = vmatpush.msra.mxu0 %v6628
        %6693 = vmatmul.f32.gmra.mxu0 %v6545
        %v6694 = vpop.f32.mrf.mxu0
        %v6695 = vadd.f32 0.0, %v6694
        %6696 = vdwg.mxu0
        %v6697 = vadd.f32 %v6522, %v6675
        %v6698 = vadd.f32 %v6542, %v6695
        %v6699 = vrot.slane %v6397, 1
        %v6700 = vsel %vm1363, %v6699, 0
        %6702 = vmatpush.msra.mxu0 0.0
        %6703 = vmatpush.msra.mxu0 %v6655
        %6704 = vmatpush.msra.mxu0 %v6653
        %6705 = vmatpush.msra.mxu0 %v6651
        %6706 = vmatpush.msra.mxu0 %v6649
        %6707 = vmatpush.msra.mxu0 %v6647
        %6708 = vmatpush.msra.mxu0 %v6645
        %6709 = vmatpush.msra.mxu0 %v6643
        %6710 = vmatpush.msra.mxu0 %v6641
        %6711 = vmatpush.msra.mxu0 %v6639
        %6712 = vmatpush.msra.mxu0 %v6637
        %6713 = vmatpush.msra.mxu0 %v6635
        %6714 = vmatpush.msra.mxu0 %v6633
        %6715 = vmatpush.msra.mxu0 %v6631
        %6716 = vmatpush.msra.mxu0 %v6629
        %6717 = vmatpush.msra.mxu0 %v6627
        %6718 = vmatmul.f32.gmra.mxu0 %v6700
        %v6719 = vpop.f32.mrf.mxu0
        %v6720 = vadd.f32 0.0, %v6719
        %6721 = vdwg.mxu0
        %6722 = vmatpush.msra.mxu0 0.0
        %6723 = vmatpush.msra.mxu0 %v6656
        %6724 = vmatpush.msra.mxu0 %v6654
        %6725 = vmatpush.msra.mxu0 %v6652
        %6726 = vmatpush.msra.mxu0 %v6650
        %6727 = vmatpush.msra.mxu0 %v6648
        %6728 = vmatpush.msra.mxu0 %v6646
        %6729 = vmatpush.msra.mxu0 %v6644
        %6730 = vmatpush.msra.mxu0 %v6642
        %6731 = vmatpush.msra.mxu0 %v6640
        %6732 = vmatpush.msra.mxu0 %v6638
        %6733 = vmatpush.msra.mxu0 %v6636
        %6734 = vmatpush.msra.mxu0 %v6634
        %6735 = vmatpush.msra.mxu0 %v6632
        %6736 = vmatpush.msra.mxu0 %v6630
        %6737 = vmatpush.msra.mxu0 %v6628
        %6738 = vmatmul.f32.gmra.mxu0 %v6700
        %v6739 = vpop.f32.mrf.mxu0
        %v6740 = vadd.f32 0.0, %v6739
        %6741 = vdwg.mxu0
        %v6742 = vadd.f32 %v6605, %v6720
        %v6743 = vadd.f32 %v6625, %v6740
        %v6744 = vld [vmem:[%s1651] sm:$0xff]
        %v6745 = vld [vmem:[%s1651 + $0x8] sm:$0xff]
        %v6746 = vld [vmem:[%s1651 + $0x10] sm:$0xff]
        %v6747 = vld [vmem:[%s1651 + $0x18] sm:$0xff]
        %v6748 = vld [vmem:[%s1651 + $0x20] sm:$0xff]
        %v6749 = vld [vmem:[%s1651 + $0x28] sm:$0xff]
        %v6750 = vld [vmem:[%s1651 + $0x30] sm:$0xff]
        %v6751 = vld [vmem:[%s1651 + $0x38] sm:$0xff]
        %v6752 = vld [vmem:[%s1651 + $0x40] sm:$0xff]
        %v6753 = vld [vmem:[%s1651 + $0x48] sm:$0xff]
        %v6754 = vld [vmem:[%s1651 + $0x50] sm:$0xff]
        %v6755 = vld [vmem:[%s1651 + $0x58] sm:$0xff]
        %v6756 = vld [vmem:[%s1651 + $0x60] sm:$0xff]
        %v6757 = vld [vmem:[%s1651 + $0x68] sm:$0xff]
        %v6758 = vld [vmem:[%s1651 + $0x70] sm:$0xff]
        %v6759 = vld [vmem:[%s1651 + $0x78] sm:$0xff]
        %v6760 = vld [vmem:[%s1651 + $0x80] sm:$0xff]
        %v6761 = vld [vmem:[%s1651 + $0x88] sm:$0xff]
        %v6762 = vld [vmem:[%s1651 + $0x90] sm:$0xff]
        %v6763 = vld [vmem:[%s1651 + $0x98] sm:$0xff]
        %v6764 = vld [vmem:[%s1651 + $0xa0] sm:$0xff]
        %v6765 = vld [vmem:[%s1651 + $0xa8] sm:$0xff]
        %v6766 = vld [vmem:[%s1651 + $0xb0] sm:$0xff]
        %v6767 = vld [vmem:[%s1651 + $0xb8] sm:$0xff]
        %v6768 = vld [vmem:[%s1651 + $0xc0] sm:$0xff]
        %v6769 = vld [vmem:[%s1651 + $0xc8] sm:$0xff]
        %v6770 = vld [vmem:[%s1651 + $0xd0] sm:$0xff]
        %v6771 = vld [vmem:[%s1651 + $0xd8] sm:$0xff]
        %v6772 = vld [vmem:[%s1651 + $0xe0] sm:$0xff]
        %v6773 = vld [vmem:[%s1651 + $0xe8] sm:$0xff]
        %6774 = vmatpush.msra.mxu0 0.0
        %6775 = vmatpush.msra.mxu0 %v6772
        %6776 = vmatpush.msra.mxu0 %v6770
        %6777 = vmatpush.msra.mxu0 %v6768
        %6778 = vmatpush.msra.mxu0 %v6766
        %6779 = vmatpush.msra.mxu0 %v6764
        %6780 = vmatpush.msra.mxu0 %v6762
        %6781 = vmatpush.msra.mxu0 %v6760
        %6782 = vmatpush.msra.mxu0 %v6758
        %6783 = vmatpush.msra.mxu0 %v6756
        %6784 = vmatpush.msra.mxu0 %v6754
        %6785 = vmatpush.msra.mxu0 %v6752
        %6786 = vmatpush.msra.mxu0 %v6750
        %6787 = vmatpush.msra.mxu0 %v6748
        %6788 = vmatpush.msra.mxu0 %v6746
        %6789 = vmatpush.msra.mxu0 %v6744
        %6790 = vmatmul.f32.gmra.mxu0 %v6700
        %v6791 = vpop.f32.mrf.mxu0
        %v6792 = vadd.f32 0.0, %v6791
        %6793 = vdwg.mxu0
        %6794 = vmatpush.msra.mxu0 0.0
        %6795 = vmatpush.msra.mxu0 %v6773
        %6796 = vmatpush.msra.mxu0 %v6771
        %6797 = vmatpush.msra.mxu0 %v6769
        %6798 = vmatpush.msra.mxu0 %v6767
        %6799 = vmatpush.msra.mxu0 %v6765
        %6800 = vmatpush.msra.mxu0 %v6763
        %6801 = vmatpush.msra.mxu0 %v6761
        %6802 = vmatpush.msra.mxu0 %v6759
        %6803 = vmatpush.msra.mxu0 %v6757
        %6804 = vmatpush.msra.mxu0 %v6755
        %6805 = vmatpush.msra.mxu0 %v6753
        %6806 = vmatpush.msra.mxu0 %v6751
        %6807 = vmatpush.msra.mxu0 %v6749
        %6808 = vmatpush.msra.mxu0 %v6747
        %6809 = vmatpush.msra.mxu0 %v6745
        %6810 = vmatmul.f32.gmra.mxu0 %v6700
        %v6811 = vpop.f32.mrf.mxu0
        %v6812 = vadd.f32 0.0, %v6811
        %6813 = vdwg.mxu0
        %v6814 = vadd.f32 %v6697, %v6792
        %v6815 = vadd.f32 %v6698, %v6812
        %v6816 = vrot.slane %v6386, 2
        %v6817 = vsel %vm1363, %v6816, 0
        %6819 = vmatpush.msra.mxu0 0.0
        %6820 = vmatpush.msra.mxu0 %v6772
        %6821 = vmatpush.msra.mxu0 %v6770
        %6822 = vmatpush.msra.mxu0 %v6768
        %6823 = vmatpush.msra.mxu0 %v6766
        %6824 = vmatpush.msra.mxu0 %v6764
        %6825 = vmatpush.msra.mxu0 %v6762
        %6826 = vmatpush.msra.mxu0 %v6760
        %6827 = vmatpush.msra.mxu0 %v6758
        %6828 = vmatpush.msra.mxu0 %v6756
        %6829 = vmatpush.msra.mxu0 %v6754
        %6830 = vmatpush.msra.mxu0 %v6752
        %6831 = vmatpush.msra.mxu0 %v6750
        %6832 = vmatpush.msra.mxu0 %v6748
        %6833 = vmatpush.msra.mxu0 %v6746
        %6834 = vmatpush.msra.mxu0 %v6744
        %6835 = vmatmul.f32.gmra.mxu0 %v6817
        %v6836 = vpop.f32.mrf.mxu0
        %v6837 = vadd.f32 0.0, %v6836
        %6838 = vdwg.mxu0
        %6839 = vmatpush.msra.mxu0 0.0
        %6840 = vmatpush.msra.mxu0 %v6773
        %6841 = vmatpush.msra.mxu0 %v6771
        %6842 = vmatpush.msra.mxu0 %v6769
        %6843 = vmatpush.msra.mxu0 %v6767
        %6844 = vmatpush.msra.mxu0 %v6765
        %6845 = vmatpush.msra.mxu0 %v6763
        %6846 = vmatpush.msra.mxu0 %v6761
        %6847 = vmatpush.msra.mxu0 %v6759
        %6848 = vmatpush.msra.mxu0 %v6757
        %6849 = vmatpush.msra.mxu0 %v6755
        %6850 = vmatpush.msra.mxu0 %v6753
        %6851 = vmatpush.msra.mxu0 %v6751
        %6852 = vmatpush.msra.mxu0 %v6749
        %6853 = vmatpush.msra.mxu0 %v6747
        %6854 = vmatpush.msra.mxu0 %v6745
        %6855 = vmatmul.f32.gmra.mxu0 %v6817
        %v6856 = vpop.f32.mrf.mxu0
        %v6857 = vadd.f32 0.0, %v6856
        %6858 = vdwg.mxu0
        %v6859 = vadd.f32 %v6742, %v6837
        %v6860 = vadd.f32 %v6743, %v6857
        %v6861 = vld [vmem:[%s1769] sm:$0xff]
        %v6862 = vld [vmem:[%s1769 + $0x8] sm:$0xff]
        %v6863 = vld [vmem:[%s1769 + $0x10] sm:$0xff]
        %v6864 = vld [vmem:[%s1769 + $0x18] sm:$0xff]
        %v6865 = vld [vmem:[%s1769 + $0x20] sm:$0xff]
        %v6866 = vld [vmem:[%s1769 + $0x28] sm:$0xff]
        %v6867 = vld [vmem:[%s1769 + $0x30] sm:$0xff]
        %v6868 = vld [vmem:[%s1769 + $0x38] sm:$0xff]
        %v6869 = vld [vmem:[%s1769 + $0x40] sm:$0xff]
        %v6870 = vld [vmem:[%s1769 + $0x48] sm:$0xff]
        %v6871 = vld [vmem:[%s1769 + $0x50] sm:$0xff]
        %v6872 = vld [vmem:[%s1769 + $0x58] sm:$0xff]
        %v6873 = vld [vmem:[%s1769 + $0x60] sm:$0xff]
        %v6874 = vld [vmem:[%s1769 + $0x68] sm:$0xff]
        %v6875 = vld [vmem:[%s1769 + $0x70] sm:$0xff]
        %v6876 = vld [vmem:[%s1769 + $0x78] sm:$0xff]
        %v6877 = vld [vmem:[%s1769 + $0x80] sm:$0xff]
        %v6878 = vld [vmem:[%s1769 + $0x88] sm:$0xff]
        %v6879 = vld [vmem:[%s1769 + $0x90] sm:$0xff]
        %v6880 = vld [vmem:[%s1769 + $0x98] sm:$0xff]
        %v6881 = vld [vmem:[%s1769 + $0xa0] sm:$0xff]
        %v6882 = vld [vmem:[%s1769 + $0xa8] sm:$0xff]
        %v6883 = vld [vmem:[%s1769 + $0xb0] sm:$0xff]
        %v6884 = vld [vmem:[%s1769 + $0xb8] sm:$0xff]
        %v6885 = vld [vmem:[%s1769 + $0xc0] sm:$0xff]
        %v6886 = vld [vmem:[%s1769 + $0xc8] sm:$0xff]
        %v6887 = vld [vmem:[%s1769 + $0xd0] sm:$0xff]
        %v6888 = vld [vmem:[%s1769 + $0xd8] sm:$0xff]
        %v6889 = vld [vmem:[%s1769 + $0xe0] sm:$0xff]
        %v6890 = vld [vmem:[%s1769 + $0xe8] sm:$0xff]
        %6891 = vmatpush.msra.mxu0 0.0
        %6892 = vmatpush.msra.mxu0 %v6889
        %6893 = vmatpush.msra.mxu0 %v6887
        %6894 = vmatpush.msra.mxu0 %v6885
        %6895 = vmatpush.msra.mxu0 %v6883
        %6896 = vmatpush.msra.mxu0 %v6881
        %6897 = vmatpush.msra.mxu0 %v6879
        %6898 = vmatpush.msra.mxu0 %v6877
        %6899 = vmatpush.msra.mxu0 %v6875
        %6900 = vmatpush.msra.mxu0 %v6873
        %6901 = vmatpush.msra.mxu0 %v6871
        %6902 = vmatpush.msra.mxu0 %v6869
        %6903 = vmatpush.msra.mxu0 %v6867
        %6904 = vmatpush.msra.mxu0 %v6865
        %6905 = vmatpush.msra.mxu0 %v6863
        %6906 = vmatpush.msra.mxu0 %v6861
        %6907 = vmatmul.f32.gmra.mxu0 %v6817
        %v6908 = vpop.f32.mrf.mxu0
        %v6909 = vadd.f32 0.0, %v6908
        %6910 = vdwg.mxu0
        %6911 = vmatpush.msra.mxu0 0.0
        %6912 = vmatpush.msra.mxu0 %v6890
        %6913 = vmatpush.msra.mxu0 %v6888
        %6914 = vmatpush.msra.mxu0 %v6886
        %6915 = vmatpush.msra.mxu0 %v6884
        %6916 = vmatpush.msra.mxu0 %v6882
        %6917 = vmatpush.msra.mxu0 %v6880
        %6918 = vmatpush.msra.mxu0 %v6878
        %6919 = vmatpush.msra.mxu0 %v6876
        %6920 = vmatpush.msra.mxu0 %v6874
        %6921 = vmatpush.msra.mxu0 %v6872
        %6922 = vmatpush.msra.mxu0 %v6870
        %6923 = vmatpush.msra.mxu0 %v6868
        %6924 = vmatpush.msra.mxu0 %v6866
        %6925 = vmatpush.msra.mxu0 %v6864
        %6926 = vmatpush.msra.mxu0 %v6862
        %6927 = vmatmul.f32.gmra.mxu0 %v6817
        %v6928 = vpop.f32.mrf.mxu0
        %v6929 = vadd.f32 0.0, %v6928
        %6930 = vdwg.mxu0
        %v6931 = vadd.f32 %v6814, %v6909
        %v6932 = vadd.f32 %v6815, %v6929
        %v6933 = vrot.slane %v6397, 2
        %v6934 = vsel %vm1363, %v6933, 0
        %6936 = vmatpush.msra.mxu0 0.0
        %6937 = vmatpush.msra.mxu0 %v6889
        %6938 = vmatpush.msra.mxu0 %v6887
        %6939 = vmatpush.msra.mxu0 %v6885
        %6940 = vmatpush.msra.mxu0 %v6883
        %6941 = vmatpush.msra.mxu0 %v6881
        %6942 = vmatpush.msra.mxu0 %v6879
        %6943 = vmatpush.msra.mxu0 %v6877
        %6944 = vmatpush.msra.mxu0 %v6875
        %6945 = vmatpush.msra.mxu0 %v6873
        %6946 = vmatpush.msra.mxu0 %v6871
        %6947 = vmatpush.msra.mxu0 %v6869
        %6948 = vmatpush.msra.mxu0 %v6867
        %6949 = vmatpush.msra.mxu0 %v6865
        %6950 = vmatpush.msra.mxu0 %v6863
        %6951 = vmatpush.msra.mxu0 %v6861
        %6952 = vmatmul.f32.gmra.mxu0 %v6934
        %v6953 = vpop.f32.mrf.mxu0
        %v6954 = vadd.f32 0.0, %v6953
        %6955 = vdwg.mxu0
        %6956 = vmatpush.msra.mxu0 0.0
        %6957 = vmatpush.msra.mxu0 %v6890
        %6958 = vmatpush.msra.mxu0 %v6888
        %6959 = vmatpush.msra.mxu0 %v6886
        %6960 = vmatpush.msra.mxu0 %v6884
        %6961 = vmatpush.msra.mxu0 %v6882
        %6962 = vmatpush.msra.mxu0 %v6880
        %6963 = vmatpush.msra.mxu0 %v6878
        %6964 = vmatpush.msra.mxu0 %v6876
        %6965 = vmatpush.msra.mxu0 %v6874
        %6966 = vmatpush.msra.mxu0 %v6872
        %6967 = vmatpush.msra.mxu0 %v6870
        %6968 = vmatpush.msra.mxu0 %v6868
        %6969 = vmatpush.msra.mxu0 %v6866
        %6970 = vmatpush.msra.mxu0 %v6864
        %6971 = vmatpush.msra.mxu0 %v6862
        %6972 = vmatmul.f32.gmra.mxu0 %v6934
        %v6973 = vpop.f32.mrf.mxu0
        %v6974 = vadd.f32 0.0, %v6973
        %6975 = vdwg.mxu0
        %v6976 = vadd.f32 %v6859, %v6954
        %v6977 = vadd.f32 %v6860, %v6974
        %v6978 = vmax.f32 %v6931, %v6976
        %v6979 = vmax.f32 %v6932, %v6977
        %6982 = vrot.lane.b32.xlu0 %v6978, 48
        %v6983 = vpop.permute.xlu0 %6982
        %6984 = vrot.lane.b32.xlu0 %v6979, 48
        %v6985 = vpop.permute.xlu0 %6984
        %v6986 = vsel %vm1895, %v6983, %v6985
        %v6988 = vmax.f32 %v6978, %v6986
        %v6989 = vld [vmem:[%s4] sm:$0x1]
        %v6991 = vperm.slane %v6989, 0
        %v6993 = vadd.f32 %v6988, %v6991
        %v6994 = vmax.f32 %v6993, 0.0
        %v6995 = vld [vmem:[%s5] sm:$0xff]
        %v6996 = vld [vmem:[%s5 + $0x8] sm:$0xff]
        %v6997 = vld [vmem:[%s5 + $0x10] sm:$0xff]
        %v6998 = vld [vmem:[%s5 + $0x18] sm:$0xff]
        %v6999 = vld [vmem:[%s5 + $0x20] sm:$0xff]
        %v7000 = vld [vmem:[%s5 + $0x28] sm:$0xff]
        %v7001 = vld [vmem:[%s5 + $0x30] sm:$0xff]
        %v7002 = vld [vmem:[%s5 + $0x38] sm:$0xff]
        %v7003 = vld [vmem:[%s5 + $0x40] sm:$0xff]
        %v7004 = vld [vmem:[%s5 + $0x48] sm:$0xff]
        %v7005 = vld [vmem:[%s1915] sm:$0xff]
        %v7006 = vld [vmem:[%s1915 + $0x8] sm:$0xff]
        %v7007 = vld [vmem:[%s1915 + $0x10] sm:$0xff]
        %v7008 = vld [vmem:[%s1915 + $0x18] sm:$0xff]
        %v7009 = vld [vmem:[%s1915 + $0x20] sm:$0xff]
        %v7010 = vld [vmem:[%s1915 + $0x28] sm:$0xff]
        %v7011 = vld [vmem:[%s1915 + $0x30] sm:$0xff]
        %v7012 = vld [vmem:[%s1915 + $0x38] sm:$0xff]
        %v7013 = vld [vmem:[%s1915 + $0x40] sm:$0xff]
        %v7014 = vld [vmem:[%s1915 + $0x48] sm:$0xff]
        %v7016 = vrot.slane %v6994, 1
        %v7017 = vsel %vm1928, %v7016, 0
        %7019 = vmatpush.msra.mxu0 0.0
        %7020 = vmatpush.msra.mxu0 0.0
        %7021 = vmatpush.msra.mxu0 0.0
        %7022 = vmatpush.msra.mxu0 0.0
        %7023 = vmatpush.msra.mxu0 0.0
        %7024 = vmatpush.msra.mxu0 0.0
        %7025 = vmatpush.msra.mxu0 %v7014
        %7026 = vmatpush.msra.mxu0 %v7013
        %7027 = vmatpush.msra.mxu0 %v7012
        %7028 = vmatpush.msra.mxu0 %v7011
        %7029 = vmatpush.msra.mxu0 %v7010
        %7030 = vmatpush.msra.mxu0 %v7009
        %7031 = vmatpush.msra.mxu0 %v7008
        %7032 = vmatpush.msra.mxu0 %v7007
        %7033 = vmatpush.msra.mxu0 %v7006
        %7034 = vmatpush.msra.mxu0 %v7005
        %7035 = vmatmul.f32.gmra.mxu0 %v7017
        %v7036 = vpop.f32.mrf.mxu0
        %v7037 = vadd.f32 0.0, %v7036
        %7038 = vdwg.mxu0
        %v7039 = vsel %vm1928, %v6994, 0
        %7041 = vmatpush.msra.mxu0 0.0
        %7042 = vmatpush.msra.mxu0 0.0
        %7043 = vmatpush.msra.mxu0 0.0
        %7044 = vmatpush.msra.mxu0 0.0
        %7045 = vmatpush.msra.mxu0 0.0
        %7046 = vmatpush.msra.mxu0 0.0
        %7047 = vmatpush.msra.mxu0 %v7004
        %7048 = vmatpush.msra.mxu0 %v7003
        %7049 = vmatpush.msra.mxu0 %v7002
        %7050 = vmatpush.msra.mxu0 %v7001
        %7051 = vmatpush.msra.mxu0 %v7000
        %7052 = vmatpush.msra.mxu0 %v6999
        %7053 = vmatpush.msra.mxu0 %v6998
        %7054 = vmatpush.msra.mxu0 %v6997
        %7055 = vmatpush.msra.mxu0 %v6996
        %7056 = vmatpush.msra.mxu0 %v6995
        %7057 = vmatmul.f32.gmra.mxu0 %v7039
        %v7058 = vpop.f32.mrf.mxu0
        %v7059 = vadd.f32 %v7037, %v7058
        %7060 = vdwg.mxu0
        %v7061 = vld [vmem:[%s1973] sm:$0xff]
        %v7062 = vld [vmem:[%s1973 + $0x8] sm:$0xff]
        %v7063 = vld [vmem:[%s1973 + $0x10] sm:$0xff]
        %v7064 = vld [vmem:[%s1973 + $0x18] sm:$0xff]
        %v7065 = vld [vmem:[%s1973 + $0x20] sm:$0xff]
        %v7066 = vld [vmem:[%s1973 + $0x28] sm:$0xff]
        %v7067 = vld [vmem:[%s1973 + $0x30] sm:$0xff]
        %v7068 = vld [vmem:[%s1973 + $0x38] sm:$0xff]
        %v7069 = vld [vmem:[%s1973 + $0x40] sm:$0xff]
        %v7070 = vld [vmem:[%s1973 + $0x48] sm:$0xff]
        %v7071 = vrot.slane %v6994, 2
        %v7072 = vsel %vm1928, %v7071, 0
        %7074 = vmatpush.msra.mxu0 0.0
        %7075 = vmatpush.msra.mxu0 0.0
        %7076 = vmatpush.msra.mxu0 0.0
        %7077 = vmatpush.msra.mxu0 0.0
        %7078 = vmatpush.msra.mxu0 0.0
        %7079 = vmatpush.msra.mxu0 0.0
        %7080 = vmatpush.msra.mxu0 %v7070
        %7081 = vmatpush.msra.mxu0 %v7069
        %7082 = vmatpush.msra.mxu0 %v7068
        %7083 = vmatpush.msra.mxu0 %v7067
        %7084 = vmatpush.msra.mxu0 %v7066
        %7085 = vmatpush.msra.mxu0 %v7065
        %7086 = vmatpush.msra.mxu0 %v7064
        %7087 = vmatpush.msra.mxu0 %v7063
        %7088 = vmatpush.msra.mxu0 %v7062
        %7089 = vmatpush.msra.mxu0 %v7061
        %7090 = vmatmul.f32.gmra.mxu0 %v7072
        %v7091 = vpop.f32.mrf.mxu0
        %v7092 = vadd.f32 0.0, %v7091
        %7093 = vdwg.mxu0
        %v7094 = vadd.f32 %v7059, %v7092
        %v7095 = vld [vmem:[%s2008] sm:$0xff]
        %v7096 = vld [vmem:[%s2008 + $0x8] sm:$0xff]
        %v7097 = vld [vmem:[%s2008 + $0x10] sm:$0xff]
        %v7098 = vld [vmem:[%s2008 + $0x18] sm:$0xff]
        %v7099 = vld [vmem:[%s2008 + $0x20] sm:$0xff]
        %v7100 = vld [vmem:[%s2008 + $0x28] sm:$0xff]
        %v7101 = vld [vmem:[%s2008 + $0x30] sm:$0xff]
        %v7102 = vld [vmem:[%s2008 + $0x38] sm:$0xff]
        %v7103 = vld [vmem:[%s2008 + $0x40] sm:$0xff]
        %v7104 = vld [vmem:[%s2008 + $0x48] sm:$0xff]
        %v7105 = vrot.slane %v6994, 3
        %v7106 = vsel %vm1928, %v7105, 0
        %7108 = vmatpush.msra.mxu0 0.0
        %7109 = vmatpush.msra.mxu0 0.0
        %7110 = vmatpush.msra.mxu0 0.0
        %7111 = vmatpush.msra.mxu0 0.0
        %7112 = vmatpush.msra.mxu0 0.0
        %7113 = vmatpush.msra.mxu0 0.0
        %7114 = vmatpush.msra.mxu0 %v7104
        %7115 = vmatpush.msra.mxu0 %v7103
        %7116 = vmatpush.msra.mxu0 %v7102
        %7117 = vmatpush.msra.mxu0 %v7101
        %7118 = vmatpush.msra.mxu0 %v7100
        %7119 = vmatpush.msra.mxu0 %v7099
        %7120 = vmatpush.msra.mxu0 %v7098
        %7121 = vmatpush.msra.mxu0 %v7097
        %7122 = vmatpush.msra.mxu0 %v7096
        %7123 = vmatpush.msra.mxu0 %v7095
        %7124 = vmatmul.f32.gmra.mxu0 %v7106
        %v7125 = vpop.f32.mrf.mxu0
        %v7126 = vadd.f32 0.0, %v7125
        %7127 = vdwg.mxu0
        %v7128 = vadd.f32 %v7094, %v7126
        %v7129 = vld [vmem:[%s6] sm:$0x1]
        %v7130 = vadd.f32 %v7128, %v7129
        %v7131 = vmax.f32 %v7130, 0.0
        %7132 = vst.msk [vmem:[#allocation2 + $0x3] sm:$0x1] %vm2046, %v7131
        %v7133 = vld [vmem:[#allocation2] sm:$0xf]
        %v7134 = vld [vmem:[%s7] sm:$0xff]
        %v7135 = vld [vmem:[%s7 + $0x8] sm:$0xff]
        %v7136 = vld [vmem:[%s7 + $0x10] sm:$0xff]
        %v7137 = vld [vmem:[%s7 + $0x18] sm:$0xff]
        %v7138 = vld [vmem:[%s7 + $0x20] sm:$0xff]
        %v7139 = vld [vmem:[%s7 + $0x28] sm:$0xff]
        %v7140 = vld [vmem:[%s7 + $0x30] sm:$0x3]
        %v7141 = vld [vmem:[%s8] sm:$0x1]
        %v7143 = vperm.slane %v7141, 0
        %vm7145 = vcmask 408576
        %v7147 = vsel %vm7145, %v7133, 0
        %vm7149 = vcmask 1041408
        %v7151 = vsel %vm7149, %v7140, 0
        %7153 = vmatpush.msra.mxu0 0.0
        %7154 = vmatpush.msra.mxu0 0.0
        %7155 = vmatpush.msra.mxu0 0.0
        %7156 = vmatpush.msra.mxu0 0.0
        %7157 = vmatpush.msra.mxu0 0.0
        %7158 = vmatpush.msra.mxu0 0.0
        %7159 = vmatpush.msra.mxu0 0.0
        %7160 = vmatpush.msra.mxu0 0.0
        %7161 = vmatpush.msra.mxu0 0.0
        %7162 = vmatpush.msra.mxu0 %v7151
        %7163 = vmatpush.msra.mxu0 %v7139
        %7164 = vmatpush.msra.mxu0 %v7138
        %7165 = vmatpush.msra.mxu0 %v7137
        %7166 = vmatpush.msra.mxu0 %v7136
        %7167 = vmatpush.msra.mxu0 %v7135
        %7168 = vmatpush.msra.mxu0 %v7134
        %7169 = vmatmul.f32.gmra.mxu0 %v7147
        %v7170 = vpop.f32.mrf.mxu0
        %v7171 = vadd.f32 %v7143, %v7170
        %7172 = vdwg.mxu0
        %vm7173 = vcmask 76800
        %v7174 = vsel %vm7173, %v7171, -inf
        %7175 = vmax.xlane.f32.xlu0 %v7174
        %v7176 = vpop.xlane.xlu0 %7175
        %v7177 = vsub.f32 %v7171, %v7176
        %v7178 = vmul.f32 %v7177, 1.442695
        %v7179 = vpow.pop %v7178
        %v7180 = vsel %vm7173, %v7179, 0.0
        %7181 = vadd.xlane.f32.xlu0 %v7180
        %v7182 = vpop.xlane.xlu0 %7181
        %v7183 = vlog2.pop %v7182
        %v7184 = vmul.f32 %v7183, 0.6931472
        %v7185 = vsub.f32 %v7177, %v7184
        %7186 = vst.msk [vmem:[%s328] sm:$0xf] %vm7173, %v7185
        %s7187 = sand.u32 %s225, 1
        %s7188 = scalar_lea.sflag [#allocation4], %s7187
        %s7189 = sand.u32 %s225, 1
        %s7190 = smul.addr %s7189, 4
        %s7191 = scalar_lea.vmem [#allocation3], %s7190
        // Predicated region
        $region57: #{net_forward.1} parent=55 // pred_check
          %p7192 = pneg %p235
        $region58: #{net_forward.1} parent=55 // pred_check_branch
          %7194 = sbr.rel (%p7192) target = $region60
        $region59: #{net_forward.1} parent=55 // pred_region
          %7196 = vsyncadd %s7188, 0
          %s7197 = smul.addr %s23, 4
          %s7198 = scalar_lea.hbm %s9, %s7197
          %s7200 = sshll.u32 %s7191, 4
          %s7201 = int_to_ptr.vmem [resolvable:$true] %s7200
          %s7202 = sshll.u32 %s7198, 4
          %s7203 = int_to_ptr.hbm [resolvable:$true] %s7202
          %7205 = dma.vmem_to_hbm [thread:$0]  %s7201, 64, %s7203, %s7188
        $region60: #{net_forward.1} parent=55 // pred_fallthru
          _
      $region56: #{net_forward.1} parent=5 // pred_fallthru
        _
      %p7206 = scmp.le.s32.totalorder 2, %s18
      // Predicated region
      $region61: #{net_forward.1} parent=5 // pred_check
        %p7207 = pneg %p7206
      $region62: #{net_forward.1} parent=5 // pred_check_branch
        %7209 = sbr.rel (%p7207) target = $region64
      $region63: #{net_forward.1} parent=5 // pred_region
        %s7210 = ssub.s32 %s18, 2
        // Predicated region
        $region65: #{net_forward.1} parent=63 // pred_check
          %p7211 = pneg %p241
        $region66: #{net_forward.1} parent=63 // pred_check_branch
          %7213 = sbr.rel (%p7211) target = $region68
        $region67: #{net_forward.1} parent=63 // pred_region
          %s7214 = sand.u32 %s226, 1
          %s7215 = scalar_lea.sflag [#allocation4], %s7214
          %s7216 = sand.u32 %s226, 1
          %s7217 = smul.addr %s7216, 4
          %s7218 = scalar_lea.vmem [#allocation3], %s7217
          %7220 = dma.done %s7215, 64
        $region68: #{net_forward.1} parent=63 // pred_fallthru
          _
      $region64: #{net_forward.1} parent=5 // pred_fallthru
        _
    $region6: #{net_forward.1} parent=1 // loop_footer
      %s22 = sadd.s32 1, %s18
    $region7: #{net_forward.1} parent=1 // loop_footer_branch
      %17 = sbr.rel target = $region3
    $region8: #{net_forward.1} parent=1 // loop_exit
      _
    %7221 = vsyncpa [#allocation4], 1
    %s7222 = scalar_lea.sflag [#allocation4], 1
    %7223 = vsyncpa %s7222, 1

</llo_original>
